<compile_context>
chip_gen: v7x
topology: tpu7x:2x2x1
jax: 0.10.0
libtpu: 0.0.40
codegen_flags: <defaults>
</compile_context>

<pallas_src>
import functools

import numpy as np
import jax
import jax.numpy as jnp
from jax.experimental import pallas as pl
from jax.experimental.pallas import tpu as pltpu


def _ceil128(c):
    return (c + 127) // 128 * 128


# ----------------------------------------------------------------------------
# Kernel 1: fused 3x3 conv (stride 1, pad 1), bias (+ ReLU) epilogue.
# The full spatially-padded activation is one VMEM-resident block; the grid
# tiles output rows and output channels; the 9 taps are accumulated in-kernel.
# ----------------------------------------------------------------------------
def _conv3x3_kernel(x_ref, w_ref, b_ref, o_ref, *, tr, wout, cinp, relu):
    i = pl.program_id(2)                    # output row block
    h0 = i * tr
    acc = None
    for di in range(3):
        for dj in range(3):
            t = di * 3 + dj
            xt = x_ref[:, pl.ds(h0 + di, tr), pl.ds(dj, wout), :]
            xt = xt.reshape(tr * wout, cinp)
            wt = w_ref[pl.ds(t * cinp, cinp), :]
            d = jnp.dot(xt, wt, preferred_element_type=jnp.float32)
            acc = d if acc is None else acc + d
    y = acc + b_ref[...]
    if relu:
        y = jnp.maximum(y, 0.0)
    o_ref[...] = y.reshape(o_ref.shape).astype(o_ref.dtype)


def _pick_rows(H, W):
    # When W is not a multiple of 8, keep tr=1 so the in-kernel reshapes are pure
    # squeezes (no sublane repacking).  Otherwise: biggest tr dividing H with
    # tr*W <= 512 rows of MXU work per step.
    if W % 8 != 0:
        return 1
    best = 1
    for tr in range(1, H + 1):
        if H % tr == 0 and tr * W <= 512:
            best = tr
    return best


def _pick_cout_tile(cinp, coutp):
    # >=2 cout blocks when possible (v7x megacore), weight block capped at ~6 MiB.
    tn = coutp // 2 if coutp >= 256 else coutp
    while 9 * cinp * tn * 2 > 6 * 1024 * 1024 and tn % 256 == 0:
        tn //= 2
    return tn


def conv3x3(x, p, out_dtype=jnp.bfloat16):
    """x: (N, H, W, Cin_pad) NHWC bf16, channel-padded.  3x3 conv, stride 1, pad 1."""
    n, H, W, cinp = x.shape
    coutp = p["coutp"]
    xp = jnp.pad(x, ((0, 0), (1, 1), (1, 1), (0, 0)))      # small spatial halo only
    Hp, Wp = H + 2, W + 2
    tr = _pick_rows(H, W)
    nb = H // tr
    tn = _pick_cout_tile(cinp, coutp)
    nj = coutp // tn
    out_bytes = n * H * W * coutp * jnp.dtype(out_dtype).itemsize

    kern = functools.partial(_conv3x3_kernel, tr=tr, wout=W, cinp=cinp,
                             relu=p["relu"])
    return pl.pallas_call(
        kern,
        out_shape=jax.ShapeDtypeStruct((n, H, W, coutp), out_dtype),
        grid_spec=pltpu.PrefetchScalarGridSpec(
            num_scalar_prefetch=0,
            grid=(n, nj, nb),
            in_specs=[
                pl.BlockSpec((1, Hp, Wp, cinp), lambda b, j, i: (b, 0, 0, 0)),
                pl.BlockSpec((9 * cinp, tn), lambda b, j, i: (0, j)),
                pl.BlockSpec((1, tn), lambda b, j, i: (0, j)),
            ],
            out_specs=pl.BlockSpec((1, tr, W, tn), lambda b, j, i: (b, i, 0, j)),
        ),
        compiler_params=pltpu.CompilerParams(
            dimension_semantics=("parallel", "parallel", "parallel"),
            vmem_limit_bytes=48 * 1024 * 1024,
        ),
        cost_estimate=pl.CostEstimate(
            flops=2 * n * H * W * 9 * cinp * coutp,
            transcendentals=0,
            bytes_accessed=n * Hp * Wp * cinp * 2 + 9 * cinp * coutp * 2 + out_bytes,
        ),
    )(xp, p["wmat"], p["bias"])


# ----------------------------------------------------------------------------
# Kernel 2: tiled matmul (1x1 convs / "fc" head), bias (+ ReLU) epilogue.
# ----------------------------------------------------------------------------
def _matmul_bias_kernel(x_ref, w_ref, b_ref, o_ref, acc_ref, *, relu):
    k = pl.program_id(2)

    @pl.when(k == 0)
    def _():
        acc_ref[...] = jnp.zeros_like(acc_ref)

    acc_ref[...] += jnp.dot(x_ref[...], w_ref[...],
                            preferred_element_type=jnp.float32)

    @pl.when(k == pl.num_programs(2) - 1)
    def _():
        y = acc_ref[...] + b_ref[...]
        if relu:
            y = jnp.maximum(y, 0.0)
        o_ref[...] = y.astype(o_ref.dtype)


def conv1x1(x, p, out_dtype=jnp.bfloat16):
    """x: (N, H, W, Cin_pad) channel-padded.  Returns (N, H, W, Cout_pad)."""
    n, H, W, cinp = x.shape
    coutp = p["coutp"]
    M = n * H * W
    xm = x.reshape(M, cinp)

    if M <= 512:
        tm, Mp = M, M                       # full-dim block: no M pad, no out slice
    else:
        tm = 256
        Mp = (M + tm - 1) // tm * tm
        xm = jnp.pad(xm, ((0, Mp - M), (0, 0)))

    tk = min(cinp, 2048)
    if cinp % tk:
        tk = 128
    tn = min(coutp // 2 if coutp >= 256 else coutp, 2048)   # >=2 N blocks for fc6/fc7
    if coutp % tn or tn % 128:
        tn = 128

    grid = (Mp // tm, coutp // tn, cinp // tk)
    out_bytes = Mp * coutp * jnp.dtype(out_dtype).itemsize
    out = pl.pallas_call(
        functools.partial(_matmul_bias_kernel, relu=p["relu"]),
        out_shape=jax.ShapeDtypeStruct((Mp, coutp), out_dtype),
        grid_spec=pltpu.PrefetchScalarGridSpec(
            num_scalar_prefetch=0,
            grid=grid,
            in_specs=[
                pl.BlockSpec((tm, tk), lambda i, j, k: (i, k)),
                pl.BlockSpec((tk, tn), lambda i, j, k: (k, j)),
                pl.BlockSpec((1, tn), lambda i, j, k: (0, j)),
            ],
            out_specs=pl.BlockSpec((tm, tn), lambda i, j, k: (i, j)),
            scratch_shapes=[pltpu.VMEM((tm, tn), jnp.float32)],
        ),
        compiler_params=pltpu.CompilerParams(
            dimension_semantics=("parallel", "parallel", "arbitrary"),
            vmem_limit_bytes=48 * 1024 * 1024,
        ),
        cost_estimate=pl.CostEstimate(
            flops=2 * Mp * coutp * cinp,
            transcendentals=0,
            bytes_accessed=Mp * cinp * 2 + cinp * coutp * 2 + out_bytes,
        ),
    )(xm, p["wmat"], p["bias"])
    if Mp != M:
        out = out[:M]
    return out.reshape(n, H, W, coutp)


# ----------------------------------------------------------------------------
# MaxPool2d(2, 2).
# TODO(synk): could be fused into the preceding conv kernel's epilogue to save one
# HBM round trip per pooled stage; kept as XLA strided-max for robustness.
# ----------------------------------------------------------------------------
def maxpool2x2(x):
    a = jnp.maximum(x[:, 0::2, 0::2, :], x[:, 0::2, 1::2, :])
    b = jnp.maximum(x[:, 1::2, 0::2, :], x[:, 1::2, 1::2, :])
    return jnp.maximum(a, b)


# ----------------------------------------------------------------------------
# ConvTranspose2d(k=2s, stride=s, pad=s/2) == stride-1 3x3 conv (pad 1) producing
# s*s*C channels (weights pre-transformed at init) + depth-to-space pixel shuffle.
# ----------------------------------------------------------------------------
def deconv_subpixel(x, p, out_dtype=jnp.bfloat16):
    s = p["stride"]
    cp = p["coutp_base"]
    y = conv3x3(x, p, out_dtype=out_dtype)              # (n, h, w, s*s*cp)
    n, h, w, _ = y.shape
    y = y.reshape(n, h, w, s, s, cp)
    y = jnp.transpose(y, (0, 1, 3, 2, 4, 5))
    return y.reshape(n, h * s, w * s, cp)


# ----------------------------------------------------------------------------
# Parameter construction (deterministic, synthetic).
# TODO(synk): pretrained VGG16 weights cannot be loaded offline; He-init synthetic
# weights with the exact FCN8s layer shapes are used instead.
# ----------------------------------------------------------------------------
def _init_conv3(key, cin, cout, relu=True):
    cinp, coutp = _ceil128(cin), _ceil128(cout)
    k1, k2 = jax.random.split(key)
    w = jax.random.normal(k1, (3, 3, cin, cout), jnp.float32) * np.sqrt(2.0 / (9 * cin))
    b = 0.01 * jax.random.normal(k2, (cout,), jnp.float32)
    wpad = jnp.zeros((3, 3, cinp, coutp), jnp.float32).at[:, :, :cin, :cout].set(w)
    wmat = wpad.reshape(9 * cinp, coutp).astype(jnp.bfloat16)
    bias = jnp.zeros((1, coutp), jnp.float32).at[0, :cout].set(b)
    return dict(wmat=wmat, bias=bias, coutp=coutp, relu=relu)


def _init_conv1(key, cin, cout, relu):
    cinp, coutp = _ceil128(cin), _ceil128(cout)
    k1, k2 = jax.random.split(key)
    w = jax.random.normal(k1, (cin, cout), jnp.float32) * np.sqrt(2.0 / cin)
    b = 0.01 * jax.random.normal(k2, (cout,), jnp.float32)
    wmat = jnp.zeros((cinp, coutp), jnp.float32).at[:cin, :cout].set(w)
    wmat = wmat.astype(jnp.bfloat16)
    bias = jnp.zeros((1, coutp), jnp.float32).at[0, :cout].set(b)
    return dict(wmat=wmat, bias=bias, coutp=coutp, relu=relu)


def _init_deconv(key, cin, cout, k, s, pad):
    # PyTorch ConvTranspose2d weight layout: (cin, cout, kH, kW).
    assert k == 2 * s and 2 * pad == k - s
    cinp, cp = _ceil128(cin), _ceil128(cout)
    k1, k2 = jax.random.split(key)
    w = jax.random.normal(k1, (cin, cout, k, k), jnp.float32) * np.sqrt(1.0 / (cin * k * k))
    bvec = 0.01 * jax.random.normal(k2, (cout,), jnp.float32)
    wnp, bnp = np.asarray(w), np.asarray(bvec)
    # Equivalent stride-1 3x3 conv (pad 1) with output channels grouped (a, b, cout):
    #   out[s*yo+a, s*xo+bb, co] = sum_{dy,dx,ci} in_pad1[yo+dy, xo+dx, ci] * w3[dy,dx,ci,a,bb,co]
    w3 = np.zeros((3, 3, cinp, s, s, cp), np.float32)
    for a in range(s):
        qa, ta = divmod(a + pad, s)
        for u in range(2):
            dy, ky = qa + u, s * (1 - u) + ta
            for bb in range(s):
                qb, tb = divmod(bb + pad, s)
                for v in range(2):
                    dx, kx = qb + v, s * (1 - v) + tb
                    w3[dy, dx, :cin, a, bb, :cout] = wnp[:, :, ky, kx]
    wmat = jnp.asarray(w3.reshape(9 * cinp, s * s * cp), dtype=jnp.bfloat16)
    bias3 = np.zeros((s, s, cp), np.float32)
    bias3[:, :, :cout] = bnp[None, None, :]
    bias = jnp.asarray(bias3.reshape(1, s * s * cp))
    return dict(wmat=wmat, bias=bias, coutp=s * s * cp, coutp_base=cp,
                stride=s, relu=False)


def init_params(key, num_classes):
    vgg_convs = [
        ("conv1_1", 3, 64), ("conv1_2", 64, 64),
        ("conv2_1", 64, 128), ("conv2_2", 128, 128),
        ("conv3_1", 128, 256), ("conv3_2", 256, 256), ("conv3_3", 256, 256),
        ("conv4_1", 256, 512), ("conv4_2", 512, 512), ("conv4_3", 512, 512),
        ("conv5_1", 512, 512), ("conv5_2", 512, 512), ("conv5_3", 512, 512),
    ]
    keys = jax.random.split(key, len(vgg_convs) + 8)
    params, i = {}, 0
    for name, cin, cout in vgg_convs:
        params[name] = _init_conv3(keys[i], cin, cout, relu=True); i += 1
    params["fc6"] = _init_conv1(keys[i], 512, 4096, relu=True); i += 1
    params["fc7"] = _init_conv1(keys[i], 4096, 4096, relu=True); i += 1
    params["score_fr"] = _init_conv1(keys[i], 4096, num_classes, relu=False); i += 1
    params["score_pool3_fr"] = _init_conv1(keys[i], 256, num_classes, relu=False); i += 1
    params["score_pool4_fr"] = _init_conv1(keys[i], 512, num_classes, relu=False); i += 1
    params["upscore2"] = _init_deconv(keys[i], num_classes, num_classes, 4, 2, 1); i += 1
    params["upscore2_pool4"] = _init_deconv(keys[i], num_classes, num_classes, 4, 2, 1); i += 1
    params["upscore8"] = _init_deconv(keys[i], num_classes, num_classes, 16, 8, 4); i += 1
    return params


# ----------------------------------------------------------------------------
# Forward pass (mirrors FCN8s.forward).
# ----------------------------------------------------------------------------
def fcn8s_forward(params, x_nchw, num_classes):
    n, c, H, W = x_nchw.shape
    cpad = _ceil128(c)
    h = jnp.transpose(x_nchw, (0, 2, 3, 1))                         # NCHW -> NHWC
    h = jnp.pad(h, ((0, 0), (0, 0), (0, 0), (0, cpad - c))).astype(jnp.bfloat16)

    # features_map1 = VGG16 features[0:17]  (conv1_1 .. pool3)
    h = conv3x3(h, params["conv1_1"]); h = conv3x3(h, params["conv1_2"]); h = maxpool2x2(h)
    h = conv3x3(h, params["conv2_1"]); h = conv3x3(h, params["conv2_2"]); h = maxpool2x2(h)
    h = conv3x3(h, params["conv3_1"]); h = conv3x3(h, params["conv3_2"])
    h = conv3x3(h, params["conv3_3"]); h = maxpool2x2(h)
    pool3 = h
    # features_map2 = features[17:24]  (conv4_1 .. pool4)
    h = conv3x3(h, params["conv4_1"]); h = conv3x3(h, params["conv4_2"])
    h = conv3x3(h, params["conv4_3"]); h = maxpool2x2(h)
    pool4 = h
    # features_map3 = features[24:31]  (conv5_1 .. pool5)
    h = conv3x3(h, params["conv5_1"]); h = conv3x3(h, params["conv5_2"])
    h = conv3x3(h, params["conv5_3"]); h = maxpool2x2(h)

    # self.conv: 1x1 convs + ReLU + Dropout.  TODO(synk): Dropout in eval mode (identity).
    h = conv1x1(h, params["fc6"])
    h = conv1x1(h, params["fc7"])
    h = conv1x1(h, params["score_fr"])

    score_pool3c = conv1x1(pool3, params["score_pool3_fr"])
    score_pool4c = conv1x1(pool4, params["score_pool4_fr"])

    upscore2 = deconv_subpixel(h, params["upscore2"])
    h = upscore2 + score_pool4c
    upscore2_pool4c = deconv_subpixel(h, params["upscore2_pool4"])
    h = upscore2_pool4c + score_pool3c
    upscore8 = deconv_subpixel(h, params["upscore8"], out_dtype=jnp.float32)

    out = upscore8[:, :, :, :num_classes]                           # drop padded classes
    return jnp.transpose(out, (0, 3, 1, 2))                         # NHWC -> NCHW


if __name__ == "__main__":
    key = jax.random.PRNGKey(0)
    pkey, xkey = jax.random.split(key)

    num_classes = 21
    params = init_params(pkey, num_classes)

    # FCN8s needs spatial dims divisible by 32 (5 pools + stride-2/stride-8 upsampling).
    x = jax.random.normal(xkey, (1, 3, 64, 64), jnp.float32)

    out = fcn8s_forward(params, x, num_classes)
    out = jax.block_until_ready(out)

    assert out.shape == (1, num_classes, 64, 64), out.shape
    assert bool(jnp.all(jnp.isfinite(out))), "non-finite output"
    print("KERNEL_OK")
</pallas_src>

<mosaic_0001>
module attributes {stable_mosaic.version = 11 : i64} {
  func.func @_conv3x3_kernel(%arg0: i32, %arg1: i32, %arg2: i32, %arg3: memref<1x66x66x128xbf16, #tpu.memory_space<vmem>>, %arg4: memref<1152x128xbf16, #tpu.memory_space<vmem>>, %arg5: memref<1x128xf32, #tpu.memory_space<vmem>>, %arg6: memref<1x8x64x128xbf16, #tpu.memory_space<vmem>>) attributes {dimension_semantics = [#tpu.dimension_semantics<parallel>, #tpu.dimension_semantics<parallel>, #tpu.dimension_semantics<parallel>], iteration_bounds = array<i64: 1, 1, 8>, scalar_prefetch = 0 : i64, scratch_operands = 0 : i64, tpu.core_type = #tpu.core_type<tc>, window_params = [{transform_indices = @transform_0, window_bounds = array<i64: 1, 66, 66, 128>}, {transform_indices = @transform_1, window_bounds = array<i64: 1152, 128>}, {transform_indices = @transform_2, window_bounds = array<i64: 1, 128>}, {transform_indices = @transform_3, window_bounds = array<i64: 1, 8, 64, 128>}]} {
    %c8_i32 = arith.constant 8 : i32
    %0 = arith.muli %arg2, %c8_i32 : i32
    %c0_i32 = arith.constant 0 : i32
    %1 = arith.addi %0, %c0_i32 : i32
    %c0 = arith.constant 0 : index
    %2 = arith.index_cast %1 : i32 to index
    %c0_0 = arith.constant 0 : index
    %c0_1 = arith.constant 0 : index
    %3 = vector.load %arg3[%c0, %2, %c0_0, %c0_1] : memref<1x66x66x128xbf16, #tpu.memory_space<vmem>>, vector<1x8x64x128xbf16>
    %4 = vector.shape_cast %3 : vector<1x8x64x128xbf16> to vector<512x128xbf16>
    %c0_2 = arith.constant 0 : index
    %c0_3 = arith.constant 0 : index
    %5 = vector.load %arg4[%c0_2, %c0_3] : memref<1152x128xbf16, #tpu.memory_space<vmem>>, vector<128x128xbf16>
    %cst = arith.constant dense<0.000000e+00> : vector<512x128xf32>
    %6 = tpu.matmul %4, %5, %cst {dimension_numbers = #tpu.dot_dimension_numbers<[1], [0], [0], [1], [0, 0, 1, 1], [], []>} : vector<512x128xbf16>, vector<128x128xbf16>, vector<512x128xf32> -> vector<512x128xf32>
    %c0_i32_4 = arith.constant 0 : i32
    %7 = arith.addi %0, %c0_i32_4 : i32
    %c0_5 = arith.constant 0 : index
    %8 = arith.index_cast %7 : i32 to index
    %c1 = arith.constant 1 : index
    %c0_6 = arith.constant 0 : index
    %9 = vector.load %arg3[%c0_5, %8, %c1, %c0_6] : memref<1x66x66x128xbf16, #tpu.memory_space<vmem>>, vector<1x8x64x128xbf16>
    %10 = vector.shape_cast %9 : vector<1x8x64x128xbf16> to vector<512x128xbf16>
    %c128 = arith.constant 128 : index
    %c0_7 = arith.constant 0 : index
    %11 = vector.load %arg4[%c128, %c0_7] : memref<1152x128xbf16, #tpu.memory_space<vmem>>, vector<128x128xbf16>
    %cst_8 = arith.constant dense<0.000000e+00> : vector<512x128xf32>
    %12 = tpu.matmul %10, %11, %cst_8 {dimension_numbers = #tpu.dot_dimension_numbers<[1], [0], [0], [1], [0, 0, 1, 1], [], []>} : vector<512x128xbf16>, vector<128x128xbf16>, vector<512x128xf32> -> vector<512x128xf32>
    %13 = arith.addf %6, %12 : vector<512x128xf32>
    %c0_i32_9 = arith.constant 0 : i32
    %14 = arith.addi %0, %c0_i32_9 : i32
    %c0_10 = arith.constant 0 : index
    %15 = arith.index_cast %14 : i32 to index
    %c2 = arith.constant 2 : index
    %c0_11 = arith.constant 0 : index
    %16 = vector.load %arg3[%c0_10, %15, %c2, %c0_11] : memref<1x66x66x128xbf16, #tpu.memory_space<vmem>>, vector<1x8x64x128xbf16>
    %17 = vector.shape_cast %16 : vector<1x8x64x128xbf16> to vector<512x128xbf16>
    %c256 = arith.constant 256 : index
    %c0_12 = arith.constant 0 : index
    %18 = vector.load %arg4[%c256, %c0_12] : memref<1152x128xbf16, #tpu.memory_space<vmem>>, vector<128x128xbf16>
    %cst_13 = arith.constant dense<0.000000e+00> : vector<512x128xf32>
    %19 = tpu.matmul %17, %18, %cst_13 {dimension_numbers = #tpu.dot_dimension_numbers<[1], [0], [0], [1], [0, 0, 1, 1], [], []>} : vector<512x128xbf16>, vector<128x128xbf16>, vector<512x128xf32> -> vector<512x128xf32>
    %20 = arith.addf %13, %19 : vector<512x128xf32>
    %c1_i32 = arith.constant 1 : i32
    %21 = arith.addi %0, %c1_i32 : i32
    %c0_14 = arith.constant 0 : index
    %22 = arith.index_cast %21 : i32 to index
    %c0_15 = arith.constant 0 : index
    %c0_16 = arith.constant 0 : index
    %23 = vector.load %arg3[%c0_14, %22, %c0_15, %c0_16] : memref<1x66x66x128xbf16, #tpu.memory_space<vmem>>, vector<1x8x64x128xbf16>
    %24 = vector.shape_cast %23 : vector<1x8x64x128xbf16> to vector<512x128xbf16>
    %c384 = arith.constant 384 : index
    %c0_17 = arith.constant 0 : index
    %25 = vector.load %arg4[%c384, %c0_17] : memref<1152x128xbf16, #tpu.memory_space<vmem>>, vector<128x128xbf16>
    %cst_18 = arith.constant dense<0.000000e+00> : vector<512x128xf32>
    %26 = tpu.matmul %24, %25, %cst_18 {dimension_numbers = #tpu.dot_dimension_numbers<[1], [0], [0], [1], [0, 0, 1, 1], [], []>} : vector<512x128xbf16>, vector<128x128xbf16>, vector<512x128xf32> -> vector<512x128xf32>
    %27 = arith.addf %20, %26 : vector<512x128xf32>
    %c1_i32_19 = arith.constant 1 : i32
    %28 = arith.addi %0, %c1_i32_19 : i32
    %c0_20 = arith.constant 0 : index
    %29 = arith.index_cast %28 : i32 to index
    %c1_21 = arith.constant 1 : index
    %c0_22 = arith.constant 0 : index
    %30 = vector.load %arg3[%c0_20, %29, %c1_21, %c0_22] : memref<1x66x66x128xbf16, #tpu.memory_space<vmem>>, vector<1x8x64x128xbf16>
    %31 = vector.shape_cast %30 : vector<1x8x64x128xbf16> to vector<512x128xbf16>
    %c512 = arith.constant 512 : index
    %c0_23 = arith.constant 0 : index
    %32 = vector.load %arg4[%c512, %c0_23] : memref<1152x128xbf16, #tpu.memory_space<vmem>>, vector<128x128xbf16>
    %cst_24 = arith.constant dense<0.000000e+00> : vector<512x128xf32>
    %33 = tpu.matmul %31, %32, %cst_24 {dimension_numbers = #tpu.dot_dimension_numbers<[1], [0], [0], [1], [0, 0, 1, 1], [], []>} : vector<512x128xbf16>, vector<128x128xbf16>, vector<512x128xf32> -> vector<512x128xf32>
    %34 = arith.addf %27, %33 : vector<512x128xf32>
    %c1_i32_25 = arith.constant 1 : i32
    %35 = arith.addi %0, %c1_i32_25 : i32
    %c0_26 = arith.constant 0 : index
    %36 = arith.index_cast %35 : i32 to index
    %c2_27 = arith.constant 2 : index
    %c0_28 = arith.constant 0 : index
    %37 = vector.load %arg3[%c0_26, %36, %c2_27, %c0_28] : memref<1x66x66x128xbf16, #tpu.memory_space<vmem>>, vector<1x8x64x128xbf16>
    %38 = vector.shape_cast %37 : vector<1x8x64x128xbf16> to vector<512x128xbf16>
    %c640 = arith.constant 640 : index
    %c0_29 = arith.constant 0 : index
    %39 = vector.load %arg4[%c640, %c0_29] : memref<1152x128xbf16, #tpu.memory_space<vmem>>, vector<128x128xbf16>
    %cst_30 = arith.constant dense<0.000000e+00> : vector<512x128xf32>
    %40 = tpu.matmul %38, %39, %cst_30 {dimension_numbers = #tpu.dot_dimension_numbers<[1], [0], [0], [1], [0, 0, 1, 1], [], []>} : vector<512x128xbf16>, vector<128x128xbf16>, vector<512x128xf32> -> vector<512x128xf32>
    %41 = arith.addf %34, %40 : vector<512x128xf32>
    %c2_i32 = arith.constant 2 : i32
    %42 = arith.addi %0, %c2_i32 : i32
    %c0_31 = arith.constant 0 : index
    %43 = arith.index_cast %42 : i32 to index
    %c0_32 = arith.constant 0 : index
    %c0_33 = arith.constant 0 : index
    %44 = vector.load %arg3[%c0_31, %43, %c0_32, %c0_33] : memref<1x66x66x128xbf16, #tpu.memory_space<vmem>>, vector<1x8x64x128xbf16>
    %45 = vector.shape_cast %44 : vector<1x8x64x128xbf16> to vector<512x128xbf16>
    %c768 = arith.constant 768 : index
    %c0_34 = arith.constant 0 : index
    %46 = vector.load %arg4[%c768, %c0_34] : memref<1152x128xbf16, #tpu.memory_space<vmem>>, vector<128x128xbf16>
    %cst_35 = arith.constant dense<0.000000e+00> : vector<512x128xf32>
    %47 = tpu.matmul %45, %46, %cst_35 {dimension_numbers = #tpu.dot_dimension_numbers<[1], [0], [0], [1], [0, 0, 1, 1], [], []>} : vector<512x128xbf16>, vector<128x128xbf16>, vector<512x128xf32> -> vector<512x128xf32>
    %48 = arith.addf %41, %47 : vector<512x128xf32>
    %c2_i32_36 = arith.constant 2 : i32
    %49 = arith.addi %0, %c2_i32_36 : i32
    %c0_37 = arith.constant 0 : index
    %50 = arith.index_cast %49 : i32 to index
    %c1_38 = arith.constant 1 : index
    %c0_39 = arith.constant 0 : index
    %51 = vector.load %arg3[%c0_37, %50, %c1_38, %c0_39] : memref<1x66x66x128xbf16, #tpu.memory_space<vmem>>, vector<1x8x64x128xbf16>
    %52 = vector.shape_cast %51 : vector<1x8x64x128xbf16> to vector<512x128xbf16>
    %c896 = arith.constant 896 : index
    %c0_40 = arith.constant 0 : index
    %53 = vector.load %arg4[%c896, %c0_40] : memref<1152x128xbf16, #tpu.memory_space<vmem>>, vector<128x128xbf16>
    %cst_41 = arith.constant dense<0.000000e+00> : vector<512x128xf32>
    %54 = tpu.matmul %52, %53, %cst_41 {dimension_numbers = #tpu.dot_dimension_numbers<[1], [0], [0], [1], [0, 0, 1, 1], [], []>} : vector<512x128xbf16>, vector<128x128xbf16>, vector<512x128xf32> -> vector<512x128xf32>
    %55 = arith.addf %48, %54 : vector<512x128xf32>
    %c2_i32_42 = arith.constant 2 : i32
    %56 = arith.addi %0, %c2_i32_42 : i32
    %c0_43 = arith.constant 0 : index
    %57 = arith.index_cast %56 : i32 to index
    %c2_44 = arith.constant 2 : index
    %c0_45 = arith.constant 0 : index
    %58 = vector.load %arg3[%c0_43, %57, %c2_44, %c0_45] : memref<1x66x66x128xbf16, #tpu.memory_space<vmem>>, vector<1x8x64x128xbf16>
    %59 = vector.shape_cast %58 : vector<1x8x64x128xbf16> to vector<512x128xbf16>
    %c1024 = arith.constant 1024 : index
    %c0_46 = arith.constant 0 : index
    %60 = vector.load %arg4[%c1024, %c0_46] : memref<1152x128xbf16, #tpu.memory_space<vmem>>, vector<128x128xbf16>
    %cst_47 = arith.constant dense<0.000000e+00> : vector<512x128xf32>
    %61 = tpu.matmul %59, %60, %cst_47 {dimension_numbers = #tpu.dot_dimension_numbers<[1], [0], [0], [1], [0, 0, 1, 1], [], []>} : vector<512x128xbf16>, vector<128x128xbf16>, vector<512x128xf32> -> vector<512x128xf32>
    %62 = arith.addf %55, %61 : vector<512x128xf32>
    %c0_48 = arith.constant 0 : index
    %c0_49 = arith.constant 0 : index
    %63 = vector.load %arg5[%c0_48, %c0_49] : memref<1x128xf32, #tpu.memory_space<vmem>>, vector<1x128xf32>
    %64 = vector.broadcast %63 : vector<1x128xf32> to vector<512x128xf32>
    %65 = arith.addf %62, %64 : vector<512x128xf32>
    %cst_50 = arith.constant 0.000000e+00 : f32
    %66 = vector.broadcast %cst_50 : f32 to vector<512x128xf32>
    %67 = arith.maximumf %65, %66 : vector<512x128xf32>
    %68 = vector.shape_cast %67 : vector<512x128xf32> to vector<1x8x64x128xf32>
    %69 = arith.truncf %68 : vector<1x8x64x128xf32> to vector<1x8x64x128xbf16>
    %c0_51 = arith.constant 0 : index
    %c0_52 = arith.constant 0 : index
    %c0_53 = arith.constant 0 : index
    %c0_54 = arith.constant 0 : index
    %70 = vector.load %arg6[%c0_51, %c0_52, %c0_53, %c0_54] : memref<1x8x64x128xbf16, #tpu.memory_space<vmem>>, vector<1x8x64x128xbf16>
    tpu.vector_store %arg6[%c0_51, %c0_52, %c0_53, %c0_54], %69 {strides = array<i32>} : memref<1x8x64x128xbf16, #tpu.memory_space<vmem>>, vector<1x8x64x128xbf16>,
    return
  }
  func.func @transform_0(%arg0: i32, %arg1: i32, %arg2: i32) -> (i32, i32, i32, i32) {
    %c0_i32 = arith.constant 0 : i32
    %c0_i32_0 = arith.constant 0 : i32
    %c0_i32_1 = arith.constant 0 : i32
    %c0_i32_2 = arith.constant 0 : i32
    return %arg0, %c0_i32, %c0_i32_0, %c0_i32_1 : i32, i32, i32, i32
  }
  func.func @transform_1(%arg0: i32, %arg1: i32, %arg2: i32) -> (i32, i32) {
    %c0_i32 = arith.constant 0 : i32
    %c0_i32_0 = arith.constant 0 : i32
    return %c0_i32, %arg1 : i32, i32
  }
  func.func @transform_2(%arg0: i32, %arg1: i32, %arg2: i32) -> (i32, i32) {
    %c0_i32 = arith.constant 0 : i32
    %c0_i32_0 = arith.constant 0 : i32
    return %c0_i32, %arg1 : i32, i32
  }
  func.func @transform_3(%arg0: i32, %arg1: i32, %arg2: i32) -> (i32, i32, i32, i32) {
    %c0_i32 = arith.constant 0 : i32
    %c0_i32_0 = arith.constant 0 : i32
    return %arg0, %arg2, %c0_i32, %arg1 : i32, i32, i32, i32
  }
}

</mosaic_0001>

<llo_original>
// kernel: tpu_custom_call.1
$region0: #{tpu_custom_call.1}
  #allocation0 [shape = 'u32[]', space=smem, size = 0x4, offset = 0x4, fixed_abs, tag = 'smem constant byte address 0x4 - core index']
  #allocation1 [shape = 'u32[144,128]{1,0:T(1,128)}', space=vmem, size = 0x12000, scoped, tag = 'internal scratch']
  %s0 = inlined_call_operand.hbm [shape: bf16[1,66,66,128], index: 0, kind: input, shape index: {}]
  %s1 = inlined_call_operand.hbm [shape: bf16[1152,128], index: 1, kind: input, shape index: {}]
  %s2 = inlined_call_operand.hbm [shape: f32[1,128], index: 2, kind: input, shape index: {}]
  %s3 = inlined_call_operand.hbm [shape: bf16[1,64,64,128], index: 3, kind: output, shape index: {}]
  %s4 = sld [smem:[#allocation0]]
  $region57: #{tpu_custom_call.1} parent=0
    _
  %s6 = ssub.s32 1, %s4
  %s7 = scalar_select 0, %s6, %s4
  $region1: #{tpu_custom_call.1} parent=0
    #allocation2 [shape = 'u8[1216512]{0}', space=vmem, size = 0x129000, scoped, tag = 'input window, operand 0, single buffered']
    #allocation3 [shape = 's32[2]{0}', space=sflag, size = 0x8, scoped, tag = 'scoped memory for tpu_custom_call.1']
    #allocation4 [shape = 's32[2]{0}', space=sflag, size = 0x8, scoped, tag = 'scoped memory for tpu_custom_call.1']
    #allocation5 [shape = 'u8[294912]{0}', space=vmem, size = 0x48000, scoped, tag = 'input window, operand 1, single buffered']
    #allocation6 [shape = 's32[1]{0}', space=sflag, size = 0x4, scoped, tag = 'scoped memory for tpu_custom_call.1']
    #allocation7 [shape = 'u8[512]{0}', space=vmem, size = 0x400, scoped, tag = 'input window, operand 2, single buffered']
    #allocation8 [shape = 'u8[262144]{0}', space=vmem, size = 0x40000, scoped, tag = 'output window, operand 0']
    %8 = vsyncpa [#allocation3], 0
    %9 = vsyncpa [#allocation6], 0
    %10 = vsyncpa [#allocation4], 0
    %s11 = scalar_lea.sflag [#allocation4], 1
    %12 = vsyncpa %s11, 0
    loop: start=0, step=1, limit=10
    $region2: #{tpu_custom_call.1} parent=1 // loop_pre_header
      _
    $region3: #{tpu_custom_call.1} parent=1 // loop_header
      %s14 = sphi 0, %s18
      %p15 = scmp.ge.s32.totalorder %s14, 10
      %s21 = sphi 0, %s40
      %s22 = sphi 0, %s36
      %s23 = sphi 0, %s32
      %s24 = sphi 0, %s21
      %s25 = sphi 0, %s22
      %s26 = sphi 0, %s23
      %s27 = sphi 0, %s24
      %s28 = sphi 0, %s25
      %s29 = sphi 0, %s26
      %s43 = sphi 0, %s45
      %s46 = sphi 0, %s43
      %s47 = sphi 0, %s46
      %s63 = sphi 0, %s47
      %s69 = sphi 0, %s71
      %s72 = sphi 0, %s69
      %s73 = sphi 0, %s72
      %s89 = sphi 0, %s73
      %s95 = sphi 0, %s97
      %s98 = sphi 0, %s95
      %s99 = sphi 0, %s98
      %s115 = sphi 0, %s99
      %s125 = sphi 0, %s127
      %s128 = sphi 0, %s125
      %s129 = sphi 0, %s128
      %s145 = sphi 0, %s129
    $region4: #{tpu_custom_call.1} parent=1 // loop_header_branch
      %17 = sbr.rel (%p15) target = $region8
    $region5: #{tpu_custom_call.1} parent=1 // loop_body
      %s19 = ssub.s32 %s14, 1
      %s20 = ssub.s32 %s14, 2
      %s30 = sadd.s32 1, %s23
      %p31 = scmp.ge.s32.totalorder %s30, 8
      %s32 = scalar_select %p31, 0, %s30
      %s33 = sadd.s32 1, %s22
      %s34 = scalar_select %p31, %s33, %s22
      %p35 = scmp.ge.s32.totalorder %s34, 1
      %s36 = scalar_select %p35, 0, %s34
      %s37 = sadd.s32 1, %s21
      %s38 = scalar_select %p35, %s37, %s21
      %p39 = scmp.ge.s32.totalorder %s38, 1
      %s40 = scalar_select %p39, 0, %s38
      %s41 = ssub.s32 %s21, %s40
      %p42 = scmp.eq.s32.totalorder %s41, 0
      %s44 = sadd.s32 %s43, 1
      %s45 = scalar_select %p42, %s43, %s44
      %p48 = pneg %p42
      %p49 = scmp.eq.s32.totalorder %s14, 7
      %p50 = por %p48, %p49
      %p51 = scmp.ne.s32.totalorder %s43, %s46
      %p52 = scmp.eq.s32.totalorder %s14, 0
      %p53 = por %p51, %p52
      %p54 = scmp.ne.s32.totalorder %s43, %s46
      %p55 = scmp.eq.s32.totalorder %s19, 7
      %p56 = por %p54, %p55
      %p57 = scmp.ne.s32.totalorder %s46, %s47
      %p58 = scmp.eq.s32.totalorder %s19, 0
      %p59 = por %p57, %p58
      %p60 = scmp.ne.s32.totalorder %s46, %s47
      %p61 = scmp.eq.s32.totalorder %s20, 7
      %p62 = por %p60, %p61
      %p64 = scmp.ne.s32.totalorder %s47, %s63
      %p65 = scmp.eq.s32.totalorder %s20, 0
      %p66 = por %p64, %p65
      %s67 = ssub.s32 %s22, %s36
      %p68 = scmp.eq.s32.totalorder %s67, 0
      %s70 = sadd.s32 %s69, 1
      %s71 = scalar_select %p68, %s69, %s70
      %p74 = pneg %p68
      %p75 = scmp.eq.s32.totalorder %s14, 7
      %p76 = por %p74, %p75
      %p77 = scmp.ne.s32.totalorder %s69, %s72
      %p78 = scmp.eq.s32.totalorder %s14, 0
      %p79 = por %p77, %p78
      %p80 = scmp.ne.s32.totalorder %s69, %s72
      %p81 = scmp.eq.s32.totalorder %s19, 7
      %p82 = por %p80, %p81
      %p83 = scmp.ne.s32.totalorder %s72, %s73
      %p84 = scmp.eq.s32.totalorder %s19, 0
      %p85 = por %p83, %p84
      %p86 = scmp.ne.s32.totalorder %s72, %s73
      %p87 = scmp.eq.s32.totalorder %s20, 7
      %p88 = por %p86, %p87
      %p90 = scmp.ne.s32.totalorder %s73, %s89
      %p91 = scmp.eq.s32.totalorder %s20, 0
      %p92 = por %p90, %p91
      %s93 = ssub.s32 %s22, %s36
      %p94 = scmp.eq.s32.totalorder %s93, 0
      %s96 = sadd.s32 %s95, 1
      %s97 = scalar_select %p94, %s95, %s96
      %p100 = pneg %p94
      %p101 = scmp.eq.s32.totalorder %s14, 7
      %p102 = por %p100, %p101
      %p103 = scmp.ne.s32.totalorder %s95, %s98
      %p104 = scmp.eq.s32.totalorder %s14, 0
      %p105 = por %p103, %p104
      %p106 = scmp.ne.s32.totalorder %s95, %s98
      %p107 = scmp.eq.s32.totalorder %s19, 7
      %p108 = por %p106, %p107
      %p109 = scmp.ne.s32.totalorder %s98, %s99
      %p110 = scmp.eq.s32.totalorder %s19, 0
      %p111 = por %p109, %p110
      %p112 = scmp.ne.s32.totalorder %s98, %s99
      %p113 = scmp.eq.s32.totalorder %s20, 7
      %p114 = por %p112, %p113
      %p116 = scmp.ne.s32.totalorder %s99, %s115
      %p117 = scmp.eq.s32.totalorder %s20, 0
      %p118 = por %p116, %p117
      %s119 = ssub.s32 %s21, %s40
      %s120 = ssub.s32 %s23, %s32
      %s121 = sor.u32 %s119, %s120
      %s122 = ssub.s32 %s22, %s36
      %s123 = sor.u32 %s121, %s122
      %p124 = scmp.eq.s32.totalorder %s123, 0
      %s126 = sadd.s32 %s125, 1
      %s127 = scalar_select %p124, %s125, %s126
      %p130 = pneg %p124
      %p131 = scmp.eq.s32.totalorder %s14, 7
      %p132 = por %p130, %p131
      %p133 = scmp.ne.s32.totalorder %s125, %s128
      %p134 = scmp.eq.s32.totalorder %s14, 0
      %p135 = por %p133, %p134
      %p136 = scmp.ne.s32.totalorder %s125, %s128
      %p137 = scmp.eq.s32.totalorder %s19, 7
      %p138 = por %p136, %p137
      %p139 = scmp.ne.s32.totalorder %s128, %s129
      %p140 = scmp.eq.s32.totalorder %s19, 0
      %p141 = por %p139, %p140
      %p142 = scmp.ne.s32.totalorder %s128, %s129
      %p143 = scmp.eq.s32.totalorder %s20, 7
      %p144 = por %p142, %p143
      %p146 = scmp.ne.s32.totalorder %s129, %s145
      %p147 = scmp.eq.s32.totalorder %s20, 0
      %p148 = por %p146, %p147
      %p149 = scmp.le.s32.totalorder 1, %s14
      %p150 = scmp.lt.s32.totalorder %s14, 9
      %p151 = pnand %p149, %p150
      %p152 = pneg %p151
      // Predicated region
      $region9: #{tpu_custom_call.1} parent=5 // pred_check
        _
      $region10: #{tpu_custom_call.1} parent=5 // pred_check_branch
        %154 = sbr.rel (%p151) target = $region12
      $region11: #{tpu_custom_call.1} parent=5 // pred_region
        %s155 = ssub.s32 %s14, 1
        // Predicated region
        $region13: #{tpu_custom_call.1} parent=11 // pred_check
          %p156 = pneg %p59
        $region14: #{tpu_custom_call.1} parent=11 // pred_check_branch
          %158 = sbr.rel (%p156) target = $region16
        $region15: #{tpu_custom_call.1} parent=11 // pred_region
          %s160 = ssub.s32 38016, 38016
          %161 = vsyncadd [#allocation3], %s160
          %s162 = smul.addr %s24, 594
          %s163 = smul.addr %s162, 64
          %s164 = scalar_lea.hbm %s0, %s163
          %s165 = sshll.u32 [#allocation2], 4
          %s166 = int_to_ptr.vmem [resolvable:$true] %s165
          %171 = dma.hbm_to_vmem [thread:$0]  %s164, 38016, %s166, [#allocation3], 64, 64, 4
        $region16: #{tpu_custom_call.1} parent=11 // pred_fallthru
          _
        // Predicated region
        $region17: #{tpu_custom_call.1} parent=11 // pred_check
          %p172 = pneg %p85
        $region18: #{tpu_custom_call.1} parent=11 // pred_check_branch
          %174 = sbr.rel (%p172) target = $region20
        $region19: #{tpu_custom_call.1} parent=11 // pred_region
          %s176 = ssub.s32 9216, 9216
          %177 = vsyncadd [#allocation6], %s176
          %s178 = smul.addr %s25, 64
          %s179 = scalar_lea.hbm %s1, %s178
          %s180 = sshll.u32 [#allocation5], 4
          %s181 = int_to_ptr.vmem [resolvable:$true] %s180
          %186 = dma.hbm_to_vmem [thread:$0]  %s179, 9216, %s181, [#allocation6], 64, 64, 4
        $region20: #{tpu_custom_call.1} parent=11 // pred_fallthru
          _
        // Predicated region
        $region21: #{tpu_custom_call.1} parent=11 // pred_check
          %p187 = pneg %p111
        $region22: #{tpu_custom_call.1} parent=11 // pred_check_branch
          %189 = sbr.rel (%p187) target = $region24
        $region23: #{tpu_custom_call.1} parent=11 // pred_region
          %s191 = ssub.s32 16, 16
          %192 = vsyncadd [#allocation6], %s191
          %s193 = smul.addr %s25, 16
          %s194 = scalar_lea.hbm %s2, %s193
          %s196 = sshll.u32 [#allocation7], 4
          %s197 = int_to_ptr.vmem [resolvable:$true] %s196
          %199 = dma.hbm_to_vmem [thread:$0]  %s194, 16, %s197, [#allocation6]
        $region24: #{tpu_custom_call.1} parent=11 // pred_fallthru
          _
      $region12: #{tpu_custom_call.1} parent=5 // pred_fallthru
        _
      %p200 = scmp.lt.s32.totalorder %s14, 8
      // Predicated region
      $region25: #{tpu_custom_call.1} parent=5 // pred_check
        %p201 = pneg %p200
      $region26: #{tpu_custom_call.1} parent=5 // pred_check_branch
        %203 = sbr.rel (%p201) target = $region28
      $region27: #{tpu_custom_call.1} parent=5 // pred_region
        _
      $region28: #{tpu_custom_call.1} parent=5 // pred_fallthru
        _
      %p204 = scmp.le.s32.totalorder 1, %s14
      %p205 = scmp.lt.s32.totalorder %s14, 9
      %p206 = pnand %p204, %p205
      %p207 = pneg %p206
      // Predicated region
      $region29: #{tpu_custom_call.1} parent=5 // pred_check
        _
      $region30: #{tpu_custom_call.1} parent=5 // pred_check_branch
        %209 = sbr.rel (%p206) target = $region32
      $region31: #{tpu_custom_call.1} parent=5 // pred_region
        %s210 = ssub.s32 %s14, 1
        // Predicated region
        $region33: #{tpu_custom_call.1} parent=31 // pred_check
          %p211 = pneg %p59
        $region34: #{tpu_custom_call.1} parent=31 // pred_check_branch
          %213 = sbr.rel (%p211) target = $region36
        $region35: #{tpu_custom_call.1} parent=31 // pred_region
          %214 = dma.done [#allocation3], 38016
        $region36: #{tpu_custom_call.1} parent=31 // pred_fallthru
          _
        // Predicated region
        $region37: #{tpu_custom_call.1} parent=31 // pred_check
          %p215 = pneg %p85
        $region38: #{tpu_custom_call.1} parent=31 // pred_check_branch
          %217 = sbr.rel (%p215) target = $region40
        $region39: #{tpu_custom_call.1} parent=31 // pred_region
          %218 = dma.done [#allocation6], 9216
        $region40: #{tpu_custom_call.1} parent=31 // pred_fallthru
          _
        // Predicated region
        $region41: #{tpu_custom_call.1} parent=31 // pred_check
          %p219 = pneg %p111
        $region42: #{tpu_custom_call.1} parent=31 // pred_check_branch
          %221 = sbr.rel (%p219) target = $region44
        $region43: #{tpu_custom_call.1} parent=31 // pred_region
          %222 = dma.done [#allocation6], 16
        $region44: #{tpu_custom_call.1} parent=31 // pred_fallthru
          _
        %p223 = pneg %p59
        %p224 = pneg %p56
        %p225 = pneg %p85
        %p226 = pneg %p82
        %p227 = pneg %p111
        %p228 = pneg %p108
        %p229 = pneg %p141
        %p230 = pneg %p138
        %s231 = sand.u32 %s128, 1
        %s232 = scalar_lea.sflag [#allocation4], %s231
        %s233 = sand.u32 %s128, 1
        %s234 = smul.addr %s233, 256
        %s235 = scalar_lea.vmem [#allocation8], %s234
        %s236 = smul.u32 8, %s26
        %s238 = smul.u32 %s26, 8
        %s239 = smul.u32 %s238, 9
        %s240 = smul.addr %s239, 4
        %s241 = scalar_lea.vmem [#allocation2], %s240
        %v242 = vld [vmem:[%s241] sm:$0xf]
        %v243 = vld [vmem:[%s241 + $0x4] sm:$0xf]
        %v244 = vld [vmem:[%s241 + $0x8] sm:$0xf]
        %v245 = vld [vmem:[%s241 + $0xc] sm:$0xf]
        %v246 = vld [vmem:[%s241 + $0x10] sm:$0xf]
        %v247 = vld [vmem:[%s241 + $0x14] sm:$0xf]
        %v248 = vld [vmem:[%s241 + $0x18] sm:$0xf]
        %v249 = vld [vmem:[%s241 + $0x1c] sm:$0xf]
        %v250 = vld [vmem:[%s241 + $0x24] sm:$0xf]
        %v251 = vld [vmem:[%s241 + $0x28] sm:$0xf]
        %v252 = vld [vmem:[%s241 + $0x2c] sm:$0xf]
        %v253 = vld [vmem:[%s241 + $0x30] sm:$0xf]
        %v254 = vld [vmem:[%s241 + $0x34] sm:$0xf]
        %v255 = vld [vmem:[%s241 + $0x38] sm:$0xf]
        %v256 = vld [vmem:[%s241 + $0x3c] sm:$0xf]
        %v257 = vld [vmem:[%s241 + $0x40] sm:$0xf]
        %v258 = vld [vmem:[%s241 + $0x48] sm:$0xf]
        %v259 = vld [vmem:[%s241 + $0x4c] sm:$0xf]
        %v260 = vld [vmem:[%s241 + $0x50] sm:$0xf]
        %v261 = vld [vmem:[%s241 + $0x54] sm:$0xf]
        %v262 = vld [vmem:[%s241 + $0x58] sm:$0xf]
        %v263 = vld [vmem:[%s241 + $0x5c] sm:$0xf]
        %v264 = vld [vmem:[%s241 + $0x60] sm:$0xf]
        %v265 = vld [vmem:[%s241 + $0x64] sm:$0xf]
        %v266 = vld [vmem:[%s241 + $0x6c] sm:$0xf]
        %v267 = vld [vmem:[%s241 + $0x70] sm:$0xf]
        %v268 = vld [vmem:[%s241 + $0x74] sm:$0xf]
        %v269 = vld [vmem:[%s241 + $0x78] sm:$0xf]
        %v270 = vld [vmem:[%s241 + $0x7c] sm:$0xf]
        %v271 = vld [vmem:[%s241 + $0x80] sm:$0xf]
        %v272 = vld [vmem:[%s241 + $0x84] sm:$0xf]
        %v273 = vld [vmem:[%s241 + $0x88] sm:$0xf]
        %v274 = vld [vmem:[%s241 + $0x90] sm:$0xf]
        %v275 = vld [vmem:[%s241 + $0x94] sm:$0xf]
        %v276 = vld [vmem:[%s241 + $0x98] sm:$0xf]
        %v277 = vld [vmem:[%s241 + $0x9c] sm:$0xf]
        %v278 = vld [vmem:[%s241 + $0xa0] sm:$0xf]
        %v279 = vld [vmem:[%s241 + $0xa4] sm:$0xf]
        %v280 = vld [vmem:[%s241 + $0xa8] sm:$0xf]
        %v281 = vld [vmem:[%s241 + $0xac] sm:$0xf]
        %v282 = vld [vmem:[%s241 + $0xb4] sm:$0xf]
        %v283 = vld [vmem:[%s241 + $0xb8] sm:$0xf]
        %v284 = vld [vmem:[%s241 + $0xbc] sm:$0xf]
        %v285 = vld [vmem:[%s241 + $0xc0] sm:$0xf]
        %v286 = vld [vmem:[%s241 + $0xc4] sm:$0xf]
        %v287 = vld [vmem:[%s241 + $0xc8] sm:$0xf]
        %v288 = vld [vmem:[%s241 + $0xcc] sm:$0xf]
        %v289 = vld [vmem:[%s241 + $0xd0] sm:$0xf]
        %v290 = vld [vmem:[%s241 + $0xd8] sm:$0xf]
        %v291 = vld [vmem:[%s241 + $0xdc] sm:$0xf]
        %v292 = vld [vmem:[%s241 + $0xe0] sm:$0xf]
        %v293 = vld [vmem:[%s241 + $0xe4] sm:$0xf]
        %v294 = vld [vmem:[%s241 + $0xe8] sm:$0xf]
        %v295 = vld [vmem:[%s241 + $0xec] sm:$0xf]
        %v296 = vld [vmem:[%s241 + $0xf0] sm:$0xf]
        %v297 = vld [vmem:[%s241 + $0xf4] sm:$0xf]
        %v298 = vld [vmem:[%s241 + $0xfc] sm:$0xf]
        %v299 = vld [vmem:[%s241 + $0x100] sm:$0xf]
        %v300 = vld [vmem:[%s241 + $0x104] sm:$0xf]
        %v301 = vld [vmem:[%s241 + $0x108] sm:$0xf]
        %v302 = vld [vmem:[%s241 + $0x10c] sm:$0xf]
        %v303 = vld [vmem:[%s241 + $0x110] sm:$0xf]
        %v304 = vld [vmem:[%s241 + $0x114] sm:$0xf]
        %v305 = vld [vmem:[%s241 + $0x118] sm:$0xf]
        %v306 = vld [vmem:[#allocation5] sm:$0xf]
        %v307 = vld [vmem:[#allocation5 + $0x4] sm:$0xf]
        %v308 = vld [vmem:[#allocation5 + $0x8] sm:$0xf]
        %v309 = vld [vmem:[#allocation5 + $0xc] sm:$0xf]
        %v310 = vld [vmem:[#allocation5 + $0x10] sm:$0xf]
        %v311 = vld [vmem:[#allocation5 + $0x14] sm:$0xf]
        %v312 = vld [vmem:[#allocation5 + $0x18] sm:$0xf]
        %v313 = vld [vmem:[#allocation5 + $0x1c] sm:$0xf]
        %v314 = vld [vmem:[#allocation5 + $0x20] sm:$0xf]
        %v315 = vld [vmem:[#allocation5 + $0x24] sm:$0xf]
        %v316 = vld [vmem:[#allocation5 + $0x28] sm:$0xf]
        %v317 = vld [vmem:[#allocation5 + $0x2c] sm:$0xf]
        %v318 = vld [vmem:[#allocation5 + $0x30] sm:$0xf]
        %v319 = vld [vmem:[#allocation5 + $0x34] sm:$0xf]
        %v320 = vld [vmem:[#allocation5 + $0x38] sm:$0xf]
        %v321 = vld [vmem:[#allocation5 + $0x3c] sm:$0xf]
        %v322 = vld [vmem:[%s241 + $0x20] sm:$0x1]
        %v323 = vld [vmem:[%s241 + $0x44] sm:$0x1]
        %v324 = vld [vmem:[%s241 + $0x68] sm:$0x1]
        %v325 = vld [vmem:[%s241 + $0x8c] sm:$0x1]
        %v326 = vld [vmem:[%s241 + $0xb0] sm:$0x1]
        %v327 = vld [vmem:[%s241 + $0xd4] sm:$0x1]
        %v328 = vld [vmem:[%s241 + $0xf8] sm:$0x1]
        %v329 = vld [vmem:[%s241 + $0x11c] sm:$0x1]
        %vm330 = vsmask.f32 3328
        %vm331 = vsmask.f32 7440
        %vm332 = vmor %vm330, %vm331
        %v334 = vshrl.u32 %v242, 16
        %v336 = vrot.slane %v334, 4
        %v337 = vshll.u32 %v242, 16
        %v339 = vrot.slane %v337, 5
        %v340 = vor.u32 %v336, %v339
        %v341 = vrot.slane %v340, 4
        %v343 = vshll.u32 %v243, 16
        %v345 = vrot.slane %v343, 5
        %v346 = vsel %vm332, %v341, %v345
        %v347 = vshrl.u32 %v243, 16
        %v349 = vrot.slane %v347, 4
        %v350 = vor.u32 %v349, %v345
        %v351 = vrot.slane %v350, 4
        %v353 = vshll.u32 %v244, 16
        %v355 = vrot.slane %v353, 5
        %v356 = vsel %vm332, %v351, %v355
        %v357 = vshrl.u32 %v244, 16
        %v359 = vrot.slane %v357, 4
        %v360 = vor.u32 %v359, %v355
        %v361 = vrot.slane %v360, 4
        %v363 = vshll.u32 %v245, 16
        %v365 = vrot.slane %v363, 5
        %v366 = vsel %vm332, %v361, %v365
        %v367 = vshrl.u32 %v245, 16
        %v369 = vrot.slane %v367, 4
        %v370 = vor.u32 %v369, %v365
        %v371 = vrot.slane %v370, 4
        %v373 = vshll.u32 %v246, 16
        %v375 = vrot.slane %v373, 5
        %v376 = vsel %vm332, %v371, %v375
        %v377 = vshrl.u32 %v246, 16
        %v379 = vrot.slane %v377, 4
        %v380 = vor.u32 %v379, %v375
        %v381 = vrot.slane %v380, 4
        %v383 = vshll.u32 %v247, 16
        %v385 = vrot.slane %v383, 5
        %v386 = vsel %vm332, %v381, %v385
        %v387 = vshrl.u32 %v247, 16
        %v389 = vrot.slane %v387, 4
        %v390 = vor.u32 %v389, %v385
        %v391 = vrot.slane %v390, 4
        %v393 = vshll.u32 %v248, 16
        %v395 = vrot.slane %v393, 5
        %v396 = vsel %vm332, %v391, %v395
        %v397 = vshrl.u32 %v248, 16
        %v399 = vrot.slane %v397, 4
        %v400 = vor.u32 %v399, %v395
        %v401 = vrot.slane %v400, 4
        %v403 = vshll.u32 %v249, 16
        %v405 = vrot.slane %v403, 5
        %v406 = vsel %vm332, %v401, %v405
        %v407 = vshrl.u32 %v249, 16
        %v409 = vrot.slane %v407, 4
        %v410 = vor.u32 %v409, %v405
        %v411 = vrot.slane %v410, 4
        %v413 = vshll.u32 %v322, 16
        %v415 = vrot.slane %v413, 5
        %v416 = vsel %vm332, %v411, %v415
        %v418 = vshrl.u32 %v250, 16
        %v420 = vrot.slane %v418, 4
        %v421 = vshll.u32 %v250, 16
        %v423 = vrot.slane %v421, 5
        %v424 = vor.u32 %v420, %v423
        %v425 = vrot.slane %v424, 4
        %v427 = vshll.u32 %v251, 16
        %v429 = vrot.slane %v427, 5
        %v430 = vsel %vm332, %v425, %v429
        %v431 = vshrl.u32 %v251, 16
        %v433 = vrot.slane %v431, 4
        %v434 = vor.u32 %v433, %v429
        %v435 = vrot.slane %v434, 4
        %v437 = vshll.u32 %v252, 16
        %v439 = vrot.slane %v437, 5
        %v440 = vsel %vm332, %v435, %v439
        %v441 = vshrl.u32 %v252, 16
        %v443 = vrot.slane %v441, 4
        %v444 = vor.u32 %v443, %v439
        %v445 = vrot.slane %v444, 4
        %v447 = vshll.u32 %v253, 16
        %v449 = vrot.slane %v447, 5
        %v450 = vsel %vm332, %v445, %v449
        %v451 = vshrl.u32 %v253, 16
        %v453 = vrot.slane %v451, 4
        %v454 = vor.u32 %v453, %v449
        %v455 = vrot.slane %v454, 4
        %v457 = vshll.u32 %v254, 16
        %v459 = vrot.slane %v457, 5
        %v460 = vsel %vm332, %v455, %v459
        %v461 = vshrl.u32 %v254, 16
        %v463 = vrot.slane %v461, 4
        %v464 = vor.u32 %v463, %v459
        %v465 = vrot.slane %v464, 4
        %v467 = vshll.u32 %v255, 16
        %v469 = vrot.slane %v467, 5
        %v470 = vsel %vm332, %v465, %v469
        %v471 = vshrl.u32 %v255, 16
        %v473 = vrot.slane %v471, 4
        %v474 = vor.u32 %v473, %v469
        %v475 = vrot.slane %v474, 4
        %v477 = vshll.u32 %v256, 16
        %v479 = vrot.slane %v477, 5
        %v480 = vsel %vm332, %v475, %v479
        %v481 = vshrl.u32 %v256, 16
        %v483 = vrot.slane %v481, 4
        %v484 = vor.u32 %v483, %v479
        %v485 = vrot.slane %v484, 4
        %v487 = vshll.u32 %v257, 16
        %v489 = vrot.slane %v487, 5
        %v490 = vsel %vm332, %v485, %v489
        %v491 = vshrl.u32 %v257, 16
        %v493 = vrot.slane %v491, 4
        %v494 = vor.u32 %v493, %v489
        %v495 = vrot.slane %v494, 4
        %v497 = vshll.u32 %v323, 16
        %v499 = vrot.slane %v497, 5
        %v500 = vsel %vm332, %v495, %v499
        %v502 = vshrl.u32 %v258, 16
        %v504 = vrot.slane %v502, 4
        %v505 = vshll.u32 %v258, 16
        %v507 = vrot.slane %v505, 5
        %v508 = vor.u32 %v504, %v507
        %v509 = vrot.slane %v508, 4
        %v511 = vshll.u32 %v259, 16
        %v513 = vrot.slane %v511, 5
        %v514 = vsel %vm332, %v509, %v513
        %v515 = vshrl.u32 %v259, 16
        %v517 = vrot.slane %v515, 4
        %v518 = vor.u32 %v517, %v513
        %v519 = vrot.slane %v518, 4
        %v521 = vshll.u32 %v260, 16
        %v523 = vrot.slane %v521, 5
        %v524 = vsel %vm332, %v519, %v523
        %v525 = vshrl.u32 %v260, 16
        %v527 = vrot.slane %v525, 4
        %v528 = vor.u32 %v527, %v523
        %v529 = vrot.slane %v528, 4
        %v531 = vshll.u32 %v261, 16
        %v533 = vrot.slane %v531, 5
        %v534 = vsel %vm332, %v529, %v533
        %v535 = vshrl.u32 %v261, 16
        %v537 = vrot.slane %v535, 4
        %v538 = vor.u32 %v537, %v533
        %v539 = vrot.slane %v538, 4
        %v541 = vshll.u32 %v262, 16
        %v543 = vrot.slane %v541, 5
        %v544 = vsel %vm332, %v539, %v543
        %v545 = vshrl.u32 %v262, 16
        %v547 = vrot.slane %v545, 4
        %v548 = vor.u32 %v547, %v543
        %v549 = vrot.slane %v548, 4
        %v551 = vshll.u32 %v263, 16
        %v553 = vrot.slane %v551, 5
        %v554 = vsel %vm332, %v549, %v553
        %v555 = vshrl.u32 %v263, 16
        %v557 = vrot.slane %v555, 4
        %v558 = vor.u32 %v557, %v553
        %v559 = vrot.slane %v558, 4
        %v561 = vshll.u32 %v264, 16
        %v563 = vrot.slane %v561, 5
        %v564 = vsel %vm332, %v559, %v563
        %v565 = vshrl.u32 %v264, 16
        %v567 = vrot.slane %v565, 4
        %v568 = vor.u32 %v567, %v563
        %v569 = vrot.slane %v568, 4
        %v571 = vshll.u32 %v265, 16
        %v573 = vrot.slane %v571, 5
        %v574 = vsel %vm332, %v569, %v573
        %v575 = vshrl.u32 %v265, 16
        %v577 = vrot.slane %v575, 4
        %v578 = vor.u32 %v577, %v573
        %v579 = vrot.slane %v578, 4
        %v581 = vshll.u32 %v324, 16
        %v583 = vrot.slane %v581, 5
        %v584 = vsel %vm332, %v579, %v583
        %v586 = vshrl.u32 %v266, 16
        %v588 = vrot.slane %v586, 4
        %v589 = vshll.u32 %v266, 16
        %v591 = vrot.slane %v589, 5
        %v592 = vor.u32 %v588, %v591
        %v593 = vrot.slane %v592, 4
        %v595 = vshll.u32 %v267, 16
        %v597 = vrot.slane %v595, 5
        %v598 = vsel %vm332, %v593, %v597
        %v599 = vshrl.u32 %v267, 16
        %v601 = vrot.slane %v599, 4
        %v602 = vor.u32 %v601, %v597
        %v603 = vrot.slane %v602, 4
        %v605 = vshll.u32 %v268, 16
        %v607 = vrot.slane %v605, 5
        %v608 = vsel %vm332, %v603, %v607
        %v609 = vshrl.u32 %v268, 16
        %v611 = vrot.slane %v609, 4
        %v612 = vor.u32 %v611, %v607
        %v613 = vrot.slane %v612, 4
        %v615 = vshll.u32 %v269, 16
        %v617 = vrot.slane %v615, 5
        %v618 = vsel %vm332, %v613, %v617
        %v619 = vshrl.u32 %v269, 16
        %v621 = vrot.slane %v619, 4
        %v622 = vor.u32 %v621, %v617
        %v623 = vrot.slane %v622, 4
        %v625 = vshll.u32 %v270, 16
        %v627 = vrot.slane %v625, 5
        %v628 = vsel %vm332, %v623, %v627
        %v629 = vshrl.u32 %v270, 16
        %v631 = vrot.slane %v629, 4
        %v632 = vor.u32 %v631, %v627
        %v633 = vrot.slane %v632, 4
        %v635 = vshll.u32 %v271, 16
        %v637 = vrot.slane %v635, 5
        %v638 = vsel %vm332, %v633, %v637
        %v639 = vshrl.u32 %v271, 16
        %v641 = vrot.slane %v639, 4
        %v642 = vor.u32 %v641, %v637
        %v643 = vrot.slane %v642, 4
        %v645 = vshll.u32 %v272, 16
        %v647 = vrot.slane %v645, 5
        %v648 = vsel %vm332, %v643, %v647
        %v649 = vshrl.u32 %v272, 16
        %v651 = vrot.slane %v649, 4
        %v652 = vor.u32 %v651, %v647
        %v653 = vrot.slane %v652, 4
        %v655 = vshll.u32 %v273, 16
        %v657 = vrot.slane %v655, 5
        %v658 = vsel %vm332, %v653, %v657
        %v659 = vshrl.u32 %v273, 16
        %v661 = vrot.slane %v659, 4
        %v662 = vor.u32 %v661, %v657
        %v663 = vrot.slane %v662, 4
        %v665 = vshll.u32 %v325, 16
        %v667 = vrot.slane %v665, 5
        %v668 = vsel %vm332, %v663, %v667
        %v670 = vshrl.u32 %v274, 16
        %v672 = vrot.slane %v670, 4
        %v673 = vshll.u32 %v274, 16
        %v675 = vrot.slane %v673, 5
        %v676 = vor.u32 %v672, %v675
        %v677 = vrot.slane %v676, 4
        %v679 = vshll.u32 %v275, 16
        %v681 = vrot.slane %v679, 5
        %v682 = vsel %vm332, %v677, %v681
        %v683 = vshrl.u32 %v275, 16
        %v685 = vrot.slane %v683, 4
        %v686 = vor.u32 %v685, %v681
        %v687 = vrot.slane %v686, 4
        %v689 = vshll.u32 %v276, 16
        %v691 = vrot.slane %v689, 5
        %v692 = vsel %vm332, %v687, %v691
        %v693 = vshrl.u32 %v276, 16
        %v695 = vrot.slane %v693, 4
        %v696 = vor.u32 %v695, %v691
        %v697 = vrot.slane %v696, 4
        %v699 = vshll.u32 %v277, 16
        %v701 = vrot.slane %v699, 5
        %v702 = vsel %vm332, %v697, %v701
        %v703 = vshrl.u32 %v277, 16
        %v705 = vrot.slane %v703, 4
        %v706 = vor.u32 %v705, %v701
        %v707 = vrot.slane %v706, 4
        %v709 = vshll.u32 %v278, 16
        %v711 = vrot.slane %v709, 5
        %v712 = vsel %vm332, %v707, %v711
        %v713 = vshrl.u32 %v278, 16
        %v715 = vrot.slane %v713, 4
        %v716 = vor.u32 %v715, %v711
        %v717 = vrot.slane %v716, 4
        %v719 = vshll.u32 %v279, 16
        %v721 = vrot.slane %v719, 5
        %v722 = vsel %vm332, %v717, %v721
        %v723 = vshrl.u32 %v279, 16
        %v725 = vrot.slane %v723, 4
        %v726 = vor.u32 %v725, %v721
        %v727 = vrot.slane %v726, 4
        %v729 = vshll.u32 %v280, 16
        %v731 = vrot.slane %v729, 5
        %v732 = vsel %vm332, %v727, %v731
        %v733 = vshrl.u32 %v280, 16
        %v735 = vrot.slane %v733, 4
        %v736 = vor.u32 %v735, %v731
        %v737 = vrot.slane %v736, 4
        %v739 = vshll.u32 %v281, 16
        %v741 = vrot.slane %v739, 5
        %v742 = vsel %vm332, %v737, %v741
        %v743 = vshrl.u32 %v281, 16
        %v745 = vrot.slane %v743, 4
        %v746 = vor.u32 %v745, %v741
        %v747 = vrot.slane %v746, 4
        %v749 = vshll.u32 %v326, 16
        %v751 = vrot.slane %v749, 5
        %v752 = vsel %vm332, %v747, %v751
        %v754 = vshrl.u32 %v282, 16
        %v756 = vrot.slane %v754, 4
        %v757 = vshll.u32 %v282, 16
        %v759 = vrot.slane %v757, 5
        %v760 = vor.u32 %v756, %v759
        %v761 = vrot.slane %v760, 4
        %v763 = vshll.u32 %v283, 16
        %v765 = vrot.slane %v763, 5
        %v766 = vsel %vm332, %v761, %v765
        %v767 = vshrl.u32 %v283, 16
        %v769 = vrot.slane %v767, 4
        %v770 = vor.u32 %v769, %v765
        %v771 = vrot.slane %v770, 4
        %v773 = vshll.u32 %v284, 16
        %v775 = vrot.slane %v773, 5
        %v776 = vsel %vm332, %v771, %v775
        %v777 = vshrl.u32 %v284, 16
        %v779 = vrot.slane %v777, 4
        %v780 = vor.u32 %v779, %v775
        %v781 = vrot.slane %v780, 4
        %v783 = vshll.u32 %v285, 16
        %v785 = vrot.slane %v783, 5
        %v786 = vsel %vm332, %v781, %v785
        %v787 = vshrl.u32 %v285, 16
        %v789 = vrot.slane %v787, 4
        %v790 = vor.u32 %v789, %v785
        %v791 = vrot.slane %v790, 4
        %v793 = vshll.u32 %v286, 16
        %v795 = vrot.slane %v793, 5
        %v796 = vsel %vm332, %v791, %v795
        %v797 = vshrl.u32 %v286, 16
        %v799 = vrot.slane %v797, 4
        %v800 = vor.u32 %v799, %v795
        %v801 = vrot.slane %v800, 4
        %v803 = vshll.u32 %v287, 16
        %v805 = vrot.slane %v803, 5
        %v806 = vsel %vm332, %v801, %v805
        %v807 = vshrl.u32 %v287, 16
        %v809 = vrot.slane %v807, 4
        %v810 = vor.u32 %v809, %v805
        %v811 = vrot.slane %v810, 4
        %v813 = vshll.u32 %v288, 16
        %v815 = vrot.slane %v813, 5
        %v816 = vsel %vm332, %v811, %v815
        %v817 = vshrl.u32 %v288, 16
        %v819 = vrot.slane %v817, 4
        %v820 = vor.u32 %v819, %v815
        %v821 = vrot.slane %v820, 4
        %v823 = vshll.u32 %v289, 16
        %v825 = vrot.slane %v823, 5
        %v826 = vsel %vm332, %v821, %v825
        %v827 = vshrl.u32 %v289, 16
        %v829 = vrot.slane %v827, 4
        %v830 = vor.u32 %v829, %v825
        %v831 = vrot.slane %v830, 4
        %v833 = vshll.u32 %v327, 16
        %v835 = vrot.slane %v833, 5
        %v836 = vsel %vm332, %v831, %v835
        %v838 = vshrl.u32 %v290, 16
        %v840 = vrot.slane %v838, 4
        %v841 = vshll.u32 %v290, 16
        %v843 = vrot.slane %v841, 5
        %v844 = vor.u32 %v840, %v843
        %v845 = vrot.slane %v844, 4
        %v847 = vshll.u32 %v291, 16
        %v849 = vrot.slane %v847, 5
        %v850 = vsel %vm332, %v845, %v849
        %v851 = vshrl.u32 %v291, 16
        %v853 = vrot.slane %v851, 4
        %v854 = vor.u32 %v853, %v849
        %v855 = vrot.slane %v854, 4
        %v857 = vshll.u32 %v292, 16
        %v859 = vrot.slane %v857, 5
        %v860 = vsel %vm332, %v855, %v859
        %v861 = vshrl.u32 %v292, 16
        %v863 = vrot.slane %v861, 4
        %v864 = vor.u32 %v863, %v859
        %v865 = vrot.slane %v864, 4
        %v867 = vshll.u32 %v293, 16
        %v869 = vrot.slane %v867, 5
        %v870 = vsel %vm332, %v865, %v869
        %v871 = vshrl.u32 %v293, 16
        %v873 = vrot.slane %v871, 4
        %v874 = vor.u32 %v873, %v869
        %v875 = vrot.slane %v874, 4
        %v877 = vshll.u32 %v294, 16
        %v879 = vrot.slane %v877, 5
        %v880 = vsel %vm332, %v875, %v879
        %v881 = vshrl.u32 %v294, 16
        %v883 = vrot.slane %v881, 4
        %v884 = vor.u32 %v883, %v879
        %v885 = vrot.slane %v884, 4
        %v887 = vshll.u32 %v295, 16
        %v889 = vrot.slane %v887, 5
        %v890 = vsel %vm332, %v885, %v889
        %v891 = vshrl.u32 %v295, 16
        %v893 = vrot.slane %v891, 4
        %v894 = vor.u32 %v893, %v889
        %v895 = vrot.slane %v894, 4
        %v897 = vshll.u32 %v296, 16
        %v899 = vrot.slane %v897, 5
        %v900 = vsel %vm332, %v895, %v899
        %v901 = vshrl.u32 %v296, 16
        %v903 = vrot.slane %v901, 4
        %v904 = vor.u32 %v903, %v899
        %v905 = vrot.slane %v904, 4
        %v907 = vshll.u32 %v297, 16
        %v909 = vrot.slane %v907, 5
        %v910 = vsel %vm332, %v905, %v909
        %v911 = vshrl.u32 %v297, 16
        %v913 = vrot.slane %v911, 4
        %v914 = vor.u32 %v913, %v909
        %v915 = vrot.slane %v914, 4
        %v917 = vshll.u32 %v328, 16
        %v919 = vrot.slane %v917, 5
        %v920 = vsel %vm332, %v915, %v919
        %v922 = vshrl.u32 %v298, 16
        %v924 = vrot.slane %v922, 4
        %v925 = vshll.u32 %v298, 16
        %v927 = vrot.slane %v925, 5
        %v928 = vor.u32 %v924, %v927
        %v929 = vrot.slane %v928, 4
        %v931 = vshll.u32 %v299, 16
        %v933 = vrot.slane %v931, 5
        %v934 = vsel %vm332, %v929, %v933
        %v935 = vshrl.u32 %v299, 16
        %v937 = vrot.slane %v935, 4
        %v938 = vor.u32 %v937, %v933
        %v939 = vrot.slane %v938, 4
        %v941 = vshll.u32 %v300, 16
        %v943 = vrot.slane %v941, 5
        %v944 = vsel %vm332, %v939, %v943
        %v945 = vshrl.u32 %v300, 16
        %v947 = vrot.slane %v945, 4
        %v948 = vor.u32 %v947, %v943
        %v949 = vrot.slane %v948, 4
        %v951 = vshll.u32 %v301, 16
        %v953 = vrot.slane %v951, 5
        %v954 = vsel %vm332, %v949, %v953
        %v955 = vshrl.u32 %v301, 16
        %v957 = vrot.slane %v955, 4
        %v958 = vor.u32 %v957, %v953
        %v959 = vrot.slane %v958, 4
        %v961 = vshll.u32 %v302, 16
        %v963 = vrot.slane %v961, 5
        %v964 = vsel %vm332, %v959, %v963
        %v965 = vshrl.u32 %v302, 16
        %v967 = vrot.slane %v965, 4
        %v968 = vor.u32 %v967, %v963
        %v969 = vrot.slane %v968, 4
        %v971 = vshll.u32 %v303, 16
        %v973 = vrot.slane %v971, 5
        %v974 = vsel %vm332, %v969, %v973
        %v975 = vshrl.u32 %v303, 16
        %v977 = vrot.slane %v975, 4
        %v978 = vor.u32 %v977, %v973
        %v979 = vrot.slane %v978, 4
        %v981 = vshll.u32 %v304, 16
        %v983 = vrot.slane %v981, 5
        %v984 = vsel %vm332, %v979, %v983
        %v985 = vshrl.u32 %v304, 16
        %v987 = vrot.slane %v985, 4
        %v988 = vor.u32 %v987, %v983
        %v989 = vrot.slane %v988, 4
        %v991 = vshll.u32 %v305, 16
        %v993 = vrot.slane %v991, 5
        %v994 = vsel %vm332, %v989, %v993
        %v995 = vshrl.u32 %v305, 16
        %v997 = vrot.slane %v995, 4
        %v998 = vor.u32 %v997, %v993
        %v999 = vrot.slane %v998, 4
        %v1001 = vshll.u32 %v329, 16
        %v1003 = vrot.slane %v1001, 5
        %v1004 = vsel %vm332, %v999, %v1003
        %v1005 = vld [vmem:[#allocation5 + $0x40] sm:$0xf]
        %v1006 = vld [vmem:[#allocation5 + $0x44] sm:$0xf]
        %v1007 = vld [vmem:[#allocation5 + $0x48] sm:$0xf]
        %v1008 = vld [vmem:[#allocation5 + $0x4c] sm:$0xf]
        %v1009 = vld [vmem:[#allocation5 + $0x50] sm:$0xf]
        %v1010 = vld [vmem:[#allocation5 + $0x54] sm:$0xf]
        %v1011 = vld [vmem:[#allocation5 + $0x58] sm:$0xf]
        %v1012 = vld [vmem:[#allocation5 + $0x5c] sm:$0xf]
        %v1013 = vld [vmem:[#allocation5 + $0x60] sm:$0xf]
        %v1014 = vld [vmem:[#allocation5 + $0x64] sm:$0xf]
        %v1015 = vld [vmem:[#allocation5 + $0x68] sm:$0xf]
        %v1016 = vld [vmem:[#allocation5 + $0x6c] sm:$0xf]
        %v1017 = vld [vmem:[#allocation5 + $0x70] sm:$0xf]
        %v1018 = vld [vmem:[#allocation5 + $0x74] sm:$0xf]
        %v1019 = vld [vmem:[#allocation5 + $0x78] sm:$0xf]
        %v1020 = vld [vmem:[#allocation5 + $0x7c] sm:$0xf]
        %v1021 = vunpack.c.l.b16 %v346
        %v1022 = vunpack.c.l.b16 %v356
        %v1023 = vunpack.c.l.b16 %v366
        %v1024 = vunpack.c.l.b16 %v376
        %v1025 = vunpack.c.l.b16 %v386
        %v1026 = vunpack.c.l.b16 %v396
        %v1027 = vunpack.c.l.b16 %v406
        %v1028 = vunpack.c.l.b16 %v416
        %v1029 = vunpack.c.l.b16 %v430
        %v1030 = vunpack.c.l.b16 %v440
        %v1031 = vunpack.c.l.b16 %v450
        %v1032 = vunpack.c.l.b16 %v460
        %v1033 = vunpack.c.l.b16 %v470
        %v1034 = vunpack.c.l.b16 %v480
        %v1035 = vunpack.c.l.b16 %v490
        %v1036 = vunpack.c.l.b16 %v500
        %v1037 = vunpack.c.l.b16 %v514
        %v1038 = vunpack.c.l.b16 %v524
        %v1039 = vunpack.c.l.b16 %v534
        %v1040 = vunpack.c.l.b16 %v544
        %v1041 = vunpack.c.l.b16 %v554
        %v1042 = vunpack.c.l.b16 %v564
        %v1043 = vunpack.c.l.b16 %v574
        %v1044 = vunpack.c.l.b16 %v584
        %v1045 = vunpack.c.l.b16 %v598
        %v1046 = vunpack.c.l.b16 %v608
        %v1047 = vunpack.c.l.b16 %v618
        %v1048 = vunpack.c.l.b16 %v628
        %v1049 = vunpack.c.l.b16 %v638
        %v1050 = vunpack.c.l.b16 %v648
        %v1051 = vunpack.c.l.b16 %v658
        %v1052 = vunpack.c.l.b16 %v668
        %v1053 = vunpack.c.l.b16 %v682
        %v1054 = vunpack.c.l.b16 %v692
        %v1055 = vunpack.c.l.b16 %v702
        %v1056 = vunpack.c.l.b16 %v712
        %v1057 = vunpack.c.l.b16 %v722
        %v1058 = vunpack.c.l.b16 %v732
        %v1059 = vunpack.c.l.b16 %v742
        %v1060 = vunpack.c.l.b16 %v752
        %v1061 = vunpack.c.l.b16 %v766
        %v1062 = vunpack.c.l.b16 %v776
        %v1063 = vunpack.c.l.b16 %v786
        %v1064 = vunpack.c.l.b16 %v796
        %v1065 = vunpack.c.l.b16 %v806
        %v1066 = vunpack.c.l.b16 %v816
        %v1067 = vunpack.c.l.b16 %v826
        %v1068 = vunpack.c.l.b16 %v836
        %v1069 = vunpack.c.l.b16 %v850
        %v1070 = vunpack.c.l.b16 %v860
        %v1071 = vunpack.c.l.b16 %v870
        %v1072 = vunpack.c.l.b16 %v880
        %v1073 = vunpack.c.l.b16 %v890
        %v1074 = vunpack.c.l.b16 %v900
        %v1075 = vunpack.c.l.b16 %v910
        %v1076 = vunpack.c.l.b16 %v920
        %v1077 = vunpack.c.l.b16 %v934
        %v1078 = vunpack.c.l.b16 %v944
        %v1079 = vunpack.c.l.b16 %v954
        %v1080 = vunpack.c.l.b16 %v964
        %v1081 = vunpack.c.l.b16 %v974
        %v1082 = vunpack.c.l.b16 %v984
        %v1083 = vunpack.c.l.b16 %v994
        %v1084 = vunpack.c.l.b16 %v1004
        %v1085 = vpack.c.b16 %v1022, %v1021
        %v1086 = vpack.c.b16 %v1024, %v1023
        %v1087 = vpack.c.b16 %v1026, %v1025
        %v1088 = vpack.c.b16 %v1028, %v1027
        %v1089 = vpack.c.b16 %v1030, %v1029
        %v1090 = vpack.c.b16 %v1032, %v1031
        %v1091 = vpack.c.b16 %v1034, %v1033
        %v1092 = vpack.c.b16 %v1036, %v1035
        %v1093 = vpack.c.b16 %v1038, %v1037
        %v1094 = vpack.c.b16 %v1040, %v1039
        %v1095 = vpack.c.b16 %v1042, %v1041
        %v1096 = vpack.c.b16 %v1044, %v1043
        %v1097 = vpack.c.b16 %v1046, %v1045
        %v1098 = vpack.c.b16 %v1048, %v1047
        %v1099 = vpack.c.b16 %v1050, %v1049
        %v1100 = vpack.c.b16 %v1052, %v1051
        %v1101 = vpack.c.b16 %v1054, %v1053
        %v1102 = vpack.c.b16 %v1056, %v1055
        %v1103 = vpack.c.b16 %v1058, %v1057
        %v1104 = vpack.c.b16 %v1060, %v1059
        %v1105 = vpack.c.b16 %v1062, %v1061
        %v1106 = vpack.c.b16 %v1064, %v1063
        %v1107 = vpack.c.b16 %v1066, %v1065
        %v1108 = vpack.c.b16 %v1068, %v1067
        %v1109 = vpack.c.b16 %v1070, %v1069
        %v1110 = vpack.c.b16 %v1072, %v1071
        %v1111 = vpack.c.b16 %v1074, %v1073
        %v1112 = vpack.c.b16 %v1076, %v1075
        %v1113 = vpack.c.b16 %v1078, %v1077
        %v1114 = vpack.c.b16 %v1080, %v1079
        %v1115 = vpack.c.b16 %v1082, %v1081
        %v1116 = vpack.c.b16 %v1084, %v1083
        %v1165 = vunpack.c.l.b16 %v1005
        %v1166 = vunpack.c.l.b16 %v1006
        %v1167 = vunpack.c.l.b16 %v1007
        %v1168 = vunpack.c.l.b16 %v1008
        %v1169 = vunpack.c.l.b16 %v1009
        %v1170 = vunpack.c.l.b16 %v1010
        %v1171 = vunpack.c.l.b16 %v1011
        %v1172 = vunpack.c.l.b16 %v1012
        %v1173 = vunpack.c.l.b16 %v1013
        %v1174 = vunpack.c.l.b16 %v1014
        %v1175 = vunpack.c.l.b16 %v1015
        %v1176 = vunpack.c.l.b16 %v1016
        %v1177 = vunpack.c.l.b16 %v1017
        %v1178 = vunpack.c.l.b16 %v1018
        %v1179 = vunpack.c.l.b16 %v1019
        %v1180 = vunpack.c.l.b16 %v1020
        %v1181 = vpack.c.b16 %v1166, %v1165
        %v1182 = vpack.c.b16 %v1168, %v1167
        %v1183 = vpack.c.b16 %v1170, %v1169
        %v1184 = vpack.c.b16 %v1172, %v1171
        %v1185 = vpack.c.b16 %v1174, %v1173
        %v1186 = vpack.c.b16 %v1176, %v1175
        %v1187 = vpack.c.b16 %v1178, %v1177
        %v1188 = vpack.c.b16 %v1180, %v1179
        %1197 = vmatprep.subr.bf16.mxu0 0
        %1198 = vmatpush1.bf16.msra.mxu0 %v1181
        %1199 = vmatprep.subr.bf16.mxu0 0
        %1200 = vmatpush1.bf16.msra.mxu0 %v1182
        %1201 = vmatprep.subr.bf16.mxu0 0
        %1202 = vmatpush1.bf16.msra.mxu0 %v1183
        %1203 = vmatprep.subr.bf16.mxu0 0
        %1204 = vmatpush1.bf16.msra.mxu0 %v1184
        %1205 = vmatprep.subr.bf16.mxu0 0
        %1206 = vmatpush1.bf16.msra.mxu0 %v1185
        %1207 = vmatprep.subr.bf16.mxu0 0
        %1208 = vmatpush1.bf16.msra.mxu0 %v1186
        %1209 = vmatprep.subr.bf16.mxu0 0
        %1210 = vmatpush1.bf16.msra.mxu0 %v1187
        %1211 = vmatprep.subr.bf16.mxu0 0
        %1212 = vmatpush1.bf16.msra.mxu0 %v1188
        %1213 = vmatprep.subr.bf16.mxu0 0
        %1214 = vmatpush1.bf16.msra.mxu0 0
        %1215 = vmatprep.subr.bf16.mxu0 0
        %1216 = vmatpush1.bf16.msra.mxu0 0
        %1217 = vmatprep.subr.bf16.mxu0 0
        %1218 = vmatpush1.bf16.msra.mxu0 0
        %1219 = vmatprep.subr.bf16.mxu0 0
        %1220 = vmatpush1.bf16.msra.mxu0 0
        %1221 = vmatprep.subr.bf16.mxu0 0
        %1222 = vmatpush1.bf16.msra.mxu0 0
        %1223 = vmatprep.subr.bf16.mxu0 0
        %1224 = vmatpush1.bf16.msra.mxu0 0
        %1225 = vmatprep.subr.bf16.mxu0 0
        %1226 = vmatpush1.bf16.msra.mxu0 0
        %1227 = vmatprep.subr.bf16.mxu0 0
        %1228 = vmatpush1.bf16.msra.mxu0 0
        %1229 = vmatprep.mubr.bf16.mxu0 0
        %1230 = vmatmul.mubr.bf16.gmra.mrb[0].mxu0 %v1085
        %v1231 = vpop.f32.mrb[0].mxu0
        %v1232 = vadd.f32 0.0, %v1231
        %v1233 = vpop.f32.mrb[0].mxu0
        %v1234 = vpop.f32.mrb[0].mxu0
        %v1235 = vadd.f32 0.0, %v1234
        %v1236 = vpop.f32.mrb[0].mxu0
        %1237 = vmatprep.mubr.bf16.mxu0 0
        %1238 = vmatmul.mubr.bf16.gmra.mrb[0].mxu0 %v1086
        %v1239 = vpop.f32.mrb[0].mxu0
        %v1240 = vadd.f32 0.0, %v1239
        %v1241 = vpop.f32.mrb[0].mxu0
        %v1242 = vpop.f32.mrb[0].mxu0
        %v1243 = vadd.f32 0.0, %v1242
        %v1244 = vpop.f32.mrb[0].mxu0
        %1245 = vmatprep.mubr.bf16.mxu0 0
        %1246 = vmatmul.mubr.bf16.gmra.mrb[0].mxu0 %v1087
        %v1247 = vpop.f32.mrb[0].mxu0
        %v1248 = vadd.f32 0.0, %v1247
        %v1249 = vpop.f32.mrb[0].mxu0
        %v1250 = vpop.f32.mrb[0].mxu0
        %v1251 = vadd.f32 0.0, %v1250
        %v1252 = vpop.f32.mrb[0].mxu0
        %1253 = vmatprep.mubr.bf16.mxu0 0
        %1254 = vmatmul.mubr.bf16.gmra.mrb[0].mxu0 %v1088
        %v1255 = vpop.f32.mrb[0].mxu0
        %v1256 = vadd.f32 0.0, %v1255
        %v1257 = vpop.f32.mrb[0].mxu0
        %v1258 = vpop.f32.mrb[0].mxu0
        %v1259 = vadd.f32 0.0, %v1258
        %v1260 = vpop.f32.mrb[0].mxu0
        %1261 = vmatprep.mubr.bf16.mxu0 0
        %1262 = vmatmul.mubr.bf16.gmra.mrb[0].mxu0 %v1089
        %v1263 = vpop.f32.mrb[0].mxu0
        %v1264 = vadd.f32 0.0, %v1263
        %v1265 = vpop.f32.mrb[0].mxu0
        %v1266 = vpop.f32.mrb[0].mxu0
        %v1267 = vadd.f32 0.0, %v1266
        %v1268 = vpop.f32.mrb[0].mxu0
        %1269 = vmatprep.mubr.bf16.mxu0 0
        %1270 = vmatmul.mubr.bf16.gmra.mrb[0].mxu0 %v1090
        %v1271 = vpop.f32.mrb[0].mxu0
        %v1272 = vadd.f32 0.0, %v1271
        %v1273 = vpop.f32.mrb[0].mxu0
        %v1274 = vpop.f32.mrb[0].mxu0
        %v1275 = vadd.f32 0.0, %v1274
        %v1276 = vpop.f32.mrb[0].mxu0
        %1277 = vmatprep.mubr.bf16.mxu0 0
        %1278 = vmatmul.mubr.bf16.gmra.mrb[0].mxu0 %v1091
        %v1279 = vpop.f32.mrb[0].mxu0
        %v1280 = vadd.f32 0.0, %v1279
        %v1281 = vpop.f32.mrb[0].mxu0
        %v1282 = vpop.f32.mrb[0].mxu0
        %v1283 = vadd.f32 0.0, %v1282
        %v1284 = vpop.f32.mrb[0].mxu0
        %1285 = vmatprep.mubr.bf16.mxu0 0
        %1286 = vmatmul.mubr.bf16.gmra.mrb[0].mxu0 %v1092
        %v1287 = vpop.f32.mrb[0].mxu0
        %v1288 = vadd.f32 0.0, %v1287
        %v1289 = vpop.f32.mrb[0].mxu0
        %v1290 = vpop.f32.mrb[0].mxu0
        %v1291 = vadd.f32 0.0, %v1290
        %v1292 = vpop.f32.mrb[0].mxu0
        %1293 = vmatprep.mubr.bf16.mxu0 0
        %1294 = vmatmul.mubr.bf16.gmra.mrb[0].mxu0 %v1093
        %v1295 = vpop.f32.mrb[0].mxu0
        %v1296 = vadd.f32 0.0, %v1295
        %v1297 = vpop.f32.mrb[0].mxu0
        %v1298 = vpop.f32.mrb[0].mxu0
        %v1299 = vadd.f32 0.0, %v1298
        %v1300 = vpop.f32.mrb[0].mxu0
        %1301 = vmatprep.mubr.bf16.mxu0 0
        %1302 = vmatmul.mubr.bf16.gmra.mrb[0].mxu0 %v1094
        %v1303 = vpop.f32.mrb[0].mxu0
        %v1304 = vadd.f32 0.0, %v1303
        %v1305 = vpop.f32.mrb[0].mxu0
        %v1306 = vpop.f32.mrb[0].mxu0
        %v1307 = vadd.f32 0.0, %v1306
        %v1308 = vpop.f32.mrb[0].mxu0
        %1309 = vmatprep.mubr.bf16.mxu0 0
        %1310 = vmatmul.mubr.bf16.gmra.mrb[0].mxu0 %v1095
        %v1311 = vpop.f32.mrb[0].mxu0
        %v1312 = vadd.f32 0.0, %v1311
        %v1313 = vpop.f32.mrb[0].mxu0
        %v1314 = vpop.f32.mrb[0].mxu0
        %v1315 = vadd.f32 0.0, %v1314
        %v1316 = vpop.f32.mrb[0].mxu0
        %1317 = vmatprep.mubr.bf16.mxu0 0
        %1318 = vmatmul.mubr.bf16.gmra.mrb[0].mxu0 %v1096
        %v1319 = vpop.f32.mrb[0].mxu0
        %v1320 = vadd.f32 0.0, %v1319
        %v1321 = vpop.f32.mrb[0].mxu0
        %v1322 = vpop.f32.mrb[0].mxu0
        %v1323 = vadd.f32 0.0, %v1322
        %v1324 = vpop.f32.mrb[0].mxu0
        %1325 = vmatprep.mubr.bf16.mxu0 0
        %1326 = vmatmul.mubr.bf16.gmra.mrb[0].mxu0 %v1097
        %v1327 = vpop.f32.mrb[0].mxu0
        %v1328 = vadd.f32 0.0, %v1327
        %v1329 = vpop.f32.mrb[0].mxu0
        %v1330 = vpop.f32.mrb[0].mxu0
        %v1331 = vadd.f32 0.0, %v1330
        %v1332 = vpop.f32.mrb[0].mxu0
        %1333 = vmatprep.mubr.bf16.mxu0 0
        %1334 = vmatmul.mubr.bf16.gmra.mrb[0].mxu0 %v1098
        %v1335 = vpop.f32.mrb[0].mxu0
        %v1336 = vadd.f32 0.0, %v1335
        %v1337 = vpop.f32.mrb[0].mxu0
        %v1338 = vpop.f32.mrb[0].mxu0
        %v1339 = vadd.f32 0.0, %v1338
        %v1340 = vpop.f32.mrb[0].mxu0
        %1341 = vmatprep.mubr.bf16.mxu0 0
        %1342 = vmatmul.mubr.bf16.gmra.mrb[0].mxu0 %v1099
        %v1343 = vpop.f32.mrb[0].mxu0
        %v1344 = vadd.f32 0.0, %v1343
        %v1345 = vpop.f32.mrb[0].mxu0
        %v1346 = vpop.f32.mrb[0].mxu0
        %v1347 = vadd.f32 0.0, %v1346
        %v1348 = vpop.f32.mrb[0].mxu0
        %1349 = vmatprep.mubr.bf16.mxu0 0
        %1350 = vmatmul.mubr.bf16.gmra.mrb[0].mxu0 %v1100
        %v1351 = vpop.f32.mrb[0].mxu0
        %v1352 = vadd.f32 0.0, %v1351
        %v1353 = vpop.f32.mrb[0].mxu0
        %v1354 = vpop.f32.mrb[0].mxu0
        %v1355 = vadd.f32 0.0, %v1354
        %v1356 = vpop.f32.mrb[0].mxu0
        %1357 = vmatprep.mubr.bf16.mxu0 0
        %1358 = vmatmul.mubr.bf16.gmra.mrb[0].mxu0 %v1101
        %v1359 = vpop.f32.mrb[0].mxu0
        %v1360 = vadd.f32 0.0, %v1359
        %v1361 = vpop.f32.mrb[0].mxu0
        %v1362 = vpop.f32.mrb[0].mxu0
        %v1363 = vadd.f32 0.0, %v1362
        %v1364 = vpop.f32.mrb[0].mxu0
        %1365 = vmatprep.mubr.bf16.mxu0 0
        %1366 = vmatmul.mubr.bf16.gmra.mrb[0].mxu0 %v1102
        %v1367 = vpop.f32.mrb[0].mxu0
        %v1368 = vadd.f32 0.0, %v1367
        %v1369 = vpop.f32.mrb[0].mxu0
        %v1370 = vpop.f32.mrb[0].mxu0
        %v1371 = vadd.f32 0.0, %v1370
        %v1372 = vpop.f32.mrb[0].mxu0
        %1373 = vmatprep.mubr.bf16.mxu0 0
        %1374 = vmatmul.mubr.bf16.gmra.mrb[0].mxu0 %v1103
        %v1375 = vpop.f32.mrb[0].mxu0
        %v1376 = vadd.f32 0.0, %v1375
        %v1377 = vpop.f32.mrb[0].mxu0
        %v1378 = vpop.f32.mrb[0].mxu0
        %v1379 = vadd.f32 0.0, %v1378
        %v1380 = vpop.f32.mrb[0].mxu0
        %1381 = vmatprep.mubr.bf16.mxu0 0
        %1382 = vmatmul.mubr.bf16.gmra.mrb[0].mxu0 %v1104
        %v1383 = vpop.f32.mrb[0].mxu0
        %v1384 = vadd.f32 0.0, %v1383
        %v1385 = vpop.f32.mrb[0].mxu0
        %v1386 = vpop.f32.mrb[0].mxu0
        %v1387 = vadd.f32 0.0, %v1386
        %v1388 = vpop.f32.mrb[0].mxu0
        %1389 = vmatprep.mubr.bf16.mxu0 0
        %1390 = vmatmul.mubr.bf16.gmra.mrb[0].mxu0 %v1105
        %v1391 = vpop.f32.mrb[0].mxu0
        %v1392 = vadd.f32 0.0, %v1391
        %v1393 = vpop.f32.mrb[0].mxu0
        %v1394 = vpop.f32.mrb[0].mxu0
        %v1395 = vadd.f32 0.0, %v1394
        %v1396 = vpop.f32.mrb[0].mxu0
        %1397 = vmatprep.mubr.bf16.mxu0 0
        %1398 = vmatmul.mubr.bf16.gmra.mrb[0].mxu0 %v1106
        %v1399 = vpop.f32.mrb[0].mxu0
        %v1400 = vadd.f32 0.0, %v1399
        %v1401 = vpop.f32.mrb[0].mxu0
        %v1402 = vpop.f32.mrb[0].mxu0
        %v1403 = vadd.f32 0.0, %v1402
        %v1404 = vpop.f32.mrb[0].mxu0
        %1405 = vmatprep.mubr.bf16.mxu0 0
        %1406 = vmatmul.mubr.bf16.gmra.mrb[0].mxu0 %v1107
        %v1407 = vpop.f32.mrb[0].mxu0
        %v1408 = vadd.f32 0.0, %v1407
        %v1409 = vpop.f32.mrb[0].mxu0
        %v1410 = vpop.f32.mrb[0].mxu0
        %v1411 = vadd.f32 0.0, %v1410
        %v1412 = vpop.f32.mrb[0].mxu0
        %1413 = vmatprep.mubr.bf16.mxu0 0
        %1414 = vmatmul.mubr.bf16.gmra.mrb[0].mxu0 %v1108
        %v1415 = vpop.f32.mrb[0].mxu0
        %v1416 = vadd.f32 0.0, %v1415
        %v1417 = vpop.f32.mrb[0].mxu0
        %v1418 = vpop.f32.mrb[0].mxu0
        %v1419 = vadd.f32 0.0, %v1418
        %v1420 = vpop.f32.mrb[0].mxu0
        %1421 = vmatprep.mubr.bf16.mxu0 0
        %1422 = vmatmul.mubr.bf16.gmra.mrb[0].mxu0 %v1109
        %v1423 = vpop.f32.mrb[0].mxu0
        %v1424 = vadd.f32 0.0, %v1423
        %v1425 = vpop.f32.mrb[0].mxu0
        %v1426 = vpop.f32.mrb[0].mxu0
        %v1427 = vadd.f32 0.0, %v1426
        %v1428 = vpop.f32.mrb[0].mxu0
        %1429 = vmatprep.mubr.bf16.mxu0 0
        %1430 = vmatmul.mubr.bf16.gmra.mrb[0].mxu0 %v1110
        %v1431 = vpop.f32.mrb[0].mxu0
        %v1432 = vadd.f32 0.0, %v1431
        %v1433 = vpop.f32.mrb[0].mxu0
        %v1434 = vpop.f32.mrb[0].mxu0
        %v1435 = vadd.f32 0.0, %v1434
        %v1436 = vpop.f32.mrb[0].mxu0
        %1437 = vmatprep.mubr.bf16.mxu0 0
        %1438 = vmatmul.mubr.bf16.gmra.mrb[0].mxu0 %v1111
        %v1439 = vpop.f32.mrb[0].mxu0
        %v1440 = vadd.f32 0.0, %v1439
        %v1441 = vpop.f32.mrb[0].mxu0
        %v1442 = vpop.f32.mrb[0].mxu0
        %v1443 = vadd.f32 0.0, %v1442
        %v1444 = vpop.f32.mrb[0].mxu0
        %1445 = vmatprep.mubr.bf16.mxu0 0
        %1446 = vmatmul.mubr.bf16.gmra.mrb[0].mxu0 %v1112
        %v1447 = vpop.f32.mrb[0].mxu0
        %v1448 = vadd.f32 0.0, %v1447
        %v1449 = vpop.f32.mrb[0].mxu0
        %v1450 = vpop.f32.mrb[0].mxu0
        %v1451 = vadd.f32 0.0, %v1450
        %v1452 = vpop.f32.mrb[0].mxu0
        %1453 = vmatprep.mubr.bf16.mxu0 0
        %1454 = vmatmul.mubr.bf16.gmra.mrb[0].mxu0 %v1113
        %v1455 = vpop.f32.mrb[0].mxu0
        %v1456 = vadd.f32 0.0, %v1455
        %v1457 = vpop.f32.mrb[0].mxu0
        %v1458 = vpop.f32.mrb[0].mxu0
        %v1459 = vadd.f32 0.0, %v1458
        %v1460 = vpop.f32.mrb[0].mxu0
        %1461 = vmatprep.mubr.bf16.mxu0 0
        %1462 = vmatmul.mubr.bf16.gmra.mrb[0].mxu0 %v1114
        %v1463 = vpop.f32.mrb[0].mxu0
        %v1464 = vadd.f32 0.0, %v1463
        %v1465 = vpop.f32.mrb[0].mxu0
        %v1466 = vpop.f32.mrb[0].mxu0
        %v1467 = vadd.f32 0.0, %v1466
        %v1468 = vpop.f32.mrb[0].mxu0
        %1469 = vmatprep.mubr.bf16.mxu0 0
        %1470 = vmatmul.mubr.bf16.gmra.mrb[0].mxu0 %v1115
        %v1471 = vpop.f32.mrb[0].mxu0
        %v1472 = vadd.f32 0.0, %v1471
        %v1473 = vpop.f32.mrb[0].mxu0
        %v1474 = vpop.f32.mrb[0].mxu0
        %v1475 = vadd.f32 0.0, %v1474
        %v1476 = vpop.f32.mrb[0].mxu0
        %1477 = vmatprep.mubr.bf16.mxu0 0
        %1478 = vmatmul.mubr.bf16.gmra.mrb[0].mxu0 %v1116
        %v1479 = vpop.f32.mrb[0].mxu0
        %v1480 = vadd.f32 0.0, %v1479
        %v1481 = vpop.f32.mrb[0].mxu0
        %v1482 = vpop.f32.mrb[0].mxu0
        %v1483 = vadd.f32 0.0, %v1482
        %v1484 = vpop.f32.mrb[0].mxu0
        %1485 = vdwg.mxu0
        %v1550 = vunpack.c.l.b16 %v242
        %v1551 = vunpack.c.l.b16 %v243
        %v1552 = vunpack.c.l.b16 %v244
        %v1553 = vunpack.c.l.b16 %v245
        %v1554 = vunpack.c.l.b16 %v246
        %v1555 = vunpack.c.l.b16 %v247
        %v1556 = vunpack.c.l.b16 %v248
        %v1557 = vunpack.c.l.b16 %v249
        %v1558 = vunpack.c.l.b16 %v250
        %v1559 = vunpack.c.l.b16 %v251
        %v1560 = vunpack.c.l.b16 %v252
        %v1561 = vunpack.c.l.b16 %v253
        %v1562 = vunpack.c.l.b16 %v254
        %v1563 = vunpack.c.l.b16 %v255
        %v1564 = vunpack.c.l.b16 %v256
        %v1565 = vunpack.c.l.b16 %v257
        %v1566 = vunpack.c.l.b16 %v258
        %v1567 = vunpack.c.l.b16 %v259
        %v1568 = vunpack.c.l.b16 %v260
        %v1569 = vunpack.c.l.b16 %v261
        %v1570 = vunpack.c.l.b16 %v262
        %v1571 = vunpack.c.l.b16 %v263
        %v1572 = vunpack.c.l.b16 %v264
        %v1573 = vunpack.c.l.b16 %v265
        %v1574 = vunpack.c.l.b16 %v266
        %v1575 = vunpack.c.l.b16 %v267
        %v1576 = vunpack.c.l.b16 %v268
        %v1577 = vunpack.c.l.b16 %v269
        %v1578 = vunpack.c.l.b16 %v270
        %v1579 = vunpack.c.l.b16 %v271
        %v1580 = vunpack.c.l.b16 %v272
        %v1581 = vunpack.c.l.b16 %v273
        %v1582 = vunpack.c.l.b16 %v274
        %v1583 = vunpack.c.l.b16 %v275
        %v1584 = vunpack.c.l.b16 %v276
        %v1585 = vunpack.c.l.b16 %v277
        %v1586 = vunpack.c.l.b16 %v278
        %v1587 = vunpack.c.l.b16 %v279
        %v1588 = vunpack.c.l.b16 %v280
        %v1589 = vunpack.c.l.b16 %v281
        %v1590 = vunpack.c.l.b16 %v282
        %v1591 = vunpack.c.l.b16 %v283
        %v1592 = vunpack.c.l.b16 %v284
        %v1593 = vunpack.c.l.b16 %v285
        %v1594 = vunpack.c.l.b16 %v286
        %v1595 = vunpack.c.l.b16 %v287
        %v1596 = vunpack.c.l.b16 %v288
        %v1597 = vunpack.c.l.b16 %v289
        %v1598 = vunpack.c.l.b16 %v290
        %v1599 = vunpack.c.l.b16 %v291
        %v1600 = vunpack.c.l.b16 %v292
        %v1601 = vunpack.c.l.b16 %v293
        %v1602 = vunpack.c.l.b16 %v294
        %v1603 = vunpack.c.l.b16 %v295
        %v1604 = vunpack.c.l.b16 %v296
        %v1605 = vunpack.c.l.b16 %v297
        %v1606 = vunpack.c.l.b16 %v298
        %v1607 = vunpack.c.l.b16 %v299
        %v1608 = vunpack.c.l.b16 %v300
        %v1609 = vunpack.c.l.b16 %v301
        %v1610 = vunpack.c.l.b16 %v302
        %v1611 = vunpack.c.l.b16 %v303
        %v1612 = vunpack.c.l.b16 %v304
        %v1613 = vunpack.c.l.b16 %v305
        %v1614 = vpack.c.b16 %v1551, %v1550
        %v1615 = vpack.c.b16 %v1553, %v1552
        %v1616 = vpack.c.b16 %v1555, %v1554
        %v1617 = vpack.c.b16 %v1557, %v1556
        %v1618 = vpack.c.b16 %v1559, %v1558
        %v1619 = vpack.c.b16 %v1561, %v1560
        %v1620 = vpack.c.b16 %v1563, %v1562
        %v1621 = vpack.c.b16 %v1565, %v1564
        %v1622 = vpack.c.b16 %v1567, %v1566
        %v1623 = vpack.c.b16 %v1569, %v1568
        %v1624 = vpack.c.b16 %v1571, %v1570
        %v1625 = vpack.c.b16 %v1573, %v1572
        %v1626 = vpack.c.b16 %v1575, %v1574
        %v1627 = vpack.c.b16 %v1577, %v1576
        %v1628 = vpack.c.b16 %v1579, %v1578
        %v1629 = vpack.c.b16 %v1581, %v1580
        %v1630 = vpack.c.b16 %v1583, %v1582
        %v1631 = vpack.c.b16 %v1585, %v1584
        %v1632 = vpack.c.b16 %v1587, %v1586
        %v1633 = vpack.c.b16 %v1589, %v1588
        %v1634 = vpack.c.b16 %v1591, %v1590
        %v1635 = vpack.c.b16 %v1593, %v1592
        %v1636 = vpack.c.b16 %v1595, %v1594
        %v1637 = vpack.c.b16 %v1597, %v1596
        %v1638 = vpack.c.b16 %v1599, %v1598
        %v1639 = vpack.c.b16 %v1601, %v1600
        %v1640 = vpack.c.b16 %v1603, %v1602
        %v1641 = vpack.c.b16 %v1605, %v1604
        %v1642 = vpack.c.b16 %v1607, %v1606
        %v1643 = vpack.c.b16 %v1609, %v1608
        %v1644 = vpack.c.b16 %v1611, %v1610
        %v1645 = vpack.c.b16 %v1613, %v1612
        %v1694 = vunpack.c.l.b16 %v306
        %v1695 = vunpack.c.l.b16 %v307
        %v1696 = vunpack.c.l.b16 %v308
        %v1697 = vunpack.c.l.b16 %v309
        %v1698 = vunpack.c.l.b16 %v310
        %v1699 = vunpack.c.l.b16 %v311
        %v1700 = vunpack.c.l.b16 %v312
        %v1701 = vunpack.c.l.b16 %v313
        %v1702 = vunpack.c.l.b16 %v314
        %v1703 = vunpack.c.l.b16 %v315
        %v1704 = vunpack.c.l.b16 %v316
        %v1705 = vunpack.c.l.b16 %v317
        %v1706 = vunpack.c.l.b16 %v318
        %v1707 = vunpack.c.l.b16 %v319
        %v1708 = vunpack.c.l.b16 %v320
        %v1709 = vunpack.c.l.b16 %v321
        %v1710 = vpack.c.b16 %v1695, %v1694
        %v1711 = vpack.c.b16 %v1697, %v1696
        %v1712 = vpack.c.b16 %v1699, %v1698
        %v1713 = vpack.c.b16 %v1701, %v1700
        %v1714 = vpack.c.b16 %v1703, %v1702
        %v1715 = vpack.c.b16 %v1705, %v1704
        %v1716 = vpack.c.b16 %v1707, %v1706
        %v1717 = vpack.c.b16 %v1709, %v1708
        %1726 = vmatprep.subr.bf16.mxu0 0
        %1727 = vmatpush1.bf16.msra.mxu0 %v1710
        %1728 = vmatprep.subr.bf16.mxu0 0
        %1729 = vmatpush1.bf16.msra.mxu0 %v1711
        %1730 = vmatprep.subr.bf16.mxu0 0
        %1731 = vmatpush1.bf16.msra.mxu0 %v1712
        %1732 = vmatprep.subr.bf16.mxu0 0
        %1733 = vmatpush1.bf16.msra.mxu0 %v1713
        %1734 = vmatprep.subr.bf16.mxu0 0
        %1735 = vmatpush1.bf16.msra.mxu0 %v1714
        %1736 = vmatprep.subr.bf16.mxu0 0
        %1737 = vmatpush1.bf16.msra.mxu0 %v1715
        %1738 = vmatprep.subr.bf16.mxu0 0
        %1739 = vmatpush1.bf16.msra.mxu0 %v1716
        %1740 = vmatprep.subr.bf16.mxu0 0
        %1741 = vmatpush1.bf16.msra.mxu0 %v1717
        %1742 = vmatprep.subr.bf16.mxu0 0
        %1743 = vmatpush1.bf16.msra.mxu0 0
        %1744 = vmatprep.subr.bf16.mxu0 0
        %1745 = vmatpush1.bf16.msra.mxu0 0
        %1746 = vmatprep.subr.bf16.mxu0 0
        %1747 = vmatpush1.bf16.msra.mxu0 0
        %1748 = vmatprep.subr.bf16.mxu0 0
        %1749 = vmatpush1.bf16.msra.mxu0 0
        %1750 = vmatprep.subr.bf16.mxu0 0
        %1751 = vmatpush1.bf16.msra.mxu0 0
        %1752 = vmatprep.subr.bf16.mxu0 0
        %1753 = vmatpush1.bf16.msra.mxu0 0
        %1754 = vmatprep.subr.bf16.mxu0 0
        %1755 = vmatpush1.bf16.msra.mxu0 0
        %1756 = vmatprep.subr.bf16.mxu0 0
        %1757 = vmatpush1.bf16.msra.mxu0 0
        %1758 = vmatprep.mubr.bf16.mxu0 0
        %1759 = vmatmul.mubr.bf16.gmra.mrb[0].mxu0 %v1614
        %v1760 = vpop.f32.mrb[0].mxu0
        %v1761 = vadd.f32 %v1232, %v1760
        %v1762 = vpop.f32.mrb[0].mxu0
        %v1763 = vpop.f32.mrb[0].mxu0
        %v1764 = vadd.f32 %v1235, %v1763
        %v1765 = vpop.f32.mrb[0].mxu0
        %1766 = vmatprep.mubr.bf16.mxu0 0
        %1767 = vmatmul.mubr.bf16.gmra.mrb[0].mxu0 %v1615
        %v1768 = vpop.f32.mrb[0].mxu0
        %v1769 = vadd.f32 %v1240, %v1768
        %v1770 = vpop.f32.mrb[0].mxu0
        %v1771 = vpop.f32.mrb[0].mxu0
        %v1772 = vadd.f32 %v1243, %v1771
        %v1773 = vpop.f32.mrb[0].mxu0
        %1774 = vmatprep.mubr.bf16.mxu0 0
        %1775 = vmatmul.mubr.bf16.gmra.mrb[0].mxu0 %v1616
        %v1776 = vpop.f32.mrb[0].mxu0
        %v1777 = vadd.f32 %v1248, %v1776
        %v1778 = vpop.f32.mrb[0].mxu0
        %v1779 = vpop.f32.mrb[0].mxu0
        %v1780 = vadd.f32 %v1251, %v1779
        %v1781 = vpop.f32.mrb[0].mxu0
        %1782 = vmatprep.mubr.bf16.mxu0 0
        %1783 = vmatmul.mubr.bf16.gmra.mrb[0].mxu0 %v1617
        %v1784 = vpop.f32.mrb[0].mxu0
        %v1785 = vadd.f32 %v1256, %v1784
        %v1786 = vpop.f32.mrb[0].mxu0
        %v1787 = vpop.f32.mrb[0].mxu0
        %v1788 = vadd.f32 %v1259, %v1787
        %v1789 = vpop.f32.mrb[0].mxu0
        %1790 = vmatprep.mubr.bf16.mxu0 0
        %1791 = vmatmul.mubr.bf16.gmra.mrb[0].mxu0 %v1618
        %v1792 = vpop.f32.mrb[0].mxu0
        %v1793 = vadd.f32 %v1264, %v1792
        %v1794 = vpop.f32.mrb[0].mxu0
        %v1795 = vpop.f32.mrb[0].mxu0
        %v1796 = vadd.f32 %v1267, %v1795
        %v1797 = vpop.f32.mrb[0].mxu0
        %1798 = vmatprep.mubr.bf16.mxu0 0
        %1799 = vmatmul.mubr.bf16.gmra.mrb[0].mxu0 %v1619
        %v1800 = vpop.f32.mrb[0].mxu0
        %v1801 = vadd.f32 %v1272, %v1800
        %v1802 = vpop.f32.mrb[0].mxu0
        %v1803 = vpop.f32.mrb[0].mxu0
        %v1804 = vadd.f32 %v1275, %v1803
        %v1805 = vpop.f32.mrb[0].mxu0
        %1806 = vmatprep.mubr.bf16.mxu0 0
        %1807 = vmatmul.mubr.bf16.gmra.mrb[0].mxu0 %v1620
        %v1808 = vpop.f32.mrb[0].mxu0
        %v1809 = vadd.f32 %v1280, %v1808
        %v1810 = vpop.f32.mrb[0].mxu0
        %v1811 = vpop.f32.mrb[0].mxu0
        %v1812 = vadd.f32 %v1283, %v1811
        %v1813 = vpop.f32.mrb[0].mxu0
        %1814 = vmatprep.mubr.bf16.mxu0 0
        %1815 = vmatmul.mubr.bf16.gmra.mrb[0].mxu0 %v1621
        %v1816 = vpop.f32.mrb[0].mxu0
        %v1817 = vadd.f32 %v1288, %v1816
        %v1818 = vpop.f32.mrb[0].mxu0
        %v1819 = vpop.f32.mrb[0].mxu0
        %v1820 = vadd.f32 %v1291, %v1819
        %v1821 = vpop.f32.mrb[0].mxu0
        %1822 = vmatprep.mubr.bf16.mxu0 0
        %1823 = vmatmul.mubr.bf16.gmra.mrb[0].mxu0 %v1622
        %v1824 = vpop.f32.mrb[0].mxu0
        %v1825 = vadd.f32 %v1296, %v1824
        %v1826 = vpop.f32.mrb[0].mxu0
        %v1827 = vpop.f32.mrb[0].mxu0
        %v1828 = vadd.f32 %v1299, %v1827
        %v1829 = vpop.f32.mrb[0].mxu0
        %1830 = vmatprep.mubr.bf16.mxu0 0
        %1831 = vmatmul.mubr.bf16.gmra.mrb[0].mxu0 %v1623
        %v1832 = vpop.f32.mrb[0].mxu0
        %v1833 = vadd.f32 %v1304, %v1832
        %v1834 = vpop.f32.mrb[0].mxu0
        %v1835 = vpop.f32.mrb[0].mxu0
        %v1836 = vadd.f32 %v1307, %v1835
        %v1837 = vpop.f32.mrb[0].mxu0
        %1838 = vmatprep.mubr.bf16.mxu0 0
        %1839 = vmatmul.mubr.bf16.gmra.mrb[0].mxu0 %v1624
        %v1840 = vpop.f32.mrb[0].mxu0
        %v1841 = vadd.f32 %v1312, %v1840
        %v1842 = vpop.f32.mrb[0].mxu0
        %v1843 = vpop.f32.mrb[0].mxu0
        %v1844 = vadd.f32 %v1315, %v1843
        %v1845 = vpop.f32.mrb[0].mxu0
        %1846 = vmatprep.mubr.bf16.mxu0 0
        %1847 = vmatmul.mubr.bf16.gmra.mrb[0].mxu0 %v1625
        %v1848 = vpop.f32.mrb[0].mxu0
        %v1849 = vadd.f32 %v1320, %v1848
        %v1850 = vpop.f32.mrb[0].mxu0
        %v1851 = vpop.f32.mrb[0].mxu0
        %v1852 = vadd.f32 %v1323, %v1851
        %v1853 = vpop.f32.mrb[0].mxu0
        %1854 = vmatprep.mubr.bf16.mxu0 0
        %1855 = vmatmul.mubr.bf16.gmra.mrb[0].mxu0 %v1626
        %v1856 = vpop.f32.mrb[0].mxu0
        %v1857 = vadd.f32 %v1328, %v1856
        %v1858 = vpop.f32.mrb[0].mxu0
        %v1859 = vpop.f32.mrb[0].mxu0
        %v1860 = vadd.f32 %v1331, %v1859
        %v1861 = vpop.f32.mrb[0].mxu0
        %1862 = vmatprep.mubr.bf16.mxu0 0
        %1863 = vmatmul.mubr.bf16.gmra.mrb[0].mxu0 %v1627
        %v1864 = vpop.f32.mrb[0].mxu0
        %v1865 = vadd.f32 %v1336, %v1864
        %v1866 = vpop.f32.mrb[0].mxu0
        %v1867 = vpop.f32.mrb[0].mxu0
        %v1868 = vadd.f32 %v1339, %v1867
        %v1869 = vpop.f32.mrb[0].mxu0
        %1870 = vmatprep.mubr.bf16.mxu0 0
        %1871 = vmatmul.mubr.bf16.gmra.mrb[0].mxu0 %v1628
        %v1872 = vpop.f32.mrb[0].mxu0
        %v1873 = vadd.f32 %v1344, %v1872
        %v1874 = vpop.f32.mrb[0].mxu0
        %v1875 = vpop.f32.mrb[0].mxu0
        %v1876 = vadd.f32 %v1347, %v1875
        %v1877 = vpop.f32.mrb[0].mxu0
        %1878 = vmatprep.mubr.bf16.mxu0 0
        %1879 = vmatmul.mubr.bf16.gmra.mrb[0].mxu0 %v1629
        %v1880 = vpop.f32.mrb[0].mxu0
        %v1881 = vadd.f32 %v1352, %v1880
        %v1882 = vpop.f32.mrb[0].mxu0
        %v1883 = vpop.f32.mrb[0].mxu0
        %v1884 = vadd.f32 %v1355, %v1883
        %v1885 = vpop.f32.mrb[0].mxu0
        %1886 = vmatprep.mubr.bf16.mxu0 0
        %1887 = vmatmul.mubr.bf16.gmra.mrb[0].mxu0 %v1630
        %v1888 = vpop.f32.mrb[0].mxu0
        %v1889 = vadd.f32 %v1360, %v1888
        %v1890 = vpop.f32.mrb[0].mxu0
        %v1891 = vpop.f32.mrb[0].mxu0
        %v1892 = vadd.f32 %v1363, %v1891
        %v1893 = vpop.f32.mrb[0].mxu0
        %1894 = vmatprep.mubr.bf16.mxu0 0
        %1895 = vmatmul.mubr.bf16.gmra.mrb[0].mxu0 %v1631
        %v1896 = vpop.f32.mrb[0].mxu0
        %v1897 = vadd.f32 %v1368, %v1896
        %v1898 = vpop.f32.mrb[0].mxu0
        %v1899 = vpop.f32.mrb[0].mxu0
        %v1900 = vadd.f32 %v1371, %v1899
        %v1901 = vpop.f32.mrb[0].mxu0
        %1902 = vmatprep.mubr.bf16.mxu0 0
        %1903 = vmatmul.mubr.bf16.gmra.mrb[0].mxu0 %v1632
        %v1904 = vpop.f32.mrb[0].mxu0
        %v1905 = vadd.f32 %v1376, %v1904
        %v1906 = vpop.f32.mrb[0].mxu0
        %v1907 = vpop.f32.mrb[0].mxu0
        %v1908 = vadd.f32 %v1379, %v1907
        %v1909 = vpop.f32.mrb[0].mxu0
        %1910 = vmatprep.mubr.bf16.mxu0 0
        %1911 = vmatmul.mubr.bf16.gmra.mrb[0].mxu0 %v1633
        %v1912 = vpop.f32.mrb[0].mxu0
        %v1913 = vadd.f32 %v1384, %v1912
        %v1914 = vpop.f32.mrb[0].mxu0
        %v1915 = vpop.f32.mrb[0].mxu0
        %v1916 = vadd.f32 %v1387, %v1915
        %v1917 = vpop.f32.mrb[0].mxu0
        %1918 = vmatprep.mubr.bf16.mxu0 0
        %1919 = vmatmul.mubr.bf16.gmra.mrb[0].mxu0 %v1634
        %v1920 = vpop.f32.mrb[0].mxu0
        %v1921 = vadd.f32 %v1392, %v1920
        %v1922 = vpop.f32.mrb[0].mxu0
        %v1923 = vpop.f32.mrb[0].mxu0
        %v1924 = vadd.f32 %v1395, %v1923
        %v1925 = vpop.f32.mrb[0].mxu0
        %1926 = vmatprep.mubr.bf16.mxu0 0
        %1927 = vmatmul.mubr.bf16.gmra.mrb[0].mxu0 %v1635
        %v1928 = vpop.f32.mrb[0].mxu0
        %v1929 = vadd.f32 %v1400, %v1928
        %v1930 = vpop.f32.mrb[0].mxu0
        %v1931 = vpop.f32.mrb[0].mxu0
        %v1932 = vadd.f32 %v1403, %v1931
        %v1933 = vpop.f32.mrb[0].mxu0
        %1934 = vmatprep.mubr.bf16.mxu0 0
        %1935 = vmatmul.mubr.bf16.gmra.mrb[0].mxu0 %v1636
        %v1936 = vpop.f32.mrb[0].mxu0
        %v1937 = vadd.f32 %v1408, %v1936
        %v1938 = vpop.f32.mrb[0].mxu0
        %v1939 = vpop.f32.mrb[0].mxu0
        %v1940 = vadd.f32 %v1411, %v1939
        %v1941 = vpop.f32.mrb[0].mxu0
        %1942 = vmatprep.mubr.bf16.mxu0 0
        %1943 = vmatmul.mubr.bf16.gmra.mrb[0].mxu0 %v1637
        %v1944 = vpop.f32.mrb[0].mxu0
        %v1945 = vadd.f32 %v1416, %v1944
        %v1946 = vpop.f32.mrb[0].mxu0
        %v1947 = vpop.f32.mrb[0].mxu0
        %v1948 = vadd.f32 %v1419, %v1947
        %v1949 = vpop.f32.mrb[0].mxu0
        %1950 = vmatprep.mubr.bf16.mxu0 0
        %1951 = vmatmul.mubr.bf16.gmra.mrb[0].mxu0 %v1638
        %v1952 = vpop.f32.mrb[0].mxu0
        %v1953 = vadd.f32 %v1424, %v1952
        %v1954 = vpop.f32.mrb[0].mxu0
        %v1955 = vpop.f32.mrb[0].mxu0
        %v1956 = vadd.f32 %v1427, %v1955
        %v1957 = vpop.f32.mrb[0].mxu0
        %1958 = vmatprep.mubr.bf16.mxu0 0
        %1959 = vmatmul.mubr.bf16.gmra.mrb[0].mxu0 %v1639
        %v1960 = vpop.f32.mrb[0].mxu0
        %v1961 = vadd.f32 %v1432, %v1960
        %v1962 = vpop.f32.mrb[0].mxu0
        %v1963 = vpop.f32.mrb[0].mxu0
        %v1964 = vadd.f32 %v1435, %v1963
        %v1965 = vpop.f32.mrb[0].mxu0
        %1966 = vmatprep.mubr.bf16.mxu0 0
        %1967 = vmatmul.mubr.bf16.gmra.mrb[0].mxu0 %v1640
        %v1968 = vpop.f32.mrb[0].mxu0
        %v1969 = vadd.f32 %v1440, %v1968
        %v1970 = vpop.f32.mrb[0].mxu0
        %v1971 = vpop.f32.mrb[0].mxu0
        %v1972 = vadd.f32 %v1443, %v1971
        %v1973 = vpop.f32.mrb[0].mxu0
        %1974 = vmatprep.mubr.bf16.mxu0 0
        %1975 = vmatmul.mubr.bf16.gmra.mrb[0].mxu0 %v1641
        %v1976 = vpop.f32.mrb[0].mxu0
        %v1977 = vadd.f32 %v1448, %v1976
        %v1978 = vpop.f32.mrb[0].mxu0
        %v1979 = vpop.f32.mrb[0].mxu0
        %v1980 = vadd.f32 %v1451, %v1979
        %v1981 = vpop.f32.mrb[0].mxu0
        %1982 = vmatprep.mubr.bf16.mxu0 0
        %1983 = vmatmul.mubr.bf16.gmra.mrb[0].mxu0 %v1642
        %v1984 = vpop.f32.mrb[0].mxu0
        %v1985 = vadd.f32 %v1456, %v1984
        %v1986 = vpop.f32.mrb[0].mxu0
        %v1987 = vpop.f32.mrb[0].mxu0
        %v1988 = vadd.f32 %v1459, %v1987
        %v1989 = vpop.f32.mrb[0].mxu0
        %1990 = vmatprep.mubr.bf16.mxu0 0
        %1991 = vmatmul.mubr.bf16.gmra.mrb[0].mxu0 %v1643
        %v1992 = vpop.f32.mrb[0].mxu0
        %v1993 = vadd.f32 %v1464, %v1992
        %v1994 = vpop.f32.mrb[0].mxu0
        %v1995 = vpop.f32.mrb[0].mxu0
        %v1996 = vadd.f32 %v1467, %v1995
        %v1997 = vpop.f32.mrb[0].mxu0
        %1998 = vmatprep.mubr.bf16.mxu0 0
        %1999 = vmatmul.mubr.bf16.gmra.mrb[0].mxu0 %v1644
        %v2000 = vpop.f32.mrb[0].mxu0
        %v2001 = vadd.f32 %v1472, %v2000
        %v2002 = vpop.f32.mrb[0].mxu0
        %v2003 = vpop.f32.mrb[0].mxu0
        %v2004 = vadd.f32 %v1475, %v2003
        %v2005 = vpop.f32.mrb[0].mxu0
        %2006 = vmatprep.mubr.bf16.mxu0 0
        %2007 = vmatmul.mubr.bf16.gmra.mrb[0].mxu0 %v1645
        %v2008 = vpop.f32.mrb[0].mxu0
        %v2009 = vadd.f32 %v1480, %v2008
        %v2010 = vpop.f32.mrb[0].mxu0
        %v2011 = vpop.f32.mrb[0].mxu0
        %v2012 = vadd.f32 %v1483, %v2011
        %v2013 = vpop.f32.mrb[0].mxu0
        %2014 = vdwg.mxu0
        %v2015 = vld [vmem:[%s241] sm:$0xe]
        %v2016 = vld [vmem:[%s241 + $0x24] sm:$0xe]
        %v2017 = vld [vmem:[%s241 + $0x48] sm:$0xe]
        %v2018 = vld [vmem:[%s241 + $0x6c] sm:$0xe]
        %v2019 = vld [vmem:[%s241 + $0x90] sm:$0xe]
        %v2020 = vld [vmem:[%s241 + $0xb4] sm:$0xe]
        %v2021 = vld [vmem:[%s241 + $0xd8] sm:$0xe]
        %v2022 = vld [vmem:[%s241 + $0xfc] sm:$0xe]
        %vm2039 = vcmask 1042432
        %vm2040 = vcmask 1046532
        %vm2041 = vmor %vm2039, %vm2040
        %v2042 = vrot.slane %v2015, 5
        %v2043 = vrot.slane %v2042, 4
        %v2044 = vrot.slane %v243, 5
        %v2045 = vsel %vm2041, %v2043, %v2044
        %v2046 = vrot.slane %v2044, 4
        %v2047 = vrot.slane %v244, 5
        %v2048 = vsel %vm2041, %v2046, %v2047
        %v2049 = vrot.slane %v2047, 4
        %v2050 = vrot.slane %v245, 5
        %v2051 = vsel %vm2041, %v2049, %v2050
        %v2052 = vrot.slane %v2050, 4
        %v2053 = vrot.slane %v246, 5
        %v2054 = vsel %vm2041, %v2052, %v2053
        %v2055 = vrot.slane %v2053, 4
        %v2056 = vrot.slane %v247, 5
        %v2057 = vsel %vm2041, %v2055, %v2056
        %v2058 = vrot.slane %v2056, 4
        %v2059 = vrot.slane %v248, 5
        %v2060 = vsel %vm2041, %v2058, %v2059
        %v2061 = vrot.slane %v2059, 4
        %v2062 = vrot.slane %v249, 5
        %v2063 = vsel %vm2041, %v2061, %v2062
        %v2064 = vrot.slane %v2062, 4
        %v2065 = vrot.slane %v322, 5
        %v2066 = vsel %vm2041, %v2064, %v2065
        %v2067 = vrot.slane %v2016, 5
        %v2068 = vrot.slane %v2067, 4
        %v2069 = vrot.slane %v251, 5
        %v2070 = vsel %vm2041, %v2068, %v2069
        %v2071 = vrot.slane %v2069, 4
        %v2072 = vrot.slane %v252, 5
        %v2073 = vsel %vm2041, %v2071, %v2072
        %v2074 = vrot.slane %v2072, 4
        %v2075 = vrot.slane %v253, 5
        %v2076 = vsel %vm2041, %v2074, %v2075
        %v2077 = vrot.slane %v2075, 4
        %v2078 = vrot.slane %v254, 5
        %v2079 = vsel %vm2041, %v2077, %v2078
        %v2080 = vrot.slane %v2078, 4
        %v2081 = vrot.slane %v255, 5
        %v2082 = vsel %vm2041, %v2080, %v2081
        %v2083 = vrot.slane %v2081, 4
        %v2084 = vrot.slane %v256, 5
        %v2085 = vsel %vm2041, %v2083, %v2084
        %v2086 = vrot.slane %v2084, 4
        %v2087 = vrot.slane %v257, 5
        %v2088 = vsel %vm2041, %v2086, %v2087
        %v2089 = vrot.slane %v2087, 4
        %v2090 = vrot.slane %v323, 5
        %v2091 = vsel %vm2041, %v2089, %v2090
        %v2092 = vrot.slane %v2017, 5
        %v2093 = vrot.slane %v2092, 4
        %v2094 = vrot.slane %v259, 5
        %v2095 = vsel %vm2041, %v2093, %v2094
        %v2096 = vrot.slane %v2094, 4
        %v2097 = vrot.slane %v260, 5
        %v2098 = vsel %vm2041, %v2096, %v2097
        %v2099 = vrot.slane %v2097, 4
        %v2100 = vrot.slane %v261, 5
        %v2101 = vsel %vm2041, %v2099, %v2100
        %v2102 = vrot.slane %v2100, 4
        %v2103 = vrot.slane %v262, 5
        %v2104 = vsel %vm2041, %v2102, %v2103
        %v2105 = vrot.slane %v2103, 4
        %v2106 = vrot.slane %v263, 5
        %v2107 = vsel %vm2041, %v2105, %v2106
        %v2108 = vrot.slane %v2106, 4
        %v2109 = vrot.slane %v264, 5
        %v2110 = vsel %vm2041, %v2108, %v2109
        %v2111 = vrot.slane %v2109, 4
        %v2112 = vrot.slane %v265, 5
        %v2113 = vsel %vm2041, %v2111, %v2112
        %v2114 = vrot.slane %v2112, 4
        %v2115 = vrot.slane %v324, 5
        %v2116 = vsel %vm2041, %v2114, %v2115
        %v2117 = vrot.slane %v2018, 5
        %v2118 = vrot.slane %v2117, 4
        %v2119 = vrot.slane %v267, 5
        %v2120 = vsel %vm2041, %v2118, %v2119
        %v2121 = vrot.slane %v2119, 4
        %v2122 = vrot.slane %v268, 5
        %v2123 = vsel %vm2041, %v2121, %v2122
        %v2124 = vrot.slane %v2122, 4
        %v2125 = vrot.slane %v269, 5
        %v2126 = vsel %vm2041, %v2124, %v2125
        %v2127 = vrot.slane %v2125, 4
        %v2128 = vrot.slane %v270, 5
        %v2129 = vsel %vm2041, %v2127, %v2128
        %v2130 = vrot.slane %v2128, 4
        %v2131 = vrot.slane %v271, 5
        %v2132 = vsel %vm2041, %v2130, %v2131
        %v2133 = vrot.slane %v2131, 4
        %v2134 = vrot.slane %v272, 5
        %v2135 = vsel %vm2041, %v2133, %v2134
        %v2136 = vrot.slane %v2134, 4
        %v2137 = vrot.slane %v273, 5
        %v2138 = vsel %vm2041, %v2136, %v2137
        %v2139 = vrot.slane %v2137, 4
        %v2140 = vrot.slane %v325, 5
        %v2141 = vsel %vm2041, %v2139, %v2140
        %v2142 = vrot.slane %v2019, 5
        %v2143 = vrot.slane %v2142, 4
        %v2144 = vrot.slane %v275, 5
        %v2145 = vsel %vm2041, %v2143, %v2144
        %v2146 = vrot.slane %v2144, 4
        %v2147 = vrot.slane %v276, 5
        %v2148 = vsel %vm2041, %v2146, %v2147
        %v2149 = vrot.slane %v2147, 4
        %v2150 = vrot.slane %v277, 5
        %v2151 = vsel %vm2041, %v2149, %v2150
        %v2152 = vrot.slane %v2150, 4
        %v2153 = vrot.slane %v278, 5
        %v2154 = vsel %vm2041, %v2152, %v2153
        %v2155 = vrot.slane %v2153, 4
        %v2156 = vrot.slane %v279, 5
        %v2157 = vsel %vm2041, %v2155, %v2156
        %v2158 = vrot.slane %v2156, 4
        %v2159 = vrot.slane %v280, 5
        %v2160 = vsel %vm2041, %v2158, %v2159
        %v2161 = vrot.slane %v2159, 4
        %v2162 = vrot.slane %v281, 5
        %v2163 = vsel %vm2041, %v2161, %v2162
        %v2164 = vrot.slane %v2162, 4
        %v2165 = vrot.slane %v326, 5
        %v2166 = vsel %vm2041, %v2164, %v2165
        %v2167 = vrot.slane %v2020, 5
        %v2168 = vrot.slane %v2167, 4
        %v2169 = vrot.slane %v283, 5
        %v2170 = vsel %vm2041, %v2168, %v2169
        %v2171 = vrot.slane %v2169, 4
        %v2172 = vrot.slane %v284, 5
        %v2173 = vsel %vm2041, %v2171, %v2172
        %v2174 = vrot.slane %v2172, 4
        %v2175 = vrot.slane %v285, 5
        %v2176 = vsel %vm2041, %v2174, %v2175
        %v2177 = vrot.slane %v2175, 4
        %v2178 = vrot.slane %v286, 5
        %v2179 = vsel %vm2041, %v2177, %v2178
        %v2180 = vrot.slane %v2178, 4
        %v2181 = vrot.slane %v287, 5
        %v2182 = vsel %vm2041, %v2180, %v2181
        %v2183 = vrot.slane %v2181, 4
        %v2184 = vrot.slane %v288, 5
        %v2185 = vsel %vm2041, %v2183, %v2184
        %v2186 = vrot.slane %v2184, 4
        %v2187 = vrot.slane %v289, 5
        %v2188 = vsel %vm2041, %v2186, %v2187
        %v2189 = vrot.slane %v2187, 4
        %v2190 = vrot.slane %v327, 5
        %v2191 = vsel %vm2041, %v2189, %v2190
        %v2192 = vrot.slane %v2021, 5
        %v2193 = vrot.slane %v2192, 4
        %v2194 = vrot.slane %v291, 5
        %v2195 = vsel %vm2041, %v2193, %v2194
        %v2196 = vrot.slane %v2194, 4
        %v2197 = vrot.slane %v292, 5
        %v2198 = vsel %vm2041, %v2196, %v2197
        %v2199 = vrot.slane %v2197, 4
        %v2200 = vrot.slane %v293, 5
        %v2201 = vsel %vm2041, %v2199, %v2200
        %v2202 = vrot.slane %v2200, 4
        %v2203 = vrot.slane %v294, 5
        %v2204 = vsel %vm2041, %v2202, %v2203
        %v2205 = vrot.slane %v2203, 4
        %v2206 = vrot.slane %v295, 5
        %v2207 = vsel %vm2041, %v2205, %v2206
        %v2208 = vrot.slane %v2206, 4
        %v2209 = vrot.slane %v296, 5
        %v2210 = vsel %vm2041, %v2208, %v2209
        %v2211 = vrot.slane %v2209, 4
        %v2212 = vrot.slane %v297, 5
        %v2213 = vsel %vm2041, %v2211, %v2212
        %v2214 = vrot.slane %v2212, 4
        %v2215 = vrot.slane %v328, 5
        %v2216 = vsel %vm2041, %v2214, %v2215
        %v2217 = vrot.slane %v2022, 5
        %v2218 = vrot.slane %v2217, 4
        %v2219 = vrot.slane %v299, 5
        %v2220 = vsel %vm2041, %v2218, %v2219
        %v2221 = vrot.slane %v2219, 4
        %v2222 = vrot.slane %v300, 5
        %v2223 = vsel %vm2041, %v2221, %v2222
        %v2224 = vrot.slane %v2222, 4
        %v2225 = vrot.slane %v301, 5
        %v2226 = vsel %vm2041, %v2224, %v2225
        %v2227 = vrot.slane %v2225, 4
        %v2228 = vrot.slane %v302, 5
        %v2229 = vsel %vm2041, %v2227, %v2228
        %v2230 = vrot.slane %v2228, 4
        %v2231 = vrot.slane %v303, 5
        %v2232 = vsel %vm2041, %v2230, %v2231
        %v2233 = vrot.slane %v2231, 4
        %v2234 = vrot.slane %v304, 5
        %v2235 = vsel %vm2041, %v2233, %v2234
        %v2236 = vrot.slane %v2234, 4
        %v2237 = vrot.slane %v305, 5
        %v2238 = vsel %vm2041, %v2236, %v2237
        %v2239 = vrot.slane %v2237, 4
        %v2240 = vrot.slane %v329, 5
        %v2241 = vsel %vm2041, %v2239, %v2240
        %v2242 = vld [vmem:[#allocation5 + $0x80] sm:$0xf]
        %v2243 = vld [vmem:[#allocation5 + $0x84] sm:$0xf]
        %v2244 = vld [vmem:[#allocation5 + $0x88] sm:$0xf]
        %v2245 = vld [vmem:[#allocation5 + $0x8c] sm:$0xf]
        %v2246 = vld [vmem:[#allocation5 + $0x90] sm:$0xf]
        %v2247 = vld [vmem:[#allocation5 + $0x94] sm:$0xf]
        %v2248 = vld [vmem:[#allocation5 + $0x98] sm:$0xf]
        %v2249 = vld [vmem:[#allocation5 + $0x9c] sm:$0xf]
        %v2250 = vld [vmem:[#allocation5 + $0xa0] sm:$0xf]
        %v2251 = vld [vmem:[#allocation5 + $0xa4] sm:$0xf]
        %v2252 = vld [vmem:[#allocation5 + $0xa8] sm:$0xf]
        %v2253 = vld [vmem:[#allocation5 + $0xac] sm:$0xf]
        %v2254 = vld [vmem:[#allocation5 + $0xb0] sm:$0xf]
        %v2255 = vld [vmem:[#allocation5 + $0xb4] sm:$0xf]
        %v2256 = vld [vmem:[#allocation5 + $0xb8] sm:$0xf]
        %v2257 = vld [vmem:[#allocation5 + $0xbc] sm:$0xf]
        %v2258 = vunpack.c.l.b16 %v2045
        %v2259 = vunpack.c.l.b16 %v2048
        %v2260 = vunpack.c.l.b16 %v2051
        %v2261 = vunpack.c.l.b16 %v2054
        %v2262 = vunpack.c.l.b16 %v2057
        %v2263 = vunpack.c.l.b16 %v2060
        %v2264 = vunpack.c.l.b16 %v2063
        %v2265 = vunpack.c.l.b16 %v2066
        %v2266 = vunpack.c.l.b16 %v2070
        %v2267 = vunpack.c.l.b16 %v2073
        %v2268 = vunpack.c.l.b16 %v2076
        %v2269 = vunpack.c.l.b16 %v2079
        %v2270 = vunpack.c.l.b16 %v2082
        %v2271 = vunpack.c.l.b16 %v2085
        %v2272 = vunpack.c.l.b16 %v2088
        %v2273 = vunpack.c.l.b16 %v2091
        %v2274 = vunpack.c.l.b16 %v2095
        %v2275 = vunpack.c.l.b16 %v2098
        %v2276 = vunpack.c.l.b16 %v2101
        %v2277 = vunpack.c.l.b16 %v2104
        %v2278 = vunpack.c.l.b16 %v2107
        %v2279 = vunpack.c.l.b16 %v2110
        %v2280 = vunpack.c.l.b16 %v2113
        %v2281 = vunpack.c.l.b16 %v2116
        %v2282 = vunpack.c.l.b16 %v2120
        %v2283 = vunpack.c.l.b16 %v2123
        %v2284 = vunpack.c.l.b16 %v2126
        %v2285 = vunpack.c.l.b16 %v2129
        %v2286 = vunpack.c.l.b16 %v2132
        %v2287 = vunpack.c.l.b16 %v2135
        %v2288 = vunpack.c.l.b16 %v2138
        %v2289 = vunpack.c.l.b16 %v2141
        %v2290 = vunpack.c.l.b16 %v2145
        %v2291 = vunpack.c.l.b16 %v2148
        %v2292 = vunpack.c.l.b16 %v2151
        %v2293 = vunpack.c.l.b16 %v2154
        %v2294 = vunpack.c.l.b16 %v2157
        %v2295 = vunpack.c.l.b16 %v2160
        %v2296 = vunpack.c.l.b16 %v2163
        %v2297 = vunpack.c.l.b16 %v2166
        %v2298 = vunpack.c.l.b16 %v2170
        %v2299 = vunpack.c.l.b16 %v2173
        %v2300 = vunpack.c.l.b16 %v2176
        %v2301 = vunpack.c.l.b16 %v2179
        %v2302 = vunpack.c.l.b16 %v2182
        %v2303 = vunpack.c.l.b16 %v2185
        %v2304 = vunpack.c.l.b16 %v2188
        %v2305 = vunpack.c.l.b16 %v2191
        %v2306 = vunpack.c.l.b16 %v2195
        %v2307 = vunpack.c.l.b16 %v2198
        %v2308 = vunpack.c.l.b16 %v2201
        %v2309 = vunpack.c.l.b16 %v2204
        %v2310 = vunpack.c.l.b16 %v2207
        %v2311 = vunpack.c.l.b16 %v2210
        %v2312 = vunpack.c.l.b16 %v2213
        %v2313 = vunpack.c.l.b16 %v2216
        %v2314 = vunpack.c.l.b16 %v2220
        %v2315 = vunpack.c.l.b16 %v2223
        %v2316 = vunpack.c.l.b16 %v2226
        %v2317 = vunpack.c.l.b16 %v2229
        %v2318 = vunpack.c.l.b16 %v2232
        %v2319 = vunpack.c.l.b16 %v2235
        %v2320 = vunpack.c.l.b16 %v2238
        %v2321 = vunpack.c.l.b16 %v2241
        %v2322 = vpack.c.b16 %v2259, %v2258
        %v2323 = vpack.c.b16 %v2261, %v2260
        %v2324 = vpack.c.b16 %v2263, %v2262
        %v2325 = vpack.c.b16 %v2265, %v2264
        %v2326 = vpack.c.b16 %v2267, %v2266
        %v2327 = vpack.c.b16 %v2269, %v2268
        %v2328 = vpack.c.b16 %v2271, %v2270
        %v2329 = vpack.c.b16 %v2273, %v2272
        %v2330 = vpack.c.b16 %v2275, %v2274
        %v2331 = vpack.c.b16 %v2277, %v2276
        %v2332 = vpack.c.b16 %v2279, %v2278
        %v2333 = vpack.c.b16 %v2281, %v2280
        %v2334 = vpack.c.b16 %v2283, %v2282
        %v2335 = vpack.c.b16 %v2285, %v2284
        %v2336 = vpack.c.b16 %v2287, %v2286
        %v2337 = vpack.c.b16 %v2289, %v2288
        %v2338 = vpack.c.b16 %v2291, %v2290
        %v2339 = vpack.c.b16 %v2293, %v2292
        %v2340 = vpack.c.b16 %v2295, %v2294
        %v2341 = vpack.c.b16 %v2297, %v2296
        %v2342 = vpack.c.b16 %v2299, %v2298
        %v2343 = vpack.c.b16 %v2301, %v2300
        %v2344 = vpack.c.b16 %v2303, %v2302
        %v2345 = vpack.c.b16 %v2305, %v2304
        %v2346 = vpack.c.b16 %v2307, %v2306
        %v2347 = vpack.c.b16 %v2309, %v2308
        %v2348 = vpack.c.b16 %v2311, %v2310
        %v2349 = vpack.c.b16 %v2313, %v2312
        %v2350 = vpack.c.b16 %v2315, %v2314
        %v2351 = vpack.c.b16 %v2317, %v2316
        %v2352 = vpack.c.b16 %v2319, %v2318
        %v2353 = vpack.c.b16 %v2321, %v2320
        %v2402 = vunpack.c.l.b16 %v2242
        %v2403 = vunpack.c.l.b16 %v2243
        %v2404 = vunpack.c.l.b16 %v2244
        %v2405 = vunpack.c.l.b16 %v2245
        %v2406 = vunpack.c.l.b16 %v2246
        %v2407 = vunpack.c.l.b16 %v2247
        %v2408 = vunpack.c.l.b16 %v2248
        %v2409 = vunpack.c.l.b16 %v2249
        %v2410 = vunpack.c.l.b16 %v2250
        %v2411 = vunpack.c.l.b16 %v2251
        %v2412 = vunpack.c.l.b16 %v2252
        %v2413 = vunpack.c.l.b16 %v2253
        %v2414 = vunpack.c.l.b16 %v2254
        %v2415 = vunpack.c.l.b16 %v2255
        %v2416 = vunpack.c.l.b16 %v2256
        %v2417 = vunpack.c.l.b16 %v2257
        %v2418 = vpack.c.b16 %v2403, %v2402
        %v2419 = vpack.c.b16 %v2405, %v2404
        %v2420 = vpack.c.b16 %v2407, %v2406
        %v2421 = vpack.c.b16 %v2409, %v2408
        %v2422 = vpack.c.b16 %v2411, %v2410
        %v2423 = vpack.c.b16 %v2413, %v2412
        %v2424 = vpack.c.b16 %v2415, %v2414
        %v2425 = vpack.c.b16 %v2417, %v2416
        %2434 = vmatprep.subr.bf16.mxu0 0
        %2435 = vmatpush1.bf16.msra.mxu0 %v2418
        %2436 = vmatprep.subr.bf16.mxu0 0
        %2437 = vmatpush1.bf16.msra.mxu0 %v2419
        %2438 = vmatprep.subr.bf16.mxu0 0
        %2439 = vmatpush1.bf16.msra.mxu0 %v2420
        %2440 = vmatprep.subr.bf16.mxu0 0
        %2441 = vmatpush1.bf16.msra.mxu0 %v2421
        %2442 = vmatprep.subr.bf16.mxu0 0
        %2443 = vmatpush1.bf16.msra.mxu0 %v2422
        %2444 = vmatprep.subr.bf16.mxu0 0
        %2445 = vmatpush1.bf16.msra.mxu0 %v2423
        %2446 = vmatprep.subr.bf16.mxu0 0
        %2447 = vmatpush1.bf16.msra.mxu0 %v2424
        %2448 = vmatprep.subr.bf16.mxu0 0
        %2449 = vmatpush1.bf16.msra.mxu0 %v2425
        %2450 = vmatprep.subr.bf16.mxu0 0
        %2451 = vmatpush1.bf16.msra.mxu0 0
        %2452 = vmatprep.subr.bf16.mxu0 0
        %2453 = vmatpush1.bf16.msra.mxu0 0
        %2454 = vmatprep.subr.bf16.mxu0 0
        %2455 = vmatpush1.bf16.msra.mxu0 0
        %2456 = vmatprep.subr.bf16.mxu0 0
        %2457 = vmatpush1.bf16.msra.mxu0 0
        %2458 = vmatprep.subr.bf16.mxu0 0
        %2459 = vmatpush1.bf16.msra.mxu0 0
        %2460 = vmatprep.subr.bf16.mxu0 0
        %2461 = vmatpush1.bf16.msra.mxu0 0
        %2462 = vmatprep.subr.bf16.mxu0 0
        %2463 = vmatpush1.bf16.msra.mxu0 0
        %2464 = vmatprep.subr.bf16.mxu0 0
        %2465 = vmatpush1.bf16.msra.mxu0 0
        %2466 = vmatprep.mubr.bf16.mxu0 0
        %2467 = vmatmul.mubr.bf16.gmra.mrb[0].mxu0 %v2322
        %v2468 = vpop.f32.mrb[0].mxu0
        %v2469 = vadd.f32 0.0, %v2468
        %v2470 = vpop.f32.mrb[0].mxu0
        %v2471 = vpop.f32.mrb[0].mxu0
        %v2472 = vadd.f32 0.0, %v2471
        %v2473 = vpop.f32.mrb[0].mxu0
        %2474 = vmatprep.mubr.bf16.mxu0 0
        %2475 = vmatmul.mubr.bf16.gmra.mrb[0].mxu0 %v2323
        %v2476 = vpop.f32.mrb[0].mxu0
        %v2477 = vadd.f32 0.0, %v2476
        %v2478 = vpop.f32.mrb[0].mxu0
        %v2479 = vpop.f32.mrb[0].mxu0
        %v2480 = vadd.f32 0.0, %v2479
        %v2481 = vpop.f32.mrb[0].mxu0
        %2482 = vmatprep.mubr.bf16.mxu0 0
        %2483 = vmatmul.mubr.bf16.gmra.mrb[0].mxu0 %v2324
        %v2484 = vpop.f32.mrb[0].mxu0
        %v2485 = vadd.f32 0.0, %v2484
        %v2486 = vpop.f32.mrb[0].mxu0
        %v2487 = vpop.f32.mrb[0].mxu0
        %v2488 = vadd.f32 0.0, %v2487
        %v2489 = vpop.f32.mrb[0].mxu0
        %2490 = vmatprep.mubr.bf16.mxu0 0
        %2491 = vmatmul.mubr.bf16.gmra.mrb[0].mxu0 %v2325
        %v2492 = vpop.f32.mrb[0].mxu0
        %v2493 = vadd.f32 0.0, %v2492
        %v2494 = vpop.f32.mrb[0].mxu0
        %v2495 = vpop.f32.mrb[0].mxu0
        %v2496 = vadd.f32 0.0, %v2495
        %v2497 = vpop.f32.mrb[0].mxu0
        %2498 = vmatprep.mubr.bf16.mxu0 0
        %2499 = vmatmul.mubr.bf16.gmra.mrb[0].mxu0 %v2326
        %v2500 = vpop.f32.mrb[0].mxu0
        %v2501 = vadd.f32 0.0, %v2500
        %v2502 = vpop.f32.mrb[0].mxu0
        %v2503 = vpop.f32.mrb[0].mxu0
        %v2504 = vadd.f32 0.0, %v2503
        %v2505 = vpop.f32.mrb[0].mxu0
        %2506 = vmatprep.mubr.bf16.mxu0 0
        %2507 = vmatmul.mubr.bf16.gmra.mrb[0].mxu0 %v2327
        %v2508 = vpop.f32.mrb[0].mxu0
        %v2509 = vadd.f32 0.0, %v2508
        %v2510 = vpop.f32.mrb[0].mxu0
        %v2511 = vpop.f32.mrb[0].mxu0
        %v2512 = vadd.f32 0.0, %v2511
        %v2513 = vpop.f32.mrb[0].mxu0
        %2514 = vmatprep.mubr.bf16.mxu0 0
        %2515 = vmatmul.mubr.bf16.gmra.mrb[0].mxu0 %v2328
        %v2516 = vpop.f32.mrb[0].mxu0
        %v2517 = vadd.f32 0.0, %v2516
        %v2518 = vpop.f32.mrb[0].mxu0
        %v2519 = vpop.f32.mrb[0].mxu0
        %v2520 = vadd.f32 0.0, %v2519
        %v2521 = vpop.f32.mrb[0].mxu0
        %2522 = vmatprep.mubr.bf16.mxu0 0
        %2523 = vmatmul.mubr.bf16.gmra.mrb[0].mxu0 %v2329
        %v2524 = vpop.f32.mrb[0].mxu0
        %v2525 = vadd.f32 0.0, %v2524
        %v2526 = vpop.f32.mrb[0].mxu0
        %v2527 = vpop.f32.mrb[0].mxu0
        %v2528 = vadd.f32 0.0, %v2527
        %v2529 = vpop.f32.mrb[0].mxu0
        %2530 = vmatprep.mubr.bf16.mxu0 0
        %2531 = vmatmul.mubr.bf16.gmra.mrb[0].mxu0 %v2330
        %v2532 = vpop.f32.mrb[0].mxu0
        %v2533 = vadd.f32 0.0, %v2532
        %v2534 = vpop.f32.mrb[0].mxu0
        %v2535 = vpop.f32.mrb[0].mxu0
        %v2536 = vadd.f32 0.0, %v2535
        %v2537 = vpop.f32.mrb[0].mxu0
        %2538 = vmatprep.mubr.bf16.mxu0 0
        %2539 = vmatmul.mubr.bf16.gmra.mrb[0].mxu0 %v2331
        %v2540 = vpop.f32.mrb[0].mxu0
        %v2541 = vadd.f32 0.0, %v2540
        %v2542 = vpop.f32.mrb[0].mxu0
        %v2543 = vpop.f32.mrb[0].mxu0
        %v2544 = vadd.f32 0.0, %v2543
        %v2545 = vpop.f32.mrb[0].mxu0
        %2546 = vmatprep.mubr.bf16.mxu0 0
        %2547 = vmatmul.mubr.bf16.gmra.mrb[0].mxu0 %v2332
        %v2548 = vpop.f32.mrb[0].mxu0
        %v2549 = vadd.f32 0.0, %v2548
        %v2550 = vpop.f32.mrb[0].mxu0
        %v2551 = vpop.f32.mrb[0].mxu0
        %v2552 = vadd.f32 0.0, %v2551
        %v2553 = vpop.f32.mrb[0].mxu0
        %2554 = vmatprep.mubr.bf16.mxu0 0
        %2555 = vmatmul.mubr.bf16.gmra.mrb[0].mxu0 %v2333
        %v2556 = vpop.f32.mrb[0].mxu0
        %v2557 = vadd.f32 0.0, %v2556
        %v2558 = vpop.f32.mrb[0].mxu0
        %v2559 = vpop.f32.mrb[0].mxu0
        %v2560 = vadd.f32 0.0, %v2559
        %v2561 = vpop.f32.mrb[0].mxu0
        %2562 = vmatprep.mubr.bf16.mxu0 0
        %2563 = vmatmul.mubr.bf16.gmra.mrb[0].mxu0 %v2334
        %v2564 = vpop.f32.mrb[0].mxu0
        %v2565 = vadd.f32 0.0, %v2564
        %v2566 = vpop.f32.mrb[0].mxu0
        %v2567 = vpop.f32.mrb[0].mxu0
        %v2568 = vadd.f32 0.0, %v2567
        %v2569 = vpop.f32.mrb[0].mxu0
        %2570 = vmatprep.mubr.bf16.mxu0 0
        %2571 = vmatmul.mubr.bf16.gmra.mrb[0].mxu0 %v2335
        %v2572 = vpop.f32.mrb[0].mxu0
        %v2573 = vadd.f32 0.0, %v2572
        %v2574 = vpop.f32.mrb[0].mxu0
        %v2575 = vpop.f32.mrb[0].mxu0
        %v2576 = vadd.f32 0.0, %v2575
        %v2577 = vpop.f32.mrb[0].mxu0
        %2578 = vmatprep.mubr.bf16.mxu0 0
        %2579 = vmatmul.mubr.bf16.gmra.mrb[0].mxu0 %v2336
        %v2580 = vpop.f32.mrb[0].mxu0
        %v2581 = vadd.f32 0.0, %v2580
        %v2582 = vpop.f32.mrb[0].mxu0
        %v2583 = vpop.f32.mrb[0].mxu0
        %v2584 = vadd.f32 0.0, %v2583
        %v2585 = vpop.f32.mrb[0].mxu0
        %2586 = vmatprep.mubr.bf16.mxu0 0
        %2587 = vmatmul.mubr.bf16.gmra.mrb[0].mxu0 %v2337
        %v2588 = vpop.f32.mrb[0].mxu0
        %v2589 = vadd.f32 0.0, %v2588
        %v2590 = vpop.f32.mrb[0].mxu0
        %v2591 = vpop.f32.mrb[0].mxu0
        %v2592 = vadd.f32 0.0, %v2591
        %v2593 = vpop.f32.mrb[0].mxu0
        %2594 = vmatprep.mubr.bf16.mxu0 0
        %2595 = vmatmul.mubr.bf16.gmra.mrb[0].mxu0 %v2338
        %v2596 = vpop.f32.mrb[0].mxu0
        %v2597 = vadd.f32 0.0, %v2596
        %v2598 = vpop.f32.mrb[0].mxu0
        %v2599 = vpop.f32.mrb[0].mxu0
        %v2600 = vadd.f32 0.0, %v2599
        %v2601 = vpop.f32.mrb[0].mxu0
        %2602 = vmatprep.mubr.bf16.mxu0 0
        %2603 = vmatmul.mubr.bf16.gmra.mrb[0].mxu0 %v2339
        %v2604 = vpop.f32.mrb[0].mxu0
        %v2605 = vadd.f32 0.0, %v2604
        %v2606 = vpop.f32.mrb[0].mxu0
        %v2607 = vpop.f32.mrb[0].mxu0
        %v2608 = vadd.f32 0.0, %v2607
        %v2609 = vpop.f32.mrb[0].mxu0
        %2610 = vmatprep.mubr.bf16.mxu0 0
        %2611 = vmatmul.mubr.bf16.gmra.mrb[0].mxu0 %v2340
        %v2612 = vpop.f32.mrb[0].mxu0
        %v2613 = vadd.f32 0.0, %v2612
        %v2614 = vpop.f32.mrb[0].mxu0
        %v2615 = vpop.f32.mrb[0].mxu0
        %v2616 = vadd.f32 0.0, %v2615
        %v2617 = vpop.f32.mrb[0].mxu0
        %2618 = vmatprep.mubr.bf16.mxu0 0
        %2619 = vmatmul.mubr.bf16.gmra.mrb[0].mxu0 %v2341
        %v2620 = vpop.f32.mrb[0].mxu0
        %v2621 = vadd.f32 0.0, %v2620
        %v2622 = vpop.f32.mrb[0].mxu0
        %v2623 = vpop.f32.mrb[0].mxu0
        %v2624 = vadd.f32 0.0, %v2623
        %v2625 = vpop.f32.mrb[0].mxu0
        %2626 = vmatprep.mubr.bf16.mxu0 0
        %2627 = vmatmul.mubr.bf16.gmra.mrb[0].mxu0 %v2342
        %v2628 = vpop.f32.mrb[0].mxu0
        %v2629 = vadd.f32 0.0, %v2628
        %v2630 = vpop.f32.mrb[0].mxu0
        %v2631 = vpop.f32.mrb[0].mxu0
        %v2632 = vadd.f32 0.0, %v2631
        %v2633 = vpop.f32.mrb[0].mxu0
        %2634 = vmatprep.mubr.bf16.mxu0 0
        %2635 = vmatmul.mubr.bf16.gmra.mrb[0].mxu0 %v2343
        %v2636 = vpop.f32.mrb[0].mxu0
        %v2637 = vadd.f32 0.0, %v2636
        %v2638 = vpop.f32.mrb[0].mxu0
        %v2639 = vpop.f32.mrb[0].mxu0
        %v2640 = vadd.f32 0.0, %v2639
        %v2641 = vpop.f32.mrb[0].mxu0
        %2642 = vmatprep.mubr.bf16.mxu0 0
        %2643 = vmatmul.mubr.bf16.gmra.mrb[0].mxu0 %v2344
        %v2644 = vpop.f32.mrb[0].mxu0
        %v2645 = vadd.f32 0.0, %v2644
        %v2646 = vpop.f32.mrb[0].mxu0
        %v2647 = vpop.f32.mrb[0].mxu0
        %v2648 = vadd.f32 0.0, %v2647
        %v2649 = vpop.f32.mrb[0].mxu0
        %2650 = vmatprep.mubr.bf16.mxu0 0
        %2651 = vmatmul.mubr.bf16.gmra.mrb[0].mxu0 %v2345
        %v2652 = vpop.f32.mrb[0].mxu0
        %v2653 = vadd.f32 0.0, %v2652
        %v2654 = vpop.f32.mrb[0].mxu0
        %v2655 = vpop.f32.mrb[0].mxu0
        %v2656 = vadd.f32 0.0, %v2655
        %v2657 = vpop.f32.mrb[0].mxu0
        %2658 = vmatprep.mubr.bf16.mxu0 0
        %2659 = vmatmul.mubr.bf16.gmra.mrb[0].mxu0 %v2346
        %v2660 = vpop.f32.mrb[0].mxu0
        %v2661 = vadd.f32 0.0, %v2660
        %v2662 = vpop.f32.mrb[0].mxu0
        %v2663 = vpop.f32.mrb[0].mxu0
        %v2664 = vadd.f32 0.0, %v2663
        %v2665 = vpop.f32.mrb[0].mxu0
        %2666 = vmatprep.mubr.bf16.mxu0 0
        %2667 = vmatmul.mubr.bf16.gmra.mrb[0].mxu0 %v2347
        %v2668 = vpop.f32.mrb[0].mxu0
        %v2669 = vadd.f32 0.0, %v2668
        %v2670 = vpop.f32.mrb[0].mxu0
        %v2671 = vpop.f32.mrb[0].mxu0
        %v2672 = vadd.f32 0.0, %v2671
        %v2673 = vpop.f32.mrb[0].mxu0
        %2674 = vmatprep.mubr.bf16.mxu0 0
        %2675 = vmatmul.mubr.bf16.gmra.mrb[0].mxu0 %v2348
        %v2676 = vpop.f32.mrb[0].mxu0
        %v2677 = vadd.f32 0.0, %v2676
        %v2678 = vpop.f32.mrb[0].mxu0
        %v2679 = vpop.f32.mrb[0].mxu0
        %v2680 = vadd.f32 0.0, %v2679
        %v2681 = vpop.f32.mrb[0].mxu0
        %2682 = vmatprep.mubr.bf16.mxu0 0
        %2683 = vmatmul.mubr.bf16.gmra.mrb[0].mxu0 %v2349
        %v2684 = vpop.f32.mrb[0].mxu0
        %v2685 = vadd.f32 0.0, %v2684
        %v2686 = vpop.f32.mrb[0].mxu0
        %v2687 = vpop.f32.mrb[0].mxu0
        %v2688 = vadd.f32 0.0, %v2687
        %v2689 = vpop.f32.mrb[0].mxu0
        %2690 = vmatprep.mubr.bf16.mxu0 0
        %2691 = vmatmul.mubr.bf16.gmra.mrb[0].mxu0 %v2350
        %v2692 = vpop.f32.mrb[0].mxu0
        %v2693 = vadd.f32 0.0, %v2692
        %v2694 = vpop.f32.mrb[0].mxu0
        %v2695 = vpop.f32.mrb[0].mxu0
        %v2696 = vadd.f32 0.0, %v2695
        %v2697 = vpop.f32.mrb[0].mxu0
        %2698 = vmatprep.mubr.bf16.mxu0 0
        %2699 = vmatmul.mubr.bf16.gmra.mrb[0].mxu0 %v2351
        %v2700 = vpop.f32.mrb[0].mxu0
        %v2701 = vadd.f32 0.0, %v2700
        %v2702 = vpop.f32.mrb[0].mxu0
        %v2703 = vpop.f32.mrb[0].mxu0
        %v2704 = vadd.f32 0.0, %v2703
        %v2705 = vpop.f32.mrb[0].mxu0
        %2706 = vmatprep.mubr.bf16.mxu0 0
        %2707 = vmatmul.mubr.bf16.gmra.mrb[0].mxu0 %v2352
        %v2708 = vpop.f32.mrb[0].mxu0
        %v2709 = vadd.f32 0.0, %v2708
        %v2710 = vpop.f32.mrb[0].mxu0
        %v2711 = vpop.f32.mrb[0].mxu0
        %v2712 = vadd.f32 0.0, %v2711
        %v2713 = vpop.f32.mrb[0].mxu0
        %2714 = vmatprep.mubr.bf16.mxu0 0
        %2715 = vmatmul.mubr.bf16.gmra.mrb[0].mxu0 %v2353
        %v2716 = vpop.f32.mrb[0].mxu0
        %v2717 = vadd.f32 0.0, %v2716
        %v2718 = vpop.f32.mrb[0].mxu0
        %v2719 = vpop.f32.mrb[0].mxu0
        %v2720 = vadd.f32 0.0, %v2719
        %v2721 = vpop.f32.mrb[0].mxu0
        %2722 = vdwg.mxu0
        %v2723 = vadd.f32 %v1761, %v2469
        %v2724 = vadd.f32 %v1764, %v2472
        %v2725 = vadd.f32 %v1769, %v2477
        %v2726 = vadd.f32 %v1772, %v2480
        %v2727 = vadd.f32 %v1777, %v2485
        %v2728 = vadd.f32 %v1780, %v2488
        %v2729 = vadd.f32 %v1785, %v2493
        %v2730 = vadd.f32 %v1788, %v2496
        %v2731 = vadd.f32 %v1793, %v2501
        %v2732 = vadd.f32 %v1796, %v2504
        %v2733 = vadd.f32 %v1801, %v2509
        %v2734 = vadd.f32 %v1804, %v2512
        %v2735 = vadd.f32 %v1809, %v2517
        %v2736 = vadd.f32 %v1812, %v2520
        %v2737 = vadd.f32 %v1817, %v2525
        %v2738 = vadd.f32 %v1820, %v2528
        %v2739 = vadd.f32 %v1825, %v2533
        %v2740 = vadd.f32 %v1828, %v2536
        %v2741 = vadd.f32 %v1833, %v2541
        %v2742 = vadd.f32 %v1836, %v2544
        %v2743 = vadd.f32 %v1841, %v2549
        %v2744 = vadd.f32 %v1844, %v2552
        %v2745 = vadd.f32 %v1849, %v2557
        %v2746 = vadd.f32 %v1852, %v2560
        %v2747 = vadd.f32 %v1857, %v2565
        %v2748 = vadd.f32 %v1860, %v2568
        %v2749 = vadd.f32 %v1865, %v2573
        %v2750 = vadd.f32 %v1868, %v2576
        %v2751 = vadd.f32 %v1873, %v2581
        %v2752 = vadd.f32 %v1876, %v2584
        %v2753 = vadd.f32 %v1881, %v2589
        %v2754 = vadd.f32 %v1884, %v2592
        %v2755 = vadd.f32 %v1889, %v2597
        %v2756 = vadd.f32 %v1892, %v2600
        %v2757 = vadd.f32 %v1897, %v2605
        %v2758 = vadd.f32 %v1900, %v2608
        %v2759 = vadd.f32 %v1905, %v2613
        %v2760 = vadd.f32 %v1908, %v2616
        %v2761 = vadd.f32 %v1913, %v2621
        %v2762 = vadd.f32 %v1916, %v2624
        %v2763 = vadd.f32 %v1921, %v2629
        %v2764 = vadd.f32 %v1924, %v2632
        %v2765 = vadd.f32 %v1929, %v2637
        %v2766 = vadd.f32 %v1932, %v2640
        %v2767 = vadd.f32 %v1937, %v2645
        %v2768 = vadd.f32 %v1940, %v2648
        %v2769 = vadd.f32 %v1945, %v2653
        %v2770 = vadd.f32 %v1948, %v2656
        %v2771 = vadd.f32 %v1953, %v2661
        %v2772 = vadd.f32 %v1956, %v2664
        %v2773 = vadd.f32 %v1961, %v2669
        %v2774 = vadd.f32 %v1964, %v2672
        %v2775 = vadd.f32 %v1969, %v2677
        %v2776 = vadd.f32 %v1972, %v2680
        %v2777 = vadd.f32 %v1977, %v2685
        %v2778 = vadd.f32 %v1980, %v2688
        %v2779 = vadd.f32 %v1985, %v2693
        %v2780 = vadd.f32 %v1988, %v2696
        %v2781 = vadd.f32 %v1993, %v2701
        %v2782 = vadd.f32 %v1996, %v2704
        %v2783 = vadd.f32 %v2001, %v2709
        %v2784 = vadd.f32 %v2004, %v2712
        %v2785 = vadd.f32 %v2009, %v2717
        %v2786 = vadd.f32 %v2012, %v2720
        %s2787 = sadd.s32 %s238, 1
        %s2788 = smul.u32 %s2787, 9
        %s2789 = smul.addr %s2788, 4
        %s2790 = scalar_lea.vmem [#allocation2], %s2789
        %v2791 = vld [vmem:[%s2790] sm:$0xf]
        %v2792 = vld [vmem:[%s2790 + $0x4] sm:$0xf]
        %v2793 = vld [vmem:[%s2790 + $0x8] sm:$0xf]
        %v2794 = vld [vmem:[%s2790 + $0xc] sm:$0xf]
        %v2795 = vld [vmem:[%s2790 + $0x10] sm:$0xf]
        %v2796 = vld [vmem:[%s2790 + $0x14] sm:$0xf]
        %v2797 = vld [vmem:[%s2790 + $0x18] sm:$0xf]
        %v2798 = vld [vmem:[%s2790 + $0x1c] sm:$0xf]
        %v2799 = vld [vmem:[%s2790 + $0x24] sm:$0xf]
        %v2800 = vld [vmem:[%s2790 + $0x28] sm:$0xf]
        %v2801 = vld [vmem:[%s2790 + $0x2c] sm:$0xf]
        %v2802 = vld [vmem:[%s2790 + $0x30] sm:$0xf]
        %v2803 = vld [vmem:[%s2790 + $0x34] sm:$0xf]
        %v2804 = vld [vmem:[%s2790 + $0x38] sm:$0xf]
        %v2805 = vld [vmem:[%s2790 + $0x3c] sm:$0xf]
        %v2806 = vld [vmem:[%s2790 + $0x40] sm:$0xf]
        %v2807 = vld [vmem:[%s2790 + $0x48] sm:$0xf]
        %v2808 = vld [vmem:[%s2790 + $0x4c] sm:$0xf]
        %v2809 = vld [vmem:[%s2790 + $0x50] sm:$0xf]
        %v2810 = vld [vmem:[%s2790 + $0x54] sm:$0xf]
        %v2811 = vld [vmem:[%s2790 + $0x58] sm:$0xf]
        %v2812 = vld [vmem:[%s2790 + $0x5c] sm:$0xf]
        %v2813 = vld [vmem:[%s2790 + $0x60] sm:$0xf]
        %v2814 = vld [vmem:[%s2790 + $0x64] sm:$0xf]
        %v2815 = vld [vmem:[%s2790 + $0x6c] sm:$0xf]
        %v2816 = vld [vmem:[%s2790 + $0x70] sm:$0xf]
        %v2817 = vld [vmem:[%s2790 + $0x74] sm:$0xf]
        %v2818 = vld [vmem:[%s2790 + $0x78] sm:$0xf]
        %v2819 = vld [vmem:[%s2790 + $0x7c] sm:$0xf]
        %v2820 = vld [vmem:[%s2790 + $0x80] sm:$0xf]
        %v2821 = vld [vmem:[%s2790 + $0x84] sm:$0xf]
        %v2822 = vld [vmem:[%s2790 + $0x88] sm:$0xf]
        %v2823 = vld [vmem:[%s2790 + $0x90] sm:$0xf]
        %v2824 = vld [vmem:[%s2790 + $0x94] sm:$0xf]
        %v2825 = vld [vmem:[%s2790 + $0x98] sm:$0xf]
        %v2826 = vld [vmem:[%s2790 + $0x9c] sm:$0xf]
        %v2827 = vld [vmem:[%s2790 + $0xa0] sm:$0xf]
        %v2828 = vld [vmem:[%s2790 + $0xa4] sm:$0xf]
        %v2829 = vld [vmem:[%s2790 + $0xa8] sm:$0xf]
        %v2830 = vld [vmem:[%s2790 + $0xac] sm:$0xf]
        %v2831 = vld [vmem:[%s2790 + $0xb4] sm:$0xf]
        %v2832 = vld [vmem:[%s2790 + $0xb8] sm:$0xf]
        %v2833 = vld [vmem:[%s2790 + $0xbc] sm:$0xf]
        %v2834 = vld [vmem:[%s2790 + $0xc0] sm:$0xf]
        %v2835 = vld [vmem:[%s2790 + $0xc4] sm:$0xf]
        %v2836 = vld [vmem:[%s2790 + $0xc8] sm:$0xf]
        %v2837 = vld [vmem:[%s2790 + $0xcc] sm:$0xf]
        %v2838 = vld [vmem:[%s2790 + $0xd0] sm:$0xf]
        %v2839 = vld [vmem:[%s2790 + $0xd8] sm:$0xf]
        %v2840 = vld [vmem:[%s2790 + $0xdc] sm:$0xf]
        %v2841 = vld [vmem:[%s2790 + $0xe0] sm:$0xf]
        %v2842 = vld [vmem:[%s2790 + $0xe4] sm:$0xf]
        %v2843 = vld [vmem:[%s2790 + $0xe8] sm:$0xf]
        %v2844 = vld [vmem:[%s2790 + $0xec] sm:$0xf]
        %v2845 = vld [vmem:[%s2790 + $0xf0] sm:$0xf]
        %v2846 = vld [vmem:[%s2790 + $0xf4] sm:$0xf]
        %v2847 = vld [vmem:[%s2790 + $0xfc] sm:$0xf]
        %v2848 = vld [vmem:[%s2790 + $0x100] sm:$0xf]
        %v2849 = vld [vmem:[%s2790 + $0x104] sm:$0xf]
        %v2850 = vld [vmem:[%s2790 + $0x108] sm:$0xf]
        %v2851 = vld [vmem:[%s2790 + $0x10c] sm:$0xf]
        %v2852 = vld [vmem:[%s2790 + $0x110] sm:$0xf]
        %v2853 = vld [vmem:[%s2790 + $0x114] sm:$0xf]
        %v2854 = vld [vmem:[%s2790 + $0x118] sm:$0xf]
        %v2855 = vld [vmem:[#allocation5 + $0xc0] sm:$0xf]
        %v2856 = vld [vmem:[#allocation5 + $0xc4] sm:$0xf]
        %v2857 = vld [vmem:[#allocation5 + $0xc8] sm:$0xf]
        %v2858 = vld [vmem:[#allocation5 + $0xcc] sm:$0xf]
        %v2859 = vld [vmem:[#allocation5 + $0xd0] sm:$0xf]
        %v2860 = vld [vmem:[#allocation5 + $0xd4] sm:$0xf]
        %v2861 = vld [vmem:[#allocation5 + $0xd8] sm:$0xf]
        %v2862 = vld [vmem:[#allocation5 + $0xdc] sm:$0xf]
        %v2863 = vld [vmem:[#allocation5 + $0xe0] sm:$0xf]
        %v2864 = vld [vmem:[#allocation5 + $0xe4] sm:$0xf]
        %v2865 = vld [vmem:[#allocation5 + $0xe8] sm:$0xf]
        %v2866 = vld [vmem:[#allocation5 + $0xec] sm:$0xf]
        %v2867 = vld [vmem:[#allocation5 + $0xf0] sm:$0xf]
        %v2868 = vld [vmem:[#allocation5 + $0xf4] sm:$0xf]
        %v2869 = vld [vmem:[#allocation5 + $0xf8] sm:$0xf]
        %v2870 = vld [vmem:[#allocation5 + $0xfc] sm:$0xf]
        %v2935 = vunpack.c.l.b16 %v2791
        %v2936 = vunpack.c.l.b16 %v2792
        %v2937 = vunpack.c.l.b16 %v2793
        %v2938 = vunpack.c.l.b16 %v2794
        %v2939 = vunpack.c.l.b16 %v2795
        %v2940 = vunpack.c.l.b16 %v2796
        %v2941 = vunpack.c.l.b16 %v2797
        %v2942 = vunpack.c.l.b16 %v2798
        %v2943 = vunpack.c.l.b16 %v2799
        %v2944 = vunpack.c.l.b16 %v2800
        %v2945 = vunpack.c.l.b16 %v2801
        %v2946 = vunpack.c.l.b16 %v2802
        %v2947 = vunpack.c.l.b16 %v2803
        %v2948 = vunpack.c.l.b16 %v2804
        %v2949 = vunpack.c.l.b16 %v2805
        %v2950 = vunpack.c.l.b16 %v2806
        %v2951 = vunpack.c.l.b16 %v2807
        %v2952 = vunpack.c.l.b16 %v2808
        %v2953 = vunpack.c.l.b16 %v2809
        %v2954 = vunpack.c.l.b16 %v2810
        %v2955 = vunpack.c.l.b16 %v2811
        %v2956 = vunpack.c.l.b16 %v2812
        %v2957 = vunpack.c.l.b16 %v2813
        %v2958 = vunpack.c.l.b16 %v2814
        %v2959 = vunpack.c.l.b16 %v2815
        %v2960 = vunpack.c.l.b16 %v2816
        %v2961 = vunpack.c.l.b16 %v2817
        %v2962 = vunpack.c.l.b16 %v2818
        %v2963 = vunpack.c.l.b16 %v2819
        %v2964 = vunpack.c.l.b16 %v2820
        %v2965 = vunpack.c.l.b16 %v2821
        %v2966 = vunpack.c.l.b16 %v2822
        %v2967 = vunpack.c.l.b16 %v2823
        %v2968 = vunpack.c.l.b16 %v2824
        %v2969 = vunpack.c.l.b16 %v2825
        %v2970 = vunpack.c.l.b16 %v2826
        %v2971 = vunpack.c.l.b16 %v2827
        %v2972 = vunpack.c.l.b16 %v2828
        %v2973 = vunpack.c.l.b16 %v2829
        %v2974 = vunpack.c.l.b16 %v2830
        %v2975 = vunpack.c.l.b16 %v2831
        %v2976 = vunpack.c.l.b16 %v2832
        %v2977 = vunpack.c.l.b16 %v2833
        %v2978 = vunpack.c.l.b16 %v2834
        %v2979 = vunpack.c.l.b16 %v2835
        %v2980 = vunpack.c.l.b16 %v2836
        %v2981 = vunpack.c.l.b16 %v2837
        %v2982 = vunpack.c.l.b16 %v2838
        %v2983 = vunpack.c.l.b16 %v2839
        %v2984 = vunpack.c.l.b16 %v2840
        %v2985 = vunpack.c.l.b16 %v2841
        %v2986 = vunpack.c.l.b16 %v2842
        %v2987 = vunpack.c.l.b16 %v2843
        %v2988 = vunpack.c.l.b16 %v2844
        %v2989 = vunpack.c.l.b16 %v2845
        %v2990 = vunpack.c.l.b16 %v2846
        %v2991 = vunpack.c.l.b16 %v2847
        %v2992 = vunpack.c.l.b16 %v2848
        %v2993 = vunpack.c.l.b16 %v2849
        %v2994 = vunpack.c.l.b16 %v2850
        %v2995 = vunpack.c.l.b16 %v2851
        %v2996 = vunpack.c.l.b16 %v2852
        %v2997 = vunpack.c.l.b16 %v2853
        %v2998 = vunpack.c.l.b16 %v2854
        %v2999 = vpack.c.b16 %v2936, %v2935
        %v3000 = vpack.c.b16 %v2938, %v2937
        %v3001 = vpack.c.b16 %v2940, %v2939
        %v3002 = vpack.c.b16 %v2942, %v2941
        %v3003 = vpack.c.b16 %v2944, %v2943
        %v3004 = vpack.c.b16 %v2946, %v2945
        %v3005 = vpack.c.b16 %v2948, %v2947
        %v3006 = vpack.c.b16 %v2950, %v2949
        %v3007 = vpack.c.b16 %v2952, %v2951
        %v3008 = vpack.c.b16 %v2954, %v2953
        %v3009 = vpack.c.b16 %v2956, %v2955
        %v3010 = vpack.c.b16 %v2958, %v2957
        %v3011 = vpack.c.b16 %v2960, %v2959
        %v3012 = vpack.c.b16 %v2962, %v2961
        %v3013 = vpack.c.b16 %v2964, %v2963
        %v3014 = vpack.c.b16 %v2966, %v2965
        %v3015 = vpack.c.b16 %v2968, %v2967
        %v3016 = vpack.c.b16 %v2970, %v2969
        %v3017 = vpack.c.b16 %v2972, %v2971
        %v3018 = vpack.c.b16 %v2974, %v2973
        %v3019 = vpack.c.b16 %v2976, %v2975
        %v3020 = vpack.c.b16 %v2978, %v2977
        %v3021 = vpack.c.b16 %v2980, %v2979
        %v3022 = vpack.c.b16 %v2982, %v2981
        %v3023 = vpack.c.b16 %v2984, %v2983
        %v3024 = vpack.c.b16 %v2986, %v2985
        %v3025 = vpack.c.b16 %v2988, %v2987
        %v3026 = vpack.c.b16 %v2990, %v2989
        %v3027 = vpack.c.b16 %v2992, %v2991
        %v3028 = vpack.c.b16 %v2994, %v2993
        %v3029 = vpack.c.b16 %v2996, %v2995
        %v3030 = vpack.c.b16 %v2998, %v2997
        %v3079 = vunpack.c.l.b16 %v2855
        %v3080 = vunpack.c.l.b16 %v2856
        %v3081 = vunpack.c.l.b16 %v2857
        %v3082 = vunpack.c.l.b16 %v2858
        %v3083 = vunpack.c.l.b16 %v2859
        %v3084 = vunpack.c.l.b16 %v2860
        %v3085 = vunpack.c.l.b16 %v2861
        %v3086 = vunpack.c.l.b16 %v2862
        %v3087 = vunpack.c.l.b16 %v2863
        %v3088 = vunpack.c.l.b16 %v2864
        %v3089 = vunpack.c.l.b16 %v2865
        %v3090 = vunpack.c.l.b16 %v2866
        %v3091 = vunpack.c.l.b16 %v2867
        %v3092 = vunpack.c.l.b16 %v2868
        %v3093 = vunpack.c.l.b16 %v2869
        %v3094 = vunpack.c.l.b16 %v2870
        %v3095 = vpack.c.b16 %v3080, %v3079
        %v3096 = vpack.c.b16 %v3082, %v3081
        %v3097 = vpack.c.b16 %v3084, %v3083
        %v3098 = vpack.c.b16 %v3086, %v3085
        %v3099 = vpack.c.b16 %v3088, %v3087
        %v3100 = vpack.c.b16 %v3090, %v3089
        %v3101 = vpack.c.b16 %v3092, %v3091
        %v3102 = vpack.c.b16 %v3094, %v3093
        %3111 = vmatprep.subr.bf16.mxu0 0
        %3112 = vmatpush1.bf16.msra.mxu0 %v3095
        %3113 = vmatprep.subr.bf16.mxu0 0
        %3114 = vmatpush1.bf16.msra.mxu0 %v3096
        %3115 = vmatprep.subr.bf16.mxu0 0
        %3116 = vmatpush1.bf16.msra.mxu0 %v3097
        %3117 = vmatprep.subr.bf16.mxu0 0
        %3118 = vmatpush1.bf16.msra.mxu0 %v3098
        %3119 = vmatprep.subr.bf16.mxu0 0
        %3120 = vmatpush1.bf16.msra.mxu0 %v3099
        %3121 = vmatprep.subr.bf16.mxu0 0
        %3122 = vmatpush1.bf16.msra.mxu0 %v3100
        %3123 = vmatprep.subr.bf16.mxu0 0
        %3124 = vmatpush1.bf16.msra.mxu0 %v3101
        %3125 = vmatprep.subr.bf16.mxu0 0
        %3126 = vmatpush1.bf16.msra.mxu0 %v3102
        %3127 = vmatprep.subr.bf16.mxu0 0
        %3128 = vmatpush1.bf16.msra.mxu0 0
        %3129 = vmatprep.subr.bf16.mxu0 0
        %3130 = vmatpush1.bf16.msra.mxu0 0
        %3131 = vmatprep.subr.bf16.mxu0 0
        %3132 = vmatpush1.bf16.msra.mxu0 0
        %3133 = vmatprep.subr.bf16.mxu0 0
        %3134 = vmatpush1.bf16.msra.mxu0 0
        %3135 = vmatprep.subr.bf16.mxu0 0
        %3136 = vmatpush1.bf16.msra.mxu0 0
        %3137 = vmatprep.subr.bf16.mxu0 0
        %3138 = vmatpush1.bf16.msra.mxu0 0
        %3139 = vmatprep.subr.bf16.mxu0 0
        %3140 = vmatpush1.bf16.msra.mxu0 0
        %3141 = vmatprep.subr.bf16.mxu0 0
        %3142 = vmatpush1.bf16.msra.mxu0 0
        %3143 = vmatprep.mubr.bf16.mxu0 0
        %3144 = vmatmul.mubr.bf16.gmra.mrb[0].mxu0 %v2999
        %v3145 = vpop.f32.mrb[0].mxu0
        %v3146 = vadd.f32 0.0, %v3145
        %v3147 = vpop.f32.mrb[0].mxu0
        %v3148 = vpop.f32.mrb[0].mxu0
        %v3149 = vadd.f32 0.0, %v3148
        %v3150 = vpop.f32.mrb[0].mxu0
        %3151 = vmatprep.mubr.bf16.mxu0 0
        %3152 = vmatmul.mubr.bf16.gmra.mrb[0].mxu0 %v3000
        %v3153 = vpop.f32.mrb[0].mxu0
        %v3154 = vadd.f32 0.0, %v3153
        %v3155 = vpop.f32.mrb[0].mxu0
        %v3156 = vpop.f32.mrb[0].mxu0
        %v3157 = vadd.f32 0.0, %v3156
        %v3158 = vpop.f32.mrb[0].mxu0
        %3159 = vmatprep.mubr.bf16.mxu0 0
        %3160 = vmatmul.mubr.bf16.gmra.mrb[0].mxu0 %v3001
        %v3161 = vpop.f32.mrb[0].mxu0
        %v3162 = vadd.f32 0.0, %v3161
        %v3163 = vpop.f32.mrb[0].mxu0
        %v3164 = vpop.f32.mrb[0].mxu0
        %v3165 = vadd.f32 0.0, %v3164
        %v3166 = vpop.f32.mrb[0].mxu0
        %3167 = vmatprep.mubr.bf16.mxu0 0
        %3168 = vmatmul.mubr.bf16.gmra.mrb[0].mxu0 %v3002
        %v3169 = vpop.f32.mrb[0].mxu0
        %v3170 = vadd.f32 0.0, %v3169
        %v3171 = vpop.f32.mrb[0].mxu0
        %v3172 = vpop.f32.mrb[0].mxu0
        %v3173 = vadd.f32 0.0, %v3172
        %v3174 = vpop.f32.mrb[0].mxu0
        %3175 = vmatprep.mubr.bf16.mxu0 0
        %3176 = vmatmul.mubr.bf16.gmra.mrb[0].mxu0 %v3003
        %v3177 = vpop.f32.mrb[0].mxu0
        %v3178 = vadd.f32 0.0, %v3177
        %v3179 = vpop.f32.mrb[0].mxu0
        %v3180 = vpop.f32.mrb[0].mxu0
        %v3181 = vadd.f32 0.0, %v3180
        %v3182 = vpop.f32.mrb[0].mxu0
        %3183 = vmatprep.mubr.bf16.mxu0 0
        %3184 = vmatmul.mubr.bf16.gmra.mrb[0].mxu0 %v3004
        %v3185 = vpop.f32.mrb[0].mxu0
        %v3186 = vadd.f32 0.0, %v3185
        %v3187 = vpop.f32.mrb[0].mxu0
        %v3188 = vpop.f32.mrb[0].mxu0
        %v3189 = vadd.f32 0.0, %v3188
        %v3190 = vpop.f32.mrb[0].mxu0
        %3191 = vmatprep.mubr.bf16.mxu0 0
        %3192 = vmatmul.mubr.bf16.gmra.mrb[0].mxu0 %v3005
        %v3193 = vpop.f32.mrb[0].mxu0
        %v3194 = vadd.f32 0.0, %v3193
        %v3195 = vpop.f32.mrb[0].mxu0
        %v3196 = vpop.f32.mrb[0].mxu0
        %v3197 = vadd.f32 0.0, %v3196
        %v3198 = vpop.f32.mrb[0].mxu0
        %3199 = vmatprep.mubr.bf16.mxu0 0
        %3200 = vmatmul.mubr.bf16.gmra.mrb[0].mxu0 %v3006
        %v3201 = vpop.f32.mrb[0].mxu0
        %v3202 = vadd.f32 0.0, %v3201
        %v3203 = vpop.f32.mrb[0].mxu0
        %v3204 = vpop.f32.mrb[0].mxu0
        %v3205 = vadd.f32 0.0, %v3204
        %v3206 = vpop.f32.mrb[0].mxu0
        %3207 = vmatprep.mubr.bf16.mxu0 0
        %3208 = vmatmul.mubr.bf16.gmra.mrb[0].mxu0 %v3007
        %v3209 = vpop.f32.mrb[0].mxu0
        %v3210 = vadd.f32 0.0, %v3209
        %v3211 = vpop.f32.mrb[0].mxu0
        %v3212 = vpop.f32.mrb[0].mxu0
        %v3213 = vadd.f32 0.0, %v3212
        %v3214 = vpop.f32.mrb[0].mxu0
        %3215 = vmatprep.mubr.bf16.mxu0 0
        %3216 = vmatmul.mubr.bf16.gmra.mrb[0].mxu0 %v3008
        %v3217 = vpop.f32.mrb[0].mxu0
        %v3218 = vadd.f32 0.0, %v3217
        %v3219 = vpop.f32.mrb[0].mxu0
        %v3220 = vpop.f32.mrb[0].mxu0
        %v3221 = vadd.f32 0.0, %v3220
        %v3222 = vpop.f32.mrb[0].mxu0
        %3223 = vmatprep.mubr.bf16.mxu0 0
        %3224 = vmatmul.mubr.bf16.gmra.mrb[0].mxu0 %v3009
        %v3225 = vpop.f32.mrb[0].mxu0
        %v3226 = vadd.f32 0.0, %v3225
        %v3227 = vpop.f32.mrb[0].mxu0
        %v3228 = vpop.f32.mrb[0].mxu0
        %v3229 = vadd.f32 0.0, %v3228
        %v3230 = vpop.f32.mrb[0].mxu0
        %3231 = vmatprep.mubr.bf16.mxu0 0
        %3232 = vmatmul.mubr.bf16.gmra.mrb[0].mxu0 %v3010
        %v3233 = vpop.f32.mrb[0].mxu0
        %v3234 = vadd.f32 0.0, %v3233
        %v3235 = vpop.f32.mrb[0].mxu0
        %v3236 = vpop.f32.mrb[0].mxu0
        %v3237 = vadd.f32 0.0, %v3236
        %v3238 = vpop.f32.mrb[0].mxu0
        %3239 = vmatprep.mubr.bf16.mxu0 0
        %3240 = vmatmul.mubr.bf16.gmra.mrb[0].mxu0 %v3011
        %v3241 = vpop.f32.mrb[0].mxu0
        %v3242 = vadd.f32 0.0, %v3241
        %v3243 = vpop.f32.mrb[0].mxu0
        %v3244 = vpop.f32.mrb[0].mxu0
        %v3245 = vadd.f32 0.0, %v3244
        %v3246 = vpop.f32.mrb[0].mxu0
        %3247 = vmatprep.mubr.bf16.mxu0 0
        %3248 = vmatmul.mubr.bf16.gmra.mrb[0].mxu0 %v3012
        %v3249 = vpop.f32.mrb[0].mxu0
        %v3250 = vadd.f32 0.0, %v3249
        %v3251 = vpop.f32.mrb[0].mxu0
        %v3252 = vpop.f32.mrb[0].mxu0
        %v3253 = vadd.f32 0.0, %v3252
        %v3254 = vpop.f32.mrb[0].mxu0
        %3255 = vmatprep.mubr.bf16.mxu0 0
        %3256 = vmatmul.mubr.bf16.gmra.mrb[0].mxu0 %v3013
        %v3257 = vpop.f32.mrb[0].mxu0
        %v3258 = vadd.f32 0.0, %v3257
        %v3259 = vpop.f32.mrb[0].mxu0
        %v3260 = vpop.f32.mrb[0].mxu0
        %v3261 = vadd.f32 0.0, %v3260
        %v3262 = vpop.f32.mrb[0].mxu0
        %3263 = vmatprep.mubr.bf16.mxu0 0
        %3264 = vmatmul.mubr.bf16.gmra.mrb[0].mxu0 %v3014
        %v3265 = vpop.f32.mrb[0].mxu0
        %v3266 = vadd.f32 0.0, %v3265
        %v3267 = vpop.f32.mrb[0].mxu0
        %v3268 = vpop.f32.mrb[0].mxu0
        %v3269 = vadd.f32 0.0, %v3268
        %v3270 = vpop.f32.mrb[0].mxu0
        %3271 = vmatprep.mubr.bf16.mxu0 0
        %3272 = vmatmul.mubr.bf16.gmra.mrb[0].mxu0 %v3015
        %v3273 = vpop.f32.mrb[0].mxu0
        %v3274 = vadd.f32 0.0, %v3273
        %v3275 = vpop.f32.mrb[0].mxu0
        %v3276 = vpop.f32.mrb[0].mxu0
        %v3277 = vadd.f32 0.0, %v3276
        %v3278 = vpop.f32.mrb[0].mxu0
        %3279 = vmatprep.mubr.bf16.mxu0 0
        %3280 = vmatmul.mubr.bf16.gmra.mrb[0].mxu0 %v3016
        %v3281 = vpop.f32.mrb[0].mxu0
        %v3282 = vadd.f32 0.0, %v3281
        %v3283 = vpop.f32.mrb[0].mxu0
        %v3284 = vpop.f32.mrb[0].mxu0
        %v3285 = vadd.f32 0.0, %v3284
        %v3286 = vpop.f32.mrb[0].mxu0
        %3287 = vmatprep.mubr.bf16.mxu0 0
        %3288 = vmatmul.mubr.bf16.gmra.mrb[0].mxu0 %v3017
        %v3289 = vpop.f32.mrb[0].mxu0
        %v3290 = vadd.f32 0.0, %v3289
        %v3291 = vpop.f32.mrb[0].mxu0
        %v3292 = vpop.f32.mrb[0].mxu0
        %v3293 = vadd.f32 0.0, %v3292
        %v3294 = vpop.f32.mrb[0].mxu0
        %3295 = vmatprep.mubr.bf16.mxu0 0
        %3296 = vmatmul.mubr.bf16.gmra.mrb[0].mxu0 %v3018
        %v3297 = vpop.f32.mrb[0].mxu0
        %v3298 = vadd.f32 0.0, %v3297
        %v3299 = vpop.f32.mrb[0].mxu0
        %v3300 = vpop.f32.mrb[0].mxu0
        %v3301 = vadd.f32 0.0, %v3300
        %v3302 = vpop.f32.mrb[0].mxu0
        %3303 = vmatprep.mubr.bf16.mxu0 0
        %3304 = vmatmul.mubr.bf16.gmra.mrb[0].mxu0 %v3019
        %v3305 = vpop.f32.mrb[0].mxu0
        %v3306 = vadd.f32 0.0, %v3305
        %v3307 = vpop.f32.mrb[0].mxu0
        %v3308 = vpop.f32.mrb[0].mxu0
        %v3309 = vadd.f32 0.0, %v3308
        %v3310 = vpop.f32.mrb[0].mxu0
        %3311 = vmatprep.mubr.bf16.mxu0 0
        %3312 = vmatmul.mubr.bf16.gmra.mrb[0].mxu0 %v3020
        %v3313 = vpop.f32.mrb[0].mxu0
        %v3314 = vadd.f32 0.0, %v3313
        %v3315 = vpop.f32.mrb[0].mxu0
        %v3316 = vpop.f32.mrb[0].mxu0
        %v3317 = vadd.f32 0.0, %v3316
        %v3318 = vpop.f32.mrb[0].mxu0
        %3319 = vmatprep.mubr.bf16.mxu0 0
        %3320 = vmatmul.mubr.bf16.gmra.mrb[0].mxu0 %v3021
        %v3321 = vpop.f32.mrb[0].mxu0
        %v3322 = vadd.f32 0.0, %v3321
        %v3323 = vpop.f32.mrb[0].mxu0
        %v3324 = vpop.f32.mrb[0].mxu0
        %v3325 = vadd.f32 0.0, %v3324
        %v3326 = vpop.f32.mrb[0].mxu0
        %3327 = vmatprep.mubr.bf16.mxu0 0
        %3328 = vmatmul.mubr.bf16.gmra.mrb[0].mxu0 %v3022
        %v3329 = vpop.f32.mrb[0].mxu0
        %v3330 = vadd.f32 0.0, %v3329
        %v3331 = vpop.f32.mrb[0].mxu0
        %v3332 = vpop.f32.mrb[0].mxu0
        %v3333 = vadd.f32 0.0, %v3332
        %v3334 = vpop.f32.mrb[0].mxu0
        %3335 = vmatprep.mubr.bf16.mxu0 0
        %3336 = vmatmul.mubr.bf16.gmra.mrb[0].mxu0 %v3023
        %v3337 = vpop.f32.mrb[0].mxu0
        %v3338 = vadd.f32 0.0, %v3337
        %v3339 = vpop.f32.mrb[0].mxu0
        %v3340 = vpop.f32.mrb[0].mxu0
        %v3341 = vadd.f32 0.0, %v3340
        %v3342 = vpop.f32.mrb[0].mxu0
        %3343 = vmatprep.mubr.bf16.mxu0 0
        %3344 = vmatmul.mubr.bf16.gmra.mrb[0].mxu0 %v3024
        %v3345 = vpop.f32.mrb[0].mxu0
        %v3346 = vadd.f32 0.0, %v3345
        %v3347 = vpop.f32.mrb[0].mxu0
        %v3348 = vpop.f32.mrb[0].mxu0
        %v3349 = vadd.f32 0.0, %v3348
        %v3350 = vpop.f32.mrb[0].mxu0
        %3351 = vmatprep.mubr.bf16.mxu0 0
        %3352 = vmatmul.mubr.bf16.gmra.mrb[0].mxu0 %v3025
        %v3353 = vpop.f32.mrb[0].mxu0
        %v3354 = vadd.f32 0.0, %v3353
        %v3355 = vpop.f32.mrb[0].mxu0
        %v3356 = vpop.f32.mrb[0].mxu0
        %v3357 = vadd.f32 0.0, %v3356
        %v3358 = vpop.f32.mrb[0].mxu0
        %3359 = vmatprep.mubr.bf16.mxu0 0
        %3360 = vmatmul.mubr.bf16.gmra.mrb[0].mxu0 %v3026
        %v3361 = vpop.f32.mrb[0].mxu0
        %v3362 = vadd.f32 0.0, %v3361
        %v3363 = vpop.f32.mrb[0].mxu0
        %v3364 = vpop.f32.mrb[0].mxu0
        %v3365 = vadd.f32 0.0, %v3364
        %v3366 = vpop.f32.mrb[0].mxu0
        %3367 = vmatprep.mubr.bf16.mxu0 0
        %3368 = vmatmul.mubr.bf16.gmra.mrb[0].mxu0 %v3027
        %v3369 = vpop.f32.mrb[0].mxu0
        %v3370 = vadd.f32 0.0, %v3369
        %v3371 = vpop.f32.mrb[0].mxu0
        %v3372 = vpop.f32.mrb[0].mxu0
        %v3373 = vadd.f32 0.0, %v3372
        %v3374 = vpop.f32.mrb[0].mxu0
        %3375 = vmatprep.mubr.bf16.mxu0 0
        %3376 = vmatmul.mubr.bf16.gmra.mrb[0].mxu0 %v3028
        %v3377 = vpop.f32.mrb[0].mxu0
        %v3378 = vadd.f32 0.0, %v3377
        %v3379 = vpop.f32.mrb[0].mxu0
        %v3380 = vpop.f32.mrb[0].mxu0
        %v3381 = vadd.f32 0.0, %v3380
        %v3382 = vpop.f32.mrb[0].mxu0
        %3383 = vmatprep.mubr.bf16.mxu0 0
        %3384 = vmatmul.mubr.bf16.gmra.mrb[0].mxu0 %v3029
        %v3385 = vpop.f32.mrb[0].mxu0
        %v3386 = vadd.f32 0.0, %v3385
        %v3387 = vpop.f32.mrb[0].mxu0
        %v3388 = vpop.f32.mrb[0].mxu0
        %v3389 = vadd.f32 0.0, %v3388
        %v3390 = vpop.f32.mrb[0].mxu0
        %3391 = vmatprep.mubr.bf16.mxu0 0
        %3392 = vmatmul.mubr.bf16.gmra.mrb[0].mxu0 %v3030
        %v3393 = vpop.f32.mrb[0].mxu0
        %v3394 = vadd.f32 0.0, %v3393
        %v3395 = vpop.f32.mrb[0].mxu0
        %v3396 = vpop.f32.mrb[0].mxu0
        %v3397 = vadd.f32 0.0, %v3396
        %v3398 = vpop.f32.mrb[0].mxu0
        %3399 = vdwg.mxu0
        %v3400 = vadd.f32 %v2723, %v3146
        %v3401 = vadd.f32 %v2724, %v3149
        %v3402 = vadd.f32 %v2725, %v3154
        %v3403 = vadd.f32 %v2726, %v3157
        %v3404 = vadd.f32 %v2727, %v3162
        %v3405 = vadd.f32 %v2728, %v3165
        %v3406 = vadd.f32 %v2729, %v3170
        %v3407 = vadd.f32 %v2730, %v3173
        %v3408 = vadd.f32 %v2731, %v3178
        %v3409 = vadd.f32 %v2732, %v3181
        %v3410 = vadd.f32 %v2733, %v3186
        %v3411 = vadd.f32 %v2734, %v3189
        %v3412 = vadd.f32 %v2735, %v3194
        %v3413 = vadd.f32 %v2736, %v3197
        %v3414 = vadd.f32 %v2737, %v3202
        %v3415 = vadd.f32 %v2738, %v3205
        %v3416 = vadd.f32 %v2739, %v3210
        %v3417 = vadd.f32 %v2740, %v3213
        %v3418 = vadd.f32 %v2741, %v3218
        %v3419 = vadd.f32 %v2742, %v3221
        %v3420 = vadd.f32 %v2743, %v3226
        %v3421 = vadd.f32 %v2744, %v3229
        %v3422 = vadd.f32 %v2745, %v3234
        %v3423 = vadd.f32 %v2746, %v3237
        %v3424 = vadd.f32 %v2747, %v3242
        %v3425 = vadd.f32 %v2748, %v3245
        %v3426 = vadd.f32 %v2749, %v3250
        %v3427 = vadd.f32 %v2750, %v3253
        %v3428 = vadd.f32 %v2751, %v3258
        %v3429 = vadd.f32 %v2752, %v3261
        %v3430 = vadd.f32 %v2753, %v3266
        %v3431 = vadd.f32 %v2754, %v3269
        %v3432 = vadd.f32 %v2755, %v3274
        %v3433 = vadd.f32 %v2756, %v3277
        %v3434 = vadd.f32 %v2757, %v3282
        %v3435 = vadd.f32 %v2758, %v3285
        %v3436 = vadd.f32 %v2759, %v3290
        %v3437 = vadd.f32 %v2760, %v3293
        %v3438 = vadd.f32 %v2761, %v3298
        %v3439 = vadd.f32 %v2762, %v3301
        %v3440 = vadd.f32 %v2763, %v3306
        %v3441 = vadd.f32 %v2764, %v3309
        %v3442 = vadd.f32 %v2765, %v3314
        %v3443 = vadd.f32 %v2766, %v3317
        %v3444 = vadd.f32 %v2767, %v3322
        %v3445 = vadd.f32 %v2768, %v3325
        %v3446 = vadd.f32 %v2769, %v3330
        %v3447 = vadd.f32 %v2770, %v3333
        %v3448 = vadd.f32 %v2771, %v3338
        %v3449 = vadd.f32 %v2772, %v3341
        %v3450 = vadd.f32 %v2773, %v3346
        %v3451 = vadd.f32 %v2774, %v3349
        %v3452 = vadd.f32 %v2775, %v3354
        %v3453 = vadd.f32 %v2776, %v3357
        %v3454 = vadd.f32 %v2777, %v3362
        %v3455 = vadd.f32 %v2778, %v3365
        %v3456 = vadd.f32 %v2779, %v3370
        %v3457 = vadd.f32 %v2780, %v3373
        %v3458 = vadd.f32 %v2781, %v3378
        %v3459 = vadd.f32 %v2782, %v3381
        %v3460 = vadd.f32 %v2783, %v3386
        %v3461 = vadd.f32 %v2784, %v3389
        %v3462 = vadd.f32 %v2785, %v3394
        %v3463 = vadd.f32 %v2786, %v3397
        %v3464 = vld [vmem:[%s2790] sm:$0xf]
        %v3465 = vld [vmem:[%s2790 + $0x4] sm:$0xf]
        %v3466 = vld [vmem:[%s2790 + $0x8] sm:$0xf]
        %v3467 = vld [vmem:[%s2790 + $0xc] sm:$0xf]
        %v3468 = vld [vmem:[%s2790 + $0x10] sm:$0xf]
        %v3469 = vld [vmem:[%s2790 + $0x14] sm:$0xf]
        %v3470 = vld [vmem:[%s2790 + $0x18] sm:$0xf]
        %v3471 = vld [vmem:[%s2790 + $0x1c] sm:$0xf]
        %v3472 = vld [vmem:[%s2790 + $0x20] sm:$0x1]
        %v3473 = vld [vmem:[%s2790 + $0x24] sm:$0xf]
        %v3474 = vld [vmem:[%s2790 + $0x28] sm:$0xf]
        %v3475 = vld [vmem:[%s2790 + $0x2c] sm:$0xf]
        %v3476 = vld [vmem:[%s2790 + $0x30] sm:$0xf]
        %v3477 = vld [vmem:[%s2790 + $0x34] sm:$0xf]
        %v3478 = vld [vmem:[%s2790 + $0x38] sm:$0xf]
        %v3479 = vld [vmem:[%s2790 + $0x3c] sm:$0xf]
        %v3480 = vld [vmem:[%s2790 + $0x40] sm:$0xf]
        %v3481 = vld [vmem:[%s2790 + $0x44] sm:$0x1]
        %v3482 = vld [vmem:[%s2790 + $0x48] sm:$0xf]
        %v3483 = vld [vmem:[%s2790 + $0x4c] sm:$0xf]
        %v3484 = vld [vmem:[%s2790 + $0x50] sm:$0xf]
        %v3485 = vld [vmem:[%s2790 + $0x54] sm:$0xf]
        %v3486 = vld [vmem:[%s2790 + $0x58] sm:$0xf]
        %v3487 = vld [vmem:[%s2790 + $0x5c] sm:$0xf]
        %v3488 = vld [vmem:[%s2790 + $0x60] sm:$0xf]
        %v3489 = vld [vmem:[%s2790 + $0x64] sm:$0xf]
        %v3490 = vld [vmem:[%s2790 + $0x68] sm:$0x1]
        %v3491 = vld [vmem:[%s2790 + $0x6c] sm:$0xf]
        %v3492 = vld [vmem:[%s2790 + $0x70] sm:$0xf]
        %v3493 = vld [vmem:[%s2790 + $0x74] sm:$0xf]
        %v3494 = vld [vmem:[%s2790 + $0x78] sm:$0xf]
        %v3495 = vld [vmem:[%s2790 + $0x7c] sm:$0xf]
        %v3496 = vld [vmem:[%s2790 + $0x80] sm:$0xf]
        %v3497 = vld [vmem:[%s2790 + $0x84] sm:$0xf]
        %v3498 = vld [vmem:[%s2790 + $0x88] sm:$0xf]
        %v3499 = vld [vmem:[%s2790 + $0x8c] sm:$0x1]
        %v3500 = vld [vmem:[%s2790 + $0x90] sm:$0xf]
        %v3501 = vld [vmem:[%s2790 + $0x94] sm:$0xf]
        %v3502 = vld [vmem:[%s2790 + $0x98] sm:$0xf]
        %v3503 = vld [vmem:[%s2790 + $0x9c] sm:$0xf]
        %v3504 = vld [vmem:[%s2790 + $0xa0] sm:$0xf]
        %v3505 = vld [vmem:[%s2790 + $0xa4] sm:$0xf]
        %v3506 = vld [vmem:[%s2790 + $0xa8] sm:$0xf]
        %v3507 = vld [vmem:[%s2790 + $0xac] sm:$0xf]
        %v3508 = vld [vmem:[%s2790 + $0xb0] sm:$0x1]
        %v3509 = vld [vmem:[%s2790 + $0xb4] sm:$0xf]
        %v3510 = vld [vmem:[%s2790 + $0xb8] sm:$0xf]
        %v3511 = vld [vmem:[%s2790 + $0xbc] sm:$0xf]
        %v3512 = vld [vmem:[%s2790 + $0xc0] sm:$0xf]
        %v3513 = vld [vmem:[%s2790 + $0xc4] sm:$0xf]
        %v3514 = vld [vmem:[%s2790 + $0xc8] sm:$0xf]
        %v3515 = vld [vmem:[%s2790 + $0xcc] sm:$0xf]
        %v3516 = vld [vmem:[%s2790 + $0xd0] sm:$0xf]
        %v3517 = vld [vmem:[%s2790 + $0xd4] sm:$0x1]
        %v3518 = vld [vmem:[%s2790 + $0xd8] sm:$0xf]
        %v3519 = vld [vmem:[%s2790 + $0xdc] sm:$0xf]
        %v3520 = vld [vmem:[%s2790 + $0xe0] sm:$0xf]
        %v3521 = vld [vmem:[%s2790 + $0xe4] sm:$0xf]
        %v3522 = vld [vmem:[%s2790 + $0xe8] sm:$0xf]
        %v3523 = vld [vmem:[%s2790 + $0xec] sm:$0xf]
        %v3524 = vld [vmem:[%s2790 + $0xf0] sm:$0xf]
        %v3525 = vld [vmem:[%s2790 + $0xf4] sm:$0xf]
        %v3526 = vld [vmem:[%s2790 + $0xf8] sm:$0x1]
        %v3527 = vld [vmem:[%s2790 + $0xfc] sm:$0xf]
        %v3528 = vld [vmem:[%s2790 + $0x100] sm:$0xf]
        %v3529 = vld [vmem:[%s2790 + $0x104] sm:$0xf]
        %v3530 = vld [vmem:[%s2790 + $0x108] sm:$0xf]
        %v3531 = vld [vmem:[%s2790 + $0x10c] sm:$0xf]
        %v3532 = vld [vmem:[%s2790 + $0x110] sm:$0xf]
        %v3533 = vld [vmem:[%s2790 + $0x114] sm:$0xf]
        %v3534 = vld [vmem:[%s2790 + $0x118] sm:$0xf]
        %v3535 = vld [vmem:[%s2790 + $0x11c] sm:$0x1]
        %v3537 = vshrl.u32 %v3464, 16
        %v3539 = vrot.slane %v3537, 4
        %v3540 = vshll.u32 %v3464, 16
        %v3542 = vrot.slane %v3540, 5
        %v3543 = vor.u32 %v3539, %v3542
        %v3544 = vrot.slane %v3543, 4
        %v3546 = vshll.u32 %v3465, 16
        %v3548 = vrot.slane %v3546, 5
        %v3549 = vsel %vm332, %v3544, %v3548
        %v3550 = vshrl.u32 %v3465, 16
        %v3552 = vrot.slane %v3550, 4
        %v3553 = vor.u32 %v3552, %v3548
        %v3554 = vrot.slane %v3553, 4
        %v3556 = vshll.u32 %v3466, 16
        %v3558 = vrot.slane %v3556, 5
        %v3559 = vsel %vm332, %v3554, %v3558
        %v3560 = vshrl.u32 %v3466, 16
        %v3562 = vrot.slane %v3560, 4
        %v3563 = vor.u32 %v3562, %v3558
        %v3564 = vrot.slane %v3563, 4
        %v3566 = vshll.u32 %v3467, 16
        %v3568 = vrot.slane %v3566, 5
        %v3569 = vsel %vm332, %v3564, %v3568
        %v3570 = vshrl.u32 %v3467, 16
        %v3572 = vrot.slane %v3570, 4
        %v3573 = vor.u32 %v3572, %v3568
        %v3574 = vrot.slane %v3573, 4
        %v3576 = vshll.u32 %v3468, 16
        %v3578 = vrot.slane %v3576, 5
        %v3579 = vsel %vm332, %v3574, %v3578
        %v3580 = vshrl.u32 %v3468, 16
        %v3582 = vrot.slane %v3580, 4
        %v3583 = vor.u32 %v3582, %v3578
        %v3584 = vrot.slane %v3583, 4
        %v3586 = vshll.u32 %v3469, 16
        %v3588 = vrot.slane %v3586, 5
        %v3589 = vsel %vm332, %v3584, %v3588
        %v3590 = vshrl.u32 %v3469, 16
        %v3592 = vrot.slane %v3590, 4
        %v3593 = vor.u32 %v3592, %v3588
        %v3594 = vrot.slane %v3593, 4
        %v3596 = vshll.u32 %v3470, 16
        %v3598 = vrot.slane %v3596, 5
        %v3599 = vsel %vm332, %v3594, %v3598
        %v3600 = vshrl.u32 %v3470, 16
        %v3602 = vrot.slane %v3600, 4
        %v3603 = vor.u32 %v3602, %v3598
        %v3604 = vrot.slane %v3603, 4
        %v3606 = vshll.u32 %v3471, 16
        %v3608 = vrot.slane %v3606, 5
        %v3609 = vsel %vm332, %v3604, %v3608
        %v3610 = vshrl.u32 %v3471, 16
        %v3612 = vrot.slane %v3610, 4
        %v3613 = vor.u32 %v3612, %v3608
        %v3614 = vrot.slane %v3613, 4
        %v3616 = vshll.u32 %v3472, 16
        %v3618 = vrot.slane %v3616, 5
        %v3619 = vsel %vm332, %v3614, %v3618
        %v3621 = vshrl.u32 %v3473, 16
        %v3623 = vrot.slane %v3621, 4
        %v3624 = vshll.u32 %v3473, 16
        %v3626 = vrot.slane %v3624, 5
        %v3627 = vor.u32 %v3623, %v3626
        %v3628 = vrot.slane %v3627, 4
        %v3630 = vshll.u32 %v3474, 16
        %v3632 = vrot.slane %v3630, 5
        %v3633 = vsel %vm332, %v3628, %v3632
        %v3634 = vshrl.u32 %v3474, 16
        %v3636 = vrot.slane %v3634, 4
        %v3637 = vor.u32 %v3636, %v3632
        %v3638 = vrot.slane %v3637, 4
        %v3640 = vshll.u32 %v3475, 16
        %v3642 = vrot.slane %v3640, 5
        %v3643 = vsel %vm332, %v3638, %v3642
        %v3644 = vshrl.u32 %v3475, 16
        %v3646 = vrot.slane %v3644, 4
        %v3647 = vor.u32 %v3646, %v3642
        %v3648 = vrot.slane %v3647, 4
        %v3650 = vshll.u32 %v3476, 16
        %v3652 = vrot.slane %v3650, 5
        %v3653 = vsel %vm332, %v3648, %v3652
        %v3654 = vshrl.u32 %v3476, 16
        %v3656 = vrot.slane %v3654, 4
        %v3657 = vor.u32 %v3656, %v3652
        %v3658 = vrot.slane %v3657, 4
        %v3660 = vshll.u32 %v3477, 16
        %v3662 = vrot.slane %v3660, 5
        %v3663 = vsel %vm332, %v3658, %v3662
        %v3664 = vshrl.u32 %v3477, 16
        %v3666 = vrot.slane %v3664, 4
        %v3667 = vor.u32 %v3666, %v3662
        %v3668 = vrot.slane %v3667, 4
        %v3670 = vshll.u32 %v3478, 16
        %v3672 = vrot.slane %v3670, 5
        %v3673 = vsel %vm332, %v3668, %v3672
        %v3674 = vshrl.u32 %v3478, 16
        %v3676 = vrot.slane %v3674, 4
        %v3677 = vor.u32 %v3676, %v3672
        %v3678 = vrot.slane %v3677, 4
        %v3680 = vshll.u32 %v3479, 16
        %v3682 = vrot.slane %v3680, 5
        %v3683 = vsel %vm332, %v3678, %v3682
        %v3684 = vshrl.u32 %v3479, 16
        %v3686 = vrot.slane %v3684, 4
        %v3687 = vor.u32 %v3686, %v3682
        %v3688 = vrot.slane %v3687, 4
        %v3690 = vshll.u32 %v3480, 16
        %v3692 = vrot.slane %v3690, 5
        %v3693 = vsel %vm332, %v3688, %v3692
        %v3694 = vshrl.u32 %v3480, 16
        %v3696 = vrot.slane %v3694, 4
        %v3697 = vor.u32 %v3696, %v3692
        %v3698 = vrot.slane %v3697, 4
        %v3700 = vshll.u32 %v3481, 16
        %v3702 = vrot.slane %v3700, 5
        %v3703 = vsel %vm332, %v3698, %v3702
        %v3705 = vshrl.u32 %v3482, 16
        %v3707 = vrot.slane %v3705, 4
        %v3708 = vshll.u32 %v3482, 16
        %v3710 = vrot.slane %v3708, 5
        %v3711 = vor.u32 %v3707, %v3710
        %v3712 = vrot.slane %v3711, 4
        %v3714 = vshll.u32 %v3483, 16
        %v3716 = vrot.slane %v3714, 5
        %v3717 = vsel %vm332, %v3712, %v3716
        %v3718 = vshrl.u32 %v3483, 16
        %v3720 = vrot.slane %v3718, 4
        %v3721 = vor.u32 %v3720, %v3716
        %v3722 = vrot.slane %v3721, 4
        %v3724 = vshll.u32 %v3484, 16
        %v3726 = vrot.slane %v3724, 5
        %v3727 = vsel %vm332, %v3722, %v3726
        %v3728 = vshrl.u32 %v3484, 16
        %v3730 = vrot.slane %v3728, 4
        %v3731 = vor.u32 %v3730, %v3726
        %v3732 = vrot.slane %v3731, 4
        %v3734 = vshll.u32 %v3485, 16
        %v3736 = vrot.slane %v3734, 5
        %v3737 = vsel %vm332, %v3732, %v3736
        %v3738 = vshrl.u32 %v3485, 16
        %v3740 = vrot.slane %v3738, 4
        %v3741 = vor.u32 %v3740, %v3736
        %v3742 = vrot.slane %v3741, 4
        %v3744 = vshll.u32 %v3486, 16
        %v3746 = vrot.slane %v3744, 5
        %v3747 = vsel %vm332, %v3742, %v3746
        %v3748 = vshrl.u32 %v3486, 16
        %v3750 = vrot.slane %v3748, 4
        %v3751 = vor.u32 %v3750, %v3746
        %v3752 = vrot.slane %v3751, 4
        %v3754 = vshll.u32 %v3487, 16
        %v3756 = vrot.slane %v3754, 5
        %v3757 = vsel %vm332, %v3752, %v3756
        %v3758 = vshrl.u32 %v3487, 16
        %v3760 = vrot.slane %v3758, 4
        %v3761 = vor.u32 %v3760, %v3756
        %v3762 = vrot.slane %v3761, 4
        %v3764 = vshll.u32 %v3488, 16
        %v3766 = vrot.slane %v3764, 5
        %v3767 = vsel %vm332, %v3762, %v3766
        %v3768 = vshrl.u32 %v3488, 16
        %v3770 = vrot.slane %v3768, 4
        %v3771 = vor.u32 %v3770, %v3766
        %v3772 = vrot.slane %v3771, 4
        %v3774 = vshll.u32 %v3489, 16
        %v3776 = vrot.slane %v3774, 5
        %v3777 = vsel %vm332, %v3772, %v3776
        %v3778 = vshrl.u32 %v3489, 16
        %v3780 = vrot.slane %v3778, 4
        %v3781 = vor.u32 %v3780, %v3776
        %v3782 = vrot.slane %v3781, 4
        %v3784 = vshll.u32 %v3490, 16
        %v3786 = vrot.slane %v3784, 5
        %v3787 = vsel %vm332, %v3782, %v3786
        %v3789 = vshrl.u32 %v3491, 16
        %v3791 = vrot.slane %v3789, 4
        %v3792 = vshll.u32 %v3491, 16
        %v3794 = vrot.slane %v3792, 5
        %v3795 = vor.u32 %v3791, %v3794
        %v3796 = vrot.slane %v3795, 4
        %v3798 = vshll.u32 %v3492, 16
        %v3800 = vrot.slane %v3798, 5
        %v3801 = vsel %vm332, %v3796, %v3800
        %v3802 = vshrl.u32 %v3492, 16
        %v3804 = vrot.slane %v3802, 4
        %v3805 = vor.u32 %v3804, %v3800
        %v3806 = vrot.slane %v3805, 4
        %v3808 = vshll.u32 %v3493, 16
        %v3810 = vrot.slane %v3808, 5
        %v3811 = vsel %vm332, %v3806, %v3810
        %v3812 = vshrl.u32 %v3493, 16
        %v3814 = vrot.slane %v3812, 4
        %v3815 = vor.u32 %v3814, %v3810
        %v3816 = vrot.slane %v3815, 4
        %v3818 = vshll.u32 %v3494, 16
        %v3820 = vrot.slane %v3818, 5
        %v3821 = vsel %vm332, %v3816, %v3820
        %v3822 = vshrl.u32 %v3494, 16
        %v3824 = vrot.slane %v3822, 4
        %v3825 = vor.u32 %v3824, %v3820
        %v3826 = vrot.slane %v3825, 4
        %v3828 = vshll.u32 %v3495, 16
        %v3830 = vrot.slane %v3828, 5
        %v3831 = vsel %vm332, %v3826, %v3830
        %v3832 = vshrl.u32 %v3495, 16
        %v3834 = vrot.slane %v3832, 4
        %v3835 = vor.u32 %v3834, %v3830
        %v3836 = vrot.slane %v3835, 4
        %v3838 = vshll.u32 %v3496, 16
        %v3840 = vrot.slane %v3838, 5
        %v3841 = vsel %vm332, %v3836, %v3840
        %v3842 = vshrl.u32 %v3496, 16
        %v3844 = vrot.slane %v3842, 4
        %v3845 = vor.u32 %v3844, %v3840
        %v3846 = vrot.slane %v3845, 4
        %v3848 = vshll.u32 %v3497, 16
        %v3850 = vrot.slane %v3848, 5
        %v3851 = vsel %vm332, %v3846, %v3850
        %v3852 = vshrl.u32 %v3497, 16
        %v3854 = vrot.slane %v3852, 4
        %v3855 = vor.u32 %v3854, %v3850
        %v3856 = vrot.slane %v3855, 4
        %v3858 = vshll.u32 %v3498, 16
        %v3860 = vrot.slane %v3858, 5
        %v3861 = vsel %vm332, %v3856, %v3860
        %v3862 = vshrl.u32 %v3498, 16
        %v3864 = vrot.slane %v3862, 4
        %v3865 = vor.u32 %v3864, %v3860
        %v3866 = vrot.slane %v3865, 4
        %v3868 = vshll.u32 %v3499, 16
        %v3870 = vrot.slane %v3868, 5
        %v3871 = vsel %vm332, %v3866, %v3870
        %v3873 = vshrl.u32 %v3500, 16
        %v3875 = vrot.slane %v3873, 4
        %v3876 = vshll.u32 %v3500, 16
        %v3878 = vrot.slane %v3876, 5
        %v3879 = vor.u32 %v3875, %v3878
        %v3880 = vrot.slane %v3879, 4
        %v3882 = vshll.u32 %v3501, 16
        %v3884 = vrot.slane %v3882, 5
        %v3885 = vsel %vm332, %v3880, %v3884
        %v3886 = vshrl.u32 %v3501, 16
        %v3888 = vrot.slane %v3886, 4
        %v3889 = vor.u32 %v3888, %v3884
        %v3890 = vrot.slane %v3889, 4
        %v3892 = vshll.u32 %v3502, 16
        %v3894 = vrot.slane %v3892, 5
        %v3895 = vsel %vm332, %v3890, %v3894
        %v3896 = vshrl.u32 %v3502, 16
        %v3898 = vrot.slane %v3896, 4
        %v3899 = vor.u32 %v3898, %v3894
        %v3900 = vrot.slane %v3899, 4
        %v3902 = vshll.u32 %v3503, 16
        %v3904 = vrot.slane %v3902, 5
        %v3905 = vsel %vm332, %v3900, %v3904
        %v3906 = vshrl.u32 %v3503, 16
        %v3908 = vrot.slane %v3906, 4
        %v3909 = vor.u32 %v3908, %v3904
        %v3910 = vrot.slane %v3909, 4
        %v3912 = vshll.u32 %v3504, 16
        %v3914 = vrot.slane %v3912, 5
        %v3915 = vsel %vm332, %v3910, %v3914
        %v3916 = vshrl.u32 %v3504, 16
        %v3918 = vrot.slane %v3916, 4
        %v3919 = vor.u32 %v3918, %v3914
        %v3920 = vrot.slane %v3919, 4
        %v3922 = vshll.u32 %v3505, 16
        %v3924 = vrot.slane %v3922, 5
        %v3925 = vsel %vm332, %v3920, %v3924
        %v3926 = vshrl.u32 %v3505, 16
        %v3928 = vrot.slane %v3926, 4
        %v3929 = vor.u32 %v3928, %v3924
        %v3930 = vrot.slane %v3929, 4
        %v3932 = vshll.u32 %v3506, 16
        %v3934 = vrot.slane %v3932, 5
        %v3935 = vsel %vm332, %v3930, %v3934
        %v3936 = vshrl.u32 %v3506, 16
        %v3938 = vrot.slane %v3936, 4
        %v3939 = vor.u32 %v3938, %v3934
        %v3940 = vrot.slane %v3939, 4
        %v3942 = vshll.u32 %v3507, 16
        %v3944 = vrot.slane %v3942, 5
        %v3945 = vsel %vm332, %v3940, %v3944
        %v3946 = vshrl.u32 %v3507, 16
        %v3948 = vrot.slane %v3946, 4
        %v3949 = vor.u32 %v3948, %v3944
        %v3950 = vrot.slane %v3949, 4
        %v3952 = vshll.u32 %v3508, 16
        %v3954 = vrot.slane %v3952, 5
        %v3955 = vsel %vm332, %v3950, %v3954
        %v3957 = vshrl.u32 %v3509, 16
        %v3959 = vrot.slane %v3957, 4
        %v3960 = vshll.u32 %v3509, 16
        %v3962 = vrot.slane %v3960, 5
        %v3963 = vor.u32 %v3959, %v3962
        %v3964 = vrot.slane %v3963, 4
        %v3966 = vshll.u32 %v3510, 16
        %v3968 = vrot.slane %v3966, 5
        %v3969 = vsel %vm332, %v3964, %v3968
        %v3970 = vshrl.u32 %v3510, 16
        %v3972 = vrot.slane %v3970, 4
        %v3973 = vor.u32 %v3972, %v3968
        %v3974 = vrot.slane %v3973, 4
        %v3976 = vshll.u32 %v3511, 16
        %v3978 = vrot.slane %v3976, 5
        %v3979 = vsel %vm332, %v3974, %v3978
        %v3980 = vshrl.u32 %v3511, 16
        %v3982 = vrot.slane %v3980, 4
        %v3983 = vor.u32 %v3982, %v3978
        %v3984 = vrot.slane %v3983, 4
        %v3986 = vshll.u32 %v3512, 16
        %v3988 = vrot.slane %v3986, 5
        %v3989 = vsel %vm332, %v3984, %v3988
        %v3990 = vshrl.u32 %v3512, 16
        %v3992 = vrot.slane %v3990, 4
        %v3993 = vor.u32 %v3992, %v3988
        %v3994 = vrot.slane %v3993, 4
        %v3996 = vshll.u32 %v3513, 16
        %v3998 = vrot.slane %v3996, 5
        %v3999 = vsel %vm332, %v3994, %v3998
        %v4000 = vshrl.u32 %v3513, 16
        %v4002 = vrot.slane %v4000, 4
        %v4003 = vor.u32 %v4002, %v3998
        %v4004 = vrot.slane %v4003, 4
        %v4006 = vshll.u32 %v3514, 16
        %v4008 = vrot.slane %v4006, 5
        %v4009 = vsel %vm332, %v4004, %v4008
        %v4010 = vshrl.u32 %v3514, 16
        %v4012 = vrot.slane %v4010, 4
        %v4013 = vor.u32 %v4012, %v4008
        %v4014 = vrot.slane %v4013, 4
        %v4016 = vshll.u32 %v3515, 16
        %v4018 = vrot.slane %v4016, 5
        %v4019 = vsel %vm332, %v4014, %v4018
        %v4020 = vshrl.u32 %v3515, 16
        %v4022 = vrot.slane %v4020, 4
        %v4023 = vor.u32 %v4022, %v4018
        %v4024 = vrot.slane %v4023, 4
        %v4026 = vshll.u32 %v3516, 16
        %v4028 = vrot.slane %v4026, 5
        %v4029 = vsel %vm332, %v4024, %v4028
        %v4030 = vshrl.u32 %v3516, 16
        %v4032 = vrot.slane %v4030, 4
        %v4033 = vor.u32 %v4032, %v4028
        %v4034 = vrot.slane %v4033, 4
        %v4036 = vshll.u32 %v3517, 16
        %v4038 = vrot.slane %v4036, 5
        %v4039 = vsel %vm332, %v4034, %v4038
        %v4041 = vshrl.u32 %v3518, 16
        %v4043 = vrot.slane %v4041, 4
        %v4044 = vshll.u32 %v3518, 16
        %v4046 = vrot.slane %v4044, 5
        %v4047 = vor.u32 %v4043, %v4046
        %v4048 = vrot.slane %v4047, 4
        %v4050 = vshll.u32 %v3519, 16
        %v4052 = vrot.slane %v4050, 5
        %v4053 = vsel %vm332, %v4048, %v4052
        %v4054 = vshrl.u32 %v3519, 16
        %v4056 = vrot.slane %v4054, 4
        %v4057 = vor.u32 %v4056, %v4052
        %v4058 = vrot.slane %v4057, 4
        %v4060 = vshll.u32 %v3520, 16
        %v4062 = vrot.slane %v4060, 5
        %v4063 = vsel %vm332, %v4058, %v4062
        %v4064 = vshrl.u32 %v3520, 16
        %v4066 = vrot.slane %v4064, 4
        %v4067 = vor.u32 %v4066, %v4062
        %v4068 = vrot.slane %v4067, 4
        %v4070 = vshll.u32 %v3521, 16
        %v4072 = vrot.slane %v4070, 5
        %v4073 = vsel %vm332, %v4068, %v4072
        %v4074 = vshrl.u32 %v3521, 16
        %v4076 = vrot.slane %v4074, 4
        %v4077 = vor.u32 %v4076, %v4072
        %v4078 = vrot.slane %v4077, 4
        %v4080 = vshll.u32 %v3522, 16
        %v4082 = vrot.slane %v4080, 5
        %v4083 = vsel %vm332, %v4078, %v4082
        %v4084 = vshrl.u32 %v3522, 16
        %v4086 = vrot.slane %v4084, 4
        %v4087 = vor.u32 %v4086, %v4082
        %v4088 = vrot.slane %v4087, 4
        %v4090 = vshll.u32 %v3523, 16
        %v4092 = vrot.slane %v4090, 5
        %v4093 = vsel %vm332, %v4088, %v4092
        %v4094 = vshrl.u32 %v3523, 16
        %v4096 = vrot.slane %v4094, 4
        %v4097 = vor.u32 %v4096, %v4092
        %v4098 = vrot.slane %v4097, 4
        %v4100 = vshll.u32 %v3524, 16
        %v4102 = vrot.slane %v4100, 5
        %v4103 = vsel %vm332, %v4098, %v4102
        %v4104 = vshrl.u32 %v3524, 16
        %v4106 = vrot.slane %v4104, 4
        %v4107 = vor.u32 %v4106, %v4102
        %v4108 = vrot.slane %v4107, 4
        %v4110 = vshll.u32 %v3525, 16
        %v4112 = vrot.slane %v4110, 5
        %v4113 = vsel %vm332, %v4108, %v4112
        %v4114 = vshrl.u32 %v3525, 16
        %v4116 = vrot.slane %v4114, 4
        %v4117 = vor.u32 %v4116, %v4112
        %v4118 = vrot.slane %v4117, 4
        %v4120 = vshll.u32 %v3526, 16
        %v4122 = vrot.slane %v4120, 5
        %v4123 = vsel %vm332, %v4118, %v4122
        %v4125 = vshrl.u32 %v3527, 16
        %v4127 = vrot.slane %v4125, 4
        %v4128 = vshll.u32 %v3527, 16
        %v4130 = vrot.slane %v4128, 5
        %v4131 = vor.u32 %v4127, %v4130
        %v4132 = vrot.slane %v4131, 4
        %v4134 = vshll.u32 %v3528, 16
        %v4136 = vrot.slane %v4134, 5
        %v4137 = vsel %vm332, %v4132, %v4136
        %v4138 = vshrl.u32 %v3528, 16
        %v4140 = vrot.slane %v4138, 4
        %v4141 = vor.u32 %v4140, %v4136
        %v4142 = vrot.slane %v4141, 4
        %v4144 = vshll.u32 %v3529, 16
        %v4146 = vrot.slane %v4144, 5
        %v4147 = vsel %vm332, %v4142, %v4146
        %v4148 = vshrl.u32 %v3529, 16
        %v4150 = vrot.slane %v4148, 4
        %v4151 = vor.u32 %v4150, %v4146
        %v4152 = vrot.slane %v4151, 4
        %v4154 = vshll.u32 %v3530, 16
        %v4156 = vrot.slane %v4154, 5
        %v4157 = vsel %vm332, %v4152, %v4156
        %v4158 = vshrl.u32 %v3530, 16
        %v4160 = vrot.slane %v4158, 4
        %v4161 = vor.u32 %v4160, %v4156
        %v4162 = vrot.slane %v4161, 4
        %v4164 = vshll.u32 %v3531, 16
        %v4166 = vrot.slane %v4164, 5
        %v4167 = vsel %vm332, %v4162, %v4166
        %v4168 = vshrl.u32 %v3531, 16
        %v4170 = vrot.slane %v4168, 4
        %v4171 = vor.u32 %v4170, %v4166
        %v4172 = vrot.slane %v4171, 4
        %v4174 = vshll.u32 %v3532, 16
        %v4176 = vrot.slane %v4174, 5
        %v4177 = vsel %vm332, %v4172, %v4176
        %v4178 = vshrl.u32 %v3532, 16
        %v4180 = vrot.slane %v4178, 4
        %v4181 = vor.u32 %v4180, %v4176
        %v4182 = vrot.slane %v4181, 4
        %v4184 = vshll.u32 %v3533, 16
        %v4186 = vrot.slane %v4184, 5
        %v4187 = vsel %vm332, %v4182, %v4186
        %v4188 = vshrl.u32 %v3533, 16
        %v4190 = vrot.slane %v4188, 4
        %v4191 = vor.u32 %v4190, %v4186
        %v4192 = vrot.slane %v4191, 4
        %v4194 = vshll.u32 %v3534, 16
        %v4196 = vrot.slane %v4194, 5
        %v4197 = vsel %vm332, %v4192, %v4196
        %v4198 = vshrl.u32 %v3534, 16
        %v4200 = vrot.slane %v4198, 4
        %v4201 = vor.u32 %v4200, %v4196
        %v4202 = vrot.slane %v4201, 4
        %v4204 = vshll.u32 %v3535, 16
        %v4206 = vrot.slane %v4204, 5
        %v4207 = vsel %vm332, %v4202, %v4206
        %v4208 = vld [vmem:[#allocation5 + $0x100] sm:$0xf]
        %v4209 = vld [vmem:[#allocation5 + $0x104] sm:$0xf]
        %v4210 = vld [vmem:[#allocation5 + $0x108] sm:$0xf]
        %v4211 = vld [vmem:[#allocation5 + $0x10c] sm:$0xf]
        %v4212 = vld [vmem:[#allocation5 + $0x110] sm:$0xf]
        %v4213 = vld [vmem:[#allocation5 + $0x114] sm:$0xf]
        %v4214 = vld [vmem:[#allocation5 + $0x118] sm:$0xf]
        %v4215 = vld [vmem:[#allocation5 + $0x11c] sm:$0xf]
        %v4216 = vld [vmem:[#allocation5 + $0x120] sm:$0xf]
        %v4217 = vld [vmem:[#allocation5 + $0x124] sm:$0xf]
        %v4218 = vld [vmem:[#allocation5 + $0x128] sm:$0xf]
        %v4219 = vld [vmem:[#allocation5 + $0x12c] sm:$0xf]
        %v4220 = vld [vmem:[#allocation5 + $0x130] sm:$0xf]
        %v4221 = vld [vmem:[#allocation5 + $0x134] sm:$0xf]
        %v4222 = vld [vmem:[#allocation5 + $0x138] sm:$0xf]
        %v4223 = vld [vmem:[#allocation5 + $0x13c] sm:$0xf]
        %v4224 = vunpack.c.l.b16 %v3549
        %v4225 = vunpack.c.l.b16 %v3559
        %v4226 = vunpack.c.l.b16 %v3569
        %v4227 = vunpack.c.l.b16 %v3579
        %v4228 = vunpack.c.l.b16 %v3589
        %v4229 = vunpack.c.l.b16 %v3599
        %v4230 = vunpack.c.l.b16 %v3609
        %v4231 = vunpack.c.l.b16 %v3619
        %v4232 = vunpack.c.l.b16 %v3633
        %v4233 = vunpack.c.l.b16 %v3643
        %v4234 = vunpack.c.l.b16 %v3653
        %v4235 = vunpack.c.l.b16 %v3663
        %v4236 = vunpack.c.l.b16 %v3673
        %v4237 = vunpack.c.l.b16 %v3683
        %v4238 = vunpack.c.l.b16 %v3693
        %v4239 = vunpack.c.l.b16 %v3703
        %v4240 = vunpack.c.l.b16 %v3717
        %v4241 = vunpack.c.l.b16 %v3727
        %v4242 = vunpack.c.l.b16 %v3737
        %v4243 = vunpack.c.l.b16 %v3747
        %v4244 = vunpack.c.l.b16 %v3757
        %v4245 = vunpack.c.l.b16 %v3767
        %v4246 = vunpack.c.l.b16 %v3777
        %v4247 = vunpack.c.l.b16 %v3787
        %v4248 = vunpack.c.l.b16 %v3801
        %v4249 = vunpack.c.l.b16 %v3811
        %v4250 = vunpack.c.l.b16 %v3821
        %v4251 = vunpack.c.l.b16 %v3831
        %v4252 = vunpack.c.l.b16 %v3841
        %v4253 = vunpack.c.l.b16 %v3851
        %v4254 = vunpack.c.l.b16 %v3861
        %v4255 = vunpack.c.l.b16 %v3871
        %v4256 = vunpack.c.l.b16 %v3885
        %v4257 = vunpack.c.l.b16 %v3895
        %v4258 = vunpack.c.l.b16 %v3905
        %v4259 = vunpack.c.l.b16 %v3915
        %v4260 = vunpack.c.l.b16 %v3925
        %v4261 = vunpack.c.l.b16 %v3935
        %v4262 = vunpack.c.l.b16 %v3945
        %v4263 = vunpack.c.l.b16 %v3955
        %v4264 = vunpack.c.l.b16 %v3969
        %v4265 = vunpack.c.l.b16 %v3979
        %v4266 = vunpack.c.l.b16 %v3989
        %v4267 = vunpack.c.l.b16 %v3999
        %v4268 = vunpack.c.l.b16 %v4009
        %v4269 = vunpack.c.l.b16 %v4019
        %v4270 = vunpack.c.l.b16 %v4029
        %v4271 = vunpack.c.l.b16 %v4039
        %v4272 = vunpack.c.l.b16 %v4053
        %v4273 = vunpack.c.l.b16 %v4063
        %v4274 = vunpack.c.l.b16 %v4073
        %v4275 = vunpack.c.l.b16 %v4083
        %v4276 = vunpack.c.l.b16 %v4093
        %v4277 = vunpack.c.l.b16 %v4103
        %v4278 = vunpack.c.l.b16 %v4113
        %v4279 = vunpack.c.l.b16 %v4123
        %v4280 = vunpack.c.l.b16 %v4137
        %v4281 = vunpack.c.l.b16 %v4147
        %v4282 = vunpack.c.l.b16 %v4157
        %v4283 = vunpack.c.l.b16 %v4167
        %v4284 = vunpack.c.l.b16 %v4177
        %v4285 = vunpack.c.l.b16 %v4187
        %v4286 = vunpack.c.l.b16 %v4197
        %v4287 = vunpack.c.l.b16 %v4207
        %v4288 = vpack.c.b16 %v4225, %v4224
        %v4289 = vpack.c.b16 %v4227, %v4226
        %v4290 = vpack.c.b16 %v4229, %v4228
        %v4291 = vpack.c.b16 %v4231, %v4230
        %v4292 = vpack.c.b16 %v4233, %v4232
        %v4293 = vpack.c.b16 %v4235, %v4234
        %v4294 = vpack.c.b16 %v4237, %v4236
        %v4295 = vpack.c.b16 %v4239, %v4238
        %v4296 = vpack.c.b16 %v4241, %v4240
        %v4297 = vpack.c.b16 %v4243, %v4242
        %v4298 = vpack.c.b16 %v4245, %v4244
        %v4299 = vpack.c.b16 %v4247, %v4246
        %v4300 = vpack.c.b16 %v4249, %v4248
        %v4301 = vpack.c.b16 %v4251, %v4250
        %v4302 = vpack.c.b16 %v4253, %v4252
        %v4303 = vpack.c.b16 %v4255, %v4254
        %v4304 = vpack.c.b16 %v4257, %v4256
        %v4305 = vpack.c.b16 %v4259, %v4258
        %v4306 = vpack.c.b16 %v4261, %v4260
        %v4307 = vpack.c.b16 %v4263, %v4262
        %v4308 = vpack.c.b16 %v4265, %v4264
        %v4309 = vpack.c.b16 %v4267, %v4266
        %v4310 = vpack.c.b16 %v4269, %v4268
        %v4311 = vpack.c.b16 %v4271, %v4270
        %v4312 = vpack.c.b16 %v4273, %v4272
        %v4313 = vpack.c.b16 %v4275, %v4274
        %v4314 = vpack.c.b16 %v4277, %v4276
        %v4315 = vpack.c.b16 %v4279, %v4278
        %v4316 = vpack.c.b16 %v4281, %v4280
        %v4317 = vpack.c.b16 %v4283, %v4282
        %v4318 = vpack.c.b16 %v4285, %v4284
        %v4319 = vpack.c.b16 %v4287, %v4286
        %v4368 = vunpack.c.l.b16 %v4208
        %v4369 = vunpack.c.l.b16 %v4209
        %v4370 = vunpack.c.l.b16 %v4210
        %v4371 = vunpack.c.l.b16 %v4211
        %v4372 = vunpack.c.l.b16 %v4212
        %v4373 = vunpack.c.l.b16 %v4213
        %v4374 = vunpack.c.l.b16 %v4214
        %v4375 = vunpack.c.l.b16 %v4215
        %v4376 = vunpack.c.l.b16 %v4216
        %v4377 = vunpack.c.l.b16 %v4217
        %v4378 = vunpack.c.l.b16 %v4218
        %v4379 = vunpack.c.l.b16 %v4219
        %v4380 = vunpack.c.l.b16 %v4220
        %v4381 = vunpack.c.l.b16 %v4221
        %v4382 = vunpack.c.l.b16 %v4222
        %v4383 = vunpack.c.l.b16 %v4223
        %v4384 = vpack.c.b16 %v4369, %v4368
        %v4385 = vpack.c.b16 %v4371, %v4370
        %v4386 = vpack.c.b16 %v4373, %v4372
        %v4387 = vpack.c.b16 %v4375, %v4374
        %v4388 = vpack.c.b16 %v4377, %v4376
        %v4389 = vpack.c.b16 %v4379, %v4378
        %v4390 = vpack.c.b16 %v4381, %v4380
        %v4391 = vpack.c.b16 %v4383, %v4382
        %4400 = vmatprep.subr.bf16.mxu0 0
        %4401 = vmatpush1.bf16.msra.mxu0 %v4384
        %4402 = vmatprep.subr.bf16.mxu0 0
        %4403 = vmatpush1.bf16.msra.mxu0 %v4385
        %4404 = vmatprep.subr.bf16.mxu0 0
        %4405 = vmatpush1.bf16.msra.mxu0 %v4386
        %4406 = vmatprep.subr.bf16.mxu0 0
        %4407 = vmatpush1.bf16.msra.mxu0 %v4387
        %4408 = vmatprep.subr.bf16.mxu0 0
        %4409 = vmatpush1.bf16.msra.mxu0 %v4388
        %4410 = vmatprep.subr.bf16.mxu0 0
        %4411 = vmatpush1.bf16.msra.mxu0 %v4389
        %4412 = vmatprep.subr.bf16.mxu0 0
        %4413 = vmatpush1.bf16.msra.mxu0 %v4390
        %4414 = vmatprep.subr.bf16.mxu0 0
        %4415 = vmatpush1.bf16.msra.mxu0 %v4391
        %4416 = vmatprep.subr.bf16.mxu0 0
        %4417 = vmatpush1.bf16.msra.mxu0 0
        %4418 = vmatprep.subr.bf16.mxu0 0
        %4419 = vmatpush1.bf16.msra.mxu0 0
        %4420 = vmatprep.subr.bf16.mxu0 0
        %4421 = vmatpush1.bf16.msra.mxu0 0
        %4422 = vmatprep.subr.bf16.mxu0 0
        %4423 = vmatpush1.bf16.msra.mxu0 0
        %4424 = vmatprep.subr.bf16.mxu0 0
        %4425 = vmatpush1.bf16.msra.mxu0 0
        %4426 = vmatprep.subr.bf16.mxu0 0
        %4427 = vmatpush1.bf16.msra.mxu0 0
        %4428 = vmatprep.subr.bf16.mxu0 0
        %4429 = vmatpush1.bf16.msra.mxu0 0
        %4430 = vmatprep.subr.bf16.mxu0 0
        %4431 = vmatpush1.bf16.msra.mxu0 0
        %4432 = vmatprep.mubr.bf16.mxu0 0
        %4433 = vmatmul.mubr.bf16.gmra.mrb[0].mxu0 %v4288
        %v4434 = vpop.f32.mrb[0].mxu0
        %v4435 = vadd.f32 0.0, %v4434
        %v4436 = vpop.f32.mrb[0].mxu0
        %v4437 = vpop.f32.mrb[0].mxu0
        %v4438 = vadd.f32 0.0, %v4437
        %v4439 = vpop.f32.mrb[0].mxu0
        %4440 = vmatprep.mubr.bf16.mxu0 0
        %4441 = vmatmul.mubr.bf16.gmra.mrb[0].mxu0 %v4289
        %v4442 = vpop.f32.mrb[0].mxu0
        %v4443 = vadd.f32 0.0, %v4442
        %v4444 = vpop.f32.mrb[0].mxu0
        %v4445 = vpop.f32.mrb[0].mxu0
        %v4446 = vadd.f32 0.0, %v4445
        %v4447 = vpop.f32.mrb[0].mxu0
        %4448 = vmatprep.mubr.bf16.mxu0 0
        %4449 = vmatmul.mubr.bf16.gmra.mrb[0].mxu0 %v4290
        %v4450 = vpop.f32.mrb[0].mxu0
        %v4451 = vadd.f32 0.0, %v4450
        %v4452 = vpop.f32.mrb[0].mxu0
        %v4453 = vpop.f32.mrb[0].mxu0
        %v4454 = vadd.f32 0.0, %v4453
        %v4455 = vpop.f32.mrb[0].mxu0
        %4456 = vmatprep.mubr.bf16.mxu0 0
        %4457 = vmatmul.mubr.bf16.gmra.mrb[0].mxu0 %v4291
        %v4458 = vpop.f32.mrb[0].mxu0
        %v4459 = vadd.f32 0.0, %v4458
        %v4460 = vpop.f32.mrb[0].mxu0
        %v4461 = vpop.f32.mrb[0].mxu0
        %v4462 = vadd.f32 0.0, %v4461
        %v4463 = vpop.f32.mrb[0].mxu0
        %4464 = vmatprep.mubr.bf16.mxu0 0
        %4465 = vmatmul.mubr.bf16.gmra.mrb[0].mxu0 %v4292
        %v4466 = vpop.f32.mrb[0].mxu0
        %v4467 = vadd.f32 0.0, %v4466
        %v4468 = vpop.f32.mrb[0].mxu0
        %v4469 = vpop.f32.mrb[0].mxu0
        %v4470 = vadd.f32 0.0, %v4469
        %v4471 = vpop.f32.mrb[0].mxu0
        %4472 = vmatprep.mubr.bf16.mxu0 0
        %4473 = vmatmul.mubr.bf16.gmra.mrb[0].mxu0 %v4293
        %v4474 = vpop.f32.mrb[0].mxu0
        %v4475 = vadd.f32 0.0, %v4474
        %v4476 = vpop.f32.mrb[0].mxu0
        %v4477 = vpop.f32.mrb[0].mxu0
        %v4478 = vadd.f32 0.0, %v4477
        %v4479 = vpop.f32.mrb[0].mxu0
        %4480 = vmatprep.mubr.bf16.mxu0 0
        %4481 = vmatmul.mubr.bf16.gmra.mrb[0].mxu0 %v4294
        %v4482 = vpop.f32.mrb[0].mxu0
        %v4483 = vadd.f32 0.0, %v4482
        %v4484 = vpop.f32.mrb[0].mxu0
        %v4485 = vpop.f32.mrb[0].mxu0
        %v4486 = vadd.f32 0.0, %v4485
        %v4487 = vpop.f32.mrb[0].mxu0
        %4488 = vmatprep.mubr.bf16.mxu0 0
        %4489 = vmatmul.mubr.bf16.gmra.mrb[0].mxu0 %v4295
        %v4490 = vpop.f32.mrb[0].mxu0
        %v4491 = vadd.f32 0.0, %v4490
        %v4492 = vpop.f32.mrb[0].mxu0
        %v4493 = vpop.f32.mrb[0].mxu0
        %v4494 = vadd.f32 0.0, %v4493
        %v4495 = vpop.f32.mrb[0].mxu0
        %4496 = vmatprep.mubr.bf16.mxu0 0
        %4497 = vmatmul.mubr.bf16.gmra.mrb[0].mxu0 %v4296
        %v4498 = vpop.f32.mrb[0].mxu0
        %v4499 = vadd.f32 0.0, %v4498
        %v4500 = vpop.f32.mrb[0].mxu0
        %v4501 = vpop.f32.mrb[0].mxu0
        %v4502 = vadd.f32 0.0, %v4501
        %v4503 = vpop.f32.mrb[0].mxu0
        %4504 = vmatprep.mubr.bf16.mxu0 0
        %4505 = vmatmul.mubr.bf16.gmra.mrb[0].mxu0 %v4297
        %v4506 = vpop.f32.mrb[0].mxu0
        %v4507 = vadd.f32 0.0, %v4506
        %v4508 = vpop.f32.mrb[0].mxu0
        %v4509 = vpop.f32.mrb[0].mxu0
        %v4510 = vadd.f32 0.0, %v4509
        %v4511 = vpop.f32.mrb[0].mxu0
        %4512 = vmatprep.mubr.bf16.mxu0 0
        %4513 = vmatmul.mubr.bf16.gmra.mrb[0].mxu0 %v4298
        %v4514 = vpop.f32.mrb[0].mxu0
        %v4515 = vadd.f32 0.0, %v4514
        %v4516 = vpop.f32.mrb[0].mxu0
        %v4517 = vpop.f32.mrb[0].mxu0
        %v4518 = vadd.f32 0.0, %v4517
        %v4519 = vpop.f32.mrb[0].mxu0
        %4520 = vmatprep.mubr.bf16.mxu0 0
        %4521 = vmatmul.mubr.bf16.gmra.mrb[0].mxu0 %v4299
        %v4522 = vpop.f32.mrb[0].mxu0
        %v4523 = vadd.f32 0.0, %v4522
        %v4524 = vpop.f32.mrb[0].mxu0
        %v4525 = vpop.f32.mrb[0].mxu0
        %v4526 = vadd.f32 0.0, %v4525
        %v4527 = vpop.f32.mrb[0].mxu0
        %4528 = vmatprep.mubr.bf16.mxu0 0
        %4529 = vmatmul.mubr.bf16.gmra.mrb[0].mxu0 %v4300
        %v4530 = vpop.f32.mrb[0].mxu0
        %v4531 = vadd.f32 0.0, %v4530
        %v4532 = vpop.f32.mrb[0].mxu0
        %v4533 = vpop.f32.mrb[0].mxu0
        %v4534 = vadd.f32 0.0, %v4533
        %v4535 = vpop.f32.mrb[0].mxu0
        %4536 = vmatprep.mubr.bf16.mxu0 0
        %4537 = vmatmul.mubr.bf16.gmra.mrb[0].mxu0 %v4301
        %v4538 = vpop.f32.mrb[0].mxu0
        %v4539 = vadd.f32 0.0, %v4538
        %v4540 = vpop.f32.mrb[0].mxu0
        %v4541 = vpop.f32.mrb[0].mxu0
        %v4542 = vadd.f32 0.0, %v4541
        %v4543 = vpop.f32.mrb[0].mxu0
        %4544 = vmatprep.mubr.bf16.mxu0 0
        %4545 = vmatmul.mubr.bf16.gmra.mrb[0].mxu0 %v4302
        %v4546 = vpop.f32.mrb[0].mxu0
        %v4547 = vadd.f32 0.0, %v4546
        %v4548 = vpop.f32.mrb[0].mxu0
        %v4549 = vpop.f32.mrb[0].mxu0
        %v4550 = vadd.f32 0.0, %v4549
        %v4551 = vpop.f32.mrb[0].mxu0
        %4552 = vmatprep.mubr.bf16.mxu0 0
        %4553 = vmatmul.mubr.bf16.gmra.mrb[0].mxu0 %v4303
        %v4554 = vpop.f32.mrb[0].mxu0
        %v4555 = vadd.f32 0.0, %v4554
        %v4556 = vpop.f32.mrb[0].mxu0
        %v4557 = vpop.f32.mrb[0].mxu0
        %v4558 = vadd.f32 0.0, %v4557
        %v4559 = vpop.f32.mrb[0].mxu0
        %4560 = vmatprep.mubr.bf16.mxu0 0
        %4561 = vmatmul.mubr.bf16.gmra.mrb[0].mxu0 %v4304
        %v4562 = vpop.f32.mrb[0].mxu0
        %v4563 = vadd.f32 0.0, %v4562
        %v4564 = vpop.f32.mrb[0].mxu0
        %v4565 = vpop.f32.mrb[0].mxu0
        %v4566 = vadd.f32 0.0, %v4565
        %v4567 = vpop.f32.mrb[0].mxu0
        %4568 = vmatprep.mubr.bf16.mxu0 0
        %4569 = vmatmul.mubr.bf16.gmra.mrb[0].mxu0 %v4305
        %v4570 = vpop.f32.mrb[0].mxu0
        %v4571 = vadd.f32 0.0, %v4570
        %v4572 = vpop.f32.mrb[0].mxu0
        %v4573 = vpop.f32.mrb[0].mxu0
        %v4574 = vadd.f32 0.0, %v4573
        %v4575 = vpop.f32.mrb[0].mxu0
        %4576 = vmatprep.mubr.bf16.mxu0 0
        %4577 = vmatmul.mubr.bf16.gmra.mrb[0].mxu0 %v4306
        %v4578 = vpop.f32.mrb[0].mxu0
        %v4579 = vadd.f32 0.0, %v4578
        %v4580 = vpop.f32.mrb[0].mxu0
        %v4581 = vpop.f32.mrb[0].mxu0
        %v4582 = vadd.f32 0.0, %v4581
        %v4583 = vpop.f32.mrb[0].mxu0
        %4584 = vmatprep.mubr.bf16.mxu0 0
        %4585 = vmatmul.mubr.bf16.gmra.mrb[0].mxu0 %v4307
        %v4586 = vpop.f32.mrb[0].mxu0
        %v4587 = vadd.f32 0.0, %v4586
        %v4588 = vpop.f32.mrb[0].mxu0
        %v4589 = vpop.f32.mrb[0].mxu0
        %v4590 = vadd.f32 0.0, %v4589
        %v4591 = vpop.f32.mrb[0].mxu0
        %4592 = vmatprep.mubr.bf16.mxu0 0
        %4593 = vmatmul.mubr.bf16.gmra.mrb[0].mxu0 %v4308
        %v4594 = vpop.f32.mrb[0].mxu0
        %v4595 = vadd.f32 0.0, %v4594
        %v4596 = vpop.f32.mrb[0].mxu0
        %v4597 = vpop.f32.mrb[0].mxu0
        %v4598 = vadd.f32 0.0, %v4597
        %v4599 = vpop.f32.mrb[0].mxu0
        %4600 = vmatprep.mubr.bf16.mxu0 0
        %4601 = vmatmul.mubr.bf16.gmra.mrb[0].mxu0 %v4309
        %v4602 = vpop.f32.mrb[0].mxu0
        %v4603 = vadd.f32 0.0, %v4602
        %v4604 = vpop.f32.mrb[0].mxu0
        %v4605 = vpop.f32.mrb[0].mxu0
        %v4606 = vadd.f32 0.0, %v4605
        %v4607 = vpop.f32.mrb[0].mxu0
        %4608 = vmatprep.mubr.bf16.mxu0 0
        %4609 = vmatmul.mubr.bf16.gmra.mrb[0].mxu0 %v4310
        %v4610 = vpop.f32.mrb[0].mxu0
        %v4611 = vadd.f32 0.0, %v4610
        %v4612 = vpop.f32.mrb[0].mxu0
        %v4613 = vpop.f32.mrb[0].mxu0
        %v4614 = vadd.f32 0.0, %v4613
        %v4615 = vpop.f32.mrb[0].mxu0
        %4616 = vmatprep.mubr.bf16.mxu0 0
        %4617 = vmatmul.mubr.bf16.gmra.mrb[0].mxu0 %v4311
        %v4618 = vpop.f32.mrb[0].mxu0
        %v4619 = vadd.f32 0.0, %v4618
        %v4620 = vpop.f32.mrb[0].mxu0
        %v4621 = vpop.f32.mrb[0].mxu0
        %v4622 = vadd.f32 0.0, %v4621
        %v4623 = vpop.f32.mrb[0].mxu0
        %4624 = vmatprep.mubr.bf16.mxu0 0
        %4625 = vmatmul.mubr.bf16.gmra.mrb[0].mxu0 %v4312
        %v4626 = vpop.f32.mrb[0].mxu0
        %v4627 = vadd.f32 0.0, %v4626
        %v4628 = vpop.f32.mrb[0].mxu0
        %v4629 = vpop.f32.mrb[0].mxu0
        %v4630 = vadd.f32 0.0, %v4629
        %v4631 = vpop.f32.mrb[0].mxu0
        %4632 = vmatprep.mubr.bf16.mxu0 0
        %4633 = vmatmul.mubr.bf16.gmra.mrb[0].mxu0 %v4313
        %v4634 = vpop.f32.mrb[0].mxu0
        %v4635 = vadd.f32 0.0, %v4634
        %v4636 = vpop.f32.mrb[0].mxu0
        %v4637 = vpop.f32.mrb[0].mxu0
        %v4638 = vadd.f32 0.0, %v4637
        %v4639 = vpop.f32.mrb[0].mxu0
        %4640 = vmatprep.mubr.bf16.mxu0 0
        %4641 = vmatmul.mubr.bf16.gmra.mrb[0].mxu0 %v4314
        %v4642 = vpop.f32.mrb[0].mxu0
        %v4643 = vadd.f32 0.0, %v4642
        %v4644 = vpop.f32.mrb[0].mxu0
        %v4645 = vpop.f32.mrb[0].mxu0
        %v4646 = vadd.f32 0.0, %v4645
        %v4647 = vpop.f32.mrb[0].mxu0
        %4648 = vmatprep.mubr.bf16.mxu0 0
        %4649 = vmatmul.mubr.bf16.gmra.mrb[0].mxu0 %v4315
        %v4650 = vpop.f32.mrb[0].mxu0
        %v4651 = vadd.f32 0.0, %v4650
        %v4652 = vpop.f32.mrb[0].mxu0
        %v4653 = vpop.f32.mrb[0].mxu0
        %v4654 = vadd.f32 0.0, %v4653
        %v4655 = vpop.f32.mrb[0].mxu0
        %4656 = vmatprep.mubr.bf16.mxu0 0
        %4657 = vmatmul.mubr.bf16.gmra.mrb[0].mxu0 %v4316
        %v4658 = vpop.f32.mrb[0].mxu0
        %v4659 = vadd.f32 0.0, %v4658
        %v4660 = vpop.f32.mrb[0].mxu0
        %v4661 = vpop.f32.mrb[0].mxu0
        %v4662 = vadd.f32 0.0, %v4661
        %v4663 = vpop.f32.mrb[0].mxu0
        %4664 = vmatprep.mubr.bf16.mxu0 0
        %4665 = vmatmul.mubr.bf16.gmra.mrb[0].mxu0 %v4317
        %v4666 = vpop.f32.mrb[0].mxu0
        %v4667 = vadd.f32 0.0, %v4666
        %v4668 = vpop.f32.mrb[0].mxu0
        %v4669 = vpop.f32.mrb[0].mxu0
        %v4670 = vadd.f32 0.0, %v4669
        %v4671 = vpop.f32.mrb[0].mxu0
        %4672 = vmatprep.mubr.bf16.mxu0 0
        %4673 = vmatmul.mubr.bf16.gmra.mrb[0].mxu0 %v4318
        %v4674 = vpop.f32.mrb[0].mxu0
        %v4675 = vadd.f32 0.0, %v4674
        %v4676 = vpop.f32.mrb[0].mxu0
        %v4677 = vpop.f32.mrb[0].mxu0
        %v4678 = vadd.f32 0.0, %v4677
        %v4679 = vpop.f32.mrb[0].mxu0
        %4680 = vmatprep.mubr.bf16.mxu0 0
        %4681 = vmatmul.mubr.bf16.gmra.mrb[0].mxu0 %v4319
        %v4682 = vpop.f32.mrb[0].mxu0
        %v4683 = vadd.f32 0.0, %v4682
        %v4684 = vpop.f32.mrb[0].mxu0
        %v4685 = vpop.f32.mrb[0].mxu0
        %v4686 = vadd.f32 0.0, %v4685
        %v4687 = vpop.f32.mrb[0].mxu0
        %4688 = vdwg.mxu0
        %v4689 = vadd.f32 %v3400, %v4435
        %v4690 = vadd.f32 %v3401, %v4438
        %v4691 = vadd.f32 %v3402, %v4443
        %v4692 = vadd.f32 %v3403, %v4446
        %v4693 = vadd.f32 %v3404, %v4451
        %v4694 = vadd.f32 %v3405, %v4454
        %v4695 = vadd.f32 %v3406, %v4459
        %v4696 = vadd.f32 %v3407, %v4462
        %v4697 = vadd.f32 %v3408, %v4467
        %v4698 = vadd.f32 %v3409, %v4470
        %v4699 = vadd.f32 %v3410, %v4475
        %v4700 = vadd.f32 %v3411, %v4478
        %v4701 = vadd.f32 %v3412, %v4483
        %v4702 = vadd.f32 %v3413, %v4486
        %v4703 = vadd.f32 %v3414, %v4491
        %v4704 = vadd.f32 %v3415, %v4494
        %v4705 = vadd.f32 %v3416, %v4499
        %v4706 = vadd.f32 %v3417, %v4502
        %v4707 = vadd.f32 %v3418, %v4507
        %v4708 = vadd.f32 %v3419, %v4510
        %v4709 = vadd.f32 %v3420, %v4515
        %v4710 = vadd.f32 %v3421, %v4518
        %v4711 = vadd.f32 %v3422, %v4523
        %v4712 = vadd.f32 %v3423, %v4526
        %v4713 = vadd.f32 %v3424, %v4531
        %v4714 = vadd.f32 %v3425, %v4534
        %v4715 = vadd.f32 %v3426, %v4539
        %v4716 = vadd.f32 %v3427, %v4542
        %v4717 = vadd.f32 %v3428, %v4547
        %v4718 = vadd.f32 %v3429, %v4550
        %v4719 = vadd.f32 %v3430, %v4555
        %v4720 = vadd.f32 %v3431, %v4558
        %v4721 = vadd.f32 %v3432, %v4563
        %v4722 = vadd.f32 %v3433, %v4566
        %v4723 = vadd.f32 %v3434, %v4571
        %v4724 = vadd.f32 %v3435, %v4574
        %v4725 = vadd.f32 %v3436, %v4579
        %v4726 = vadd.f32 %v3437, %v4582
        %v4727 = vadd.f32 %v3438, %v4587
        %v4728 = vadd.f32 %v3439, %v4590
        %v4729 = vadd.f32 %v3440, %v4595
        %v4730 = vadd.f32 %v3441, %v4598
        %v4731 = vadd.f32 %v3442, %v4603
        %v4732 = vadd.f32 %v3443, %v4606
        %v4733 = vadd.f32 %v3444, %v4611
        %v4734 = vadd.f32 %v3445, %v4614
        %v4735 = vadd.f32 %v3446, %v4619
        %v4736 = vadd.f32 %v3447, %v4622
        %v4737 = vadd.f32 %v3448, %v4627
        %v4738 = vadd.f32 %v3449, %v4630
        %v4739 = vadd.f32 %v3450, %v4635
        %v4740 = vadd.f32 %v3451, %v4638
        %v4741 = vadd.f32 %v3452, %v4643
        %v4742 = vadd.f32 %v3453, %v4646
        %v4743 = vadd.f32 %v3454, %v4651
        %v4744 = vadd.f32 %v3455, %v4654
        %v4745 = vadd.f32 %v3456, %v4659
        %v4746 = vadd.f32 %v3457, %v4662
        %v4747 = vadd.f32 %v3458, %v4667
        %v4748 = vadd.f32 %v3459, %v4670
        %v4749 = vadd.f32 %v3460, %v4675
        %v4750 = vadd.f32 %v3461, %v4678
        %v4751 = vadd.f32 %v3462, %v4683
        %v4752 = vadd.f32 %v3463, %v4686
        %v4753 = vld [vmem:[%s2790] sm:$0xe]
        %v4754 = vld [vmem:[%s2790 + $0x24] sm:$0xe]
        %v4755 = vld [vmem:[%s2790 + $0x48] sm:$0xe]
        %v4756 = vld [vmem:[%s2790 + $0x6c] sm:$0xe]
        %v4757 = vld [vmem:[%s2790 + $0x90] sm:$0xe]
        %v4758 = vld [vmem:[%s2790 + $0xb4] sm:$0xe]
        %v4759 = vld [vmem:[%s2790 + $0xd8] sm:$0xe]
        %v4760 = vld [vmem:[%s2790 + $0xfc] sm:$0xe]
        %v4833 = vrot.slane %v4753, 5
        %v4834 = vrot.slane %v4833, 4
        %v4835 = vrot.slane %v3465, 5
        %v4836 = vsel %vm2041, %v4834, %v4835
        %v4837 = vrot.slane %v4835, 4
        %v4838 = vrot.slane %v3466, 5
        %v4839 = vsel %vm2041, %v4837, %v4838
        %v4840 = vrot.slane %v4838, 4
        %v4841 = vrot.slane %v3467, 5
        %v4842 = vsel %vm2041, %v4840, %v4841
        %v4843 = vrot.slane %v4841, 4
        %v4844 = vrot.slane %v3468, 5
        %v4845 = vsel %vm2041, %v4843, %v4844
        %v4846 = vrot.slane %v4844, 4
        %v4847 = vrot.slane %v3469, 5
        %v4848 = vsel %vm2041, %v4846, %v4847
        %v4849 = vrot.slane %v4847, 4
        %v4850 = vrot.slane %v3470, 5
        %v4851 = vsel %vm2041, %v4849, %v4850
        %v4852 = vrot.slane %v4850, 4
        %v4853 = vrot.slane %v3471, 5
        %v4854 = vsel %vm2041, %v4852, %v4853
        %v4855 = vrot.slane %v4853, 4
        %v4856 = vrot.slane %v3472, 5
        %v4857 = vsel %vm2041, %v4855, %v4856
        %v4858 = vrot.slane %v4754, 5
        %v4859 = vrot.slane %v4858, 4
        %v4860 = vrot.slane %v3474, 5
        %v4861 = vsel %vm2041, %v4859, %v4860
        %v4862 = vrot.slane %v4860, 4
        %v4863 = vrot.slane %v3475, 5
        %v4864 = vsel %vm2041, %v4862, %v4863
        %v4865 = vrot.slane %v4863, 4
        %v4866 = vrot.slane %v3476, 5
        %v4867 = vsel %vm2041, %v4865, %v4866
        %v4868 = vrot.slane %v4866, 4
        %v4869 = vrot.slane %v3477, 5
        %v4870 = vsel %vm2041, %v4868, %v4869
        %v4871 = vrot.slane %v4869, 4
        %v4872 = vrot.slane %v3478, 5
        %v4873 = vsel %vm2041, %v4871, %v4872
        %v4874 = vrot.slane %v4872, 4
        %v4875 = vrot.slane %v3479, 5
        %v4876 = vsel %vm2041, %v4874, %v4875
        %v4877 = vrot.slane %v4875, 4
        %v4878 = vrot.slane %v3480, 5
        %v4879 = vsel %vm2041, %v4877, %v4878
        %v4880 = vrot.slane %v4878, 4
        %v4881 = vrot.slane %v3481, 5
        %v4882 = vsel %vm2041, %v4880, %v4881
        %v4883 = vrot.slane %v4755, 5
        %v4884 = vrot.slane %v4883, 4
        %v4885 = vrot.slane %v3483, 5
        %v4886 = vsel %vm2041, %v4884, %v4885
        %v4887 = vrot.slane %v4885, 4
        %v4888 = vrot.slane %v3484, 5
        %v4889 = vsel %vm2041, %v4887, %v4888
        %v4890 = vrot.slane %v4888, 4
        %v4891 = vrot.slane %v3485, 5
        %v4892 = vsel %vm2041, %v4890, %v4891
        %v4893 = vrot.slane %v4891, 4
        %v4894 = vrot.slane %v3486, 5
        %v4895 = vsel %vm2041, %v4893, %v4894
        %v4896 = vrot.slane %v4894, 4
        %v4897 = vrot.slane %v3487, 5
        %v4898 = vsel %vm2041, %v4896, %v4897
        %v4899 = vrot.slane %v4897, 4
        %v4900 = vrot.slane %v3488, 5
        %v4901 = vsel %vm2041, %v4899, %v4900
        %v4902 = vrot.slane %v4900, 4
        %v4903 = vrot.slane %v3489, 5
        %v4904 = vsel %vm2041, %v4902, %v4903
        %v4905 = vrot.slane %v4903, 4
        %v4906 = vrot.slane %v3490, 5
        %v4907 = vsel %vm2041, %v4905, %v4906
        %v4908 = vrot.slane %v4756, 5
        %v4909 = vrot.slane %v4908, 4
        %v4910 = vrot.slane %v3492, 5
        %v4911 = vsel %vm2041, %v4909, %v4910
        %v4912 = vrot.slane %v4910, 4
        %v4913 = vrot.slane %v3493, 5
        %v4914 = vsel %vm2041, %v4912, %v4913
        %v4915 = vrot.slane %v4913, 4
        %v4916 = vrot.slane %v3494, 5
        %v4917 = vsel %vm2041, %v4915, %v4916
        %v4918 = vrot.slane %v4916, 4
        %v4919 = vrot.slane %v3495, 5
        %v4920 = vsel %vm2041, %v4918, %v4919
        %v4921 = vrot.slane %v4919, 4
        %v4922 = vrot.slane %v3496, 5
        %v4923 = vsel %vm2041, %v4921, %v4922
        %v4924 = vrot.slane %v4922, 4
        %v4925 = vrot.slane %v3497, 5
        %v4926 = vsel %vm2041, %v4924, %v4925
        %v4927 = vrot.slane %v4925, 4
        %v4928 = vrot.slane %v3498, 5
        %v4929 = vsel %vm2041, %v4927, %v4928
        %v4930 = vrot.slane %v4928, 4
        %v4931 = vrot.slane %v3499, 5
        %v4932 = vsel %vm2041, %v4930, %v4931
        %v4933 = vrot.slane %v4757, 5
        %v4934 = vrot.slane %v4933, 4
        %v4935 = vrot.slane %v3501, 5
        %v4936 = vsel %vm2041, %v4934, %v4935
        %v4937 = vrot.slane %v4935, 4
        %v4938 = vrot.slane %v3502, 5
        %v4939 = vsel %vm2041, %v4937, %v4938
        %v4940 = vrot.slane %v4938, 4
        %v4941 = vrot.slane %v3503, 5
        %v4942 = vsel %vm2041, %v4940, %v4941
        %v4943 = vrot.slane %v4941, 4
        %v4944 = vrot.slane %v3504, 5
        %v4945 = vsel %vm2041, %v4943, %v4944
        %v4946 = vrot.slane %v4944, 4
        %v4947 = vrot.slane %v3505, 5
        %v4948 = vsel %vm2041, %v4946, %v4947
        %v4949 = vrot.slane %v4947, 4
        %v4950 = vrot.slane %v3506, 5
        %v4951 = vsel %vm2041, %v4949, %v4950
        %v4952 = vrot.slane %v4950, 4
        %v4953 = vrot.slane %v3507, 5
        %v4954 = vsel %vm2041, %v4952, %v4953
        %v4955 = vrot.slane %v4953, 4
        %v4956 = vrot.slane %v3508, 5
        %v4957 = vsel %vm2041, %v4955, %v4956
        %v4958 = vrot.slane %v4758, 5
        %v4959 = vrot.slane %v4958, 4
        %v4960 = vrot.slane %v3510, 5
        %v4961 = vsel %vm2041, %v4959, %v4960
        %v4962 = vrot.slane %v4960, 4
        %v4963 = vrot.slane %v3511, 5
        %v4964 = vsel %vm2041, %v4962, %v4963
        %v4965 = vrot.slane %v4963, 4
        %v4966 = vrot.slane %v3512, 5
        %v4967 = vsel %vm2041, %v4965, %v4966
        %v4968 = vrot.slane %v4966, 4
        %v4969 = vrot.slane %v3513, 5
        %v4970 = vsel %vm2041, %v4968, %v4969
        %v4971 = vrot.slane %v4969, 4
        %v4972 = vrot.slane %v3514, 5
        %v4973 = vsel %vm2041, %v4971, %v4972
        %v4974 = vrot.slane %v4972, 4
        %v4975 = vrot.slane %v3515, 5
        %v4976 = vsel %vm2041, %v4974, %v4975
        %v4977 = vrot.slane %v4975, 4
        %v4978 = vrot.slane %v3516, 5
        %v4979 = vsel %vm2041, %v4977, %v4978
        %v4980 = vrot.slane %v4978, 4
        %v4981 = vrot.slane %v3517, 5
        %v4982 = vsel %vm2041, %v4980, %v4981
        %v4983 = vrot.slane %v4759, 5
        %v4984 = vrot.slane %v4983, 4
        %v4985 = vrot.slane %v3519, 5
        %v4986 = vsel %vm2041, %v4984, %v4985
        %v4987 = vrot.slane %v4985, 4
        %v4988 = vrot.slane %v3520, 5
        %v4989 = vsel %vm2041, %v4987, %v4988
        %v4990 = vrot.slane %v4988, 4
        %v4991 = vrot.slane %v3521, 5
        %v4992 = vsel %vm2041, %v4990, %v4991
        %v4993 = vrot.slane %v4991, 4
        %v4994 = vrot.slane %v3522, 5
        %v4995 = vsel %vm2041, %v4993, %v4994
        %v4996 = vrot.slane %v4994, 4
        %v4997 = vrot.slane %v3523, 5
        %v4998 = vsel %vm2041, %v4996, %v4997
        %v4999 = vrot.slane %v4997, 4
        %v5000 = vrot.slane %v3524, 5
        %v5001 = vsel %vm2041, %v4999, %v5000
        %v5002 = vrot.slane %v5000, 4
        %v5003 = vrot.slane %v3525, 5
        %v5004 = vsel %vm2041, %v5002, %v5003
        %v5005 = vrot.slane %v5003, 4
        %v5006 = vrot.slane %v3526, 5
        %v5007 = vsel %vm2041, %v5005, %v5006
        %v5008 = vrot.slane %v4760, 5
        %v5009 = vrot.slane %v5008, 4
        %v5010 = vrot.slane %v3528, 5
        %v5011 = vsel %vm2041, %v5009, %v5010
        %v5012 = vrot.slane %v5010, 4
        %v5013 = vrot.slane %v3529, 5
        %v5014 = vsel %vm2041, %v5012, %v5013
        %v5015 = vrot.slane %v5013, 4
        %v5016 = vrot.slane %v3530, 5
        %v5017 = vsel %vm2041, %v5015, %v5016
        %v5018 = vrot.slane %v5016, 4
        %v5019 = vrot.slane %v3531, 5
        %v5020 = vsel %vm2041, %v5018, %v5019
        %v5021 = vrot.slane %v5019, 4
        %v5022 = vrot.slane %v3532, 5
        %v5023 = vsel %vm2041, %v5021, %v5022
        %v5024 = vrot.slane %v5022, 4
        %v5025 = vrot.slane %v3533, 5
        %v5026 = vsel %vm2041, %v5024, %v5025
        %v5027 = vrot.slane %v5025, 4
        %v5028 = vrot.slane %v3534, 5
        %v5029 = vsel %vm2041, %v5027, %v5028
        %v5030 = vrot.slane %v5028, 4
        %v5031 = vrot.slane %v3535, 5
        %v5032 = vsel %vm2041, %v5030, %v5031
        %v5033 = vld [vmem:[#allocation5 + $0x140] sm:$0xf]
        %v5034 = vld [vmem:[#allocation5 + $0x144] sm:$0xf]
        %v5035 = vld [vmem:[#allocation5 + $0x148] sm:$0xf]
        %v5036 = vld [vmem:[#allocation5 + $0x14c] sm:$0xf]
        %v5037 = vld [vmem:[#allocation5 + $0x150] sm:$0xf]
        %v5038 = vld [vmem:[#allocation5 + $0x154] sm:$0xf]
        %v5039 = vld [vmem:[#allocation5 + $0x158] sm:$0xf]
        %v5040 = vld [vmem:[#allocation5 + $0x15c] sm:$0xf]
        %v5041 = vld [vmem:[#allocation5 + $0x160] sm:$0xf]
        %v5042 = vld [vmem:[#allocation5 + $0x164] sm:$0xf]
        %v5043 = vld [vmem:[#allocation5 + $0x168] sm:$0xf]
        %v5044 = vld [vmem:[#allocation5 + $0x16c] sm:$0xf]
        %v5045 = vld [vmem:[#allocation5 + $0x170] sm:$0xf]
        %v5046 = vld [vmem:[#allocation5 + $0x174] sm:$0xf]
        %v5047 = vld [vmem:[#allocation5 + $0x178] sm:$0xf]
        %v5048 = vld [vmem:[#allocation5 + $0x17c] sm:$0xf]
        %v5049 = vunpack.c.l.b16 %v4836
        %v5050 = vunpack.c.l.b16 %v4839
        %v5051 = vunpack.c.l.b16 %v4842
        %v5052 = vunpack.c.l.b16 %v4845
        %v5053 = vunpack.c.l.b16 %v4848
        %v5054 = vunpack.c.l.b16 %v4851
        %v5055 = vunpack.c.l.b16 %v4854
        %v5056 = vunpack.c.l.b16 %v4857
        %v5057 = vunpack.c.l.b16 %v4861
        %v5058 = vunpack.c.l.b16 %v4864
        %v5059 = vunpack.c.l.b16 %v4867
        %v5060 = vunpack.c.l.b16 %v4870
        %v5061 = vunpack.c.l.b16 %v4873
        %v5062 = vunpack.c.l.b16 %v4876
        %v5063 = vunpack.c.l.b16 %v4879
        %v5064 = vunpack.c.l.b16 %v4882
        %v5065 = vunpack.c.l.b16 %v4886
        %v5066 = vunpack.c.l.b16 %v4889
        %v5067 = vunpack.c.l.b16 %v4892
        %v5068 = vunpack.c.l.b16 %v4895
        %v5069 = vunpack.c.l.b16 %v4898
        %v5070 = vunpack.c.l.b16 %v4901
        %v5071 = vunpack.c.l.b16 %v4904
        %v5072 = vunpack.c.l.b16 %v4907
        %v5073 = vunpack.c.l.b16 %v4911
        %v5074 = vunpack.c.l.b16 %v4914
        %v5075 = vunpack.c.l.b16 %v4917
        %v5076 = vunpack.c.l.b16 %v4920
        %v5077 = vunpack.c.l.b16 %v4923
        %v5078 = vunpack.c.l.b16 %v4926
        %v5079 = vunpack.c.l.b16 %v4929
        %v5080 = vunpack.c.l.b16 %v4932
        %v5081 = vunpack.c.l.b16 %v4936
        %v5082 = vunpack.c.l.b16 %v4939
        %v5083 = vunpack.c.l.b16 %v4942
        %v5084 = vunpack.c.l.b16 %v4945
        %v5085 = vunpack.c.l.b16 %v4948
        %v5086 = vunpack.c.l.b16 %v4951
        %v5087 = vunpack.c.l.b16 %v4954
        %v5088 = vunpack.c.l.b16 %v4957
        %v5089 = vunpack.c.l.b16 %v4961
        %v5090 = vunpack.c.l.b16 %v4964
        %v5091 = vunpack.c.l.b16 %v4967
        %v5092 = vunpack.c.l.b16 %v4970
        %v5093 = vunpack.c.l.b16 %v4973
        %v5094 = vunpack.c.l.b16 %v4976
        %v5095 = vunpack.c.l.b16 %v4979
        %v5096 = vunpack.c.l.b16 %v4982
        %v5097 = vunpack.c.l.b16 %v4986
        %v5098 = vunpack.c.l.b16 %v4989
        %v5099 = vunpack.c.l.b16 %v4992
        %v5100 = vunpack.c.l.b16 %v4995
        %v5101 = vunpack.c.l.b16 %v4998
        %v5102 = vunpack.c.l.b16 %v5001
        %v5103 = vunpack.c.l.b16 %v5004
        %v5104 = vunpack.c.l.b16 %v5007
        %v5105 = vunpack.c.l.b16 %v5011
        %v5106 = vunpack.c.l.b16 %v5014
        %v5107 = vunpack.c.l.b16 %v5017
        %v5108 = vunpack.c.l.b16 %v5020
        %v5109 = vunpack.c.l.b16 %v5023
        %v5110 = vunpack.c.l.b16 %v5026
        %v5111 = vunpack.c.l.b16 %v5029
        %v5112 = vunpack.c.l.b16 %v5032
        %v5113 = vpack.c.b16 %v5050, %v5049
        %v5114 = vpack.c.b16 %v5052, %v5051
        %v5115 = vpack.c.b16 %v5054, %v5053
        %v5116 = vpack.c.b16 %v5056, %v5055
        %v5117 = vpack.c.b16 %v5058, %v5057
        %v5118 = vpack.c.b16 %v5060, %v5059
        %v5119 = vpack.c.b16 %v5062, %v5061
        %v5120 = vpack.c.b16 %v5064, %v5063
        %v5121 = vpack.c.b16 %v5066, %v5065
        %v5122 = vpack.c.b16 %v5068, %v5067
        %v5123 = vpack.c.b16 %v5070, %v5069
        %v5124 = vpack.c.b16 %v5072, %v5071
        %v5125 = vpack.c.b16 %v5074, %v5073
        %v5126 = vpack.c.b16 %v5076, %v5075
        %v5127 = vpack.c.b16 %v5078, %v5077
        %v5128 = vpack.c.b16 %v5080, %v5079
        %v5129 = vpack.c.b16 %v5082, %v5081
        %v5130 = vpack.c.b16 %v5084, %v5083
        %v5131 = vpack.c.b16 %v5086, %v5085
        %v5132 = vpack.c.b16 %v5088, %v5087
        %v5133 = vpack.c.b16 %v5090, %v5089
        %v5134 = vpack.c.b16 %v5092, %v5091
        %v5135 = vpack.c.b16 %v5094, %v5093
        %v5136 = vpack.c.b16 %v5096, %v5095
        %v5137 = vpack.c.b16 %v5098, %v5097
        %v5138 = vpack.c.b16 %v5100, %v5099
        %v5139 = vpack.c.b16 %v5102, %v5101
        %v5140 = vpack.c.b16 %v5104, %v5103
        %v5141 = vpack.c.b16 %v5106, %v5105
        %v5142 = vpack.c.b16 %v5108, %v5107
        %v5143 = vpack.c.b16 %v5110, %v5109
        %v5144 = vpack.c.b16 %v5112, %v5111
        %v5193 = vunpack.c.l.b16 %v5033
        %v5194 = vunpack.c.l.b16 %v5034
        %v5195 = vunpack.c.l.b16 %v5035
        %v5196 = vunpack.c.l.b16 %v5036
        %v5197 = vunpack.c.l.b16 %v5037
        %v5198 = vunpack.c.l.b16 %v5038
        %v5199 = vunpack.c.l.b16 %v5039
        %v5200 = vunpack.c.l.b16 %v5040
        %v5201 = vunpack.c.l.b16 %v5041
        %v5202 = vunpack.c.l.b16 %v5042
        %v5203 = vunpack.c.l.b16 %v5043
        %v5204 = vunpack.c.l.b16 %v5044
        %v5205 = vunpack.c.l.b16 %v5045
        %v5206 = vunpack.c.l.b16 %v5046
        %v5207 = vunpack.c.l.b16 %v5047
        %v5208 = vunpack.c.l.b16 %v5048
        %v5209 = vpack.c.b16 %v5194, %v5193
        %v5210 = vpack.c.b16 %v5196, %v5195
        %v5211 = vpack.c.b16 %v5198, %v5197
        %v5212 = vpack.c.b16 %v5200, %v5199
        %v5213 = vpack.c.b16 %v5202, %v5201
        %v5214 = vpack.c.b16 %v5204, %v5203
        %v5215 = vpack.c.b16 %v5206, %v5205
        %v5216 = vpack.c.b16 %v5208, %v5207
        %5225 = vmatprep.subr.bf16.mxu0 0
        %5226 = vmatpush1.bf16.msra.mxu0 %v5209
        %5227 = vmatprep.subr.bf16.mxu0 0
        %5228 = vmatpush1.bf16.msra.mxu0 %v5210
        %5229 = vmatprep.subr.bf16.mxu0 0
        %5230 = vmatpush1.bf16.msra.mxu0 %v5211
        %5231 = vmatprep.subr.bf16.mxu0 0
        %5232 = vmatpush1.bf16.msra.mxu0 %v5212
        %5233 = vmatprep.subr.bf16.mxu0 0
        %5234 = vmatpush1.bf16.msra.mxu0 %v5213
        %5235 = vmatprep.subr.bf16.mxu0 0
        %5236 = vmatpush1.bf16.msra.mxu0 %v5214
        %5237 = vmatprep.subr.bf16.mxu0 0
        %5238 = vmatpush1.bf16.msra.mxu0 %v5215
        %5239 = vmatprep.subr.bf16.mxu0 0
        %5240 = vmatpush1.bf16.msra.mxu0 %v5216
        %5241 = vmatprep.subr.bf16.mxu0 0
        %5242 = vmatpush1.bf16.msra.mxu0 0
        %5243 = vmatprep.subr.bf16.mxu0 0
        %5244 = vmatpush1.bf16.msra.mxu0 0
        %5245 = vmatprep.subr.bf16.mxu0 0
        %5246 = vmatpush1.bf16.msra.mxu0 0
        %5247 = vmatprep.subr.bf16.mxu0 0
        %5248 = vmatpush1.bf16.msra.mxu0 0
        %5249 = vmatprep.subr.bf16.mxu0 0
        %5250 = vmatpush1.bf16.msra.mxu0 0
        %5251 = vmatprep.subr.bf16.mxu0 0
        %5252 = vmatpush1.bf16.msra.mxu0 0
        %5253 = vmatprep.subr.bf16.mxu0 0
        %5254 = vmatpush1.bf16.msra.mxu0 0
        %5255 = vmatprep.subr.bf16.mxu0 0
        %5256 = vmatpush1.bf16.msra.mxu0 0
        %5257 = vmatprep.mubr.bf16.mxu0 0
        %5258 = vmatmul.mubr.bf16.gmra.mrb[0].mxu0 %v5113
        %v5259 = vpop.f32.mrb[0].mxu0
        %v5260 = vadd.f32 0.0, %v5259
        %v5261 = vpop.f32.mrb[0].mxu0
        %v5262 = vpop.f32.mrb[0].mxu0
        %v5263 = vadd.f32 0.0, %v5262
        %v5264 = vpop.f32.mrb[0].mxu0
        %5265 = vmatprep.mubr.bf16.mxu0 0
        %5266 = vmatmul.mubr.bf16.gmra.mrb[0].mxu0 %v5114
        %v5267 = vpop.f32.mrb[0].mxu0
        %v5268 = vadd.f32 0.0, %v5267
        %v5269 = vpop.f32.mrb[0].mxu0
        %v5270 = vpop.f32.mrb[0].mxu0
        %v5271 = vadd.f32 0.0, %v5270
        %v5272 = vpop.f32.mrb[0].mxu0
        %5273 = vmatprep.mubr.bf16.mxu0 0
        %5274 = vmatmul.mubr.bf16.gmra.mrb[0].mxu0 %v5115
        %v5275 = vpop.f32.mrb[0].mxu0
        %v5276 = vadd.f32 0.0, %v5275
        %v5277 = vpop.f32.mrb[0].mxu0
        %v5278 = vpop.f32.mrb[0].mxu0
        %v5279 = vadd.f32 0.0, %v5278
        %v5280 = vpop.f32.mrb[0].mxu0
        %5281 = vmatprep.mubr.bf16.mxu0 0
        %5282 = vmatmul.mubr.bf16.gmra.mrb[0].mxu0 %v5116
        %v5283 = vpop.f32.mrb[0].mxu0
        %v5284 = vadd.f32 0.0, %v5283
        %v5285 = vpop.f32.mrb[0].mxu0
        %v5286 = vpop.f32.mrb[0].mxu0
        %v5287 = vadd.f32 0.0, %v5286
        %v5288 = vpop.f32.mrb[0].mxu0
        %5289 = vmatprep.mubr.bf16.mxu0 0
        %5290 = vmatmul.mubr.bf16.gmra.mrb[0].mxu0 %v5117
        %v5291 = vpop.f32.mrb[0].mxu0
        %v5292 = vadd.f32 0.0, %v5291
        %v5293 = vpop.f32.mrb[0].mxu0
        %v5294 = vpop.f32.mrb[0].mxu0
        %v5295 = vadd.f32 0.0, %v5294
        %v5296 = vpop.f32.mrb[0].mxu0
        %5297 = vmatprep.mubr.bf16.mxu0 0
        %5298 = vmatmul.mubr.bf16.gmra.mrb[0].mxu0 %v5118
        %v5299 = vpop.f32.mrb[0].mxu0
        %v5300 = vadd.f32 0.0, %v5299
        %v5301 = vpop.f32.mrb[0].mxu0
        %v5302 = vpop.f32.mrb[0].mxu0
        %v5303 = vadd.f32 0.0, %v5302
        %v5304 = vpop.f32.mrb[0].mxu0
        %5305 = vmatprep.mubr.bf16.mxu0 0
        %5306 = vmatmul.mubr.bf16.gmra.mrb[0].mxu0 %v5119
        %v5307 = vpop.f32.mrb[0].mxu0
        %v5308 = vadd.f32 0.0, %v5307
        %v5309 = vpop.f32.mrb[0].mxu0
        %v5310 = vpop.f32.mrb[0].mxu0
        %v5311 = vadd.f32 0.0, %v5310
        %v5312 = vpop.f32.mrb[0].mxu0
        %5313 = vmatprep.mubr.bf16.mxu0 0
        %5314 = vmatmul.mubr.bf16.gmra.mrb[0].mxu0 %v5120
        %v5315 = vpop.f32.mrb[0].mxu0
        %v5316 = vadd.f32 0.0, %v5315
        %v5317 = vpop.f32.mrb[0].mxu0
        %v5318 = vpop.f32.mrb[0].mxu0
        %v5319 = vadd.f32 0.0, %v5318
        %v5320 = vpop.f32.mrb[0].mxu0
        %5321 = vmatprep.mubr.bf16.mxu0 0
        %5322 = vmatmul.mubr.bf16.gmra.mrb[0].mxu0 %v5121
        %v5323 = vpop.f32.mrb[0].mxu0
        %v5324 = vadd.f32 0.0, %v5323
        %v5325 = vpop.f32.mrb[0].mxu0
        %v5326 = vpop.f32.mrb[0].mxu0
        %v5327 = vadd.f32 0.0, %v5326
        %v5328 = vpop.f32.mrb[0].mxu0
        %5329 = vmatprep.mubr.bf16.mxu0 0
        %5330 = vmatmul.mubr.bf16.gmra.mrb[0].mxu0 %v5122
        %v5331 = vpop.f32.mrb[0].mxu0
        %v5332 = vadd.f32 0.0, %v5331
        %v5333 = vpop.f32.mrb[0].mxu0
        %v5334 = vpop.f32.mrb[0].mxu0
        %v5335 = vadd.f32 0.0, %v5334
        %v5336 = vpop.f32.mrb[0].mxu0
        %5337 = vmatprep.mubr.bf16.mxu0 0
        %5338 = vmatmul.mubr.bf16.gmra.mrb[0].mxu0 %v5123
        %v5339 = vpop.f32.mrb[0].mxu0
        %v5340 = vadd.f32 0.0, %v5339
        %v5341 = vpop.f32.mrb[0].mxu0
        %v5342 = vpop.f32.mrb[0].mxu0
        %v5343 = vadd.f32 0.0, %v5342
        %v5344 = vpop.f32.mrb[0].mxu0
        %5345 = vmatprep.mubr.bf16.mxu0 0
        %5346 = vmatmul.mubr.bf16.gmra.mrb[0].mxu0 %v5124
        %v5347 = vpop.f32.mrb[0].mxu0
        %v5348 = vadd.f32 0.0, %v5347
        %v5349 = vpop.f32.mrb[0].mxu0
        %v5350 = vpop.f32.mrb[0].mxu0
        %v5351 = vadd.f32 0.0, %v5350
        %v5352 = vpop.f32.mrb[0].mxu0
        %5353 = vmatprep.mubr.bf16.mxu0 0
        %5354 = vmatmul.mubr.bf16.gmra.mrb[0].mxu0 %v5125
        %v5355 = vpop.f32.mrb[0].mxu0
        %v5356 = vadd.f32 0.0, %v5355
        %v5357 = vpop.f32.mrb[0].mxu0
        %v5358 = vpop.f32.mrb[0].mxu0
        %v5359 = vadd.f32 0.0, %v5358
        %v5360 = vpop.f32.mrb[0].mxu0
        %5361 = vmatprep.mubr.bf16.mxu0 0
        %5362 = vmatmul.mubr.bf16.gmra.mrb[0].mxu0 %v5126
        %v5363 = vpop.f32.mrb[0].mxu0
        %v5364 = vadd.f32 0.0, %v5363
        %v5365 = vpop.f32.mrb[0].mxu0
        %v5366 = vpop.f32.mrb[0].mxu0
        %v5367 = vadd.f32 0.0, %v5366
        %v5368 = vpop.f32.mrb[0].mxu0
        %5369 = vmatprep.mubr.bf16.mxu0 0
        %5370 = vmatmul.mubr.bf16.gmra.mrb[0].mxu0 %v5127
        %v5371 = vpop.f32.mrb[0].mxu0
        %v5372 = vadd.f32 0.0, %v5371
        %v5373 = vpop.f32.mrb[0].mxu0
        %v5374 = vpop.f32.mrb[0].mxu0
        %v5375 = vadd.f32 0.0, %v5374
        %v5376 = vpop.f32.mrb[0].mxu0
        %5377 = vmatprep.mubr.bf16.mxu0 0
        %5378 = vmatmul.mubr.bf16.gmra.mrb[0].mxu0 %v5128
        %v5379 = vpop.f32.mrb[0].mxu0
        %v5380 = vadd.f32 0.0, %v5379
        %v5381 = vpop.f32.mrb[0].mxu0
        %v5382 = vpop.f32.mrb[0].mxu0
        %v5383 = vadd.f32 0.0, %v5382
        %v5384 = vpop.f32.mrb[0].mxu0
        %5385 = vmatprep.mubr.bf16.mxu0 0
        %5386 = vmatmul.mubr.bf16.gmra.mrb[0].mxu0 %v5129
        %v5387 = vpop.f32.mrb[0].mxu0
        %v5388 = vadd.f32 0.0, %v5387
        %v5389 = vpop.f32.mrb[0].mxu0
        %v5390 = vpop.f32.mrb[0].mxu0
        %v5391 = vadd.f32 0.0, %v5390
        %v5392 = vpop.f32.mrb[0].mxu0
        %5393 = vmatprep.mubr.bf16.mxu0 0
        %5394 = vmatmul.mubr.bf16.gmra.mrb[0].mxu0 %v5130
        %v5395 = vpop.f32.mrb[0].mxu0
        %v5396 = vadd.f32 0.0, %v5395
        %v5397 = vpop.f32.mrb[0].mxu0
        %v5398 = vpop.f32.mrb[0].mxu0
        %v5399 = vadd.f32 0.0, %v5398
        %v5400 = vpop.f32.mrb[0].mxu0
        %5401 = vmatprep.mubr.bf16.mxu0 0
        %5402 = vmatmul.mubr.bf16.gmra.mrb[0].mxu0 %v5131
        %v5403 = vpop.f32.mrb[0].mxu0
        %v5404 = vadd.f32 0.0, %v5403
        %v5405 = vpop.f32.mrb[0].mxu0
        %v5406 = vpop.f32.mrb[0].mxu0
        %v5407 = vadd.f32 0.0, %v5406
        %v5408 = vpop.f32.mrb[0].mxu0
        %5409 = vmatprep.mubr.bf16.mxu0 0
        %5410 = vmatmul.mubr.bf16.gmra.mrb[0].mxu0 %v5132
        %v5411 = vpop.f32.mrb[0].mxu0
        %v5412 = vadd.f32 0.0, %v5411
        %v5413 = vpop.f32.mrb[0].mxu0
        %v5414 = vpop.f32.mrb[0].mxu0
        %v5415 = vadd.f32 0.0, %v5414
        %v5416 = vpop.f32.mrb[0].mxu0
        %5417 = vmatprep.mubr.bf16.mxu0 0
        %5418 = vmatmul.mubr.bf16.gmra.mrb[0].mxu0 %v5133
        %v5419 = vpop.f32.mrb[0].mxu0
        %v5420 = vadd.f32 0.0, %v5419
        %v5421 = vpop.f32.mrb[0].mxu0
        %v5422 = vpop.f32.mrb[0].mxu0
        %v5423 = vadd.f32 0.0, %v5422
        %v5424 = vpop.f32.mrb[0].mxu0
        %5425 = vmatprep.mubr.bf16.mxu0 0
        %5426 = vmatmul.mubr.bf16.gmra.mrb[0].mxu0 %v5134
        %v5427 = vpop.f32.mrb[0].mxu0
        %v5428 = vadd.f32 0.0, %v5427
        %v5429 = vpop.f32.mrb[0].mxu0
        %v5430 = vpop.f32.mrb[0].mxu0
        %v5431 = vadd.f32 0.0, %v5430
        %v5432 = vpop.f32.mrb[0].mxu0
        %5433 = vmatprep.mubr.bf16.mxu0 0
        %5434 = vmatmul.mubr.bf16.gmra.mrb[0].mxu0 %v5135
        %v5435 = vpop.f32.mrb[0].mxu0
        %v5436 = vadd.f32 0.0, %v5435
        %v5437 = vpop.f32.mrb[0].mxu0
        %v5438 = vpop.f32.mrb[0].mxu0
        %v5439 = vadd.f32 0.0, %v5438
        %v5440 = vpop.f32.mrb[0].mxu0
        %5441 = vmatprep.mubr.bf16.mxu0 0
        %5442 = vmatmul.mubr.bf16.gmra.mrb[0].mxu0 %v5136
        %v5443 = vpop.f32.mrb[0].mxu0
        %v5444 = vadd.f32 0.0, %v5443
        %v5445 = vpop.f32.mrb[0].mxu0
        %v5446 = vpop.f32.mrb[0].mxu0
        %v5447 = vadd.f32 0.0, %v5446
        %v5448 = vpop.f32.mrb[0].mxu0
        %5449 = vmatprep.mubr.bf16.mxu0 0
        %5450 = vmatmul.mubr.bf16.gmra.mrb[0].mxu0 %v5137
        %v5451 = vpop.f32.mrb[0].mxu0
        %v5452 = vadd.f32 0.0, %v5451
        %v5453 = vpop.f32.mrb[0].mxu0
        %v5454 = vpop.f32.mrb[0].mxu0
        %v5455 = vadd.f32 0.0, %v5454
        %v5456 = vpop.f32.mrb[0].mxu0
        %5457 = vmatprep.mubr.bf16.mxu0 0
        %5458 = vmatmul.mubr.bf16.gmra.mrb[0].mxu0 %v5138
        %v5459 = vpop.f32.mrb[0].mxu0
        %v5460 = vadd.f32 0.0, %v5459
        %v5461 = vpop.f32.mrb[0].mxu0
        %v5462 = vpop.f32.mrb[0].mxu0
        %v5463 = vadd.f32 0.0, %v5462
        %v5464 = vpop.f32.mrb[0].mxu0
        %5465 = vmatprep.mubr.bf16.mxu0 0
        %5466 = vmatmul.mubr.bf16.gmra.mrb[0].mxu0 %v5139
        %v5467 = vpop.f32.mrb[0].mxu0
        %v5468 = vadd.f32 0.0, %v5467
        %v5469 = vpop.f32.mrb[0].mxu0
        %v5470 = vpop.f32.mrb[0].mxu0
        %v5471 = vadd.f32 0.0, %v5470
        %v5472 = vpop.f32.mrb[0].mxu0
        %5473 = vmatprep.mubr.bf16.mxu0 0
        %5474 = vmatmul.mubr.bf16.gmra.mrb[0].mxu0 %v5140
        %v5475 = vpop.f32.mrb[0].mxu0
        %v5476 = vadd.f32 0.0, %v5475
        %v5477 = vpop.f32.mrb[0].mxu0
        %v5478 = vpop.f32.mrb[0].mxu0
        %v5479 = vadd.f32 0.0, %v5478
        %v5480 = vpop.f32.mrb[0].mxu0
        %5481 = vmatprep.mubr.bf16.mxu0 0
        %5482 = vmatmul.mubr.bf16.gmra.mrb[0].mxu0 %v5141
        %v5483 = vpop.f32.mrb[0].mxu0
        %v5484 = vadd.f32 0.0, %v5483
        %v5485 = vpop.f32.mrb[0].mxu0
        %v5486 = vpop.f32.mrb[0].mxu0
        %v5487 = vadd.f32 0.0, %v5486
        %v5488 = vpop.f32.mrb[0].mxu0
        %5489 = vmatprep.mubr.bf16.mxu0 0
        %5490 = vmatmul.mubr.bf16.gmra.mrb[0].mxu0 %v5142
        %v5491 = vpop.f32.mrb[0].mxu0
        %v5492 = vadd.f32 0.0, %v5491
        %v5493 = vpop.f32.mrb[0].mxu0
        %v5494 = vpop.f32.mrb[0].mxu0
        %v5495 = vadd.f32 0.0, %v5494
        %v5496 = vpop.f32.mrb[0].mxu0
        %5497 = vmatprep.mubr.bf16.mxu0 0
        %5498 = vmatmul.mubr.bf16.gmra.mrb[0].mxu0 %v5143
        %v5499 = vpop.f32.mrb[0].mxu0
        %v5500 = vadd.f32 0.0, %v5499
        %v5501 = vpop.f32.mrb[0].mxu0
        %v5502 = vpop.f32.mrb[0].mxu0
        %v5503 = vadd.f32 0.0, %v5502
        %v5504 = vpop.f32.mrb[0].mxu0
        %5505 = vmatprep.mubr.bf16.mxu0 0
        %5506 = vmatmul.mubr.bf16.gmra.mrb[0].mxu0 %v5144
        %v5507 = vpop.f32.mrb[0].mxu0
        %v5508 = vadd.f32 0.0, %v5507
        %v5509 = vpop.f32.mrb[0].mxu0
        %v5510 = vpop.f32.mrb[0].mxu0
        %v5511 = vadd.f32 0.0, %v5510
        %v5512 = vpop.f32.mrb[0].mxu0
        %5513 = vdwg.mxu0
        %v5514 = vadd.f32 %v4689, %v5260
        %v5515 = vadd.f32 %v4690, %v5263
        %v5516 = vadd.f32 %v4691, %v5268
        %v5517 = vadd.f32 %v4692, %v5271
        %v5518 = vadd.f32 %v4693, %v5276
        %v5519 = vadd.f32 %v4694, %v5279
        %v5520 = vadd.f32 %v4695, %v5284
        %v5521 = vadd.f32 %v4696, %v5287
        %v5522 = vadd.f32 %v4697, %v5292
        %v5523 = vadd.f32 %v4698, %v5295
        %v5524 = vadd.f32 %v4699, %v5300
        %v5525 = vadd.f32 %v4700, %v5303
        %v5526 = vadd.f32 %v4701, %v5308
        %v5527 = vadd.f32 %v4702, %v5311
        %v5528 = vadd.f32 %v4703, %v5316
        %v5529 = vadd.f32 %v4704, %v5319
        %v5530 = vadd.f32 %v4705, %v5324
        %v5531 = vadd.f32 %v4706, %v5327
        %v5532 = vadd.f32 %v4707, %v5332
        %v5533 = vadd.f32 %v4708, %v5335
        %v5534 = vadd.f32 %v4709, %v5340
        %v5535 = vadd.f32 %v4710, %v5343
        %v5536 = vadd.f32 %v4711, %v5348
        %v5537 = vadd.f32 %v4712, %v5351
        %v5538 = vadd.f32 %v4713, %v5356
        %v5539 = vadd.f32 %v4714, %v5359
        %v5540 = vadd.f32 %v4715, %v5364
        %v5541 = vadd.f32 %v4716, %v5367
        %v5542 = vadd.f32 %v4717, %v5372
        %v5543 = vadd.f32 %v4718, %v5375
        %v5544 = vadd.f32 %v4719, %v5380
        %v5545 = vadd.f32 %v4720, %v5383
        %v5546 = vadd.f32 %v4721, %v5388
        %v5547 = vadd.f32 %v4722, %v5391
        %v5548 = vadd.f32 %v4723, %v5396
        %v5549 = vadd.f32 %v4724, %v5399
        %v5550 = vadd.f32 %v4725, %v5404
        %v5551 = vadd.f32 %v4726, %v5407
        %v5552 = vadd.f32 %v4727, %v5412
        %v5553 = vadd.f32 %v4728, %v5415
        %v5554 = vadd.f32 %v4729, %v5420
        %v5555 = vadd.f32 %v4730, %v5423
        %v5556 = vadd.f32 %v4731, %v5428
        %v5557 = vadd.f32 %v4732, %v5431
        %v5558 = vadd.f32 %v4733, %v5436
        %v5559 = vadd.f32 %v4734, %v5439
        %v5560 = vadd.f32 %v4735, %v5444
        %v5561 = vadd.f32 %v4736, %v5447
        %v5562 = vadd.f32 %v4737, %v5452
        %v5563 = vadd.f32 %v4738, %v5455
        %v5564 = vadd.f32 %v4739, %v5460
        %v5565 = vadd.f32 %v4740, %v5463
        %v5566 = vadd.f32 %v4741, %v5468
        %v5567 = vadd.f32 %v4742, %v5471
        %v5568 = vadd.f32 %v4743, %v5476
        %v5569 = vadd.f32 %v4744, %v5479
        %v5570 = vadd.f32 %v4745, %v5484
        %v5571 = vadd.f32 %v4746, %v5487
        %v5572 = vadd.f32 %v4747, %v5492
        %v5573 = vadd.f32 %v4748, %v5495
        %v5574 = vadd.f32 %v4749, %v5500
        %v5575 = vadd.f32 %v4750, %v5503
        %v5576 = vadd.f32 %v4751, %v5508
        %v5577 = vadd.f32 %v4752, %v5511
        %s5578 = sadd.s32 %s238, 2
        %s5579 = smul.u32 %s5578, 9
        %s5580 = smul.addr %s5579, 4
        %s5581 = scalar_lea.vmem [#allocation2], %s5580
        %v5582 = vld [vmem:[%s5581] sm:$0xf]
        %v5583 = vld [vmem:[%s5581 + $0x4] sm:$0xf]
        %v5584 = vld [vmem:[%s5581 + $0x8] sm:$0xf]
        %v5585 = vld [vmem:[%s5581 + $0xc] sm:$0xf]
        %v5586 = vld [vmem:[%s5581 + $0x10] sm:$0xf]
        %v5587 = vld [vmem:[%s5581 + $0x14] sm:$0xf]
        %v5588 = vld [vmem:[%s5581 + $0x18] sm:$0xf]
        %v5589 = vld [vmem:[%s5581 + $0x1c] sm:$0xf]
        %v5590 = vld [vmem:[%s5581 + $0x24] sm:$0xf]
        %v5591 = vld [vmem:[%s5581 + $0x28] sm:$0xf]
        %v5592 = vld [vmem:[%s5581 + $0x2c] sm:$0xf]
        %v5593 = vld [vmem:[%s5581 + $0x30] sm:$0xf]
        %v5594 = vld [vmem:[%s5581 + $0x34] sm:$0xf]
        %v5595 = vld [vmem:[%s5581 + $0x38] sm:$0xf]
        %v5596 = vld [vmem:[%s5581 + $0x3c] sm:$0xf]
        %v5597 = vld [vmem:[%s5581 + $0x40] sm:$0xf]
        %v5598 = vld [vmem:[%s5581 + $0x48] sm:$0xf]
        %v5599 = vld [vmem:[%s5581 + $0x4c] sm:$0xf]
        %v5600 = vld [vmem:[%s5581 + $0x50] sm:$0xf]
        %v5601 = vld [vmem:[%s5581 + $0x54] sm:$0xf]
        %v5602 = vld [vmem:[%s5581 + $0x58] sm:$0xf]
        %v5603 = vld [vmem:[%s5581 + $0x5c] sm:$0xf]
        %v5604 = vld [vmem:[%s5581 + $0x60] sm:$0xf]
        %v5605 = vld [vmem:[%s5581 + $0x64] sm:$0xf]
        %v5606 = vld [vmem:[%s5581 + $0x6c] sm:$0xf]
        %v5607 = vld [vmem:[%s5581 + $0x70] sm:$0xf]
        %v5608 = vld [vmem:[%s5581 + $0x74] sm:$0xf]
        %v5609 = vld [vmem:[%s5581 + $0x78] sm:$0xf]
        %v5610 = vld [vmem:[%s5581 + $0x7c] sm:$0xf]
        %v5611 = vld [vmem:[%s5581 + $0x80] sm:$0xf]
        %v5612 = vld [vmem:[%s5581 + $0x84] sm:$0xf]
        %v5613 = vld [vmem:[%s5581 + $0x88] sm:$0xf]
        %v5614 = vld [vmem:[%s5581 + $0x90] sm:$0xf]
        %v5615 = vld [vmem:[%s5581 + $0x94] sm:$0xf]
        %v5616 = vld [vmem:[%s5581 + $0x98] sm:$0xf]
        %v5617 = vld [vmem:[%s5581 + $0x9c] sm:$0xf]
        %v5618 = vld [vmem:[%s5581 + $0xa0] sm:$0xf]
        %v5619 = vld [vmem:[%s5581 + $0xa4] sm:$0xf]
        %v5620 = vld [vmem:[%s5581 + $0xa8] sm:$0xf]
        %v5621 = vld [vmem:[%s5581 + $0xac] sm:$0xf]
        %v5622 = vld [vmem:[%s5581 + $0xb4] sm:$0xf]
        %v5623 = vld [vmem:[%s5581 + $0xb8] sm:$0xf]
        %v5624 = vld [vmem:[%s5581 + $0xbc] sm:$0xf]
        %v5625 = vld [vmem:[%s5581 + $0xc0] sm:$0xf]
        %v5626 = vld [vmem:[%s5581 + $0xc4] sm:$0xf]
        %v5627 = vld [vmem:[%s5581 + $0xc8] sm:$0xf]
        %v5628 = vld [vmem:[%s5581 + $0xcc] sm:$0xf]
        %v5629 = vld [vmem:[%s5581 + $0xd0] sm:$0xf]
        %v5630 = vld [vmem:[%s5581 + $0xd8] sm:$0xf]
        %v5631 = vld [vmem:[%s5581 + $0xdc] sm:$0xf]
        %v5632 = vld [vmem:[%s5581 + $0xe0] sm:$0xf]
        %v5633 = vld [vmem:[%s5581 + $0xe4] sm:$0xf]
        %v5634 = vld [vmem:[%s5581 + $0xe8] sm:$0xf]
        %v5635 = vld [vmem:[%s5581 + $0xec] sm:$0xf]
        %v5636 = vld [vmem:[%s5581 + $0xf0] sm:$0xf]
        %v5637 = vld [vmem:[%s5581 + $0xf4] sm:$0xf]
        %v5638 = vld [vmem:[%s5581 + $0xfc] sm:$0xf]
        %v5639 = vld [vmem:[%s5581 + $0x100] sm:$0xf]
        %v5640 = vld [vmem:[%s5581 + $0x104] sm:$0xf]
        %v5641 = vld [vmem:[%s5581 + $0x108] sm:$0xf]
        %v5642 = vld [vmem:[%s5581 + $0x10c] sm:$0xf]
        %v5643 = vld [vmem:[%s5581 + $0x110] sm:$0xf]
        %v5644 = vld [vmem:[%s5581 + $0x114] sm:$0xf]
        %v5645 = vld [vmem:[%s5581 + $0x118] sm:$0xf]
        %v5646 = vld [vmem:[#allocation5 + $0x180] sm:$0xf]
        %v5647 = vld [vmem:[#allocation5 + $0x184] sm:$0xf]
        %v5648 = vld [vmem:[#allocation5 + $0x188] sm:$0xf]
        %v5649 = vld [vmem:[#allocation5 + $0x18c] sm:$0xf]
        %v5650 = vld [vmem:[#allocation5 + $0x190] sm:$0xf]
        %v5651 = vld [vmem:[#allocation5 + $0x194] sm:$0xf]
        %v5652 = vld [vmem:[#allocation5 + $0x198] sm:$0xf]
        %v5653 = vld [vmem:[#allocation5 + $0x19c] sm:$0xf]
        %v5654 = vld [vmem:[#allocation5 + $0x1a0] sm:$0xf]
        %v5655 = vld [vmem:[#allocation5 + $0x1a4] sm:$0xf]
        %v5656 = vld [vmem:[#allocation5 + $0x1a8] sm:$0xf]
        %v5657 = vld [vmem:[#allocation5 + $0x1ac] sm:$0xf]
        %v5658 = vld [vmem:[#allocation5 + $0x1b0] sm:$0xf]
        %v5659 = vld [vmem:[#allocation5 + $0x1b4] sm:$0xf]
        %v5660 = vld [vmem:[#allocation5 + $0x1b8] sm:$0xf]
        %v5661 = vld [vmem:[#allocation5 + $0x1bc] sm:$0xf]
        %v5726 = vunpack.c.l.b16 %v5582
        %v5727 = vunpack.c.l.b16 %v5583
        %v5728 = vunpack.c.l.b16 %v5584
        %v5729 = vunpack.c.l.b16 %v5585
        %v5730 = vunpack.c.l.b16 %v5586
        %v5731 = vunpack.c.l.b16 %v5587
        %v5732 = vunpack.c.l.b16 %v5588
        %v5733 = vunpack.c.l.b16 %v5589
        %v5734 = vunpack.c.l.b16 %v5590
        %v5735 = vunpack.c.l.b16 %v5591
        %v5736 = vunpack.c.l.b16 %v5592
        %v5737 = vunpack.c.l.b16 %v5593
        %v5738 = vunpack.c.l.b16 %v5594
        %v5739 = vunpack.c.l.b16 %v5595
        %v5740 = vunpack.c.l.b16 %v5596
        %v5741 = vunpack.c.l.b16 %v5597
        %v5742 = vunpack.c.l.b16 %v5598
        %v5743 = vunpack.c.l.b16 %v5599
        %v5744 = vunpack.c.l.b16 %v5600
        %v5745 = vunpack.c.l.b16 %v5601
        %v5746 = vunpack.c.l.b16 %v5602
        %v5747 = vunpack.c.l.b16 %v5603
        %v5748 = vunpack.c.l.b16 %v5604
        %v5749 = vunpack.c.l.b16 %v5605
        %v5750 = vunpack.c.l.b16 %v5606
        %v5751 = vunpack.c.l.b16 %v5607
        %v5752 = vunpack.c.l.b16 %v5608
        %v5753 = vunpack.c.l.b16 %v5609
        %v5754 = vunpack.c.l.b16 %v5610
        %v5755 = vunpack.c.l.b16 %v5611
        %v5756 = vunpack.c.l.b16 %v5612
        %v5757 = vunpack.c.l.b16 %v5613
        %v5758 = vunpack.c.l.b16 %v5614
        %v5759 = vunpack.c.l.b16 %v5615
        %v5760 = vunpack.c.l.b16 %v5616
        %v5761 = vunpack.c.l.b16 %v5617
        %v5762 = vunpack.c.l.b16 %v5618
        %v5763 = vunpack.c.l.b16 %v5619
        %v5764 = vunpack.c.l.b16 %v5620
        %v5765 = vunpack.c.l.b16 %v5621
        %v5766 = vunpack.c.l.b16 %v5622
        %v5767 = vunpack.c.l.b16 %v5623
        %v5768 = vunpack.c.l.b16 %v5624
        %v5769 = vunpack.c.l.b16 %v5625
        %v5770 = vunpack.c.l.b16 %v5626
        %v5771 = vunpack.c.l.b16 %v5627
        %v5772 = vunpack.c.l.b16 %v5628
        %v5773 = vunpack.c.l.b16 %v5629
        %v5774 = vunpack.c.l.b16 %v5630
        %v5775 = vunpack.c.l.b16 %v5631
        %v5776 = vunpack.c.l.b16 %v5632
        %v5777 = vunpack.c.l.b16 %v5633
        %v5778 = vunpack.c.l.b16 %v5634
        %v5779 = vunpack.c.l.b16 %v5635
        %v5780 = vunpack.c.l.b16 %v5636
        %v5781 = vunpack.c.l.b16 %v5637
        %v5782 = vunpack.c.l.b16 %v5638
        %v5783 = vunpack.c.l.b16 %v5639
        %v5784 = vunpack.c.l.b16 %v5640
        %v5785 = vunpack.c.l.b16 %v5641
        %v5786 = vunpack.c.l.b16 %v5642
        %v5787 = vunpack.c.l.b16 %v5643
        %v5788 = vunpack.c.l.b16 %v5644
        %v5789 = vunpack.c.l.b16 %v5645
        %v5790 = vpack.c.b16 %v5727, %v5726
        %v5791 = vpack.c.b16 %v5729, %v5728
        %v5792 = vpack.c.b16 %v5731, %v5730
        %v5793 = vpack.c.b16 %v5733, %v5732
        %v5794 = vpack.c.b16 %v5735, %v5734
        %v5795 = vpack.c.b16 %v5737, %v5736
        %v5796 = vpack.c.b16 %v5739, %v5738
        %v5797 = vpack.c.b16 %v5741, %v5740
        %v5798 = vpack.c.b16 %v5743, %v5742
        %v5799 = vpack.c.b16 %v5745, %v5744
        %v5800 = vpack.c.b16 %v5747, %v5746
        %v5801 = vpack.c.b16 %v5749, %v5748
        %v5802 = vpack.c.b16 %v5751, %v5750
        %v5803 = vpack.c.b16 %v5753, %v5752
        %v5804 = vpack.c.b16 %v5755, %v5754
        %v5805 = vpack.c.b16 %v5757, %v5756
        %v5806 = vpack.c.b16 %v5759, %v5758
        %v5807 = vpack.c.b16 %v5761, %v5760
        %v5808 = vpack.c.b16 %v5763, %v5762
        %v5809 = vpack.c.b16 %v5765, %v5764
        %v5810 = vpack.c.b16 %v5767, %v5766
        %v5811 = vpack.c.b16 %v5769, %v5768
        %v5812 = vpack.c.b16 %v5771, %v5770
        %v5813 = vpack.c.b16 %v5773, %v5772
        %v5814 = vpack.c.b16 %v5775, %v5774
        %v5815 = vpack.c.b16 %v5777, %v5776
        %v5816 = vpack.c.b16 %v5779, %v5778
        %v5817 = vpack.c.b16 %v5781, %v5780
        %v5818 = vpack.c.b16 %v5783, %v5782
        %v5819 = vpack.c.b16 %v5785, %v5784
        %v5820 = vpack.c.b16 %v5787, %v5786
        %v5821 = vpack.c.b16 %v5789, %v5788
        %v5870 = vunpack.c.l.b16 %v5646
        %v5871 = vunpack.c.l.b16 %v5647
        %v5872 = vunpack.c.l.b16 %v5648
        %v5873 = vunpack.c.l.b16 %v5649
        %v5874 = vunpack.c.l.b16 %v5650
        %v5875 = vunpack.c.l.b16 %v5651
        %v5876 = vunpack.c.l.b16 %v5652
        %v5877 = vunpack.c.l.b16 %v5653
        %v5878 = vunpack.c.l.b16 %v5654
        %v5879 = vunpack.c.l.b16 %v5655
        %v5880 = vunpack.c.l.b16 %v5656
        %v5881 = vunpack.c.l.b16 %v5657
        %v5882 = vunpack.c.l.b16 %v5658
        %v5883 = vunpack.c.l.b16 %v5659
        %v5884 = vunpack.c.l.b16 %v5660
        %v5885 = vunpack.c.l.b16 %v5661
        %v5886 = vpack.c.b16 %v5871, %v5870
        %v5887 = vpack.c.b16 %v5873, %v5872
        %v5888 = vpack.c.b16 %v5875, %v5874
        %v5889 = vpack.c.b16 %v5877, %v5876
        %v5890 = vpack.c.b16 %v5879, %v5878
        %v5891 = vpack.c.b16 %v5881, %v5880
        %v5892 = vpack.c.b16 %v5883, %v5882
        %v5893 = vpack.c.b16 %v5885, %v5884
        %5902 = vmatprep.subr.bf16.mxu0 0
        %5903 = vmatpush1.bf16.msra.mxu0 %v5886
        %5904 = vmatprep.subr.bf16.mxu0 0
        %5905 = vmatpush1.bf16.msra.mxu0 %v5887
        %5906 = vmatprep.subr.bf16.mxu0 0
        %5907 = vmatpush1.bf16.msra.mxu0 %v5888
        %5908 = vmatprep.subr.bf16.mxu0 0
        %5909 = vmatpush1.bf16.msra.mxu0 %v5889
        %5910 = vmatprep.subr.bf16.mxu0 0
        %5911 = vmatpush1.bf16.msra.mxu0 %v5890
        %5912 = vmatprep.subr.bf16.mxu0 0
        %5913 = vmatpush1.bf16.msra.mxu0 %v5891
        %5914 = vmatprep.subr.bf16.mxu0 0
        %5915 = vmatpush1.bf16.msra.mxu0 %v5892
        %5916 = vmatprep.subr.bf16.mxu0 0
        %5917 = vmatpush1.bf16.msra.mxu0 %v5893
        %5918 = vmatprep.subr.bf16.mxu0 0
        %5919 = vmatpush1.bf16.msra.mxu0 0
        %5920 = vmatprep.subr.bf16.mxu0 0
        %5921 = vmatpush1.bf16.msra.mxu0 0
        %5922 = vmatprep.subr.bf16.mxu0 0
        %5923 = vmatpush1.bf16.msra.mxu0 0
        %5924 = vmatprep.subr.bf16.mxu0 0
        %5925 = vmatpush1.bf16.msra.mxu0 0
        %5926 = vmatprep.subr.bf16.mxu0 0
        %5927 = vmatpush1.bf16.msra.mxu0 0
        %5928 = vmatprep.subr.bf16.mxu0 0
        %5929 = vmatpush1.bf16.msra.mxu0 0
        %5930 = vmatprep.subr.bf16.mxu0 0
        %5931 = vmatpush1.bf16.msra.mxu0 0
        %5932 = vmatprep.subr.bf16.mxu0 0
        %5933 = vmatpush1.bf16.msra.mxu0 0
        %5934 = vmatprep.mubr.bf16.mxu0 0
        %5935 = vmatmul.mubr.bf16.gmra.mrb[0].mxu0 %v5790
        %v5936 = vpop.f32.mrb[0].mxu0
        %v5937 = vadd.f32 0.0, %v5936
        %v5938 = vpop.f32.mrb[0].mxu0
        %v5939 = vpop.f32.mrb[0].mxu0
        %v5940 = vadd.f32 0.0, %v5939
        %v5941 = vpop.f32.mrb[0].mxu0
        %5942 = vmatprep.mubr.bf16.mxu0 0
        %5943 = vmatmul.mubr.bf16.gmra.mrb[0].mxu0 %v5791
        %v5944 = vpop.f32.mrb[0].mxu0
        %v5945 = vadd.f32 0.0, %v5944
        %v5946 = vpop.f32.mrb[0].mxu0
        %v5947 = vpop.f32.mrb[0].mxu0
        %v5948 = vadd.f32 0.0, %v5947
        %v5949 = vpop.f32.mrb[0].mxu0
        %5950 = vmatprep.mubr.bf16.mxu0 0
        %5951 = vmatmul.mubr.bf16.gmra.mrb[0].mxu0 %v5792
        %v5952 = vpop.f32.mrb[0].mxu0
        %v5953 = vadd.f32 0.0, %v5952
        %v5954 = vpop.f32.mrb[0].mxu0
        %v5955 = vpop.f32.mrb[0].mxu0
        %v5956 = vadd.f32 0.0, %v5955
        %v5957 = vpop.f32.mrb[0].mxu0
        %5958 = vmatprep.mubr.bf16.mxu0 0
        %5959 = vmatmul.mubr.bf16.gmra.mrb[0].mxu0 %v5793
        %v5960 = vpop.f32.mrb[0].mxu0
        %v5961 = vadd.f32 0.0, %v5960
        %v5962 = vpop.f32.mrb[0].mxu0
        %v5963 = vpop.f32.mrb[0].mxu0
        %v5964 = vadd.f32 0.0, %v5963
        %v5965 = vpop.f32.mrb[0].mxu0
        %5966 = vmatprep.mubr.bf16.mxu0 0
        %5967 = vmatmul.mubr.bf16.gmra.mrb[0].mxu0 %v5794
        %v5968 = vpop.f32.mrb[0].mxu0
        %v5969 = vadd.f32 0.0, %v5968
        %v5970 = vpop.f32.mrb[0].mxu0
        %v5971 = vpop.f32.mrb[0].mxu0
        %v5972 = vadd.f32 0.0, %v5971
        %v5973 = vpop.f32.mrb[0].mxu0
        %5974 = vmatprep.mubr.bf16.mxu0 0
        %5975 = vmatmul.mubr.bf16.gmra.mrb[0].mxu0 %v5795
        %v5976 = vpop.f32.mrb[0].mxu0
        %v5977 = vadd.f32 0.0, %v5976
        %v5978 = vpop.f32.mrb[0].mxu0
        %v5979 = vpop.f32.mrb[0].mxu0
        %v5980 = vadd.f32 0.0, %v5979
        %v5981 = vpop.f32.mrb[0].mxu0
        %5982 = vmatprep.mubr.bf16.mxu0 0
        %5983 = vmatmul.mubr.bf16.gmra.mrb[0].mxu0 %v5796
        %v5984 = vpop.f32.mrb[0].mxu0
        %v5985 = vadd.f32 0.0, %v5984
        %v5986 = vpop.f32.mrb[0].mxu0
        %v5987 = vpop.f32.mrb[0].mxu0
        %v5988 = vadd.f32 0.0, %v5987
        %v5989 = vpop.f32.mrb[0].mxu0
        %5990 = vmatprep.mubr.bf16.mxu0 0
        %5991 = vmatmul.mubr.bf16.gmra.mrb[0].mxu0 %v5797
        %v5992 = vpop.f32.mrb[0].mxu0
        %v5993 = vadd.f32 0.0, %v5992
        %v5994 = vpop.f32.mrb[0].mxu0
        %v5995 = vpop.f32.mrb[0].mxu0
        %v5996 = vadd.f32 0.0, %v5995
        %v5997 = vpop.f32.mrb[0].mxu0
        %5998 = vmatprep.mubr.bf16.mxu0 0
        %5999 = vmatmul.mubr.bf16.gmra.mrb[0].mxu0 %v5798
        %v6000 = vpop.f32.mrb[0].mxu0
        %v6001 = vadd.f32 0.0, %v6000
        %v6002 = vpop.f32.mrb[0].mxu0
        %v6003 = vpop.f32.mrb[0].mxu0
        %v6004 = vadd.f32 0.0, %v6003
        %v6005 = vpop.f32.mrb[0].mxu0
        %6006 = vmatprep.mubr.bf16.mxu0 0
        %6007 = vmatmul.mubr.bf16.gmra.mrb[0].mxu0 %v5799
        %v6008 = vpop.f32.mrb[0].mxu0
        %v6009 = vadd.f32 0.0, %v6008
        %v6010 = vpop.f32.mrb[0].mxu0
        %v6011 = vpop.f32.mrb[0].mxu0
        %v6012 = vadd.f32 0.0, %v6011
        %v6013 = vpop.f32.mrb[0].mxu0
        %6014 = vmatprep.mubr.bf16.mxu0 0
        %6015 = vmatmul.mubr.bf16.gmra.mrb[0].mxu0 %v5800
        %v6016 = vpop.f32.mrb[0].mxu0
        %v6017 = vadd.f32 0.0, %v6016
        %v6018 = vpop.f32.mrb[0].mxu0
        %v6019 = vpop.f32.mrb[0].mxu0
        %v6020 = vadd.f32 0.0, %v6019
        %v6021 = vpop.f32.mrb[0].mxu0
        %6022 = vmatprep.mubr.bf16.mxu0 0
        %6023 = vmatmul.mubr.bf16.gmra.mrb[0].mxu0 %v5801
        %v6024 = vpop.f32.mrb[0].mxu0
        %v6025 = vadd.f32 0.0, %v6024
        %v6026 = vpop.f32.mrb[0].mxu0
        %v6027 = vpop.f32.mrb[0].mxu0
        %v6028 = vadd.f32 0.0, %v6027
        %v6029 = vpop.f32.mrb[0].mxu0
        %6030 = vmatprep.mubr.bf16.mxu0 0
        %6031 = vmatmul.mubr.bf16.gmra.mrb[0].mxu0 %v5802
        %v6032 = vpop.f32.mrb[0].mxu0
        %v6033 = vadd.f32 0.0, %v6032
        %v6034 = vpop.f32.mrb[0].mxu0
        %v6035 = vpop.f32.mrb[0].mxu0
        %v6036 = vadd.f32 0.0, %v6035
        %v6037 = vpop.f32.mrb[0].mxu0
        %6038 = vmatprep.mubr.bf16.mxu0 0
        %6039 = vmatmul.mubr.bf16.gmra.mrb[0].mxu0 %v5803
        %v6040 = vpop.f32.mrb[0].mxu0
        %v6041 = vadd.f32 0.0, %v6040
        %v6042 = vpop.f32.mrb[0].mxu0
        %v6043 = vpop.f32.mrb[0].mxu0
        %v6044 = vadd.f32 0.0, %v6043
        %v6045 = vpop.f32.mrb[0].mxu0
        %6046 = vmatprep.mubr.bf16.mxu0 0
        %6047 = vmatmul.mubr.bf16.gmra.mrb[0].mxu0 %v5804
        %v6048 = vpop.f32.mrb[0].mxu0
        %v6049 = vadd.f32 0.0, %v6048
        %v6050 = vpop.f32.mrb[0].mxu0
        %v6051 = vpop.f32.mrb[0].mxu0
        %v6052 = vadd.f32 0.0, %v6051
        %v6053 = vpop.f32.mrb[0].mxu0
        %6054 = vmatprep.mubr.bf16.mxu0 0
        %6055 = vmatmul.mubr.bf16.gmra.mrb[0].mxu0 %v5805
        %v6056 = vpop.f32.mrb[0].mxu0
        %v6057 = vadd.f32 0.0, %v6056
        %v6058 = vpop.f32.mrb[0].mxu0
        %v6059 = vpop.f32.mrb[0].mxu0
        %v6060 = vadd.f32 0.0, %v6059
        %v6061 = vpop.f32.mrb[0].mxu0
        %6062 = vmatprep.mubr.bf16.mxu0 0
        %6063 = vmatmul.mubr.bf16.gmra.mrb[0].mxu0 %v5806
        %v6064 = vpop.f32.mrb[0].mxu0
        %v6065 = vadd.f32 0.0, %v6064
        %v6066 = vpop.f32.mrb[0].mxu0
        %v6067 = vpop.f32.mrb[0].mxu0
        %v6068 = vadd.f32 0.0, %v6067
        %v6069 = vpop.f32.mrb[0].mxu0
        %6070 = vmatprep.mubr.bf16.mxu0 0
        %6071 = vmatmul.mubr.bf16.gmra.mrb[0].mxu0 %v5807
        %v6072 = vpop.f32.mrb[0].mxu0
        %v6073 = vadd.f32 0.0, %v6072
        %v6074 = vpop.f32.mrb[0].mxu0
        %v6075 = vpop.f32.mrb[0].mxu0
        %v6076 = vadd.f32 0.0, %v6075
        %v6077 = vpop.f32.mrb[0].mxu0
        %6078 = vmatprep.mubr.bf16.mxu0 0
        %6079 = vmatmul.mubr.bf16.gmra.mrb[0].mxu0 %v5808
        %v6080 = vpop.f32.mrb[0].mxu0
        %v6081 = vadd.f32 0.0, %v6080
        %v6082 = vpop.f32.mrb[0].mxu0
        %v6083 = vpop.f32.mrb[0].mxu0
        %v6084 = vadd.f32 0.0, %v6083
        %v6085 = vpop.f32.mrb[0].mxu0
        %6086 = vmatprep.mubr.bf16.mxu0 0
        %6087 = vmatmul.mubr.bf16.gmra.mrb[0].mxu0 %v5809
        %v6088 = vpop.f32.mrb[0].mxu0
        %v6089 = vadd.f32 0.0, %v6088
        %v6090 = vpop.f32.mrb[0].mxu0
        %v6091 = vpop.f32.mrb[0].mxu0
        %v6092 = vadd.f32 0.0, %v6091
        %v6093 = vpop.f32.mrb[0].mxu0
        %6094 = vmatprep.mubr.bf16.mxu0 0
        %6095 = vmatmul.mubr.bf16.gmra.mrb[0].mxu0 %v5810
        %v6096 = vpop.f32.mrb[0].mxu0
        %v6097 = vadd.f32 0.0, %v6096
        %v6098 = vpop.f32.mrb[0].mxu0
        %v6099 = vpop.f32.mrb[0].mxu0
        %v6100 = vadd.f32 0.0, %v6099
        %v6101 = vpop.f32.mrb[0].mxu0
        %6102 = vmatprep.mubr.bf16.mxu0 0
        %6103 = vmatmul.mubr.bf16.gmra.mrb[0].mxu0 %v5811
        %v6104 = vpop.f32.mrb[0].mxu0
        %v6105 = vadd.f32 0.0, %v6104
        %v6106 = vpop.f32.mrb[0].mxu0
        %v6107 = vpop.f32.mrb[0].mxu0
        %v6108 = vadd.f32 0.0, %v6107
        %v6109 = vpop.f32.mrb[0].mxu0
        %6110 = vmatprep.mubr.bf16.mxu0 0
        %6111 = vmatmul.mubr.bf16.gmra.mrb[0].mxu0 %v5812
        %v6112 = vpop.f32.mrb[0].mxu0
        %v6113 = vadd.f32 0.0, %v6112
        %v6114 = vpop.f32.mrb[0].mxu0
        %v6115 = vpop.f32.mrb[0].mxu0
        %v6116 = vadd.f32 0.0, %v6115
        %v6117 = vpop.f32.mrb[0].mxu0
        %6118 = vmatprep.mubr.bf16.mxu0 0
        %6119 = vmatmul.mubr.bf16.gmra.mrb[0].mxu0 %v5813
        %v6120 = vpop.f32.mrb[0].mxu0
        %v6121 = vadd.f32 0.0, %v6120
        %v6122 = vpop.f32.mrb[0].mxu0
        %v6123 = vpop.f32.mrb[0].mxu0
        %v6124 = vadd.f32 0.0, %v6123
        %v6125 = vpop.f32.mrb[0].mxu0
        %6126 = vmatprep.mubr.bf16.mxu0 0
        %6127 = vmatmul.mubr.bf16.gmra.mrb[0].mxu0 %v5814
        %v6128 = vpop.f32.mrb[0].mxu0
        %v6129 = vadd.f32 0.0, %v6128
        %v6130 = vpop.f32.mrb[0].mxu0
        %v6131 = vpop.f32.mrb[0].mxu0
        %v6132 = vadd.f32 0.0, %v6131
        %v6133 = vpop.f32.mrb[0].mxu0
        %6134 = vmatprep.mubr.bf16.mxu0 0
        %6135 = vmatmul.mubr.bf16.gmra.mrb[0].mxu0 %v5815
        %v6136 = vpop.f32.mrb[0].mxu0
        %v6137 = vadd.f32 0.0, %v6136
        %v6138 = vpop.f32.mrb[0].mxu0
        %v6139 = vpop.f32.mrb[0].mxu0
        %v6140 = vadd.f32 0.0, %v6139
        %v6141 = vpop.f32.mrb[0].mxu0
        %6142 = vmatprep.mubr.bf16.mxu0 0
        %6143 = vmatmul.mubr.bf16.gmra.mrb[0].mxu0 %v5816
        %v6144 = vpop.f32.mrb[0].mxu0
        %v6145 = vadd.f32 0.0, %v6144
        %v6146 = vpop.f32.mrb[0].mxu0
        %v6147 = vpop.f32.mrb[0].mxu0
        %v6148 = vadd.f32 0.0, %v6147
        %v6149 = vpop.f32.mrb[0].mxu0
        %6150 = vmatprep.mubr.bf16.mxu0 0
        %6151 = vmatmul.mubr.bf16.gmra.mrb[0].mxu0 %v5817
        %v6152 = vpop.f32.mrb[0].mxu0
        %v6153 = vadd.f32 0.0, %v6152
        %v6154 = vpop.f32.mrb[0].mxu0
        %v6155 = vpop.f32.mrb[0].mxu0
        %v6156 = vadd.f32 0.0, %v6155
        %v6157 = vpop.f32.mrb[0].mxu0
        %6158 = vmatprep.mubr.bf16.mxu0 0
        %6159 = vmatmul.mubr.bf16.gmra.mrb[0].mxu0 %v5818
        %v6160 = vpop.f32.mrb[0].mxu0
        %v6161 = vadd.f32 0.0, %v6160
        %v6162 = vpop.f32.mrb[0].mxu0
        %v6163 = vpop.f32.mrb[0].mxu0
        %v6164 = vadd.f32 0.0, %v6163
        %v6165 = vpop.f32.mrb[0].mxu0
        %6166 = vmatprep.mubr.bf16.mxu0 0
        %6167 = vmatmul.mubr.bf16.gmra.mrb[0].mxu0 %v5819
        %v6168 = vpop.f32.mrb[0].mxu0
        %v6169 = vadd.f32 0.0, %v6168
        %v6170 = vpop.f32.mrb[0].mxu0
        %v6171 = vpop.f32.mrb[0].mxu0
        %v6172 = vadd.f32 0.0, %v6171
        %v6173 = vpop.f32.mrb[0].mxu0
        %6174 = vmatprep.mubr.bf16.mxu0 0
        %6175 = vmatmul.mubr.bf16.gmra.mrb[0].mxu0 %v5820
        %v6176 = vpop.f32.mrb[0].mxu0
        %v6177 = vadd.f32 0.0, %v6176
        %v6178 = vpop.f32.mrb[0].mxu0
        %v6179 = vpop.f32.mrb[0].mxu0
        %v6180 = vadd.f32 0.0, %v6179
        %v6181 = vpop.f32.mrb[0].mxu0
        %6182 = vmatprep.mubr.bf16.mxu0 0
        %6183 = vmatmul.mubr.bf16.gmra.mrb[0].mxu0 %v5821
        %v6184 = vpop.f32.mrb[0].mxu0
        %v6185 = vadd.f32 0.0, %v6184
        %v6186 = vpop.f32.mrb[0].mxu0
        %v6187 = vpop.f32.mrb[0].mxu0
        %v6188 = vadd.f32 0.0, %v6187
        %v6189 = vpop.f32.mrb[0].mxu0
        %6190 = vdwg.mxu0
        %v6191 = vadd.f32 %v5514, %v5937
        %v6192 = vadd.f32 %v5515, %v5940
        %v6193 = vadd.f32 %v5516, %v5945
        %v6194 = vadd.f32 %v5517, %v5948
        %v6195 = vadd.f32 %v5518, %v5953
        %v6196 = vadd.f32 %v5519, %v5956
        %v6197 = vadd.f32 %v5520, %v5961
        %v6198 = vadd.f32 %v5521, %v5964
        %v6199 = vadd.f32 %v5522, %v5969
        %v6200 = vadd.f32 %v5523, %v5972
        %v6201 = vadd.f32 %v5524, %v5977
        %v6202 = vadd.f32 %v5525, %v5980
        %v6203 = vadd.f32 %v5526, %v5985
        %v6204 = vadd.f32 %v5527, %v5988
        %v6205 = vadd.f32 %v5528, %v5993
        %v6206 = vadd.f32 %v5529, %v5996
        %v6207 = vadd.f32 %v5530, %v6001
        %v6208 = vadd.f32 %v5531, %v6004
        %v6209 = vadd.f32 %v5532, %v6009
        %v6210 = vadd.f32 %v5533, %v6012
        %v6211 = vadd.f32 %v5534, %v6017
        %v6212 = vadd.f32 %v5535, %v6020
        %v6213 = vadd.f32 %v5536, %v6025
        %v6214 = vadd.f32 %v5537, %v6028
        %v6215 = vadd.f32 %v5538, %v6033
        %v6216 = vadd.f32 %v5539, %v6036
        %v6217 = vadd.f32 %v5540, %v6041
        %v6218 = vadd.f32 %v5541, %v6044
        %v6219 = vadd.f32 %v5542, %v6049
        %v6220 = vadd.f32 %v5543, %v6052
        %v6221 = vadd.f32 %v5544, %v6057
        %v6222 = vadd.f32 %v5545, %v6060
        %v6223 = vadd.f32 %v5546, %v6065
        %v6224 = vadd.f32 %v5547, %v6068
        %v6225 = vadd.f32 %v5548, %v6073
        %v6226 = vadd.f32 %v5549, %v6076
        %v6227 = vadd.f32 %v5550, %v6081
        %v6228 = vadd.f32 %v5551, %v6084
        %v6229 = vadd.f32 %v5552, %v6089
        %v6230 = vadd.f32 %v5553, %v6092
        %v6231 = vadd.f32 %v5554, %v6097
        %v6232 = vadd.f32 %v5555, %v6100
        %v6233 = vadd.f32 %v5556, %v6105
        %v6234 = vadd.f32 %v5557, %v6108
        %v6235 = vadd.f32 %v5558, %v6113
        %v6236 = vadd.f32 %v5559, %v6116
        %v6237 = vadd.f32 %v5560, %v6121
        %v6238 = vadd.f32 %v5561, %v6124
        %v6239 = vadd.f32 %v5562, %v6129
        %v6240 = vadd.f32 %v5563, %v6132
        %v6241 = vadd.f32 %v5564, %v6137
        %v6242 = vadd.f32 %v5565, %v6140
        %v6243 = vadd.f32 %v5566, %v6145
        %v6244 = vadd.f32 %v5567, %v6148
        %v6245 = vadd.f32 %v5568, %v6153
        %v6246 = vadd.f32 %v5569, %v6156
        %v6247 = vadd.f32 %v5570, %v6161
        %v6248 = vadd.f32 %v5571, %v6164
        %v6249 = vadd.f32 %v5572, %v6169
        %v6250 = vadd.f32 %v5573, %v6172
        %v6251 = vadd.f32 %v5574, %v6177
        %v6252 = vadd.f32 %v5575, %v6180
        %v6253 = vadd.f32 %v5576, %v6185
        %v6254 = vadd.f32 %v5577, %v6188
        %v6255 = vld [vmem:[%s5581] sm:$0xf]
        %v6256 = vld [vmem:[%s5581 + $0x4] sm:$0xf]
        %v6257 = vld [vmem:[%s5581 + $0x8] sm:$0xf]
        %v6258 = vld [vmem:[%s5581 + $0xc] sm:$0xf]
        %v6259 = vld [vmem:[%s5581 + $0x10] sm:$0xf]
        %v6260 = vld [vmem:[%s5581 + $0x14] sm:$0xf]
        %v6261 = vld [vmem:[%s5581 + $0x18] sm:$0xf]
        %v6262 = vld [vmem:[%s5581 + $0x1c] sm:$0xf]
        %v6263 = vld [vmem:[%s5581 + $0x20] sm:$0x1]
        %v6264 = vld [vmem:[%s5581 + $0x24] sm:$0xf]
        %v6265 = vld [vmem:[%s5581 + $0x28] sm:$0xf]
        %v6266 = vld [vmem:[%s5581 + $0x2c] sm:$0xf]
        %v6267 = vld [vmem:[%s5581 + $0x30] sm:$0xf]
        %v6268 = vld [vmem:[%s5581 + $0x34] sm:$0xf]
        %v6269 = vld [vmem:[%s5581 + $0x38] sm:$0xf]
        %v6270 = vld [vmem:[%s5581 + $0x3c] sm:$0xf]
        %v6271 = vld [vmem:[%s5581 + $0x40] sm:$0xf]
        %v6272 = vld [vmem:[%s5581 + $0x44] sm:$0x1]
        %v6273 = vld [vmem:[%s5581 + $0x48] sm:$0xf]
        %v6274 = vld [vmem:[%s5581 + $0x4c] sm:$0xf]
        %v6275 = vld [vmem:[%s5581 + $0x50] sm:$0xf]
        %v6276 = vld [vmem:[%s5581 + $0x54] sm:$0xf]
        %v6277 = vld [vmem:[%s5581 + $0x58] sm:$0xf]
        %v6278 = vld [vmem:[%s5581 + $0x5c] sm:$0xf]
        %v6279 = vld [vmem:[%s5581 + $0x60] sm:$0xf]
        %v6280 = vld [vmem:[%s5581 + $0x64] sm:$0xf]
        %v6281 = vld [vmem:[%s5581 + $0x68] sm:$0x1]
        %v6282 = vld [vmem:[%s5581 + $0x6c] sm:$0xf]
        %v6283 = vld [vmem:[%s5581 + $0x70] sm:$0xf]
        %v6284 = vld [vmem:[%s5581 + $0x74] sm:$0xf]
        %v6285 = vld [vmem:[%s5581 + $0x78] sm:$0xf]
        %v6286 = vld [vmem:[%s5581 + $0x7c] sm:$0xf]
        %v6287 = vld [vmem:[%s5581 + $0x80] sm:$0xf]
        %v6288 = vld [vmem:[%s5581 + $0x84] sm:$0xf]
        %v6289 = vld [vmem:[%s5581 + $0x88] sm:$0xf]
        %v6290 = vld [vmem:[%s5581 + $0x8c] sm:$0x1]
        %v6291 = vld [vmem:[%s5581 + $0x90] sm:$0xf]
        %v6292 = vld [vmem:[%s5581 + $0x94] sm:$0xf]
        %v6293 = vld [vmem:[%s5581 + $0x98] sm:$0xf]
        %v6294 = vld [vmem:[%s5581 + $0x9c] sm:$0xf]
        %v6295 = vld [vmem:[%s5581 + $0xa0] sm:$0xf]
        %v6296 = vld [vmem:[%s5581 + $0xa4] sm:$0xf]
        %v6297 = vld [vmem:[%s5581 + $0xa8] sm:$0xf]
        %v6298 = vld [vmem:[%s5581 + $0xac] sm:$0xf]
        %v6299 = vld [vmem:[%s5581 + $0xb0] sm:$0x1]
        %v6300 = vld [vmem:[%s5581 + $0xb4] sm:$0xf]
        %v6301 = vld [vmem:[%s5581 + $0xb8] sm:$0xf]
        %v6302 = vld [vmem:[%s5581 + $0xbc] sm:$0xf]
        %v6303 = vld [vmem:[%s5581 + $0xc0] sm:$0xf]
        %v6304 = vld [vmem:[%s5581 + $0xc4] sm:$0xf]
        %v6305 = vld [vmem:[%s5581 + $0xc8] sm:$0xf]
        %v6306 = vld [vmem:[%s5581 + $0xcc] sm:$0xf]
        %v6307 = vld [vmem:[%s5581 + $0xd0] sm:$0xf]
        %v6308 = vld [vmem:[%s5581 + $0xd4] sm:$0x1]
        %v6309 = vld [vmem:[%s5581 + $0xd8] sm:$0xf]
        %v6310 = vld [vmem:[%s5581 + $0xdc] sm:$0xf]
        %v6311 = vld [vmem:[%s5581 + $0xe0] sm:$0xf]
        %v6312 = vld [vmem:[%s5581 + $0xe4] sm:$0xf]
        %v6313 = vld [vmem:[%s5581 + $0xe8] sm:$0xf]
        %v6314 = vld [vmem:[%s5581 + $0xec] sm:$0xf]
        %v6315 = vld [vmem:[%s5581 + $0xf0] sm:$0xf]
        %v6316 = vld [vmem:[%s5581 + $0xf4] sm:$0xf]
        %v6317 = vld [vmem:[%s5581 + $0xf8] sm:$0x1]
        %v6318 = vld [vmem:[%s5581 + $0xfc] sm:$0xf]
        %v6319 = vld [vmem:[%s5581 + $0x100] sm:$0xf]
        %v6320 = vld [vmem:[%s5581 + $0x104] sm:$0xf]
        %v6321 = vld [vmem:[%s5581 + $0x108] sm:$0xf]
        %v6322 = vld [vmem:[%s5581 + $0x10c] sm:$0xf]
        %v6323 = vld [vmem:[%s5581 + $0x110] sm:$0xf]
        %v6324 = vld [vmem:[%s5581 + $0x114] sm:$0xf]
        %v6325 = vld [vmem:[%s5581 + $0x118] sm:$0xf]
        %v6326 = vld [vmem:[%s5581 + $0x11c] sm:$0x1]
        %v6328 = vshrl.u32 %v6255, 16
        %v6330 = vrot.slane %v6328, 4
        %v6331 = vshll.u32 %v6255, 16
        %v6333 = vrot.slane %v6331, 5
        %v6334 = vor.u32 %v6330, %v6333
        %v6335 = vrot.slane %v6334, 4
        %v6337 = vshll.u32 %v6256, 16
        %v6339 = vrot.slane %v6337, 5
        %v6340 = vsel %vm332, %v6335, %v6339
        %v6341 = vshrl.u32 %v6256, 16
        %v6343 = vrot.slane %v6341, 4
        %v6344 = vor.u32 %v6343, %v6339
        %v6345 = vrot.slane %v6344, 4
        %v6347 = vshll.u32 %v6257, 16
        %v6349 = vrot.slane %v6347, 5
        %v6350 = vsel %vm332, %v6345, %v6349
        %v6351 = vshrl.u32 %v6257, 16
        %v6353 = vrot.slane %v6351, 4
        %v6354 = vor.u32 %v6353, %v6349
        %v6355 = vrot.slane %v6354, 4
        %v6357 = vshll.u32 %v6258, 16
        %v6359 = vrot.slane %v6357, 5
        %v6360 = vsel %vm332, %v6355, %v6359
        %v6361 = vshrl.u32 %v6258, 16
        %v6363 = vrot.slane %v6361, 4
        %v6364 = vor.u32 %v6363, %v6359
        %v6365 = vrot.slane %v6364, 4
        %v6367 = vshll.u32 %v6259, 16
        %v6369 = vrot.slane %v6367, 5
        %v6370 = vsel %vm332, %v6365, %v6369
        %v6371 = vshrl.u32 %v6259, 16
        %v6373 = vrot.slane %v6371, 4
        %v6374 = vor.u32 %v6373, %v6369
        %v6375 = vrot.slane %v6374, 4
        %v6377 = vshll.u32 %v6260, 16
        %v6379 = vrot.slane %v6377, 5
        %v6380 = vsel %vm332, %v6375, %v6379
        %v6381 = vshrl.u32 %v6260, 16
        %v6383 = vrot.slane %v6381, 4
        %v6384 = vor.u32 %v6383, %v6379
        %v6385 = vrot.slane %v6384, 4
        %v6387 = vshll.u32 %v6261, 16
        %v6389 = vrot.slane %v6387, 5
        %v6390 = vsel %vm332, %v6385, %v6389
        %v6391 = vshrl.u32 %v6261, 16
        %v6393 = vrot.slane %v6391, 4
        %v6394 = vor.u32 %v6393, %v6389
        %v6395 = vrot.slane %v6394, 4
        %v6397 = vshll.u32 %v6262, 16
        %v6399 = vrot.slane %v6397, 5
        %v6400 = vsel %vm332, %v6395, %v6399
        %v6401 = vshrl.u32 %v6262, 16
        %v6403 = vrot.slane %v6401, 4
        %v6404 = vor.u32 %v6403, %v6399
        %v6405 = vrot.slane %v6404, 4
        %v6407 = vshll.u32 %v6263, 16
        %v6409 = vrot.slane %v6407, 5
        %v6410 = vsel %vm332, %v6405, %v6409
        %v6412 = vshrl.u32 %v6264, 16
        %v6414 = vrot.slane %v6412, 4
        %v6415 = vshll.u32 %v6264, 16
        %v6417 = vrot.slane %v6415, 5
        %v6418 = vor.u32 %v6414, %v6417
        %v6419 = vrot.slane %v6418, 4
        %v6421 = vshll.u32 %v6265, 16
        %v6423 = vrot.slane %v6421, 5
        %v6424 = vsel %vm332, %v6419, %v6423
        %v6425 = vshrl.u32 %v6265, 16
        %v6427 = vrot.slane %v6425, 4
        %v6428 = vor.u32 %v6427, %v6423
        %v6429 = vrot.slane %v6428, 4
        %v6431 = vshll.u32 %v6266, 16
        %v6433 = vrot.slane %v6431, 5
        %v6434 = vsel %vm332, %v6429, %v6433
        %v6435 = vshrl.u32 %v6266, 16
        %v6437 = vrot.slane %v6435, 4
        %v6438 = vor.u32 %v6437, %v6433
        %v6439 = vrot.slane %v6438, 4
        %v6441 = vshll.u32 %v6267, 16
        %v6443 = vrot.slane %v6441, 5
        %v6444 = vsel %vm332, %v6439, %v6443
        %v6445 = vshrl.u32 %v6267, 16
        %v6447 = vrot.slane %v6445, 4
        %v6448 = vor.u32 %v6447, %v6443
        %v6449 = vrot.slane %v6448, 4
        %v6451 = vshll.u32 %v6268, 16
        %v6453 = vrot.slane %v6451, 5
        %v6454 = vsel %vm332, %v6449, %v6453
        %v6455 = vshrl.u32 %v6268, 16
        %v6457 = vrot.slane %v6455, 4
        %v6458 = vor.u32 %v6457, %v6453
        %v6459 = vrot.slane %v6458, 4
        %v6461 = vshll.u32 %v6269, 16
        %v6463 = vrot.slane %v6461, 5
        %v6464 = vsel %vm332, %v6459, %v6463
        %v6465 = vshrl.u32 %v6269, 16
        %v6467 = vrot.slane %v6465, 4
        %v6468 = vor.u32 %v6467, %v6463
        %v6469 = vrot.slane %v6468, 4
        %v6471 = vshll.u32 %v6270, 16
        %v6473 = vrot.slane %v6471, 5
        %v6474 = vsel %vm332, %v6469, %v6473
        %v6475 = vshrl.u32 %v6270, 16
        %v6477 = vrot.slane %v6475, 4
        %v6478 = vor.u32 %v6477, %v6473
        %v6479 = vrot.slane %v6478, 4
        %v6481 = vshll.u32 %v6271, 16
        %v6483 = vrot.slane %v6481, 5
        %v6484 = vsel %vm332, %v6479, %v6483
        %v6485 = vshrl.u32 %v6271, 16
        %v6487 = vrot.slane %v6485, 4
        %v6488 = vor.u32 %v6487, %v6483
        %v6489 = vrot.slane %v6488, 4
        %v6491 = vshll.u32 %v6272, 16
        %v6493 = vrot.slane %v6491, 5
        %v6494 = vsel %vm332, %v6489, %v6493
        %v6496 = vshrl.u32 %v6273, 16
        %v6498 = vrot.slane %v6496, 4
        %v6499 = vshll.u32 %v6273, 16
        %v6501 = vrot.slane %v6499, 5
        %v6502 = vor.u32 %v6498, %v6501
        %v6503 = vrot.slane %v6502, 4
        %v6505 = vshll.u32 %v6274, 16
        %v6507 = vrot.slane %v6505, 5
        %v6508 = vsel %vm332, %v6503, %v6507
        %v6509 = vshrl.u32 %v6274, 16
        %v6511 = vrot.slane %v6509, 4
        %v6512 = vor.u32 %v6511, %v6507
        %v6513 = vrot.slane %v6512, 4
        %v6515 = vshll.u32 %v6275, 16
        %v6517 = vrot.slane %v6515, 5
        %v6518 = vsel %vm332, %v6513, %v6517
        %v6519 = vshrl.u32 %v6275, 16
        %v6521 = vrot.slane %v6519, 4
        %v6522 = vor.u32 %v6521, %v6517
        %v6523 = vrot.slane %v6522, 4
        %v6525 = vshll.u32 %v6276, 16
        %v6527 = vrot.slane %v6525, 5
        %v6528 = vsel %vm332, %v6523, %v6527
        %v6529 = vshrl.u32 %v6276, 16
        %v6531 = vrot.slane %v6529, 4
        %v6532 = vor.u32 %v6531, %v6527
        %v6533 = vrot.slane %v6532, 4
        %v6535 = vshll.u32 %v6277, 16
        %v6537 = vrot.slane %v6535, 5
        %v6538 = vsel %vm332, %v6533, %v6537
        %v6539 = vshrl.u32 %v6277, 16
        %v6541 = vrot.slane %v6539, 4
        %v6542 = vor.u32 %v6541, %v6537
        %v6543 = vrot.slane %v6542, 4
        %v6545 = vshll.u32 %v6278, 16
        %v6547 = vrot.slane %v6545, 5
        %v6548 = vsel %vm332, %v6543, %v6547
        %v6549 = vshrl.u32 %v6278, 16
        %v6551 = vrot.slane %v6549, 4
        %v6552 = vor.u32 %v6551, %v6547
        %v6553 = vrot.slane %v6552, 4
        %v6555 = vshll.u32 %v6279, 16
        %v6557 = vrot.slane %v6555, 5
        %v6558 = vsel %vm332, %v6553, %v6557
        %v6559 = vshrl.u32 %v6279, 16
        %v6561 = vrot.slane %v6559, 4
        %v6562 = vor.u32 %v6561, %v6557
        %v6563 = vrot.slane %v6562, 4
        %v6565 = vshll.u32 %v6280, 16
        %v6567 = vrot.slane %v6565, 5
        %v6568 = vsel %vm332, %v6563, %v6567
        %v6569 = vshrl.u32 %v6280, 16
        %v6571 = vrot.slane %v6569, 4
        %v6572 = vor.u32 %v6571, %v6567
        %v6573 = vrot.slane %v6572, 4
        %v6575 = vshll.u32 %v6281, 16
        %v6577 = vrot.slane %v6575, 5
        %v6578 = vsel %vm332, %v6573, %v6577
        %v6580 = vshrl.u32 %v6282, 16
        %v6582 = vrot.slane %v6580, 4
        %v6583 = vshll.u32 %v6282, 16
        %v6585 = vrot.slane %v6583, 5
        %v6586 = vor.u32 %v6582, %v6585
        %v6587 = vrot.slane %v6586, 4
        %v6589 = vshll.u32 %v6283, 16
        %v6591 = vrot.slane %v6589, 5
        %v6592 = vsel %vm332, %v6587, %v6591
        %v6593 = vshrl.u32 %v6283, 16
        %v6595 = vrot.slane %v6593, 4
        %v6596 = vor.u32 %v6595, %v6591
        %v6597 = vrot.slane %v6596, 4
        %v6599 = vshll.u32 %v6284, 16
        %v6601 = vrot.slane %v6599, 5
        %v6602 = vsel %vm332, %v6597, %v6601
        %v6603 = vshrl.u32 %v6284, 16
        %v6605 = vrot.slane %v6603, 4
        %v6606 = vor.u32 %v6605, %v6601
        %v6607 = vrot.slane %v6606, 4
        %v6609 = vshll.u32 %v6285, 16
        %v6611 = vrot.slane %v6609, 5
        %v6612 = vsel %vm332, %v6607, %v6611
        %v6613 = vshrl.u32 %v6285, 16
        %v6615 = vrot.slane %v6613, 4
        %v6616 = vor.u32 %v6615, %v6611
        %v6617 = vrot.slane %v6616, 4
        %v6619 = vshll.u32 %v6286, 16
        %v6621 = vrot.slane %v6619, 5
        %v6622 = vsel %vm332, %v6617, %v6621
        %v6623 = vshrl.u32 %v6286, 16
        %v6625 = vrot.slane %v6623, 4
        %v6626 = vor.u32 %v6625, %v6621
        %v6627 = vrot.slane %v6626, 4
        %v6629 = vshll.u32 %v6287, 16
        %v6631 = vrot.slane %v6629, 5
        %v6632 = vsel %vm332, %v6627, %v6631
        %v6633 = vshrl.u32 %v6287, 16
        %v6635 = vrot.slane %v6633, 4
        %v6636 = vor.u32 %v6635, %v6631
        %v6637 = vrot.slane %v6636, 4
        %v6639 = vshll.u32 %v6288, 16
        %v6641 = vrot.slane %v6639, 5
        %v6642 = vsel %vm332, %v6637, %v6641
        %v6643 = vshrl.u32 %v6288, 16
        %v6645 = vrot.slane %v6643, 4
        %v6646 = vor.u32 %v6645, %v6641
        %v6647 = vrot.slane %v6646, 4
        %v6649 = vshll.u32 %v6289, 16
        %v6651 = vrot.slane %v6649, 5
        %v6652 = vsel %vm332, %v6647, %v6651
        %v6653 = vshrl.u32 %v6289, 16
        %v6655 = vrot.slane %v6653, 4
        %v6656 = vor.u32 %v6655, %v6651
        %v6657 = vrot.slane %v6656, 4
        %v6659 = vshll.u32 %v6290, 16
        %v6661 = vrot.slane %v6659, 5
        %v6662 = vsel %vm332, %v6657, %v6661
        %v6664 = vshrl.u32 %v6291, 16
        %v6666 = vrot.slane %v6664, 4
        %v6667 = vshll.u32 %v6291, 16
        %v6669 = vrot.slane %v6667, 5
        %v6670 = vor.u32 %v6666, %v6669
        %v6671 = vrot.slane %v6670, 4
        %v6673 = vshll.u32 %v6292, 16
        %v6675 = vrot.slane %v6673, 5
        %v6676 = vsel %vm332, %v6671, %v6675
        %v6677 = vshrl.u32 %v6292, 16
        %v6679 = vrot.slane %v6677, 4
        %v6680 = vor.u32 %v6679, %v6675
        %v6681 = vrot.slane %v6680, 4
        %v6683 = vshll.u32 %v6293, 16
        %v6685 = vrot.slane %v6683, 5
        %v6686 = vsel %vm332, %v6681, %v6685
        %v6687 = vshrl.u32 %v6293, 16
        %v6689 = vrot.slane %v6687, 4
        %v6690 = vor.u32 %v6689, %v6685
        %v6691 = vrot.slane %v6690, 4
        %v6693 = vshll.u32 %v6294, 16
        %v6695 = vrot.slane %v6693, 5
        %v6696 = vsel %vm332, %v6691, %v6695
        %v6697 = vshrl.u32 %v6294, 16
        %v6699 = vrot.slane %v6697, 4
        %v6700 = vor.u32 %v6699, %v6695
        %v6701 = vrot.slane %v6700, 4
        %v6703 = vshll.u32 %v6295, 16
        %v6705 = vrot.slane %v6703, 5
        %v6706 = vsel %vm332, %v6701, %v6705
        %v6707 = vshrl.u32 %v6295, 16
        %v6709 = vrot.slane %v6707, 4
        %v6710 = vor.u32 %v6709, %v6705
        %v6711 = vrot.slane %v6710, 4
        %v6713 = vshll.u32 %v6296, 16
        %v6715 = vrot.slane %v6713, 5
        %v6716 = vsel %vm332, %v6711, %v6715
        %v6717 = vshrl.u32 %v6296, 16
        %v6719 = vrot.slane %v6717, 4
        %v6720 = vor.u32 %v6719, %v6715
        %v6721 = vrot.slane %v6720, 4
        %v6723 = vshll.u32 %v6297, 16
        %v6725 = vrot.slane %v6723, 5
        %v6726 = vsel %vm332, %v6721, %v6725
        %v6727 = vshrl.u32 %v6297, 16
        %v6729 = vrot.slane %v6727, 4
        %v6730 = vor.u32 %v6729, %v6725
        %v6731 = vrot.slane %v6730, 4
        %v6733 = vshll.u32 %v6298, 16
        %v6735 = vrot.slane %v6733, 5
        %v6736 = vsel %vm332, %v6731, %v6735
        %v6737 = vshrl.u32 %v6298, 16
        %v6739 = vrot.slane %v6737, 4
        %v6740 = vor.u32 %v6739, %v6735
        %v6741 = vrot.slane %v6740, 4
        %v6743 = vshll.u32 %v6299, 16
        %v6745 = vrot.slane %v6743, 5
        %v6746 = vsel %vm332, %v6741, %v6745
        %v6748 = vshrl.u32 %v6300, 16
        %v6750 = vrot.slane %v6748, 4
        %v6751 = vshll.u32 %v6300, 16
        %v6753 = vrot.slane %v6751, 5
        %v6754 = vor.u32 %v6750, %v6753
        %v6755 = vrot.slane %v6754, 4
        %v6757 = vshll.u32 %v6301, 16
        %v6759 = vrot.slane %v6757, 5
        %v6760 = vsel %vm332, %v6755, %v6759
        %v6761 = vshrl.u32 %v6301, 16
        %v6763 = vrot.slane %v6761, 4
        %v6764 = vor.u32 %v6763, %v6759
        %v6765 = vrot.slane %v6764, 4
        %v6767 = vshll.u32 %v6302, 16
        %v6769 = vrot.slane %v6767, 5
        %v6770 = vsel %vm332, %v6765, %v6769
        %v6771 = vshrl.u32 %v6302, 16
        %v6773 = vrot.slane %v6771, 4
        %v6774 = vor.u32 %v6773, %v6769
        %v6775 = vrot.slane %v6774, 4
        %v6777 = vshll.u32 %v6303, 16
        %v6779 = vrot.slane %v6777, 5
        %v6780 = vsel %vm332, %v6775, %v6779
        %v6781 = vshrl.u32 %v6303, 16
        %v6783 = vrot.slane %v6781, 4
        %v6784 = vor.u32 %v6783, %v6779
        %v6785 = vrot.slane %v6784, 4
        %v6787 = vshll.u32 %v6304, 16
        %v6789 = vrot.slane %v6787, 5
        %v6790 = vsel %vm332, %v6785, %v6789
        %v6791 = vshrl.u32 %v6304, 16
        %v6793 = vrot.slane %v6791, 4
        %v6794 = vor.u32 %v6793, %v6789
        %v6795 = vrot.slane %v6794, 4
        %v6797 = vshll.u32 %v6305, 16
        %v6799 = vrot.slane %v6797, 5
        %v6800 = vsel %vm332, %v6795, %v6799
        %v6801 = vshrl.u32 %v6305, 16
        %v6803 = vrot.slane %v6801, 4
        %v6804 = vor.u32 %v6803, %v6799
        %v6805 = vrot.slane %v6804, 4
        %v6807 = vshll.u32 %v6306, 16
        %v6809 = vrot.slane %v6807, 5
        %v6810 = vsel %vm332, %v6805, %v6809
        %v6811 = vshrl.u32 %v6306, 16
        %v6813 = vrot.slane %v6811, 4
        %v6814 = vor.u32 %v6813, %v6809
        %v6815 = vrot.slane %v6814, 4
        %v6817 = vshll.u32 %v6307, 16
        %v6819 = vrot.slane %v6817, 5
        %v6820 = vsel %vm332, %v6815, %v6819
        %v6821 = vshrl.u32 %v6307, 16
        %v6823 = vrot.slane %v6821, 4
        %v6824 = vor.u32 %v6823, %v6819
        %v6825 = vrot.slane %v6824, 4
        %v6827 = vshll.u32 %v6308, 16
        %v6829 = vrot.slane %v6827, 5
        %v6830 = vsel %vm332, %v6825, %v6829
        %v6832 = vshrl.u32 %v6309, 16
        %v6834 = vrot.slane %v6832, 4
        %v6835 = vshll.u32 %v6309, 16
        %v6837 = vrot.slane %v6835, 5
        %v6838 = vor.u32 %v6834, %v6837
        %v6839 = vrot.slane %v6838, 4
        %v6841 = vshll.u32 %v6310, 16
        %v6843 = vrot.slane %v6841, 5
        %v6844 = vsel %vm332, %v6839, %v6843
        %v6845 = vshrl.u32 %v6310, 16
        %v6847 = vrot.slane %v6845, 4
        %v6848 = vor.u32 %v6847, %v6843
        %v6849 = vrot.slane %v6848, 4
        %v6851 = vshll.u32 %v6311, 16
        %v6853 = vrot.slane %v6851, 5
        %v6854 = vsel %vm332, %v6849, %v6853
        %v6855 = vshrl.u32 %v6311, 16
        %v6857 = vrot.slane %v6855, 4
        %v6858 = vor.u32 %v6857, %v6853
        %v6859 = vrot.slane %v6858, 4
        %v6861 = vshll.u32 %v6312, 16
        %v6863 = vrot.slane %v6861, 5
        %v6864 = vsel %vm332, %v6859, %v6863
        %v6865 = vshrl.u32 %v6312, 16
        %v6867 = vrot.slane %v6865, 4
        %v6868 = vor.u32 %v6867, %v6863
        %v6869 = vrot.slane %v6868, 4
        %v6871 = vshll.u32 %v6313, 16
        %v6873 = vrot.slane %v6871, 5
        %v6874 = vsel %vm332, %v6869, %v6873
        %v6875 = vshrl.u32 %v6313, 16
        %v6877 = vrot.slane %v6875, 4
        %v6878 = vor.u32 %v6877, %v6873
        %v6879 = vrot.slane %v6878, 4
        %v6881 = vshll.u32 %v6314, 16
        %v6883 = vrot.slane %v6881, 5
        %v6884 = vsel %vm332, %v6879, %v6883
        %v6885 = vshrl.u32 %v6314, 16
        %v6887 = vrot.slane %v6885, 4
        %v6888 = vor.u32 %v6887, %v6883
        %v6889 = vrot.slane %v6888, 4
        %v6891 = vshll.u32 %v6315, 16
        %v6893 = vrot.slane %v6891, 5
        %v6894 = vsel %vm332, %v6889, %v6893
        %v6895 = vshrl.u32 %v6315, 16
        %v6897 = vrot.slane %v6895, 4
        %v6898 = vor.u32 %v6897, %v6893
        %v6899 = vrot.slane %v6898, 4
        %v6901 = vshll.u32 %v6316, 16
        %v6903 = vrot.slane %v6901, 5
        %v6904 = vsel %vm332, %v6899, %v6903
        %v6905 = vshrl.u32 %v6316, 16
        %v6907 = vrot.slane %v6905, 4
        %v6908 = vor.u32 %v6907, %v6903
        %v6909 = vrot.slane %v6908, 4
        %v6911 = vshll.u32 %v6317, 16
        %v6913 = vrot.slane %v6911, 5
        %v6914 = vsel %vm332, %v6909, %v6913
        %v6916 = vshrl.u32 %v6318, 16
        %v6918 = vrot.slane %v6916, 4
        %v6919 = vshll.u32 %v6318, 16
        %v6921 = vrot.slane %v6919, 5
        %v6922 = vor.u32 %v6918, %v6921
        %v6923 = vrot.slane %v6922, 4
        %v6925 = vshll.u32 %v6319, 16
        %v6927 = vrot.slane %v6925, 5
        %v6928 = vsel %vm332, %v6923, %v6927
        %v6929 = vshrl.u32 %v6319, 16
        %v6931 = vrot.slane %v6929, 4
        %v6932 = vor.u32 %v6931, %v6927
        %v6933 = vrot.slane %v6932, 4
        %v6935 = vshll.u32 %v6320, 16
        %v6937 = vrot.slane %v6935, 5
        %v6938 = vsel %vm332, %v6933, %v6937
        %v6939 = vshrl.u32 %v6320, 16
        %v6941 = vrot.slane %v6939, 4
        %v6942 = vor.u32 %v6941, %v6937
        %v6943 = vrot.slane %v6942, 4
        %v6945 = vshll.u32 %v6321, 16
        %v6947 = vrot.slane %v6945, 5
        %v6948 = vsel %vm332, %v6943, %v6947
        %v6949 = vshrl.u32 %v6321, 16
        %v6951 = vrot.slane %v6949, 4
        %v6952 = vor.u32 %v6951, %v6947
        %v6953 = vrot.slane %v6952, 4
        %v6955 = vshll.u32 %v6322, 16
        %v6957 = vrot.slane %v6955, 5
        %v6958 = vsel %vm332, %v6953, %v6957
        %v6959 = vshrl.u32 %v6322, 16
        %v6961 = vrot.slane %v6959, 4
        %v6962 = vor.u32 %v6961, %v6957
        %v6963 = vrot.slane %v6962, 4
        %v6965 = vshll.u32 %v6323, 16
        %v6967 = vrot.slane %v6965, 5
        %v6968 = vsel %vm332, %v6963, %v6967
        %v6969 = vshrl.u32 %v6323, 16
        %v6971 = vrot.slane %v6969, 4
        %v6972 = vor.u32 %v6971, %v6967
        %v6973 = vrot.slane %v6972, 4
        %v6975 = vshll.u32 %v6324, 16
        %v6977 = vrot.slane %v6975, 5
        %v6978 = vsel %vm332, %v6973, %v6977
        %v6979 = vshrl.u32 %v6324, 16
        %v6981 = vrot.slane %v6979, 4
        %v6982 = vor.u32 %v6981, %v6977
        %v6983 = vrot.slane %v6982, 4
        %v6985 = vshll.u32 %v6325, 16
        %v6987 = vrot.slane %v6985, 5
        %v6988 = vsel %vm332, %v6983, %v6987
        %v6989 = vshrl.u32 %v6325, 16
        %v6991 = vrot.slane %v6989, 4
        %v6992 = vor.u32 %v6991, %v6987
        %v6993 = vrot.slane %v6992, 4
        %v6995 = vshll.u32 %v6326, 16
        %v6997 = vrot.slane %v6995, 5
        %v6998 = vsel %vm332, %v6993, %v6997
        %v6999 = vld [vmem:[#allocation5 + $0x1c0] sm:$0xf]
        %v7000 = vld [vmem:[#allocation5 + $0x1c4] sm:$0xf]
        %v7001 = vld [vmem:[#allocation5 + $0x1c8] sm:$0xf]
        %v7002 = vld [vmem:[#allocation5 + $0x1cc] sm:$0xf]
        %v7003 = vld [vmem:[#allocation5 + $0x1d0] sm:$0xf]
        %v7004 = vld [vmem:[#allocation5 + $0x1d4] sm:$0xf]
        %v7005 = vld [vmem:[#allocation5 + $0x1d8] sm:$0xf]
        %v7006 = vld [vmem:[#allocation5 + $0x1dc] sm:$0xf]
        %v7007 = vld [vmem:[#allocation5 + $0x1e0] sm:$0xf]
        %v7008 = vld [vmem:[#allocation5 + $0x1e4] sm:$0xf]
        %v7009 = vld [vmem:[#allocation5 + $0x1e8] sm:$0xf]
        %v7010 = vld [vmem:[#allocation5 + $0x1ec] sm:$0xf]
        %v7011 = vld [vmem:[#allocation5 + $0x1f0] sm:$0xf]
        %v7012 = vld [vmem:[#allocation5 + $0x1f4] sm:$0xf]
        %v7013 = vld [vmem:[#allocation5 + $0x1f8] sm:$0xf]
        %v7014 = vld [vmem:[#allocation5 + $0x1fc] sm:$0xf]
        %v7015 = vunpack.c.l.b16 %v6340
        %v7016 = vunpack.c.l.b16 %v6350
        %v7017 = vunpack.c.l.b16 %v6360
        %v7018 = vunpack.c.l.b16 %v6370
        %v7019 = vunpack.c.l.b16 %v6380
        %v7020 = vunpack.c.l.b16 %v6390
        %v7021 = vunpack.c.l.b16 %v6400
        %v7022 = vunpack.c.l.b16 %v6410
        %v7023 = vunpack.c.l.b16 %v6424
        %v7024 = vunpack.c.l.b16 %v6434
        %v7025 = vunpack.c.l.b16 %v6444
        %v7026 = vunpack.c.l.b16 %v6454
        %v7027 = vunpack.c.l.b16 %v6464
        %v7028 = vunpack.c.l.b16 %v6474
        %v7029 = vunpack.c.l.b16 %v6484
        %v7030 = vunpack.c.l.b16 %v6494
        %v7031 = vunpack.c.l.b16 %v6508
        %v7032 = vunpack.c.l.b16 %v6518
        %v7033 = vunpack.c.l.b16 %v6528
        %v7034 = vunpack.c.l.b16 %v6538
        %v7035 = vunpack.c.l.b16 %v6548
        %v7036 = vunpack.c.l.b16 %v6558
        %v7037 = vunpack.c.l.b16 %v6568
        %v7038 = vunpack.c.l.b16 %v6578
        %v7039 = vunpack.c.l.b16 %v6592
        %v7040 = vunpack.c.l.b16 %v6602
        %v7041 = vunpack.c.l.b16 %v6612
        %v7042 = vunpack.c.l.b16 %v6622
        %v7043 = vunpack.c.l.b16 %v6632
        %v7044 = vunpack.c.l.b16 %v6642
        %v7045 = vunpack.c.l.b16 %v6652
        %v7046 = vunpack.c.l.b16 %v6662
        %v7047 = vunpack.c.l.b16 %v6676
        %v7048 = vunpack.c.l.b16 %v6686
        %v7049 = vunpack.c.l.b16 %v6696
        %v7050 = vunpack.c.l.b16 %v6706
        %v7051 = vunpack.c.l.b16 %v6716
        %v7052 = vunpack.c.l.b16 %v6726
        %v7053 = vunpack.c.l.b16 %v6736
        %v7054 = vunpack.c.l.b16 %v6746
        %v7055 = vunpack.c.l.b16 %v6760
        %v7056 = vunpack.c.l.b16 %v6770
        %v7057 = vunpack.c.l.b16 %v6780
        %v7058 = vunpack.c.l.b16 %v6790
        %v7059 = vunpack.c.l.b16 %v6800
        %v7060 = vunpack.c.l.b16 %v6810
        %v7061 = vunpack.c.l.b16 %v6820
        %v7062 = vunpack.c.l.b16 %v6830
        %v7063 = vunpack.c.l.b16 %v6844
        %v7064 = vunpack.c.l.b16 %v6854
        %v7065 = vunpack.c.l.b16 %v6864
        %v7066 = vunpack.c.l.b16 %v6874
        %v7067 = vunpack.c.l.b16 %v6884
        %v7068 = vunpack.c.l.b16 %v6894
        %v7069 = vunpack.c.l.b16 %v6904
        %v7070 = vunpack.c.l.b16 %v6914
        %v7071 = vunpack.c.l.b16 %v6928
        %v7072 = vunpack.c.l.b16 %v6938
        %v7073 = vunpack.c.l.b16 %v6948
        %v7074 = vunpack.c.l.b16 %v6958
        %v7075 = vunpack.c.l.b16 %v6968
        %v7076 = vunpack.c.l.b16 %v6978
        %v7077 = vunpack.c.l.b16 %v6988
        %v7078 = vunpack.c.l.b16 %v6998
        %v7079 = vpack.c.b16 %v7016, %v7015
        %v7080 = vpack.c.b16 %v7018, %v7017
        %v7081 = vpack.c.b16 %v7020, %v7019
        %v7082 = vpack.c.b16 %v7022, %v7021
        %v7083 = vpack.c.b16 %v7024, %v7023
        %v7084 = vpack.c.b16 %v7026, %v7025
        %v7085 = vpack.c.b16 %v7028, %v7027
        %v7086 = vpack.c.b16 %v7030, %v7029
        %v7087 = vpack.c.b16 %v7032, %v7031
        %v7088 = vpack.c.b16 %v7034, %v7033
        %v7089 = vpack.c.b16 %v7036, %v7035
        %v7090 = vpack.c.b16 %v7038, %v7037
        %v7091 = vpack.c.b16 %v7040, %v7039
        %v7092 = vpack.c.b16 %v7042, %v7041
        %v7093 = vpack.c.b16 %v7044, %v7043
        %v7094 = vpack.c.b16 %v7046, %v7045
        %v7095 = vpack.c.b16 %v7048, %v7047
        %v7096 = vpack.c.b16 %v7050, %v7049
        %v7097 = vpack.c.b16 %v7052, %v7051
        %v7098 = vpack.c.b16 %v7054, %v7053
        %v7099 = vpack.c.b16 %v7056, %v7055
        %v7100 = vpack.c.b16 %v7058, %v7057
        %v7101 = vpack.c.b16 %v7060, %v7059
        %v7102 = vpack.c.b16 %v7062, %v7061
        %v7103 = vpack.c.b16 %v7064, %v7063
        %v7104 = vpack.c.b16 %v7066, %v7065
        %v7105 = vpack.c.b16 %v7068, %v7067
        %v7106 = vpack.c.b16 %v7070, %v7069
        %v7107 = vpack.c.b16 %v7072, %v7071
        %v7108 = vpack.c.b16 %v7074, %v7073
        %v7109 = vpack.c.b16 %v7076, %v7075
        %v7110 = vpack.c.b16 %v7078, %v7077
        %v7159 = vunpack.c.l.b16 %v6999
        %v7160 = vunpack.c.l.b16 %v7000
        %v7161 = vunpack.c.l.b16 %v7001
        %v7162 = vunpack.c.l.b16 %v7002
        %v7163 = vunpack.c.l.b16 %v7003
        %v7164 = vunpack.c.l.b16 %v7004
        %v7165 = vunpack.c.l.b16 %v7005
        %v7166 = vunpack.c.l.b16 %v7006
        %v7167 = vunpack.c.l.b16 %v7007
        %v7168 = vunpack.c.l.b16 %v7008
        %v7169 = vunpack.c.l.b16 %v7009
        %v7170 = vunpack.c.l.b16 %v7010
        %v7171 = vunpack.c.l.b16 %v7011
        %v7172 = vunpack.c.l.b16 %v7012
        %v7173 = vunpack.c.l.b16 %v7013
        %v7174 = vunpack.c.l.b16 %v7014
        %v7175 = vpack.c.b16 %v7160, %v7159
        %v7176 = vpack.c.b16 %v7162, %v7161
        %v7177 = vpack.c.b16 %v7164, %v7163
        %v7178 = vpack.c.b16 %v7166, %v7165
        %v7179 = vpack.c.b16 %v7168, %v7167
        %v7180 = vpack.c.b16 %v7170, %v7169
        %v7181 = vpack.c.b16 %v7172, %v7171
        %v7182 = vpack.c.b16 %v7174, %v7173
        %7191 = vmatprep.subr.bf16.mxu0 0
        %7192 = vmatpush1.bf16.msra.mxu0 %v7175
        %7193 = vmatprep.subr.bf16.mxu0 0
        %7194 = vmatpush1.bf16.msra.mxu0 %v7176
        %7195 = vmatprep.subr.bf16.mxu0 0
        %7196 = vmatpush1.bf16.msra.mxu0 %v7177
        %7197 = vmatprep.subr.bf16.mxu0 0
        %7198 = vmatpush1.bf16.msra.mxu0 %v7178
        %7199 = vmatprep.subr.bf16.mxu0 0
        %7200 = vmatpush1.bf16.msra.mxu0 %v7179
        %7201 = vmatprep.subr.bf16.mxu0 0
        %7202 = vmatpush1.bf16.msra.mxu0 %v7180
        %7203 = vmatprep.subr.bf16.mxu0 0
        %7204 = vmatpush1.bf16.msra.mxu0 %v7181
        %7205 = vmatprep.subr.bf16.mxu0 0
        %7206 = vmatpush1.bf16.msra.mxu0 %v7182
        %7207 = vmatprep.subr.bf16.mxu0 0
        %7208 = vmatpush1.bf16.msra.mxu0 0
        %7209 = vmatprep.subr.bf16.mxu0 0
        %7210 = vmatpush1.bf16.msra.mxu0 0
        %7211 = vmatprep.subr.bf16.mxu0 0
        %7212 = vmatpush1.bf16.msra.mxu0 0
        %7213 = vmatprep.subr.bf16.mxu0 0
        %7214 = vmatpush1.bf16.msra.mxu0 0
        %7215 = vmatprep.subr.bf16.mxu0 0
        %7216 = vmatpush1.bf16.msra.mxu0 0
        %7217 = vmatprep.subr.bf16.mxu0 0
        %7218 = vmatpush1.bf16.msra.mxu0 0
        %7219 = vmatprep.subr.bf16.mxu0 0
        %7220 = vmatpush1.bf16.msra.mxu0 0
        %7221 = vmatprep.subr.bf16.mxu0 0
        %7222 = vmatpush1.bf16.msra.mxu0 0
        %7223 = vmatprep.mubr.bf16.mxu0 0
        %7224 = vmatmul.mubr.bf16.gmra.mrb[0].mxu0 %v7079
        %v7225 = vpop.f32.mrb[0].mxu0
        %v7226 = vadd.f32 0.0, %v7225
        %v7227 = vpop.f32.mrb[0].mxu0
        %v7228 = vpop.f32.mrb[0].mxu0
        %v7229 = vadd.f32 0.0, %v7228
        %v7230 = vpop.f32.mrb[0].mxu0
        %7231 = vmatprep.mubr.bf16.mxu0 0
        %7232 = vmatmul.mubr.bf16.gmra.mrb[0].mxu0 %v7080
        %v7233 = vpop.f32.mrb[0].mxu0
        %v7234 = vadd.f32 0.0, %v7233
        %v7235 = vpop.f32.mrb[0].mxu0
        %v7236 = vpop.f32.mrb[0].mxu0
        %v7237 = vadd.f32 0.0, %v7236
        %v7238 = vpop.f32.mrb[0].mxu0
        %7239 = vmatprep.mubr.bf16.mxu0 0
        %7240 = vmatmul.mubr.bf16.gmra.mrb[0].mxu0 %v7081
        %v7241 = vpop.f32.mrb[0].mxu0
        %v7242 = vadd.f32 0.0, %v7241
        %v7243 = vpop.f32.mrb[0].mxu0
        %v7244 = vpop.f32.mrb[0].mxu0
        %v7245 = vadd.f32 0.0, %v7244
        %v7246 = vpop.f32.mrb[0].mxu0
        %7247 = vmatprep.mubr.bf16.mxu0 0
        %7248 = vmatmul.mubr.bf16.gmra.mrb[0].mxu0 %v7082
        %v7249 = vpop.f32.mrb[0].mxu0
        %v7250 = vadd.f32 0.0, %v7249
        %v7251 = vpop.f32.mrb[0].mxu0
        %v7252 = vpop.f32.mrb[0].mxu0
        %v7253 = vadd.f32 0.0, %v7252
        %v7254 = vpop.f32.mrb[0].mxu0
        %7255 = vmatprep.mubr.bf16.mxu0 0
        %7256 = vmatmul.mubr.bf16.gmra.mrb[0].mxu0 %v7083
        %v7257 = vpop.f32.mrb[0].mxu0
        %v7258 = vadd.f32 0.0, %v7257
        %v7259 = vpop.f32.mrb[0].mxu0
        %v7260 = vpop.f32.mrb[0].mxu0
        %v7261 = vadd.f32 0.0, %v7260
        %v7262 = vpop.f32.mrb[0].mxu0
        %7263 = vmatprep.mubr.bf16.mxu0 0
        %7264 = vmatmul.mubr.bf16.gmra.mrb[0].mxu0 %v7084
        %v7265 = vpop.f32.mrb[0].mxu0
        %v7266 = vadd.f32 0.0, %v7265
        %v7267 = vpop.f32.mrb[0].mxu0
        %v7268 = vpop.f32.mrb[0].mxu0
        %v7269 = vadd.f32 0.0, %v7268
        %v7270 = vpop.f32.mrb[0].mxu0
        %7271 = vmatprep.mubr.bf16.mxu0 0
        %7272 = vmatmul.mubr.bf16.gmra.mrb[0].mxu0 %v7085
        %v7273 = vpop.f32.mrb[0].mxu0
        %v7274 = vadd.f32 0.0, %v7273
        %v7275 = vpop.f32.mrb[0].mxu0
        %v7276 = vpop.f32.mrb[0].mxu0
        %v7277 = vadd.f32 0.0, %v7276
        %v7278 = vpop.f32.mrb[0].mxu0
        %7279 = vmatprep.mubr.bf16.mxu0 0
        %7280 = vmatmul.mubr.bf16.gmra.mrb[0].mxu0 %v7086
        %v7281 = vpop.f32.mrb[0].mxu0
        %v7282 = vadd.f32 0.0, %v7281
        %v7283 = vpop.f32.mrb[0].mxu0
        %v7284 = vpop.f32.mrb[0].mxu0
        %v7285 = vadd.f32 0.0, %v7284
        %v7286 = vpop.f32.mrb[0].mxu0
        %7287 = vmatprep.mubr.bf16.mxu0 0
        %7288 = vmatmul.mubr.bf16.gmra.mrb[0].mxu0 %v7087
        %v7289 = vpop.f32.mrb[0].mxu0
        %v7290 = vadd.f32 0.0, %v7289
        %v7291 = vpop.f32.mrb[0].mxu0
        %v7292 = vpop.f32.mrb[0].mxu0
        %v7293 = vadd.f32 0.0, %v7292
        %v7294 = vpop.f32.mrb[0].mxu0
        %7295 = vmatprep.mubr.bf16.mxu0 0
        %7296 = vmatmul.mubr.bf16.gmra.mrb[0].mxu0 %v7088
        %v7297 = vpop.f32.mrb[0].mxu0
        %v7298 = vadd.f32 0.0, %v7297
        %v7299 = vpop.f32.mrb[0].mxu0
        %v7300 = vpop.f32.mrb[0].mxu0
        %v7301 = vadd.f32 0.0, %v7300
        %v7302 = vpop.f32.mrb[0].mxu0
        %7303 = vmatprep.mubr.bf16.mxu0 0
        %7304 = vmatmul.mubr.bf16.gmra.mrb[0].mxu0 %v7089
        %v7305 = vpop.f32.mrb[0].mxu0
        %v7306 = vadd.f32 0.0, %v7305
        %v7307 = vpop.f32.mrb[0].mxu0
        %v7308 = vpop.f32.mrb[0].mxu0
        %v7309 = vadd.f32 0.0, %v7308
        %v7310 = vpop.f32.mrb[0].mxu0
        %7311 = vmatprep.mubr.bf16.mxu0 0
        %7312 = vmatmul.mubr.bf16.gmra.mrb[0].mxu0 %v7090
        %v7313 = vpop.f32.mrb[0].mxu0
        %v7314 = vadd.f32 0.0, %v7313
        %v7315 = vpop.f32.mrb[0].mxu0
        %v7316 = vpop.f32.mrb[0].mxu0
        %v7317 = vadd.f32 0.0, %v7316
        %v7318 = vpop.f32.mrb[0].mxu0
        %7319 = vmatprep.mubr.bf16.mxu0 0
        %7320 = vmatmul.mubr.bf16.gmra.mrb[0].mxu0 %v7091
        %v7321 = vpop.f32.mrb[0].mxu0
        %v7322 = vadd.f32 0.0, %v7321
        %v7323 = vpop.f32.mrb[0].mxu0
        %v7324 = vpop.f32.mrb[0].mxu0
        %v7325 = vadd.f32 0.0, %v7324
        %v7326 = vpop.f32.mrb[0].mxu0
        %7327 = vmatprep.mubr.bf16.mxu0 0
        %7328 = vmatmul.mubr.bf16.gmra.mrb[0].mxu0 %v7092
        %v7329 = vpop.f32.mrb[0].mxu0
        %v7330 = vadd.f32 0.0, %v7329
        %v7331 = vpop.f32.mrb[0].mxu0
        %v7332 = vpop.f32.mrb[0].mxu0
        %v7333 = vadd.f32 0.0, %v7332
        %v7334 = vpop.f32.mrb[0].mxu0
        %7335 = vmatprep.mubr.bf16.mxu0 0
        %7336 = vmatmul.mubr.bf16.gmra.mrb[0].mxu0 %v7093
        %v7337 = vpop.f32.mrb[0].mxu0
        %v7338 = vadd.f32 0.0, %v7337
        %v7339 = vpop.f32.mrb[0].mxu0
        %v7340 = vpop.f32.mrb[0].mxu0
        %v7341 = vadd.f32 0.0, %v7340
        %v7342 = vpop.f32.mrb[0].mxu0
        %7343 = vmatprep.mubr.bf16.mxu0 0
        %7344 = vmatmul.mubr.bf16.gmra.mrb[0].mxu0 %v7094
        %v7345 = vpop.f32.mrb[0].mxu0
        %v7346 = vadd.f32 0.0, %v7345
        %v7347 = vpop.f32.mrb[0].mxu0
        %v7348 = vpop.f32.mrb[0].mxu0
        %v7349 = vadd.f32 0.0, %v7348
        %v7350 = vpop.f32.mrb[0].mxu0
        %7351 = vmatprep.mubr.bf16.mxu0 0
        %7352 = vmatmul.mubr.bf16.gmra.mrb[0].mxu0 %v7095
        %v7353 = vpop.f32.mrb[0].mxu0
        %v7354 = vadd.f32 0.0, %v7353
        %v7355 = vpop.f32.mrb[0].mxu0
        %v7356 = vpop.f32.mrb[0].mxu0
        %v7357 = vadd.f32 0.0, %v7356
        %v7358 = vpop.f32.mrb[0].mxu0
        %7359 = vmatprep.mubr.bf16.mxu0 0
        %7360 = vmatmul.mubr.bf16.gmra.mrb[0].mxu0 %v7096
        %v7361 = vpop.f32.mrb[0].mxu0
        %v7362 = vadd.f32 0.0, %v7361
        %v7363 = vpop.f32.mrb[0].mxu0
        %v7364 = vpop.f32.mrb[0].mxu0
        %v7365 = vadd.f32 0.0, %v7364
        %v7366 = vpop.f32.mrb[0].mxu0
        %7367 = vmatprep.mubr.bf16.mxu0 0
        %7368 = vmatmul.mubr.bf16.gmra.mrb[0].mxu0 %v7097
        %v7369 = vpop.f32.mrb[0].mxu0
        %v7370 = vadd.f32 0.0, %v7369
        %v7371 = vpop.f32.mrb[0].mxu0
        %v7372 = vpop.f32.mrb[0].mxu0
        %v7373 = vadd.f32 0.0, %v7372
        %v7374 = vpop.f32.mrb[0].mxu0
        %7375 = vmatprep.mubr.bf16.mxu0 0
        %7376 = vmatmul.mubr.bf16.gmra.mrb[0].mxu0 %v7098
        %v7377 = vpop.f32.mrb[0].mxu0
        %v7378 = vadd.f32 0.0, %v7377
        %v7379 = vpop.f32.mrb[0].mxu0
        %v7380 = vpop.f32.mrb[0].mxu0
        %v7381 = vadd.f32 0.0, %v7380
        %v7382 = vpop.f32.mrb[0].mxu0
        %7383 = vmatprep.mubr.bf16.mxu0 0
        %7384 = vmatmul.mubr.bf16.gmra.mrb[0].mxu0 %v7099
        %v7385 = vpop.f32.mrb[0].mxu0
        %v7386 = vadd.f32 0.0, %v7385
        %v7387 = vpop.f32.mrb[0].mxu0
        %v7388 = vpop.f32.mrb[0].mxu0
        %v7389 = vadd.f32 0.0, %v7388
        %v7390 = vpop.f32.mrb[0].mxu0
        %7391 = vmatprep.mubr.bf16.mxu0 0
        %7392 = vmatmul.mubr.bf16.gmra.mrb[0].mxu0 %v7100
        %v7393 = vpop.f32.mrb[0].mxu0
        %v7394 = vadd.f32 0.0, %v7393
        %v7395 = vpop.f32.mrb[0].mxu0
        %v7396 = vpop.f32.mrb[0].mxu0
        %v7397 = vadd.f32 0.0, %v7396
        %v7398 = vpop.f32.mrb[0].mxu0
        %7399 = vmatprep.mubr.bf16.mxu0 0
        %7400 = vmatmul.mubr.bf16.gmra.mrb[0].mxu0 %v7101
        %v7401 = vpop.f32.mrb[0].mxu0
        %v7402 = vadd.f32 0.0, %v7401
        %v7403 = vpop.f32.mrb[0].mxu0
        %v7404 = vpop.f32.mrb[0].mxu0
        %v7405 = vadd.f32 0.0, %v7404
        %v7406 = vpop.f32.mrb[0].mxu0
        %7407 = vmatprep.mubr.bf16.mxu0 0
        %7408 = vmatmul.mubr.bf16.gmra.mrb[0].mxu0 %v7102
        %v7409 = vpop.f32.mrb[0].mxu0
        %v7410 = vadd.f32 0.0, %v7409
        %v7411 = vpop.f32.mrb[0].mxu0
        %v7412 = vpop.f32.mrb[0].mxu0
        %v7413 = vadd.f32 0.0, %v7412
        %v7414 = vpop.f32.mrb[0].mxu0
        %7415 = vmatprep.mubr.bf16.mxu0 0
        %7416 = vmatmul.mubr.bf16.gmra.mrb[0].mxu0 %v7103
        %v7417 = vpop.f32.mrb[0].mxu0
        %v7418 = vadd.f32 0.0, %v7417
        %v7419 = vpop.f32.mrb[0].mxu0
        %v7420 = vpop.f32.mrb[0].mxu0
        %v7421 = vadd.f32 0.0, %v7420
        %v7422 = vpop.f32.mrb[0].mxu0
        %7423 = vmatprep.mubr.bf16.mxu0 0
        %7424 = vmatmul.mubr.bf16.gmra.mrb[0].mxu0 %v7104
        %v7425 = vpop.f32.mrb[0].mxu0
        %v7426 = vadd.f32 0.0, %v7425
        %v7427 = vpop.f32.mrb[0].mxu0
        %v7428 = vpop.f32.mrb[0].mxu0
        %v7429 = vadd.f32 0.0, %v7428
        %v7430 = vpop.f32.mrb[0].mxu0
        %7431 = vmatprep.mubr.bf16.mxu0 0
        %7432 = vmatmul.mubr.bf16.gmra.mrb[0].mxu0 %v7105
        %v7433 = vpop.f32.mrb[0].mxu0
        %v7434 = vadd.f32 0.0, %v7433
        %v7435 = vpop.f32.mrb[0].mxu0
        %v7436 = vpop.f32.mrb[0].mxu0
        %v7437 = vadd.f32 0.0, %v7436
        %v7438 = vpop.f32.mrb[0].mxu0
        %7439 = vmatprep.mubr.bf16.mxu0 0
        %7440 = vmatmul.mubr.bf16.gmra.mrb[0].mxu0 %v7106
        %v7441 = vpop.f32.mrb[0].mxu0
        %v7442 = vadd.f32 0.0, %v7441
        %v7443 = vpop.f32.mrb[0].mxu0
        %v7444 = vpop.f32.mrb[0].mxu0
        %v7445 = vadd.f32 0.0, %v7444
        %v7446 = vpop.f32.mrb[0].mxu0
        %7447 = vmatprep.mubr.bf16.mxu0 0
        %7448 = vmatmul.mubr.bf16.gmra.mrb[0].mxu0 %v7107
        %v7449 = vpop.f32.mrb[0].mxu0
        %v7450 = vadd.f32 0.0, %v7449
        %v7451 = vpop.f32.mrb[0].mxu0
        %v7452 = vpop.f32.mrb[0].mxu0
        %v7453 = vadd.f32 0.0, %v7452
        %v7454 = vpop.f32.mrb[0].mxu0
        %7455 = vmatprep.mubr.bf16.mxu0 0
        %7456 = vmatmul.mubr.bf16.gmra.mrb[0].mxu0 %v7108
        %v7457 = vpop.f32.mrb[0].mxu0
        %v7458 = vadd.f32 0.0, %v7457
        %v7459 = vpop.f32.mrb[0].mxu0
        %v7460 = vpop.f32.mrb[0].mxu0
        %v7461 = vadd.f32 0.0, %v7460
        %v7462 = vpop.f32.mrb[0].mxu0
        %7463 = vmatprep.mubr.bf16.mxu0 0
        %7464 = vmatmul.mubr.bf16.gmra.mrb[0].mxu0 %v7109
        %v7465 = vpop.f32.mrb[0].mxu0
        %v7466 = vadd.f32 0.0, %v7465
        %v7467 = vpop.f32.mrb[0].mxu0
        %v7468 = vpop.f32.mrb[0].mxu0
        %v7469 = vadd.f32 0.0, %v7468
        %v7470 = vpop.f32.mrb[0].mxu0
        %7471 = vmatprep.mubr.bf16.mxu0 0
        %7472 = vmatmul.mubr.bf16.gmra.mrb[0].mxu0 %v7110
        %v7473 = vpop.f32.mrb[0].mxu0
        %v7474 = vadd.f32 0.0, %v7473
        %v7475 = vpop.f32.mrb[0].mxu0
        %v7476 = vpop.f32.mrb[0].mxu0
        %v7477 = vadd.f32 0.0, %v7476
        %v7478 = vpop.f32.mrb[0].mxu0
        %7479 = vdwg.mxu0
        %v7480 = vadd.f32 %v6191, %v7226
        %v7481 = vadd.f32 %v6192, %v7229
        %v7482 = vadd.f32 %v6193, %v7234
        %v7483 = vadd.f32 %v6194, %v7237
        %v7484 = vadd.f32 %v6195, %v7242
        %v7485 = vadd.f32 %v6196, %v7245
        %v7486 = vadd.f32 %v6197, %v7250
        %v7487 = vadd.f32 %v6198, %v7253
        %v7488 = vadd.f32 %v6199, %v7258
        %v7489 = vadd.f32 %v6200, %v7261
        %v7490 = vadd.f32 %v6201, %v7266
        %v7491 = vadd.f32 %v6202, %v7269
        %v7492 = vadd.f32 %v6203, %v7274
        %v7493 = vadd.f32 %v6204, %v7277
        %v7494 = vadd.f32 %v6205, %v7282
        %v7495 = vadd.f32 %v6206, %v7285
        %v7496 = vadd.f32 %v6207, %v7290
        %v7497 = vadd.f32 %v6208, %v7293
        %v7498 = vadd.f32 %v6209, %v7298
        %v7499 = vadd.f32 %v6210, %v7301
        %v7500 = vadd.f32 %v6211, %v7306
        %v7501 = vadd.f32 %v6212, %v7309
        %v7502 = vadd.f32 %v6213, %v7314
        %v7503 = vadd.f32 %v6214, %v7317
        %v7504 = vadd.f32 %v6215, %v7322
        %v7505 = vadd.f32 %v6216, %v7325
        %v7506 = vadd.f32 %v6217, %v7330
        %v7507 = vadd.f32 %v6218, %v7333
        %v7508 = vadd.f32 %v6219, %v7338
        %v7509 = vadd.f32 %v6220, %v7341
        %v7510 = vadd.f32 %v6221, %v7346
        %v7511 = vadd.f32 %v6222, %v7349
        %v7512 = vadd.f32 %v6223, %v7354
        %v7513 = vadd.f32 %v6224, %v7357
        %v7514 = vadd.f32 %v6225, %v7362
        %v7515 = vadd.f32 %v6226, %v7365
        %v7516 = vadd.f32 %v6227, %v7370
        %v7517 = vadd.f32 %v6228, %v7373
        %v7518 = vadd.f32 %v6229, %v7378
        %v7519 = vadd.f32 %v6230, %v7381
        %v7520 = vadd.f32 %v6231, %v7386
        %v7521 = vadd.f32 %v6232, %v7389
        %v7522 = vadd.f32 %v6233, %v7394
        %v7523 = vadd.f32 %v6234, %v7397
        %v7524 = vadd.f32 %v6235, %v7402
        %v7525 = vadd.f32 %v6236, %v7405
        %v7526 = vadd.f32 %v6237, %v7410
        %v7527 = vadd.f32 %v6238, %v7413
        %v7528 = vadd.f32 %v6239, %v7418
        %v7529 = vadd.f32 %v6240, %v7421
        %v7530 = vadd.f32 %v6241, %v7426
        %v7531 = vadd.f32 %v6242, %v7429
        %v7532 = vadd.f32 %v6243, %v7434
        %v7533 = vadd.f32 %v6244, %v7437
        %v7534 = vadd.f32 %v6245, %v7442
        %v7535 = vadd.f32 %v6246, %v7445
        %v7536 = vadd.f32 %v6247, %v7450
        %v7537 = vadd.f32 %v6248, %v7453
        %v7538 = vadd.f32 %v6249, %v7458
        %v7539 = vadd.f32 %v6250, %v7461
        %v7540 = vadd.f32 %v6251, %v7466
        %v7541 = vadd.f32 %v6252, %v7469
        %v7542 = vadd.f32 %v6253, %v7474
        %v7543 = vadd.f32 %v6254, %v7477
        %v7544 = vld [vmem:[%s5581] sm:$0xe]
        %v7545 = vld [vmem:[%s5581 + $0x24] sm:$0xe]
        %v7546 = vld [vmem:[%s5581 + $0x48] sm:$0xe]
        %v7547 = vld [vmem:[%s5581 + $0x6c] sm:$0xe]
        %v7548 = vld [vmem:[%s5581 + $0x90] sm:$0xe]
        %v7549 = vld [vmem:[%s5581 + $0xb4] sm:$0xe]
        %v7550 = vld [vmem:[%s5581 + $0xd8] sm:$0xe]
        %v7551 = vld [vmem:[%s5581 + $0xfc] sm:$0xe]
        %v7624 = vrot.slane %v7544, 5
        %v7625 = vrot.slane %v7624, 4
        %v7626 = vrot.slane %v6256, 5
        %v7627 = vsel %vm2041, %v7625, %v7626
        %v7628 = vrot.slane %v7626, 4
        %v7629 = vrot.slane %v6257, 5
        %v7630 = vsel %vm2041, %v7628, %v7629
        %v7631 = vrot.slane %v7629, 4
        %v7632 = vrot.slane %v6258, 5
        %v7633 = vsel %vm2041, %v7631, %v7632
        %v7634 = vrot.slane %v7632, 4
        %v7635 = vrot.slane %v6259, 5
        %v7636 = vsel %vm2041, %v7634, %v7635
        %v7637 = vrot.slane %v7635, 4
        %v7638 = vrot.slane %v6260, 5
        %v7639 = vsel %vm2041, %v7637, %v7638
        %v7640 = vrot.slane %v7638, 4
        %v7641 = vrot.slane %v6261, 5
        %v7642 = vsel %vm2041, %v7640, %v7641
        %v7643 = vrot.slane %v7641, 4
        %v7644 = vrot.slane %v6262, 5
        %v7645 = vsel %vm2041, %v7643, %v7644
        %v7646 = vrot.slane %v7644, 4
        %v7647 = vrot.slane %v6263, 5
        %v7648 = vsel %vm2041, %v7646, %v7647
        %v7649 = vrot.slane %v7545, 5
        %v7650 = vrot.slane %v7649, 4
        %v7651 = vrot.slane %v6265, 5
        %v7652 = vsel %vm2041, %v7650, %v7651
        %v7653 = vrot.slane %v7651, 4
        %v7654 = vrot.slane %v6266, 5
        %v7655 = vsel %vm2041, %v7653, %v7654
        %v7656 = vrot.slane %v7654, 4
        %v7657 = vrot.slane %v6267, 5
        %v7658 = vsel %vm2041, %v7656, %v7657
        %v7659 = vrot.slane %v7657, 4
        %v7660 = vrot.slane %v6268, 5
        %v7661 = vsel %vm2041, %v7659, %v7660
        %v7662 = vrot.slane %v7660, 4
        %v7663 = vrot.slane %v6269, 5
        %v7664 = vsel %vm2041, %v7662, %v7663
        %v7665 = vrot.slane %v7663, 4
        %v7666 = vrot.slane %v6270, 5
        %v7667 = vsel %vm2041, %v7665, %v7666
        %v7668 = vrot.slane %v7666, 4
        %v7669 = vrot.slane %v6271, 5
        %v7670 = vsel %vm2041, %v7668, %v7669
        %v7671 = vrot.slane %v7669, 4
        %v7672 = vrot.slane %v6272, 5
        %v7673 = vsel %vm2041, %v7671, %v7672
        %v7674 = vrot.slane %v7546, 5
        %v7675 = vrot.slane %v7674, 4
        %v7676 = vrot.slane %v6274, 5
        %v7677 = vsel %vm2041, %v7675, %v7676
        %v7678 = vrot.slane %v7676, 4
        %v7679 = vrot.slane %v6275, 5
        %v7680 = vsel %vm2041, %v7678, %v7679
        %v7681 = vrot.slane %v7679, 4
        %v7682 = vrot.slane %v6276, 5
        %v7683 = vsel %vm2041, %v7681, %v7682
        %v7684 = vrot.slane %v7682, 4
        %v7685 = vrot.slane %v6277, 5
        %v7686 = vsel %vm2041, %v7684, %v7685
        %v7687 = vrot.slane %v7685, 4
        %v7688 = vrot.slane %v6278, 5
        %v7689 = vsel %vm2041, %v7687, %v7688
        %v7690 = vrot.slane %v7688, 4
        %v7691 = vrot.slane %v6279, 5
        %v7692 = vsel %vm2041, %v7690, %v7691
        %v7693 = vrot.slane %v7691, 4
        %v7694 = vrot.slane %v6280, 5
        %v7695 = vsel %vm2041, %v7693, %v7694
        %v7696 = vrot.slane %v7694, 4
        %v7697 = vrot.slane %v6281, 5
        %v7698 = vsel %vm2041, %v7696, %v7697
        %v7699 = vrot.slane %v7547, 5
        %v7700 = vrot.slane %v7699, 4
        %v7701 = vrot.slane %v6283, 5
        %v7702 = vsel %vm2041, %v7700, %v7701
        %v7703 = vrot.slane %v7701, 4
        %v7704 = vrot.slane %v6284, 5
        %v7705 = vsel %vm2041, %v7703, %v7704
        %v7706 = vrot.slane %v7704, 4
        %v7707 = vrot.slane %v6285, 5
        %v7708 = vsel %vm2041, %v7706, %v7707
        %v7709 = vrot.slane %v7707, 4
        %v7710 = vrot.slane %v6286, 5
        %v7711 = vsel %vm2041, %v7709, %v7710
        %v7712 = vrot.slane %v7710, 4
        %v7713 = vrot.slane %v6287, 5
        %v7714 = vsel %vm2041, %v7712, %v7713
        %v7715 = vrot.slane %v7713, 4
        %v7716 = vrot.slane %v6288, 5
        %v7717 = vsel %vm2041, %v7715, %v7716
        %v7718 = vrot.slane %v7716, 4
        %v7719 = vrot.slane %v6289, 5
        %v7720 = vsel %vm2041, %v7718, %v7719
        %v7721 = vrot.slane %v7719, 4
        %v7722 = vrot.slane %v6290, 5
        %v7723 = vsel %vm2041, %v7721, %v7722
        %v7724 = vrot.slane %v7548, 5
        %v7725 = vrot.slane %v7724, 4
        %v7726 = vrot.slane %v6292, 5
        %v7727 = vsel %vm2041, %v7725, %v7726
        %v7728 = vrot.slane %v7726, 4
        %v7729 = vrot.slane %v6293, 5
        %v7730 = vsel %vm2041, %v7728, %v7729
        %v7731 = vrot.slane %v7729, 4
        %v7732 = vrot.slane %v6294, 5
        %v7733 = vsel %vm2041, %v7731, %v7732
        %v7734 = vrot.slane %v7732, 4
        %v7735 = vrot.slane %v6295, 5
        %v7736 = vsel %vm2041, %v7734, %v7735
        %v7737 = vrot.slane %v7735, 4
        %v7738 = vrot.slane %v6296, 5
        %v7739 = vsel %vm2041, %v7737, %v7738
        %v7740 = vrot.slane %v7738, 4
        %v7741 = vrot.slane %v6297, 5
        %v7742 = vsel %vm2041, %v7740, %v7741
        %v7743 = vrot.slane %v7741, 4
        %v7744 = vrot.slane %v6298, 5
        %v7745 = vsel %vm2041, %v7743, %v7744
        %v7746 = vrot.slane %v7744, 4
        %v7747 = vrot.slane %v6299, 5
        %v7748 = vsel %vm2041, %v7746, %v7747
        %v7749 = vrot.slane %v7549, 5
        %v7750 = vrot.slane %v7749, 4
        %v7751 = vrot.slane %v6301, 5
        %v7752 = vsel %vm2041, %v7750, %v7751
        %v7753 = vrot.slane %v7751, 4
        %v7754 = vrot.slane %v6302, 5
        %v7755 = vsel %vm2041, %v7753, %v7754
        %v7756 = vrot.slane %v7754, 4
        %v7757 = vrot.slane %v6303, 5
        %v7758 = vsel %vm2041, %v7756, %v7757
        %v7759 = vrot.slane %v7757, 4
        %v7760 = vrot.slane %v6304, 5
        %v7761 = vsel %vm2041, %v7759, %v7760
        %v7762 = vrot.slane %v7760, 4
        %v7763 = vrot.slane %v6305, 5
        %v7764 = vsel %vm2041, %v7762, %v7763
        %v7765 = vrot.slane %v7763, 4
        %v7766 = vrot.slane %v6306, 5
        %v7767 = vsel %vm2041, %v7765, %v7766
        %v7768 = vrot.slane %v7766, 4
        %v7769 = vrot.slane %v6307, 5
        %v7770 = vsel %vm2041, %v7768, %v7769
        %v7771 = vrot.slane %v7769, 4
        %v7772 = vrot.slane %v6308, 5
        %v7773 = vsel %vm2041, %v7771, %v7772
        %v7774 = vrot.slane %v7550, 5
        %v7775 = vrot.slane %v7774, 4
        %v7776 = vrot.slane %v6310, 5
        %v7777 = vsel %vm2041, %v7775, %v7776
        %v7778 = vrot.slane %v7776, 4
        %v7779 = vrot.slane %v6311, 5
        %v7780 = vsel %vm2041, %v7778, %v7779
        %v7781 = vrot.slane %v7779, 4
        %v7782 = vrot.slane %v6312, 5
        %v7783 = vsel %vm2041, %v7781, %v7782
        %v7784 = vrot.slane %v7782, 4
        %v7785 = vrot.slane %v6313, 5
        %v7786 = vsel %vm2041, %v7784, %v7785
        %v7787 = vrot.slane %v7785, 4
        %v7788 = vrot.slane %v6314, 5
        %v7789 = vsel %vm2041, %v7787, %v7788
        %v7790 = vrot.slane %v7788, 4
        %v7791 = vrot.slane %v6315, 5
        %v7792 = vsel %vm2041, %v7790, %v7791
        %v7793 = vrot.slane %v7791, 4
        %v7794 = vrot.slane %v6316, 5
        %v7795 = vsel %vm2041, %v7793, %v7794
        %v7796 = vrot.slane %v7794, 4
        %v7797 = vrot.slane %v6317, 5
        %v7798 = vsel %vm2041, %v7796, %v7797
        %v7799 = vrot.slane %v7551, 5
        %v7800 = vrot.slane %v7799, 4
        %v7801 = vrot.slane %v6319, 5
        %v7802 = vsel %vm2041, %v7800, %v7801
        %v7803 = vrot.slane %v7801, 4
        %v7804 = vrot.slane %v6320, 5
        %v7805 = vsel %vm2041, %v7803, %v7804
        %v7806 = vrot.slane %v7804, 4
        %v7807 = vrot.slane %v6321, 5
        %v7808 = vsel %vm2041, %v7806, %v7807
        %v7809 = vrot.slane %v7807, 4
        %v7810 = vrot.slane %v6322, 5
        %v7811 = vsel %vm2041, %v7809, %v7810
        %v7812 = vrot.slane %v7810, 4
        %v7813 = vrot.slane %v6323, 5
        %v7814 = vsel %vm2041, %v7812, %v7813
        %v7815 = vrot.slane %v7813, 4
        %v7816 = vrot.slane %v6324, 5
        %v7817 = vsel %vm2041, %v7815, %v7816
        %v7818 = vrot.slane %v7816, 4
        %v7819 = vrot.slane %v6325, 5
        %v7820 = vsel %vm2041, %v7818, %v7819
        %v7821 = vrot.slane %v7819, 4
        %v7822 = vrot.slane %v6326, 5
        %v7823 = vsel %vm2041, %v7821, %v7822
        %v7824 = vld [vmem:[#allocation5 + $0x200] sm:$0xf]
        %v7825 = vld [vmem:[#allocation5 + $0x204] sm:$0xf]
        %v7826 = vld [vmem:[#allocation5 + $0x208] sm:$0xf]
        %v7827 = vld [vmem:[#allocation5 + $0x20c] sm:$0xf]
        %v7828 = vld [vmem:[#allocation5 + $0x210] sm:$0xf]
        %v7829 = vld [vmem:[#allocation5 + $0x214] sm:$0xf]
        %v7830 = vld [vmem:[#allocation5 + $0x218] sm:$0xf]
        %v7831 = vld [vmem:[#allocation5 + $0x21c] sm:$0xf]
        %v7832 = vld [vmem:[#allocation5 + $0x220] sm:$0xf]
        %v7833 = vld [vmem:[#allocation5 + $0x224] sm:$0xf]
        %v7834 = vld [vmem:[#allocation5 + $0x228] sm:$0xf]
        %v7835 = vld [vmem:[#allocation5 + $0x22c] sm:$0xf]
        %v7836 = vld [vmem:[#allocation5 + $0x230] sm:$0xf]
        %v7837 = vld [vmem:[#allocation5 + $0x234] sm:$0xf]
        %v7838 = vld [vmem:[#allocation5 + $0x238] sm:$0xf]
        %v7839 = vld [vmem:[#allocation5 + $0x23c] sm:$0xf]
        %v7840 = vunpack.c.l.b16 %v7627
        %v7841 = vunpack.c.l.b16 %v7630
        %v7842 = vunpack.c.l.b16 %v7633
        %v7843 = vunpack.c.l.b16 %v7636
        %v7844 = vunpack.c.l.b16 %v7639
        %v7845 = vunpack.c.l.b16 %v7642
        %v7846 = vunpack.c.l.b16 %v7645
        %v7847 = vunpack.c.l.b16 %v7648
        %v7848 = vunpack.c.l.b16 %v7652
        %v7849 = vunpack.c.l.b16 %v7655
        %v7850 = vunpack.c.l.b16 %v7658
        %v7851 = vunpack.c.l.b16 %v7661
        %v7852 = vunpack.c.l.b16 %v7664
        %v7853 = vunpack.c.l.b16 %v7667
        %v7854 = vunpack.c.l.b16 %v7670
        %v7855 = vunpack.c.l.b16 %v7673
        %v7856 = vunpack.c.l.b16 %v7677
        %v7857 = vunpack.c.l.b16 %v7680
        %v7858 = vunpack.c.l.b16 %v7683
        %v7859 = vunpack.c.l.b16 %v7686
        %v7860 = vunpack.c.l.b16 %v7689
        %v7861 = vunpack.c.l.b16 %v7692
        %v7862 = vunpack.c.l.b16 %v7695
        %v7863 = vunpack.c.l.b16 %v7698
        %v7864 = vunpack.c.l.b16 %v7702
        %v7865 = vunpack.c.l.b16 %v7705
        %v7866 = vunpack.c.l.b16 %v7708
        %v7867 = vunpack.c.l.b16 %v7711
        %v7868 = vunpack.c.l.b16 %v7714
        %v7869 = vunpack.c.l.b16 %v7717
        %v7870 = vunpack.c.l.b16 %v7720
        %v7871 = vunpack.c.l.b16 %v7723
        %v7872 = vunpack.c.l.b16 %v7727
        %v7873 = vunpack.c.l.b16 %v7730
        %v7874 = vunpack.c.l.b16 %v7733
        %v7875 = vunpack.c.l.b16 %v7736
        %v7876 = vunpack.c.l.b16 %v7739
        %v7877 = vunpack.c.l.b16 %v7742
        %v7878 = vunpack.c.l.b16 %v7745
        %v7879 = vunpack.c.l.b16 %v7748
        %v7880 = vunpack.c.l.b16 %v7752
        %v7881 = vunpack.c.l.b16 %v7755
        %v7882 = vunpack.c.l.b16 %v7758
        %v7883 = vunpack.c.l.b16 %v7761
        %v7884 = vunpack.c.l.b16 %v7764
        %v7885 = vunpack.c.l.b16 %v7767
        %v7886 = vunpack.c.l.b16 %v7770
        %v7887 = vunpack.c.l.b16 %v7773
        %v7888 = vunpack.c.l.b16 %v7777
        %v7889 = vunpack.c.l.b16 %v7780
        %v7890 = vunpack.c.l.b16 %v7783
        %v7891 = vunpack.c.l.b16 %v7786
        %v7892 = vunpack.c.l.b16 %v7789
        %v7893 = vunpack.c.l.b16 %v7792
        %v7894 = vunpack.c.l.b16 %v7795
        %v7895 = vunpack.c.l.b16 %v7798
        %v7896 = vunpack.c.l.b16 %v7802
        %v7897 = vunpack.c.l.b16 %v7805
        %v7898 = vunpack.c.l.b16 %v7808
        %v7899 = vunpack.c.l.b16 %v7811
        %v7900 = vunpack.c.l.b16 %v7814
        %v7901 = vunpack.c.l.b16 %v7817
        %v7902 = vunpack.c.l.b16 %v7820
        %v7903 = vunpack.c.l.b16 %v7823
        %v7904 = vpack.c.b16 %v7841, %v7840
        %v7905 = vpack.c.b16 %v7843, %v7842
        %v7906 = vpack.c.b16 %v7845, %v7844
        %v7907 = vpack.c.b16 %v7847, %v7846
        %v7908 = vpack.c.b16 %v7849, %v7848
        %v7909 = vpack.c.b16 %v7851, %v7850
        %v7910 = vpack.c.b16 %v7853, %v7852
        %v7911 = vpack.c.b16 %v7855, %v7854
        %v7912 = vpack.c.b16 %v7857, %v7856
        %v7913 = vpack.c.b16 %v7859, %v7858
        %v7914 = vpack.c.b16 %v7861, %v7860
        %v7915 = vpack.c.b16 %v7863, %v7862
        %v7916 = vpack.c.b16 %v7865, %v7864
        %v7917 = vpack.c.b16 %v7867, %v7866
        %v7918 = vpack.c.b16 %v7869, %v7868
        %v7919 = vpack.c.b16 %v7871, %v7870
        %v7920 = vpack.c.b16 %v7873, %v7872
        %v7921 = vpack.c.b16 %v7875, %v7874
        %v7922 = vpack.c.b16 %v7877, %v7876
        %v7923 = vpack.c.b16 %v7879, %v7878
        %v7924 = vpack.c.b16 %v7881, %v7880
        %v7925 = vpack.c.b16 %v7883, %v7882
        %v7926 = vpack.c.b16 %v7885, %v7884
        %v7927 = vpack.c.b16 %v7887, %v7886
        %v7928 = vpack.c.b16 %v7889, %v7888
        %v7929 = vpack.c.b16 %v7891, %v7890
        %v7930 = vpack.c.b16 %v7893, %v7892
        %v7931 = vpack.c.b16 %v7895, %v7894
        %v7932 = vpack.c.b16 %v7897, %v7896
        %v7933 = vpack.c.b16 %v7899, %v7898
        %v7934 = vpack.c.b16 %v7901, %v7900
        %v7935 = vpack.c.b16 %v7903, %v7902
        %v7984 = vunpack.c.l.b16 %v7824
        %v7985 = vunpack.c.l.b16 %v7825
        %v7986 = vunpack.c.l.b16 %v7826
        %v7987 = vunpack.c.l.b16 %v7827
        %v7988 = vunpack.c.l.b16 %v7828
        %v7989 = vunpack.c.l.b16 %v7829
        %v7990 = vunpack.c.l.b16 %v7830
        %v7991 = vunpack.c.l.b16 %v7831
        %v7992 = vunpack.c.l.b16 %v7832
        %v7993 = vunpack.c.l.b16 %v7833
        %v7994 = vunpack.c.l.b16 %v7834
        %v7995 = vunpack.c.l.b16 %v7835
        %v7996 = vunpack.c.l.b16 %v7836
        %v7997 = vunpack.c.l.b16 %v7837
        %v7998 = vunpack.c.l.b16 %v7838
        %v7999 = vunpack.c.l.b16 %v7839
        %v8000 = vpack.c.b16 %v7985, %v7984
        %v8001 = vpack.c.b16 %v7987, %v7986
        %v8002 = vpack.c.b16 %v7989, %v7988
        %v8003 = vpack.c.b16 %v7991, %v7990
        %v8004 = vpack.c.b16 %v7993, %v7992
        %v8005 = vpack.c.b16 %v7995, %v7994
        %v8006 = vpack.c.b16 %v7997, %v7996
        %v8007 = vpack.c.b16 %v7999, %v7998
        %8016 = vmatprep.subr.bf16.mxu0 0
        %8017 = vmatpush1.bf16.msra.mxu0 %v8000
        %8018 = vmatprep.subr.bf16.mxu0 0
        %8019 = vmatpush1.bf16.msra.mxu0 %v8001
        %8020 = vmatprep.subr.bf16.mxu0 0
        %8021 = vmatpush1.bf16.msra.mxu0 %v8002
        %8022 = vmatprep.subr.bf16.mxu0 0
        %8023 = vmatpush1.bf16.msra.mxu0 %v8003
        %8024 = vmatprep.subr.bf16.mxu0 0
        %8025 = vmatpush1.bf16.msra.mxu0 %v8004
        %8026 = vmatprep.subr.bf16.mxu0 0
        %8027 = vmatpush1.bf16.msra.mxu0 %v8005
        %8028 = vmatprep.subr.bf16.mxu0 0
        %8029 = vmatpush1.bf16.msra.mxu0 %v8006
        %8030 = vmatprep.subr.bf16.mxu0 0
        %8031 = vmatpush1.bf16.msra.mxu0 %v8007
        %8032 = vmatprep.subr.bf16.mxu0 0
        %8033 = vmatpush1.bf16.msra.mxu0 0
        %8034 = vmatprep.subr.bf16.mxu0 0
        %8035 = vmatpush1.bf16.msra.mxu0 0
        %8036 = vmatprep.subr.bf16.mxu0 0
        %8037 = vmatpush1.bf16.msra.mxu0 0
        %8038 = vmatprep.subr.bf16.mxu0 0
        %8039 = vmatpush1.bf16.msra.mxu0 0
        %8040 = vmatprep.subr.bf16.mxu0 0
        %8041 = vmatpush1.bf16.msra.mxu0 0
        %8042 = vmatprep.subr.bf16.mxu0 0
        %8043 = vmatpush1.bf16.msra.mxu0 0
        %8044 = vmatprep.subr.bf16.mxu0 0
        %8045 = vmatpush1.bf16.msra.mxu0 0
        %8046 = vmatprep.subr.bf16.mxu0 0
        %8047 = vmatpush1.bf16.msra.mxu0 0
        %8048 = vmatprep.mubr.bf16.mxu0 0
        %8049 = vmatmul.mubr.bf16.gmra.mrb[0].mxu0 %v7904
        %v8050 = vpop.f32.mrb[0].mxu0
        %v8051 = vadd.f32 0.0, %v8050
        %v8052 = vpop.f32.mrb[0].mxu0
        %v8053 = vpop.f32.mrb[0].mxu0
        %v8054 = vadd.f32 0.0, %v8053
        %v8055 = vpop.f32.mrb[0].mxu0
        %8056 = vmatprep.mubr.bf16.mxu0 0
        %8057 = vmatmul.mubr.bf16.gmra.mrb[0].mxu0 %v7905
        %v8058 = vpop.f32.mrb[0].mxu0
        %v8059 = vadd.f32 0.0, %v8058
        %v8060 = vpop.f32.mrb[0].mxu0
        %v8061 = vpop.f32.mrb[0].mxu0
        %v8062 = vadd.f32 0.0, %v8061
        %v8063 = vpop.f32.mrb[0].mxu0
        %8064 = vmatprep.mubr.bf16.mxu0 0
        %8065 = vmatmul.mubr.bf16.gmra.mrb[0].mxu0 %v7906
        %v8066 = vpop.f32.mrb[0].mxu0
        %v8067 = vadd.f32 0.0, %v8066
        %v8068 = vpop.f32.mrb[0].mxu0
        %v8069 = vpop.f32.mrb[0].mxu0
        %v8070 = vadd.f32 0.0, %v8069
        %v8071 = vpop.f32.mrb[0].mxu0
        %8072 = vmatprep.mubr.bf16.mxu0 0
        %8073 = vmatmul.mubr.bf16.gmra.mrb[0].mxu0 %v7907
        %v8074 = vpop.f32.mrb[0].mxu0
        %v8075 = vadd.f32 0.0, %v8074
        %v8076 = vpop.f32.mrb[0].mxu0
        %v8077 = vpop.f32.mrb[0].mxu0
        %v8078 = vadd.f32 0.0, %v8077
        %v8079 = vpop.f32.mrb[0].mxu0
        %8080 = vmatprep.mubr.bf16.mxu0 0
        %8081 = vmatmul.mubr.bf16.gmra.mrb[0].mxu0 %v7908
        %v8082 = vpop.f32.mrb[0].mxu0
        %v8083 = vadd.f32 0.0, %v8082
        %v8084 = vpop.f32.mrb[0].mxu0
        %v8085 = vpop.f32.mrb[0].mxu0
        %v8086 = vadd.f32 0.0, %v8085
        %v8087 = vpop.f32.mrb[0].mxu0
        %8088 = vmatprep.mubr.bf16.mxu0 0
        %8089 = vmatmul.mubr.bf16.gmra.mrb[0].mxu0 %v7909
        %v8090 = vpop.f32.mrb[0].mxu0
        %v8091 = vadd.f32 0.0, %v8090
        %v8092 = vpop.f32.mrb[0].mxu0
        %v8093 = vpop.f32.mrb[0].mxu0
        %v8094 = vadd.f32 0.0, %v8093
        %v8095 = vpop.f32.mrb[0].mxu0
        %8096 = vmatprep.mubr.bf16.mxu0 0
        %8097 = vmatmul.mubr.bf16.gmra.mrb[0].mxu0 %v7910
        %v8098 = vpop.f32.mrb[0].mxu0
        %v8099 = vadd.f32 0.0, %v8098
        %v8100 = vpop.f32.mrb[0].mxu0
        %v8101 = vpop.f32.mrb[0].mxu0
        %v8102 = vadd.f32 0.0, %v8101
        %v8103 = vpop.f32.mrb[0].mxu0
        %8104 = vmatprep.mubr.bf16.mxu0 0
        %8105 = vmatmul.mubr.bf16.gmra.mrb[0].mxu0 %v7911
        %v8106 = vpop.f32.mrb[0].mxu0
        %v8107 = vadd.f32 0.0, %v8106
        %v8108 = vpop.f32.mrb[0].mxu0
        %v8109 = vpop.f32.mrb[0].mxu0
        %v8110 = vadd.f32 0.0, %v8109
        %v8111 = vpop.f32.mrb[0].mxu0
        %8112 = vmatprep.mubr.bf16.mxu0 0
        %8113 = vmatmul.mubr.bf16.gmra.mrb[0].mxu0 %v7912
        %v8114 = vpop.f32.mrb[0].mxu0
        %v8115 = vadd.f32 0.0, %v8114
        %v8116 = vpop.f32.mrb[0].mxu0
        %v8117 = vpop.f32.mrb[0].mxu0
        %v8118 = vadd.f32 0.0, %v8117
        %v8119 = vpop.f32.mrb[0].mxu0
        %8120 = vmatprep.mubr.bf16.mxu0 0
        %8121 = vmatmul.mubr.bf16.gmra.mrb[0].mxu0 %v7913
        %v8122 = vpop.f32.mrb[0].mxu0
        %v8123 = vadd.f32 0.0, %v8122
        %v8124 = vpop.f32.mrb[0].mxu0
        %v8125 = vpop.f32.mrb[0].mxu0
        %v8126 = vadd.f32 0.0, %v8125
        %v8127 = vpop.f32.mrb[0].mxu0
        %8128 = vmatprep.mubr.bf16.mxu0 0
        %8129 = vmatmul.mubr.bf16.gmra.mrb[0].mxu0 %v7914
        %v8130 = vpop.f32.mrb[0].mxu0
        %v8131 = vadd.f32 0.0, %v8130
        %v8132 = vpop.f32.mrb[0].mxu0
        %v8133 = vpop.f32.mrb[0].mxu0
        %v8134 = vadd.f32 0.0, %v8133
        %v8135 = vpop.f32.mrb[0].mxu0
        %8136 = vmatprep.mubr.bf16.mxu0 0
        %8137 = vmatmul.mubr.bf16.gmra.mrb[0].mxu0 %v7915
        %v8138 = vpop.f32.mrb[0].mxu0
        %v8139 = vadd.f32 0.0, %v8138
        %v8140 = vpop.f32.mrb[0].mxu0
        %v8141 = vpop.f32.mrb[0].mxu0
        %v8142 = vadd.f32 0.0, %v8141
        %v8143 = vpop.f32.mrb[0].mxu0
        %8144 = vmatprep.mubr.bf16.mxu0 0
        %8145 = vmatmul.mubr.bf16.gmra.mrb[0].mxu0 %v7916
        %v8146 = vpop.f32.mrb[0].mxu0
        %v8147 = vadd.f32 0.0, %v8146
        %v8148 = vpop.f32.mrb[0].mxu0
        %v8149 = vpop.f32.mrb[0].mxu0
        %v8150 = vadd.f32 0.0, %v8149
        %v8151 = vpop.f32.mrb[0].mxu0
        %8152 = vmatprep.mubr.bf16.mxu0 0
        %8153 = vmatmul.mubr.bf16.gmra.mrb[0].mxu0 %v7917
        %v8154 = vpop.f32.mrb[0].mxu0
        %v8155 = vadd.f32 0.0, %v8154
        %v8156 = vpop.f32.mrb[0].mxu0
        %v8157 = vpop.f32.mrb[0].mxu0
        %v8158 = vadd.f32 0.0, %v8157
        %v8159 = vpop.f32.mrb[0].mxu0
        %8160 = vmatprep.mubr.bf16.mxu0 0
        %8161 = vmatmul.mubr.bf16.gmra.mrb[0].mxu0 %v7918
        %v8162 = vpop.f32.mrb[0].mxu0
        %v8163 = vadd.f32 0.0, %v8162
        %v8164 = vpop.f32.mrb[0].mxu0
        %v8165 = vpop.f32.mrb[0].mxu0
        %v8166 = vadd.f32 0.0, %v8165
        %v8167 = vpop.f32.mrb[0].mxu0
        %8168 = vmatprep.mubr.bf16.mxu0 0
        %8169 = vmatmul.mubr.bf16.gmra.mrb[0].mxu0 %v7919
        %v8170 = vpop.f32.mrb[0].mxu0
        %v8171 = vadd.f32 0.0, %v8170
        %v8172 = vpop.f32.mrb[0].mxu0
        %v8173 = vpop.f32.mrb[0].mxu0
        %v8174 = vadd.f32 0.0, %v8173
        %v8175 = vpop.f32.mrb[0].mxu0
        %8176 = vmatprep.mubr.bf16.mxu0 0
        %8177 = vmatmul.mubr.bf16.gmra.mrb[0].mxu0 %v7920
        %v8178 = vpop.f32.mrb[0].mxu0
        %v8179 = vadd.f32 0.0, %v8178
        %v8180 = vpop.f32.mrb[0].mxu0
        %v8181 = vpop.f32.mrb[0].mxu0
        %v8182 = vadd.f32 0.0, %v8181
        %v8183 = vpop.f32.mrb[0].mxu0
        %8184 = vmatprep.mubr.bf16.mxu0 0
        %8185 = vmatmul.mubr.bf16.gmra.mrb[0].mxu0 %v7921
        %v8186 = vpop.f32.mrb[0].mxu0
        %v8187 = vadd.f32 0.0, %v8186
        %v8188 = vpop.f32.mrb[0].mxu0
        %v8189 = vpop.f32.mrb[0].mxu0
        %v8190 = vadd.f32 0.0, %v8189
        %v8191 = vpop.f32.mrb[0].mxu0
        %8192 = vmatprep.mubr.bf16.mxu0 0
        %8193 = vmatmul.mubr.bf16.gmra.mrb[0].mxu0 %v7922
        %v8194 = vpop.f32.mrb[0].mxu0
        %v8195 = vadd.f32 0.0, %v8194
        %v8196 = vpop.f32.mrb[0].mxu0
        %v8197 = vpop.f32.mrb[0].mxu0
        %v8198 = vadd.f32 0.0, %v8197
        %v8199 = vpop.f32.mrb[0].mxu0
        %8200 = vmatprep.mubr.bf16.mxu0 0
        %8201 = vmatmul.mubr.bf16.gmra.mrb[0].mxu0 %v7923
        %v8202 = vpop.f32.mrb[0].mxu0
        %v8203 = vadd.f32 0.0, %v8202
        %v8204 = vpop.f32.mrb[0].mxu0
        %v8205 = vpop.f32.mrb[0].mxu0
        %v8206 = vadd.f32 0.0, %v8205
        %v8207 = vpop.f32.mrb[0].mxu0
        %8208 = vmatprep.mubr.bf16.mxu0 0
        %8209 = vmatmul.mubr.bf16.gmra.mrb[0].mxu0 %v7924
        %v8210 = vpop.f32.mrb[0].mxu0
        %v8211 = vadd.f32 0.0, %v8210
        %v8212 = vpop.f32.mrb[0].mxu0
        %v8213 = vpop.f32.mrb[0].mxu0
        %v8214 = vadd.f32 0.0, %v8213
        %v8215 = vpop.f32.mrb[0].mxu0
        %8216 = vmatprep.mubr.bf16.mxu0 0
        %8217 = vmatmul.mubr.bf16.gmra.mrb[0].mxu0 %v7925
        %v8218 = vpop.f32.mrb[0].mxu0
        %v8219 = vadd.f32 0.0, %v8218
        %v8220 = vpop.f32.mrb[0].mxu0
        %v8221 = vpop.f32.mrb[0].mxu0
        %v8222 = vadd.f32 0.0, %v8221
        %v8223 = vpop.f32.mrb[0].mxu0
        %8224 = vmatprep.mubr.bf16.mxu0 0
        %8225 = vmatmul.mubr.bf16.gmra.mrb[0].mxu0 %v7926
        %v8226 = vpop.f32.mrb[0].mxu0
        %v8227 = vadd.f32 0.0, %v8226
        %v8228 = vpop.f32.mrb[0].mxu0
        %v8229 = vpop.f32.mrb[0].mxu0
        %v8230 = vadd.f32 0.0, %v8229
        %v8231 = vpop.f32.mrb[0].mxu0
        %8232 = vmatprep.mubr.bf16.mxu0 0
        %8233 = vmatmul.mubr.bf16.gmra.mrb[0].mxu0 %v7927
        %v8234 = vpop.f32.mrb[0].mxu0
        %v8235 = vadd.f32 0.0, %v8234
        %v8236 = vpop.f32.mrb[0].mxu0
        %v8237 = vpop.f32.mrb[0].mxu0
        %v8238 = vadd.f32 0.0, %v8237
        %v8239 = vpop.f32.mrb[0].mxu0
        %8240 = vmatprep.mubr.bf16.mxu0 0
        %8241 = vmatmul.mubr.bf16.gmra.mrb[0].mxu0 %v7928
        %v8242 = vpop.f32.mrb[0].mxu0
        %v8243 = vadd.f32 0.0, %v8242
        %v8244 = vpop.f32.mrb[0].mxu0
        %v8245 = vpop.f32.mrb[0].mxu0
        %v8246 = vadd.f32 0.0, %v8245
        %v8247 = vpop.f32.mrb[0].mxu0
        %8248 = vmatprep.mubr.bf16.mxu0 0
        %8249 = vmatmul.mubr.bf16.gmra.mrb[0].mxu0 %v7929
        %v8250 = vpop.f32.mrb[0].mxu0
        %v8251 = vadd.f32 0.0, %v8250
        %v8252 = vpop.f32.mrb[0].mxu0
        %v8253 = vpop.f32.mrb[0].mxu0
        %v8254 = vadd.f32 0.0, %v8253
        %v8255 = vpop.f32.mrb[0].mxu0
        %8256 = vmatprep.mubr.bf16.mxu0 0
        %8257 = vmatmul.mubr.bf16.gmra.mrb[0].mxu0 %v7930
        %v8258 = vpop.f32.mrb[0].mxu0
        %v8259 = vadd.f32 0.0, %v8258
        %v8260 = vpop.f32.mrb[0].mxu0
        %v8261 = vpop.f32.mrb[0].mxu0
        %v8262 = vadd.f32 0.0, %v8261
        %v8263 = vpop.f32.mrb[0].mxu0
        %8264 = vmatprep.mubr.bf16.mxu0 0
        %8265 = vmatmul.mubr.bf16.gmra.mrb[0].mxu0 %v7931
        %v8266 = vpop.f32.mrb[0].mxu0
        %v8267 = vadd.f32 0.0, %v8266
        %v8268 = vpop.f32.mrb[0].mxu0
        %v8269 = vpop.f32.mrb[0].mxu0
        %v8270 = vadd.f32 0.0, %v8269
        %v8271 = vpop.f32.mrb[0].mxu0
        %8272 = vmatprep.mubr.bf16.mxu0 0
        %8273 = vmatmul.mubr.bf16.gmra.mrb[0].mxu0 %v7932
        %v8274 = vpop.f32.mrb[0].mxu0
        %v8275 = vadd.f32 0.0, %v8274
        %v8276 = vpop.f32.mrb[0].mxu0
        %v8277 = vpop.f32.mrb[0].mxu0
        %v8278 = vadd.f32 0.0, %v8277
        %v8279 = vpop.f32.mrb[0].mxu0
        %8280 = vmatprep.mubr.bf16.mxu0 0
        %8281 = vmatmul.mubr.bf16.gmra.mrb[0].mxu0 %v7933
        %v8282 = vpop.f32.mrb[0].mxu0
        %v8283 = vadd.f32 0.0, %v8282
        %v8284 = vpop.f32.mrb[0].mxu0
        %v8285 = vpop.f32.mrb[0].mxu0
        %v8286 = vadd.f32 0.0, %v8285
        %v8287 = vpop.f32.mrb[0].mxu0
        %8288 = vmatprep.mubr.bf16.mxu0 0
        %8289 = vmatmul.mubr.bf16.gmra.mrb[0].mxu0 %v7934
        %v8290 = vpop.f32.mrb[0].mxu0
        %v8291 = vadd.f32 0.0, %v8290
        %v8292 = vpop.f32.mrb[0].mxu0
        %v8293 = vpop.f32.mrb[0].mxu0
        %v8294 = vadd.f32 0.0, %v8293
        %v8295 = vpop.f32.mrb[0].mxu0
        %8296 = vmatprep.mubr.bf16.mxu0 0
        %8297 = vmatmul.mubr.bf16.gmra.mrb[0].mxu0 %v7935
        %v8298 = vpop.f32.mrb[0].mxu0
        %v8299 = vadd.f32 0.0, %v8298
        %v8300 = vpop.f32.mrb[0].mxu0
        %v8301 = vpop.f32.mrb[0].mxu0
        %v8302 = vadd.f32 0.0, %v8301
        %v8303 = vpop.f32.mrb[0].mxu0
        %8304 = vdwg.mxu0
        %v8305 = vadd.f32 %v7480, %v8051
        %v8306 = vadd.f32 %v7481, %v8054
        %v8307 = vadd.f32 %v7482, %v8059
        %v8308 = vadd.f32 %v7483, %v8062
        %v8309 = vadd.f32 %v7484, %v8067
        %v8310 = vadd.f32 %v7485, %v8070
        %v8311 = vadd.f32 %v7486, %v8075
        %v8312 = vadd.f32 %v7487, %v8078
        %v8313 = vadd.f32 %v7488, %v8083
        %v8314 = vadd.f32 %v7489, %v8086
        %v8315 = vadd.f32 %v7490, %v8091
        %v8316 = vadd.f32 %v7491, %v8094
        %v8317 = vadd.f32 %v7492, %v8099
        %v8318 = vadd.f32 %v7493, %v8102
        %v8319 = vadd.f32 %v7494, %v8107
        %v8320 = vadd.f32 %v7495, %v8110
        %v8321 = vadd.f32 %v7496, %v8115
        %v8322 = vadd.f32 %v7497, %v8118
        %v8323 = vadd.f32 %v7498, %v8123
        %v8324 = vadd.f32 %v7499, %v8126
        %v8325 = vadd.f32 %v7500, %v8131
        %v8326 = vadd.f32 %v7501, %v8134
        %v8327 = vadd.f32 %v7502, %v8139
        %v8328 = vadd.f32 %v7503, %v8142
        %v8329 = vadd.f32 %v7504, %v8147
        %v8330 = vadd.f32 %v7505, %v8150
        %v8331 = vadd.f32 %v7506, %v8155
        %v8332 = vadd.f32 %v7507, %v8158
        %v8333 = vadd.f32 %v7508, %v8163
        %v8334 = vadd.f32 %v7509, %v8166
        %v8335 = vadd.f32 %v7510, %v8171
        %v8336 = vadd.f32 %v7511, %v8174
        %v8337 = vadd.f32 %v7512, %v8179
        %v8338 = vadd.f32 %v7513, %v8182
        %v8339 = vadd.f32 %v7514, %v8187
        %v8340 = vadd.f32 %v7515, %v8190
        %v8341 = vadd.f32 %v7516, %v8195
        %v8342 = vadd.f32 %v7517, %v8198
        %v8343 = vadd.f32 %v7518, %v8203
        %v8344 = vadd.f32 %v7519, %v8206
        %v8345 = vadd.f32 %v7520, %v8211
        %v8346 = vadd.f32 %v7521, %v8214
        %v8347 = vadd.f32 %v7522, %v8219
        %v8348 = vadd.f32 %v7523, %v8222
        %v8349 = vadd.f32 %v7524, %v8227
        %v8350 = vadd.f32 %v7525, %v8230
        %v8351 = vadd.f32 %v7526, %v8235
        %v8352 = vadd.f32 %v7527, %v8238
        %v8353 = vadd.f32 %v7528, %v8243
        %v8354 = vadd.f32 %v7529, %v8246
        %v8355 = vadd.f32 %v7530, %v8251
        %v8356 = vadd.f32 %v7531, %v8254
        %v8357 = vadd.f32 %v7532, %v8259
        %v8358 = vadd.f32 %v7533, %v8262
        %v8359 = vadd.f32 %v7534, %v8267
        %v8360 = vadd.f32 %v7535, %v8270
        %v8361 = vadd.f32 %v7536, %v8275
        %v8362 = vadd.f32 %v7537, %v8278
        %v8363 = vadd.f32 %v7538, %v8283
        %v8364 = vadd.f32 %v7539, %v8286
        %v8365 = vadd.f32 %v7540, %v8291
        %v8366 = vadd.f32 %v7541, %v8294
        %v8367 = vadd.f32 %v7542, %v8299
        %v8368 = vadd.f32 %v7543, %v8302
        %v8369 = vld [vmem:[#allocation7] sm:$0x1]
        %v8371 = vlaneseq
        %v8372 = vshrl.u32 %v8371, 7
        %v8373 = vsub.s32 0, %v8372
        %v8374 = vrot.slane %v8369, %v8373
        %v8376 = vadd.f32 %v8305, %v8374
        %v8377 = vadd.f32 %v8306, %v8374
        %v8378 = vadd.f32 %v8307, %v8374
        %v8379 = vadd.f32 %v8308, %v8374
        %v8380 = vadd.f32 %v8309, %v8374
        %v8381 = vadd.f32 %v8310, %v8374
        %v8382 = vadd.f32 %v8311, %v8374
        %v8383 = vadd.f32 %v8312, %v8374
        %v8384 = vadd.f32 %v8313, %v8374
        %v8385 = vadd.f32 %v8314, %v8374
        %v8386 = vadd.f32 %v8315, %v8374
        %v8387 = vadd.f32 %v8316, %v8374
        %v8388 = vadd.f32 %v8317, %v8374
        %v8389 = vadd.f32 %v8318, %v8374
        %v8390 = vadd.f32 %v8319, %v8374
        %v8391 = vadd.f32 %v8320, %v8374
        %v8392 = vadd.f32 %v8321, %v8374
        %v8393 = vadd.f32 %v8322, %v8374
        %v8394 = vadd.f32 %v8323, %v8374
        %v8395 = vadd.f32 %v8324, %v8374
        %v8396 = vadd.f32 %v8325, %v8374
        %v8397 = vadd.f32 %v8326, %v8374
        %v8398 = vadd.f32 %v8327, %v8374
        %v8399 = vadd.f32 %v8328, %v8374
        %v8400 = vadd.f32 %v8329, %v8374
        %v8401 = vadd.f32 %v8330, %v8374
        %v8402 = vadd.f32 %v8331, %v8374
        %v8403 = vadd.f32 %v8332, %v8374
        %v8404 = vadd.f32 %v8333, %v8374
        %v8405 = vadd.f32 %v8334, %v8374
        %v8406 = vadd.f32 %v8335, %v8374
        %v8407 = vadd.f32 %v8336, %v8374
        %v8408 = vadd.f32 %v8337, %v8374
        %v8409 = vadd.f32 %v8338, %v8374
        %v8410 = vadd.f32 %v8339, %v8374
        %v8411 = vadd.f32 %v8340, %v8374
        %v8412 = vadd.f32 %v8341, %v8374
        %v8413 = vadd.f32 %v8342, %v8374
        %v8414 = vadd.f32 %v8343, %v8374
        %v8415 = vadd.f32 %v8344, %v8374
        %v8416 = vadd.f32 %v8345, %v8374
        %v8417 = vadd.f32 %v8346, %v8374
        %v8418 = vadd.f32 %v8347, %v8374
        %v8419 = vadd.f32 %v8348, %v8374
        %v8420 = vadd.f32 %v8349, %v8374
        %v8421 = vadd.f32 %v8350, %v8374
        %v8422 = vadd.f32 %v8351, %v8374
        %v8423 = vadd.f32 %v8352, %v8374
        %v8424 = vadd.f32 %v8353, %v8374
        %v8425 = vadd.f32 %v8354, %v8374
        %v8426 = vadd.f32 %v8355, %v8374
        %v8427 = vadd.f32 %v8356, %v8374
        %v8428 = vadd.f32 %v8357, %v8374
        %v8429 = vadd.f32 %v8358, %v8374
        %v8430 = vadd.f32 %v8359, %v8374
        %v8431 = vadd.f32 %v8360, %v8374
        %v8432 = vadd.f32 %v8361, %v8374
        %v8433 = vadd.f32 %v8362, %v8374
        %v8434 = vadd.f32 %v8363, %v8374
        %v8435 = vadd.f32 %v8364, %v8374
        %v8436 = vadd.f32 %v8365, %v8374
        %v8437 = vadd.f32 %v8366, %v8374
        %v8438 = vadd.f32 %v8367, %v8374
        %v8439 = vadd.f32 %v8368, %v8374
        %v8440 = vmax.f32 %v8376, 0.0
        %v8441 = vmax.f32 %v8377, 0.0
        %v8442 = vmax.f32 %v8378, 0.0
        %v8443 = vmax.f32 %v8379, 0.0
        %v8444 = vmax.f32 %v8380, 0.0
        %v8445 = vmax.f32 %v8381, 0.0
        %v8446 = vmax.f32 %v8382, 0.0
        %v8447 = vmax.f32 %v8383, 0.0
        %v8448 = vmax.f32 %v8384, 0.0
        %v8449 = vmax.f32 %v8385, 0.0
        %v8450 = vmax.f32 %v8386, 0.0
        %v8451 = vmax.f32 %v8387, 0.0
        %v8452 = vmax.f32 %v8388, 0.0
        %v8453 = vmax.f32 %v8389, 0.0
        %v8454 = vmax.f32 %v8390, 0.0
        %v8455 = vmax.f32 %v8391, 0.0
        %v8456 = vmax.f32 %v8392, 0.0
        %v8457 = vmax.f32 %v8393, 0.0
        %v8458 = vmax.f32 %v8394, 0.0
        %v8459 = vmax.f32 %v8395, 0.0
        %v8460 = vmax.f32 %v8396, 0.0
        %v8461 = vmax.f32 %v8397, 0.0
        %v8462 = vmax.f32 %v8398, 0.0
        %v8463 = vmax.f32 %v8399, 0.0
        %v8464 = vmax.f32 %v8400, 0.0
        %v8465 = vmax.f32 %v8401, 0.0
        %v8466 = vmax.f32 %v8402, 0.0
        %v8467 = vmax.f32 %v8403, 0.0
        %v8468 = vmax.f32 %v8404, 0.0
        %v8469 = vmax.f32 %v8405, 0.0
        %v8470 = vmax.f32 %v8406, 0.0
        %v8471 = vmax.f32 %v8407, 0.0
        %v8472 = vmax.f32 %v8408, 0.0
        %v8473 = vmax.f32 %v8409, 0.0
        %v8474 = vmax.f32 %v8410, 0.0
        %v8475 = vmax.f32 %v8411, 0.0
        %v8476 = vmax.f32 %v8412, 0.0
        %v8477 = vmax.f32 %v8413, 0.0
        %v8478 = vmax.f32 %v8414, 0.0
        %v8479 = vmax.f32 %v8415, 0.0
        %v8480 = vmax.f32 %v8416, 0.0
        %v8481 = vmax.f32 %v8417, 0.0
        %v8482 = vmax.f32 %v8418, 0.0
        %v8483 = vmax.f32 %v8419, 0.0
        %v8484 = vmax.f32 %v8420, 0.0
        %v8485 = vmax.f32 %v8421, 0.0
        %v8486 = vmax.f32 %v8422, 0.0
        %v8487 = vmax.f32 %v8423, 0.0
        %v8488 = vmax.f32 %v8424, 0.0
        %v8489 = vmax.f32 %v8425, 0.0
        %v8490 = vmax.f32 %v8426, 0.0
        %v8491 = vmax.f32 %v8427, 0.0
        %v8492 = vmax.f32 %v8428, 0.0
        %v8493 = vmax.f32 %v8429, 0.0
        %v8494 = vmax.f32 %v8430, 0.0
        %v8495 = vmax.f32 %v8431, 0.0
        %v8496 = vmax.f32 %v8432, 0.0
        %v8497 = vmax.f32 %v8433, 0.0
        %v8498 = vmax.f32 %v8434, 0.0
        %v8499 = vmax.f32 %v8435, 0.0
        %v8500 = vmax.f32 %v8436, 0.0
        %v8501 = vmax.f32 %v8437, 0.0
        %v8502 = vmax.f32 %v8438, 0.0
        %v8503 = vmax.f32 %v8439, 0.0
        %v8504 = vpack.c.bf16 %v8441, %v8440
        %v8505 = vpack.c.bf16 %v8443, %v8442
        %v8506 = vpack.c.bf16 %v8445, %v8444
        %v8507 = vpack.c.bf16 %v8447, %v8446
        %v8508 = vpack.c.bf16 %v8449, %v8448
        %v8509 = vpack.c.bf16 %v8451, %v8450
        %v8510 = vpack.c.bf16 %v8453, %v8452
        %v8511 = vpack.c.bf16 %v8455, %v8454
        %v8512 = vpack.c.bf16 %v8457, %v8456
        %v8513 = vpack.c.bf16 %v8459, %v8458
        %v8514 = vpack.c.bf16 %v8461, %v8460
        %v8515 = vpack.c.bf16 %v8463, %v8462
        %v8516 = vpack.c.bf16 %v8465, %v8464
        %v8517 = vpack.c.bf16 %v8467, %v8466
        %v8518 = vpack.c.bf16 %v8469, %v8468
        %v8519 = vpack.c.bf16 %v8471, %v8470
        %v8520 = vpack.c.bf16 %v8473, %v8472
        %v8521 = vpack.c.bf16 %v8475, %v8474
        %v8522 = vpack.c.bf16 %v8477, %v8476
        %v8523 = vpack.c.bf16 %v8479, %v8478
        %v8524 = vpack.c.bf16 %v8481, %v8480
        %v8525 = vpack.c.bf16 %v8483, %v8482
        %v8526 = vpack.c.bf16 %v8485, %v8484
        %v8527 = vpack.c.bf16 %v8487, %v8486
        %v8528 = vpack.c.bf16 %v8489, %v8488
        %v8529 = vpack.c.bf16 %v8491, %v8490
        %v8530 = vpack.c.bf16 %v8493, %v8492
        %v8531 = vpack.c.bf16 %v8495, %v8494
        %v8532 = vpack.c.bf16 %v8497, %v8496
        %v8533 = vpack.c.bf16 %v8499, %v8498
        %v8534 = vpack.c.bf16 %v8501, %v8500
        %v8535 = vpack.c.bf16 %v8503, %v8502
        %v8568 = vunpack.c.l.b16 %v8504
        %v8569 = vunpack.c.h.b16 %v8504
        %v8570 = vunpack.c.l.b16 %v8505
        %v8571 = vunpack.c.h.b16 %v8505
        %v8572 = vunpack.c.l.b16 %v8506
        %v8573 = vunpack.c.h.b16 %v8506
        %v8574 = vunpack.c.l.b16 %v8507
        %v8575 = vunpack.c.h.b16 %v8507
        %v8576 = vunpack.c.l.b16 %v8508
        %v8577 = vunpack.c.h.b16 %v8508
        %v8578 = vunpack.c.l.b16 %v8509
        %v8579 = vunpack.c.h.b16 %v8509
        %v8580 = vunpack.c.l.b16 %v8510
        %v8581 = vunpack.c.h.b16 %v8510
        %v8582 = vunpack.c.l.b16 %v8511
        %v8583 = vunpack.c.h.b16 %v8511
        %v8584 = vunpack.c.l.b16 %v8512
        %v8585 = vunpack.c.h.b16 %v8512
        %v8586 = vunpack.c.l.b16 %v8513
        %v8587 = vunpack.c.h.b16 %v8513
        %v8588 = vunpack.c.l.b16 %v8514
        %v8589 = vunpack.c.h.b16 %v8514
        %v8590 = vunpack.c.l.b16 %v8515
        %v8591 = vunpack.c.h.b16 %v8515
        %v8592 = vunpack.c.l.b16 %v8516
        %v8593 = vunpack.c.h.b16 %v8516
        %v8594 = vunpack.c.l.b16 %v8517
        %v8595 = vunpack.c.h.b16 %v8517
        %v8596 = vunpack.c.l.b16 %v8518
        %v8597 = vunpack.c.h.b16 %v8518
        %v8598 = vunpack.c.l.b16 %v8519
        %v8599 = vunpack.c.h.b16 %v8519
        %v8600 = vunpack.c.l.b16 %v8520
        %v8601 = vunpack.c.h.b16 %v8520
        %v8602 = vunpack.c.l.b16 %v8521
        %v8603 = vunpack.c.h.b16 %v8521
        %v8604 = vunpack.c.l.b16 %v8522
        %v8605 = vunpack.c.h.b16 %v8522
        %v8606 = vunpack.c.l.b16 %v8523
        %v8607 = vunpack.c.h.b16 %v8523
        %v8608 = vunpack.c.l.b16 %v8524
        %v8609 = vunpack.c.h.b16 %v8524
        %v8610 = vunpack.c.l.b16 %v8525
        %v8611 = vunpack.c.h.b16 %v8525
        %v8612 = vunpack.c.l.b16 %v8526
        %v8613 = vunpack.c.h.b16 %v8526
        %v8614 = vunpack.c.l.b16 %v8527
        %v8615 = vunpack.c.h.b16 %v8527
        %v8616 = vunpack.c.l.b16 %v8528
        %v8617 = vunpack.c.h.b16 %v8528
        %v8618 = vunpack.c.l.b16 %v8529
        %v8619 = vunpack.c.h.b16 %v8529
        %v8620 = vunpack.c.l.b16 %v8530
        %v8621 = vunpack.c.h.b16 %v8530
        %v8622 = vunpack.c.l.b16 %v8531
        %v8623 = vunpack.c.h.b16 %v8531
        %v8624 = vunpack.c.l.b16 %v8532
        %v8625 = vunpack.c.h.b16 %v8532
        %v8626 = vunpack.c.l.b16 %v8533
        %v8627 = vunpack.c.h.b16 %v8533
        %v8628 = vunpack.c.l.b16 %v8534
        %v8629 = vunpack.c.h.b16 %v8534
        %v8630 = vunpack.c.l.b16 %v8535
        %v8631 = vunpack.c.h.b16 %v8535
        %v8632 = vpack.c.b16 %v8568, %v8568
        %v8633 = vpack.c.b16 %v8569, %v8569
        %v8634 = vpack.c.b16 %v8570, %v8570
        %v8635 = vpack.c.b16 %v8571, %v8571
        %v8636 = vpack.c.b16 %v8572, %v8572
        %v8637 = vpack.c.b16 %v8573, %v8573
        %v8638 = vpack.c.b16 %v8574, %v8574
        %v8639 = vpack.c.b16 %v8575, %v8575
        %v8640 = vpack.c.b16 %v8576, %v8576
        %v8641 = vpack.c.b16 %v8577, %v8577
        %v8642 = vpack.c.b16 %v8578, %v8578
        %v8643 = vpack.c.b16 %v8579, %v8579
        %v8644 = vpack.c.b16 %v8580, %v8580
        %v8645 = vpack.c.b16 %v8581, %v8581
        %v8646 = vpack.c.b16 %v8582, %v8582
        %v8647 = vpack.c.b16 %v8583, %v8583
        %v8648 = vpack.c.b16 %v8584, %v8584
        %v8649 = vpack.c.b16 %v8585, %v8585
        %v8650 = vpack.c.b16 %v8586, %v8586
        %v8651 = vpack.c.b16 %v8587, %v8587
        %v8652 = vpack.c.b16 %v8588, %v8588
        %v8653 = vpack.c.b16 %v8589, %v8589
        %v8654 = vpack.c.b16 %v8590, %v8590
        %v8655 = vpack.c.b16 %v8591, %v8591
        %v8656 = vpack.c.b16 %v8592, %v8592
        %v8657 = vpack.c.b16 %v8593, %v8593
        %v8658 = vpack.c.b16 %v8594, %v8594
        %v8659 = vpack.c.b16 %v8595, %v8595
        %v8660 = vpack.c.b16 %v8596, %v8596
        %v8661 = vpack.c.b16 %v8597, %v8597
        %v8662 = vpack.c.b16 %v8598, %v8598
        %v8663 = vpack.c.b16 %v8599, %v8599
        %v8664 = vpack.c.b16 %v8600, %v8600
        %v8665 = vpack.c.b16 %v8601, %v8601
        %v8666 = vpack.c.b16 %v8602, %v8602
        %v8667 = vpack.c.b16 %v8603, %v8603
        %v8668 = vpack.c.b16 %v8604, %v8604
        %v8669 = vpack.c.b16 %v8605, %v8605
        %v8670 = vpack.c.b16 %v8606, %v8606
        %v8671 = vpack.c.b16 %v8607, %v8607
        %v8672 = vpack.c.b16 %v8608, %v8608
        %v8673 = vpack.c.b16 %v8609, %v8609
        %v8674 = vpack.c.b16 %v8610, %v8610
        %v8675 = vpack.c.b16 %v8611, %v8611
        %v8676 = vpack.c.b16 %v8612, %v8612
        %v8677 = vpack.c.b16 %v8613, %v8613
        %v8678 = vpack.c.b16 %v8614, %v8614
        %v8679 = vpack.c.b16 %v8615, %v8615
        %v8680 = vpack.c.b16 %v8616, %v8616
        %v8681 = vpack.c.b16 %v8617, %v8617
        %v8682 = vpack.c.b16 %v8618, %v8618
        %v8683 = vpack.c.b16 %v8619, %v8619
        %v8684 = vpack.c.b16 %v8620, %v8620
        %v8685 = vpack.c.b16 %v8621, %v8621
        %v8686 = vpack.c.b16 %v8622, %v8622
        %v8687 = vpack.c.b16 %v8623, %v8623
        %v8688 = vpack.c.b16 %v8624, %v8624
        %v8689 = vpack.c.b16 %v8625, %v8625
        %v8690 = vpack.c.b16 %v8626, %v8626
        %v8691 = vpack.c.b16 %v8627, %v8627
        %v8692 = vpack.c.b16 %v8628, %v8628
        %v8693 = vpack.c.b16 %v8629, %v8629
        %v8694 = vpack.c.b16 %v8630, %v8630
        %v8695 = vpack.c.b16 %v8631, %v8631
        %8760 = vst [vmem:[%s235] sm:$0xf] %v8632
        %8761 = vst [vmem:[%s235 + $0x4] sm:$0xf] %v8633
        %8762 = vst [vmem:[%s235 + $0x8] sm:$0xf] %v8634
        %8763 = vst [vmem:[%s235 + $0xc] sm:$0xf] %v8635
        %8764 = vst [vmem:[%s235 + $0x10] sm:$0xf] %v8636
        %8765 = vst [vmem:[%s235 + $0x14] sm:$0xf] %v8637
        %8766 = vst [vmem:[%s235 + $0x18] sm:$0xf] %v8638
        %8767 = vst [vmem:[%s235 + $0x1c] sm:$0xf] %v8639
        %8768 = vst [vmem:[%s235 + $0x20] sm:$0xf] %v8640
        %8769 = vst [vmem:[%s235 + $0x24] sm:$0xf] %v8641
        %8770 = vst [vmem:[%s235 + $0x28] sm:$0xf] %v8642
        %8771 = vst [vmem:[%s235 + $0x2c] sm:$0xf] %v8643
        %8772 = vst [vmem:[%s235 + $0x30] sm:$0xf] %v8644
        %8773 = vst [vmem:[%s235 + $0x34] sm:$0xf] %v8645
        %8774 = vst [vmem:[%s235 + $0x38] sm:$0xf] %v8646
        %8775 = vst [vmem:[%s235 + $0x3c] sm:$0xf] %v8647
        %8776 = vst [vmem:[%s235 + $0x40] sm:$0xf] %v8648
        %8777 = vst [vmem:[%s235 + $0x44] sm:$0xf] %v8649
        %8778 = vst [vmem:[%s235 + $0x48] sm:$0xf] %v8650
        %8779 = vst [vmem:[%s235 + $0x4c] sm:$0xf] %v8651
        %8780 = vst [vmem:[%s235 + $0x50] sm:$0xf] %v8652
        %8781 = vst [vmem:[%s235 + $0x54] sm:$0xf] %v8653
        %8782 = vst [vmem:[%s235 + $0x58] sm:$0xf] %v8654
        %8783 = vst [vmem:[%s235 + $0x5c] sm:$0xf] %v8655
        %8784 = vst [vmem:[%s235 + $0x60] sm:$0xf] %v8656
        %8785 = vst [vmem:[%s235 + $0x64] sm:$0xf] %v8657
        %8786 = vst [vmem:[%s235 + $0x68] sm:$0xf] %v8658
        %8787 = vst [vmem:[%s235 + $0x6c] sm:$0xf] %v8659
        %8788 = vst [vmem:[%s235 + $0x70] sm:$0xf] %v8660
        %8789 = vst [vmem:[%s235 + $0x74] sm:$0xf] %v8661
        %8790 = vst [vmem:[%s235 + $0x78] sm:$0xf] %v8662
        %8791 = vst [vmem:[%s235 + $0x7c] sm:$0xf] %v8663
        %8792 = vst [vmem:[%s235 + $0x80] sm:$0xf] %v8664
        %8793 = vst [vmem:[%s235 + $0x84] sm:$0xf] %v8665
        %8794 = vst [vmem:[%s235 + $0x88] sm:$0xf] %v8666
        %8795 = vst [vmem:[%s235 + $0x8c] sm:$0xf] %v8667
        %8796 = vst [vmem:[%s235 + $0x90] sm:$0xf] %v8668
        %8797 = vst [vmem:[%s235 + $0x94] sm:$0xf] %v8669
        %8798 = vst [vmem:[%s235 + $0x98] sm:$0xf] %v8670
        %8799 = vst [vmem:[%s235 + $0x9c] sm:$0xf] %v8671
        %8800 = vst [vmem:[%s235 + $0xa0] sm:$0xf] %v8672
        %8801 = vst [vmem:[%s235 + $0xa4] sm:$0xf] %v8673
        %8802 = vst [vmem:[%s235 + $0xa8] sm:$0xf] %v8674
        %8803 = vst [vmem:[%s235 + $0xac] sm:$0xf] %v8675
        %8804 = vst [vmem:[%s235 + $0xb0] sm:$0xf] %v8676
        %8805 = vst [vmem:[%s235 + $0xb4] sm:$0xf] %v8677
        %8806 = vst [vmem:[%s235 + $0xb8] sm:$0xf] %v8678
        %8807 = vst [vmem:[%s235 + $0xbc] sm:$0xf] %v8679
        %8808 = vst [vmem:[%s235 + $0xc0] sm:$0xf] %v8680
        %8809 = vst [vmem:[%s235 + $0xc4] sm:$0xf] %v8681
        %8810 = vst [vmem:[%s235 + $0xc8] sm:$0xf] %v8682
        %8811 = vst [vmem:[%s235 + $0xcc] sm:$0xf] %v8683
        %8812 = vst [vmem:[%s235 + $0xd0] sm:$0xf] %v8684
        %8813 = vst [vmem:[%s235 + $0xd4] sm:$0xf] %v8685
        %8814 = vst [vmem:[%s235 + $0xd8] sm:$0xf] %v8686
        %8815 = vst [vmem:[%s235 + $0xdc] sm:$0xf] %v8687
        %8816 = vst [vmem:[%s235 + $0xe0] sm:$0xf] %v8688
        %8817 = vst [vmem:[%s235 + $0xe4] sm:$0xf] %v8689
        %8818 = vst [vmem:[%s235 + $0xe8] sm:$0xf] %v8690
        %8819 = vst [vmem:[%s235 + $0xec] sm:$0xf] %v8691
        %8820 = vst [vmem:[%s235 + $0xf0] sm:$0xf] %v8692
        %8821 = vst [vmem:[%s235 + $0xf4] sm:$0xf] %v8693
        %8822 = vst [vmem:[%s235 + $0xf8] sm:$0xf] %v8694
        %8823 = vst [vmem:[%s235 + $0xfc] sm:$0xf] %v8695
        %s8824 = sand.u32 %s128, 1
        %s8825 = scalar_lea.sflag [#allocation4], %s8824
        %s8826 = sand.u32 %s128, 1
        %s8827 = smul.addr %s8826, 256
        %s8828 = scalar_lea.vmem [#allocation8], %s8827
        // Predicated region
        $region45: #{tpu_custom_call.1} parent=31 // pred_check
          %p8829 = pneg %p138
        $region46: #{tpu_custom_call.1} parent=31 // pred_check_branch
          %8831 = sbr.rel (%p8829) target = $region48
        $region47: #{tpu_custom_call.1} parent=31 // pred_region
          %s8832 = smul.u32 8, %s26
          %s8834 = ssub.s32 4096, 4096
          %8835 = vsyncadd %s8825, %s8834
          %s8836 = smul.addr %s8832, 8
          %s8837 = sadd.s32 %s25, %s8836
          %s8838 = smul.addr %s24, 512
          %s8839 = sadd.s32 %s8837, %s8838
          %s8840 = smul.addr %s8839, 64
          %s8841 = scalar_lea.hbm %s3, %s8840
          %s8842 = sshll.u32 %s8828, 4
          %s8843 = int_to_ptr.vmem [resolvable:$true] %s8842
          %8848 = dma.vmem_to_hbm [thread:$0]  %s8843, 4096, %s8841, %s8825, 64, 64, 4
        $region48: #{tpu_custom_call.1} parent=31 // pred_fallthru
          _
      $region32: #{tpu_custom_call.1} parent=5 // pred_fallthru
        _
      %p8849 = scmp.le.s32.totalorder 2, %s14
      // Predicated region
      $region49: #{tpu_custom_call.1} parent=5 // pred_check
        %p8850 = pneg %p8849
      $region50: #{tpu_custom_call.1} parent=5 // pred_check_branch
        %8852 = sbr.rel (%p8850) target = $region52
      $region51: #{tpu_custom_call.1} parent=5 // pred_region
        %s8853 = ssub.s32 %s14, 2
        // Predicated region
        $region53: #{tpu_custom_call.1} parent=51 // pred_check
          %p8854 = pneg %p144
        $region54: #{tpu_custom_call.1} parent=51 // pred_check_branch
          %8856 = sbr.rel (%p8854) target = $region56
        $region55: #{tpu_custom_call.1} parent=51 // pred_region
          %s8857 = sand.u32 %s129, 1
          %s8858 = scalar_lea.sflag [#allocation4], %s8857
          %s8859 = sand.u32 %s129, 1
          %s8860 = smul.addr %s8859, 256
          %s8861 = scalar_lea.vmem [#allocation8], %s8860
          %8862 = dma.done %s8858, 4096
        $region56: #{tpu_custom_call.1} parent=51 // pred_fallthru
          _
      $region52: #{tpu_custom_call.1} parent=5 // pred_fallthru
        _
    $region6: #{tpu_custom_call.1} parent=1 // loop_footer
      %s18 = sadd.s32 1, %s14
    $region7: #{tpu_custom_call.1} parent=1 // loop_footer_branch
      %13 = sbr.rel target = $region3
    $region8: #{tpu_custom_call.1} parent=1 // loop_exit
      _
    %8863 = vsyncpa [#allocation3], 1
    %s8864 = scalar_lea.sflag [#allocation3], 1
    %8865 = vsyncpa %s8864, 1
    %8866 = vsyncpa [#allocation6], 1
    %8867 = vsyncpa [#allocation4], 1
    %s8868 = scalar_lea.sflag [#allocation4], 1
    %8869 = vsyncpa %s8868, 1

</llo_original>
